<compile_context>
chip_gen: v7x
topology: tpu7x:2x2x1
jax: 0.10.0
libtpu: 0.0.40
codegen_flags: <defaults>
</compile_context>

<pallas_src>
import math
from functools import partial

import jax
import jax.numpy as jnp
from jax import lax
from jax.experimental import pallas as pl
from jax.experimental.pallas import tpu as pltpu

NHEAD = 8              # 2 * 4 from the module definition
NHID = 512 // 4        # transformer feed-forward width (seq_len // 4 = 128)
NLAYERS = 2
LN_EPS = 1e-5
BN_EPS = 1e-5

# MXU operand dtype: bf16 operands + f32 accumulation.
MATMUL_DTYPE = jnp.bfloat16


def _mm(a, b):
    return jnp.dot(a.astype(MATMUL_DTYPE), b.astype(MATMUL_DTYPE),
                   preferred_element_type=jnp.float32)


def _bmm(a, b, dims):
    return lax.dot_general(a.astype(MATMUL_DTYPE), b.astype(MATMUL_DTYPE),
                           dims, preferred_element_type=jnp.float32)


def _shift_prev(v):
    """v[:, m] -> v[:, m-1], zero in column 0 (left conv padding)."""
    r = pltpu.roll(v, 1, axis=1)
    col = lax.broadcasted_iota(jnp.int32, r.shape, 1)
    return jnp.where(col == 0, 0.0, r)


def _shift_next(v):
    """v[:, m] -> v[:, m+1], zero in the last column (output_padding edge)."""
    n = v.shape[1]
    r = pltpu.roll(v, n - 1, axis=1)
    col = lax.broadcasted_iota(jnp.int32, r.shape, 1)
    return jnp.where(col == n - 1, 0.0, r)


# ----------------------------------------------------------------------------
# Single fused kernel: one batch element per grid step, everything in VMEM.
# ----------------------------------------------------------------------------
def fused_ae_kernel(xph_ref,
                    w1c_ref, aff1_ref,
                    w2c_ref, aff2_ref,
                    wqkv_ref, bqkv_ref, wo_ref, wf1_ref, bf1_ref, wf2_ref,
                    dvec_ref,
                    d1we_ref, d1wo_ref, aff3_ref,
                    d2we_ref, d2wo_ref, b4_ref,
                    o_ref, *, nhead, nlayers):
    # mod-4 input phases: xp_r[m] = x[4m + r]      (each [F, S], S on lanes)
    xp0 = xph_ref[0].astype(jnp.float32)
    xp1 = xph_ref[1].astype(jnp.float32)
    xp2 = xph_ref[2].astype(jnp.float32)
    xp3 = xph_ref[3].astype(jnp.float32)

    def conv_relu_bn(stacked, wcat_ref, aff_ref):
        # aff columns: conv bias, eval-BN scale, eval-BN shift
        aff = aff_ref[...]
        y = _mm(wcat_ref[...], stacked) + aff[:, 0:1]
        return jnp.maximum(y, 0.0) * aff[:, 1:2] + aff[:, 2:3]

    # ---- conv1: Conv1d(F, 2F, k=3, s=2, p=1) + ReLU + BN1(eval) -------------
    # produced directly as its even/odd sample phases (what conv2 consumes),
    # so no interleave is ever materialized.
    h1e = conv_relu_bn(jnp.concatenate([_shift_prev(xp3), xp0, xp1], axis=0),
                       w1c_ref, aff1_ref)                    # h1[2m]
    h1o = conv_relu_bn(jnp.concatenate([xp1, xp2, xp3], axis=0),
                       w1c_ref, aff1_ref)                    # h1[2m+1]

    # ---- conv2: Conv1d(2F, D, k=3, s=2, p=1) + ReLU + BN2(eval) -------------
    z = conv_relu_bn(jnp.concatenate([_shift_prev(h1o), h1e, h1o], axis=0),
                     w2c_ref, aff2_ref)                      # [D, S], natural order

    # ---- transformer encoder: 2 post-norm layers, relu FF, dropout off ------
    d_model = z.shape[0]
    head_dim = d_model // nhead

    def layer_norm(t, g, b):             # LN over the feature (sublane) axis
        mu = jnp.mean(t, axis=0, keepdims=True)
        tc = t - mu
        var = jnp.mean(tc * tc, axis=0, keepdims=True)
        return tc * lax.rsqrt(var + LN_EPS) * g + b

    for l in range(nlayers):             # short fixed trip count -> unrolled
        dv = dvec_ref[l]                 # [D, 6]: bo, ln1g, ln1b, b2, ln2g, ln2b
        qkv = _mm(wqkv_ref[l], z) + bqkv_ref[l]   # [3D, S]; q pre-scaled on host
        q = qkv[0:d_model]
        k = qkv[d_model:2 * d_model]
        v = qkv[2 * d_model:3 * d_model]
        # head split = cheap sublane slices; all heads share one batched
        # contraction each (no per-head MXU loop).
        qh = jnp.stack([q[h * head_dim:(h + 1) * head_dim].T
                        for h in range(nhead)], axis=0)      # [H, S, hd]
        kh = jnp.stack([k[h * head_dim:(h + 1) * head_dim]
                        for h in range(nhead)], axis=0)      # [H, hd, S]
        vh = jnp.stack([v[h * head_dim:(h + 1) * head_dim]
                        for h in range(nhead)], axis=0)      # [H, hd, S]
        s = _bmm(qh, kh, (((2,), (1,)), ((0,), (0,))))       # [H, Sq, Sk]
        s = s - jnp.max(s, axis=-1, keepdims=True)
        p = jnp.exp(s)
        p = p * pl.reciprocal(jnp.sum(p, axis=-1, keepdims=True), approx=True)
        ctx = _bmm(vh, p, (((2,), (2,)), ((0,), (0,))))      # [H, hd, Sq]
        attn = jnp.concatenate([ctx[h] for h in range(nhead)], axis=0)
        attn = _mm(wo_ref[l], attn) + dv[:, 0:1]
        x1 = layer_norm(z + attn, dv[:, 1:2], dv[:, 2:3])
        ff = jnp.maximum(_mm(wf1_ref[l], x1) + bf1_ref[l], 0.0)
        ff = _mm(wf2_ref[l], ff) + dv[:, 3:4]
        z = layer_norm(x1 + ff, dv[:, 4:5], dv[:, 5:6])

    # ---- deconv1: ConvT(D, 2F, k=3, s=2, p=1, op=1) + ReLU + BN3(eval) ------
    aff3 = aff3_ref[...]
    z_next = _shift_next(z)
    a3e = _mm(d1we_ref[...], z) + aff3[:, 0:1]                       # y[2j]
    a3o = (_mm(d1wo_ref[...], jnp.concatenate([z, z_next], axis=0))
           + aff3[:, 0:1])                                           # y[2j+1]
    a3e = jnp.maximum(a3e, 0.0) * aff3[:, 1:2] + aff3[:, 2:3]
    a3o = jnp.maximum(a3o, 0.0) * aff3[:, 1:2] + aff3[:, 2:3]

    # ---- deconv2: ConvT(2F, F, k=3, s=2, p=1, op=1) -> 4 output phases ------
    b4 = b4_ref[...]
    a3e_next = _shift_next(a3e)
    o_ref[0] = (_mm(d2we_ref[...], a3e) + b4).astype(o_ref.dtype)          # out[4m]
    o_ref[1] = (_mm(d2wo_ref[...], jnp.concatenate([a3e, a3o], axis=0))
                + b4).astype(o_ref.dtype)                                  # out[4m+1]
    o_ref[2] = (_mm(d2we_ref[...], a3o) + b4).astype(o_ref.dtype)          # out[4m+2]
    o_ref[3] = (_mm(d2wo_ref[...], jnp.concatenate([a3o, a3e_next], axis=0))
                + b4).astype(o_ref.dtype)                                  # out[4m+3]


# ----------------------------------------------------------------------------
# Full TransformerAE forward (eval mode).
# ----------------------------------------------------------------------------
def transformer_ae_forward(x, P):
    """x: [B, L, n_features] -> [B, L, n_features]."""
    B, L, F = x.shape
    assert L % 4 == 0, "two stride-2 convs need L % 4 == 0"
    S = L // 4
    D = 4 * F
    head_dim = D // NHEAD
    mxu = MATMUL_DTYPE
    f32 = jnp.float32

    # --- fold / pack parameters (tiny host-side prep) ------------------------
    def conv_cat(W):               # Conv1d weight [cout, cin, 3] -> [cout, 3*cin]
        return jnp.concatenate([W[:, :, 0], W[:, :, 1], W[:, :, 2]],
                               axis=1).astype(mxu)

    def deconv_tap(W, k):          # ConvT weight [cin, cout, 3] -> tap [cout, cin]
        return jnp.transpose(W[:, :, k], (1, 0))

    def affine(bias, bn):          # pack conv bias + eval-BN scale/shift -> [cout, 3]
        gamma, beta, rmean, rvar = bn
        scale = gamma * lax.rsqrt(rvar + BN_EPS)
        shift = beta - rmean * scale
        return jnp.stack([bias, scale, shift], axis=1).astype(f32)

    w1c, aff1 = conv_cat(P["conv1_w"]), affine(P["conv1_b"], P["bn1"])
    w2c, aff2 = conv_cat(P["conv2_w"]), affine(P["conv2_b"], P["bn2"])
    d1we = deconv_tap(P["deconv1_w"], 1).astype(mxu)
    d1wo = jnp.concatenate([deconv_tap(P["deconv1_w"], 2),
                            deconv_tap(P["deconv1_w"], 0)], axis=1).astype(mxu)
    aff3 = affine(P["deconv1_b"], P["bn3"])
    d2we = deconv_tap(P["deconv2_w"], 1).astype(mxu)
    d2wo = jnp.concatenate([deconv_tap(P["deconv2_w"], 2),
                            deconv_tap(P["deconv2_w"], 0)], axis=1).astype(mxu)
    b4 = P["deconv2_b"].reshape(-1, 1).astype(f32)

    tp = P["tlayer"]
    qscale = 1.0 / math.sqrt(head_dim)       # fold attention scale into q proj
    wqkv = tp["wqkv"].at[:, :D, :].multiply(qscale).astype(mxu)
    bqkv = tp["bqkv"].at[:, :D, :].multiply(qscale).astype(f32)
    wo, wf1, wf2 = tp["wo"].astype(mxu), tp["w1"].astype(mxu), tp["w2"].astype(mxu)
    bf1 = tp["b1"].astype(f32)
    dvec = jnp.concatenate([tp["bo"], tp["ln1_g"], tp["ln1_b"],
                            tp["b2"], tp["ln2_g"], tp["ln2_b"]],
                           axis=2).astype(f32)                 # [nlayers, D, 6]
    nlayers = wqkv.shape[0]

    # --- mod-4 phase decomposition of the input: x[b, 4m+r, f] -> [b, r, f, m]
    xph = jnp.transpose(x.reshape(B, S, 4, F), (0, 2, 3, 1)).astype(f32)

    def wspec(a):                  # whole-array, grid-invariant block
        return pl.BlockSpec(a.shape, lambda b, n=a.ndim: (0,) * n)

    weights = (w1c, aff1, w2c, aff2,
               wqkv, bqkv, wo, wf1, bf1, wf2, dvec,
               d1we, d1wo, aff3, d2we, d2wo, b4)

    out = pl.pallas_call(
        partial(fused_ae_kernel, nhead=NHEAD, nlayers=nlayers),
        out_shape=jax.ShapeDtypeStruct((B, 4, F, S), jnp.float32),
        grid=(B,),
        in_specs=[pl.BlockSpec((None, 4, F, S), lambda b: (b, 0, 0, 0))]
                 + [wspec(a) for a in weights],
        out_specs=pl.BlockSpec((None, 4, F, S), lambda b: (b, 0, 0, 0)),
        compiler_params=pltpu.CompilerParams(
            dimension_semantics=("parallel",),
            vmem_limit_bytes=32 * 1024 * 1024),
    )(xph, *weights)

    # re-interleave the 4 output phases: out[b, r, f, m] -> y[b, 4m+r, f]
    return jnp.transpose(out, (0, 3, 1, 2)).reshape(B, L, F)


# ----------------------------------------------------------------------------
# Deterministic synthetic parameters (shapes follow the module __init__).
# ----------------------------------------------------------------------------
def init_params(key, n_features, nlayers=NLAYERS):
    F = n_features
    D = 4 * F
    assert D % NHEAD == 0, "n_features must be even so d_model % nhead == 0"
    ks = jax.random.split(key, 9)

    def u(k, shape, s=0.1):
        return jax.random.uniform(k, shape, jnp.float32, -s, s)

    def bn(c):  # eval-mode BatchNorm1d: gamma, beta, running_mean, running_var
        return (jnp.ones((c,), jnp.float32), jnp.zeros((c,), jnp.float32),
                jnp.zeros((c,), jnp.float32), jnp.ones((c,), jnp.float32))

    P = {
        "conv1_w": u(ks[0], (2 * F, F, 3)), "conv1_b": u(ks[1], (2 * F,)),
        "conv2_w": u(ks[2], (4 * F, 2 * F, 3)), "conv2_b": u(ks[3], (4 * F,)),
        "deconv1_w": u(ks[4], (4 * F, 2 * F, 3)), "deconv1_b": u(ks[5], (2 * F,)),
        "deconv2_w": u(ks[6], (2 * F, F, 3)), "deconv2_b": u(ks[7], (F,)),
        "bn1": bn(2 * F), "bn2": bn(4 * F), "bn3": bn(2 * F),
    }
    tk = jax.random.split(ks[8], 8)
    # distinct parameters per encoder layer, stacked on a leading axis
    P["tlayer"] = {
        "wqkv": u(tk[0], (nlayers, 3 * D, D)),       # in_proj_weight
        "bqkv": u(tk[1], (nlayers, 3 * D, 1), 0.02),
        "wo":   u(tk[2], (nlayers, D, D)),           # out_proj.weight
        "bo":   u(tk[3], (nlayers, D, 1), 0.02),
        "w1":   u(tk[4], (nlayers, NHID, D)),        # linear1.weight
        "b1":   u(tk[5], (nlayers, NHID, 1), 0.02),
        "w2":   u(tk[6], (nlayers, D, NHID)),        # linear2.weight
        "b2":   u(tk[7], (nlayers, D, 1), 0.02),
        "ln1_g": jnp.ones((nlayers, D, 1), jnp.float32),
        "ln1_b": jnp.zeros((nlayers, D, 1), jnp.float32),
        "ln2_g": jnp.ones((nlayers, D, 1), jnp.float32),
        "ln2_b": jnp.zeros((nlayers, D, 1), jnp.float32),
    }
    return P


if __name__ == "__main__":
    # TODO(synk): train-mode dropout / batch-statistics BatchNorm are not
    # reproduced; this is the eval-mode forward (pos_encoder / decoders are
    # never invoked by TransformerModel.forward, matching the reference).
    B, L, n_features = 4, 512, 8       # seq_len = 512 as in the module; d_model = 32
    key = jax.random.PRNGKey(0)
    kx, kp = jax.random.split(key)
    x = jax.random.normal(kx, (B, L, n_features), jnp.float32)
    params = init_params(kp, n_features)

    fwd = jax.jit(transformer_ae_forward)
    y = fwd(x, params)
    jax.block_until_ready(y)

    assert y.shape == (B, L, n_features), y.shape
    assert bool(jnp.all(jnp.isfinite(y)))
    print("KERNEL_OK")
</pallas_src>

<mosaic_0001>
module attributes {stable_mosaic.version = 11 : i64} {
  func.func @fused_ae_kernel(%arg0: i32, %arg1: memref<1x4x8x128xf32, #tpu.memory_space<vmem>>, %arg2: memref<16x24xbf16, #tpu.memory_space<vmem>>, %arg3: memref<16x3xf32, #tpu.memory_space<vmem>>, %arg4: memref<32x48xbf16, #tpu.memory_space<vmem>>, %arg5: memref<32x3xf32, #tpu.memory_space<vmem>>, %arg6: memref<2x96x32xbf16, #tpu.memory_space<vmem>>, %arg7: memref<2x96x1xf32, #tpu.memory_space<vmem>>, %arg8: memref<2x32x32xbf16, #tpu.memory_space<vmem>>, %arg9: memref<2x128x32xbf16, #tpu.memory_space<vmem>>, %arg10: memref<2x128x1xf32, #tpu.memory_space<vmem>>, %arg11: memref<2x32x128xbf16, #tpu.memory_space<vmem>>, %arg12: memref<2x32x6xf32, #tpu.memory_space<vmem>>, %arg13: memref<16x32xbf16, #tpu.memory_space<vmem>>, %arg14: memref<16x64xbf16, #tpu.memory_space<vmem>>, %arg15: memref<16x3xf32, #tpu.memory_space<vmem>>, %arg16: memref<8x16xbf16, #tpu.memory_space<vmem>>, %arg17: memref<8x32xbf16, #tpu.memory_space<vmem>>, %arg18: memref<8x1xf32, #tpu.memory_space<vmem>>, %arg19: memref<1x4x8x128xf32, #tpu.memory_space<vmem>>) attributes {dimension_semantics = [#tpu.dimension_semantics<parallel>], iteration_bounds = array<i64: 4>, scalar_prefetch = 0 : i64, scratch_operands = 0 : i64, tpu.core_type = #tpu.core_type<tc>, window_params = [{transform_indices = @transform_0, window_bounds = array<i64: 1, 4, 8, 128>}, {pipeline_mode = #tpu.pipeline_mode<synchronous>, transform_indices = @transform_1, window_bounds = array<i64: 16, 24>}, {pipeline_mode = #tpu.pipeline_mode<synchronous>, transform_indices = @transform_2, window_bounds = array<i64: 16, 3>}, {pipeline_mode = #tpu.pipeline_mode<synchronous>, transform_indices = @transform_3, window_bounds = array<i64: 32, 48>}, {pipeline_mode = #tpu.pipeline_mode<synchronous>, transform_indices = @transform_4, window_bounds = array<i64: 32, 3>}, {pipeline_mode = #tpu.pipeline_mode<synchronous>, transform_indices = @transform_5, window_bounds = array<i64: 2, 96, 32>}, {pipeline_mode = #tpu.pipeline_mode<synchronous>, transform_indices = @transform_6, window_bounds = array<i64: 2, 96, 1>}, {pipeline_mode = #tpu.pipeline_mode<synchronous>, transform_indices = @transform_7, window_bounds = array<i64: 2, 32, 32>}, {pipeline_mode = #tpu.pipeline_mode<synchronous>, transform_indices = @transform_8, window_bounds = array<i64: 2, 128, 32>}, {pipeline_mode = #tpu.pipeline_mode<synchronous>, transform_indices = @transform_9, window_bounds = array<i64: 2, 128, 1>}, {pipeline_mode = #tpu.pipeline_mode<synchronous>, transform_indices = @transform_10, window_bounds = array<i64: 2, 32, 128>}, {pipeline_mode = #tpu.pipeline_mode<synchronous>, transform_indices = @transform_11, window_bounds = array<i64: 2, 32, 6>}, {pipeline_mode = #tpu.pipeline_mode<synchronous>, transform_indices = @transform_12, window_bounds = array<i64: 16, 32>}, {pipeline_mode = #tpu.pipeline_mode<synchronous>, transform_indices = @transform_13, window_bounds = array<i64: 16, 64>}, {pipeline_mode = #tpu.pipeline_mode<synchronous>, transform_indices = @transform_14, window_bounds = array<i64: 16, 3>}, {pipeline_mode = #tpu.pipeline_mode<synchronous>, transform_indices = @transform_15, window_bounds = array<i64: 8, 16>}, {pipeline_mode = #tpu.pipeline_mode<synchronous>, transform_indices = @transform_16, window_bounds = array<i64: 8, 32>}, {pipeline_mode = #tpu.pipeline_mode<synchronous>, transform_indices = @transform_17, window_bounds = array<i64: 8, 1>}, {transform_indices = @transform_18, window_bounds = array<i64: 1, 4, 8, 128>}]} {
    %c0 = arith.constant 0 : index
    %c0_0 = arith.constant 0 : index
    %c0_1 = arith.constant 0 : index
    %c0_2 = arith.constant 0 : index
    %0 = vector.load %arg1[%c0, %c0_0, %c0_1, %c0_2] : memref<1x4x8x128xf32, #tpu.memory_space<vmem>>, vector<1x1x8x128xf32>
    %1 = vector.shape_cast %0 : vector<1x1x8x128xf32> to vector<8x128xf32>
    %c0_3 = arith.constant 0 : index
    %c1 = arith.constant 1 : index
    %c0_4 = arith.constant 0 : index
    %c0_5 = arith.constant 0 : index
    %2 = vector.load %arg1[%c0_3, %c1, %c0_4, %c0_5] : memref<1x4x8x128xf32, #tpu.memory_space<vmem>>, vector<1x1x8x128xf32>
    %3 = vector.shape_cast %2 : vector<1x1x8x128xf32> to vector<8x128xf32>
    %c0_6 = arith.constant 0 : index
    %c2 = arith.constant 2 : index
    %c0_7 = arith.constant 0 : index
    %c0_8 = arith.constant 0 : index
    %4 = vector.load %arg1[%c0_6, %c2, %c0_7, %c0_8] : memref<1x4x8x128xf32, #tpu.memory_space<vmem>>, vector<1x1x8x128xf32>
    %5 = vector.shape_cast %4 : vector<1x1x8x128xf32> to vector<8x128xf32>
    %c0_9 = arith.constant 0 : index
    %c3 = arith.constant 3 : index
    %c0_10 = arith.constant 0 : index
    %c0_11 = arith.constant 0 : index
    %6 = vector.load %arg1[%c0_9, %c3, %c0_10, %c0_11] : memref<1x4x8x128xf32, #tpu.memory_space<vmem>>, vector<1x1x8x128xf32>
    %7 = vector.shape_cast %6 : vector<1x1x8x128xf32> to vector<8x128xf32>
    %c1_i32 = arith.constant 1 : i32
    %8 = tpu.dynamic_rotate %7 by %c1_i32 dim 1 : vector<8x128xf32>, i32 -> vector<8x128xf32>
    %9 = tpu.iota {dimensions = array<i32: 1>} : vector<8x128xi32>
    %c0_i32 = arith.constant 0 : i32
    %10 = vector.broadcast %c0_i32 : i32 to vector<8x128xi32>
    %11 = arith.cmpi eq, %9, %10 : vector<8x128xi32>
    %cst = arith.constant 0.000000e+00 : f32
    %12 = vector.broadcast %cst : f32 to vector<8x128xf32>
    %13 = arith.select %11, %12, %8 : vector<8x128xi1>, vector<8x128xf32>
    %14 = tpu.concatenate %13, %1, %3 in 0 : vector<8x128xf32>, vector<8x128xf32>, vector<8x128xf32> -> vector<24x128xf32>
    %c0_12 = arith.constant 0 : index
    %c0_13 = arith.constant 0 : index
    %15 = vector.load %arg3[%c0_12, %c0_13] : memref<16x3xf32, #tpu.memory_space<vmem>>, vector<16x3xf32>
    %c0_14 = arith.constant 0 : index
    %c0_15 = arith.constant 0 : index
    %16 = vector.load %arg2[%c0_14, %c0_15] : memref<16x24xbf16, #tpu.memory_space<vmem>>, vector<16x24xbf16>
    %17 = arith.truncf %14 : vector<24x128xf32> to vector<24x128xbf16>
    %cst_16 = arith.constant dense<0.000000e+00> : vector<16x128xf32>
    %18 = tpu.matmul %16, %17, %cst_16 {dimension_numbers = #tpu.dot_dimension_numbers<[1], [0], [0], [1], [0, 0, 1, 1], [], []>} : vector<16x24xbf16>, vector<24x128xbf16>, vector<16x128xf32> -> vector<16x128xf32>
    %19 = vector.extract_strided_slice %15 {offsets = [0, 0], sizes = [16, 1], strides = [1, 1]} : vector<16x3xf32> to vector<16x1xf32>
    %20 = vector.broadcast %19 : vector<16x1xf32> to vector<16x128xf32>
    %21 = arith.addf %18, %20 : vector<16x128xf32>
    %cst_17 = arith.constant 0.000000e+00 : f32
    %22 = vector.broadcast %cst_17 : f32 to vector<16x128xf32>
    %23 = arith.maximumf %21, %22 : vector<16x128xf32>
    %24 = vector.extract_strided_slice %15 {offsets = [0, 1], sizes = [16, 1], strides = [1, 1]} : vector<16x3xf32> to vector<16x1xf32>
    %25 = vector.broadcast %24 : vector<16x1xf32> to vector<16x128xf32>
    %26 = arith.mulf %23, %25 : vector<16x128xf32>
    %27 = vector.extract_strided_slice %15 {offsets = [0, 2], sizes = [16, 1], strides = [1, 1]} : vector<16x3xf32> to vector<16x1xf32>
    %28 = vector.broadcast %27 : vector<16x1xf32> to vector<16x128xf32>
    %29 = arith.addf %26, %28 : vector<16x128xf32>
    %30 = tpu.concatenate %3, %5, %7 in 0 : vector<8x128xf32>, vector<8x128xf32>, vector<8x128xf32> -> vector<24x128xf32>
    %c0_18 = arith.constant 0 : index
    %c0_19 = arith.constant 0 : index
    %31 = vector.load %arg3[%c0_18, %c0_19] : memref<16x3xf32, #tpu.memory_space<vmem>>, vector<16x3xf32>
    %c0_20 = arith.constant 0 : index
    %c0_21 = arith.constant 0 : index
    %32 = vector.load %arg2[%c0_20, %c0_21] : memref<16x24xbf16, #tpu.memory_space<vmem>>, vector<16x24xbf16>
    %33 = arith.truncf %30 : vector<24x128xf32> to vector<24x128xbf16>
    %cst_22 = arith.constant dense<0.000000e+00> : vector<16x128xf32>
    %34 = tpu.matmul %32, %33, %cst_22 {dimension_numbers = #tpu.dot_dimension_numbers<[1], [0], [0], [1], [0, 0, 1, 1], [], []>} : vector<16x24xbf16>, vector<24x128xbf16>, vector<16x128xf32> -> vector<16x128xf32>
    %35 = vector.extract_strided_slice %31 {offsets = [0, 0], sizes = [16, 1], strides = [1, 1]} : vector<16x3xf32> to vector<16x1xf32>
    %36 = vector.broadcast %35 : vector<16x1xf32> to vector<16x128xf32>
    %37 = arith.addf %34, %36 : vector<16x128xf32>
    %cst_23 = arith.constant 0.000000e+00 : f32
    %38 = vector.broadcast %cst_23 : f32 to vector<16x128xf32>
    %39 = arith.maximumf %37, %38 : vector<16x128xf32>
    %40 = vector.extract_strided_slice %31 {offsets = [0, 1], sizes = [16, 1], strides = [1, 1]} : vector<16x3xf32> to vector<16x1xf32>
    %41 = vector.broadcast %40 : vector<16x1xf32> to vector<16x128xf32>
    %42 = arith.mulf %39, %41 : vector<16x128xf32>
    %43 = vector.extract_strided_slice %31 {offsets = [0, 2], sizes = [16, 1], strides = [1, 1]} : vector<16x3xf32> to vector<16x1xf32>
    %44 = vector.broadcast %43 : vector<16x1xf32> to vector<16x128xf32>
    %45 = arith.addf %42, %44 : vector<16x128xf32>
    %c1_i32_24 = arith.constant 1 : i32
    %46 = tpu.dynamic_rotate %45 by %c1_i32_24 dim 1 : vector<16x128xf32>, i32 -> vector<16x128xf32>
    %47 = tpu.iota {dimensions = array<i32: 1>} : vector<16x128xi32>
    %c0_i32_25 = arith.constant 0 : i32
    %48 = vector.broadcast %c0_i32_25 : i32 to vector<16x128xi32>
    %49 = arith.cmpi eq, %47, %48 : vector<16x128xi32>
    %cst_26 = arith.constant 0.000000e+00 : f32
    %50 = vector.broadcast %cst_26 : f32 to vector<16x128xf32>
    %51 = arith.select %49, %50, %46 : vector<16x128xi1>, vector<16x128xf32>
    %52 = tpu.concatenate %51, %29, %45 in 0 : vector<16x128xf32>, vector<16x128xf32>, vector<16x128xf32> -> vector<48x128xf32>
    %c0_27 = arith.constant 0 : index
    %c0_28 = arith.constant 0 : index
    %53 = vector.load %arg5[%c0_27, %c0_28] : memref<32x3xf32, #tpu.memory_space<vmem>>, vector<32x3xf32>
    %c0_29 = arith.constant 0 : index
    %c0_30 = arith.constant 0 : index
    %54 = vector.load %arg4[%c0_29, %c0_30] : memref<32x48xbf16, #tpu.memory_space<vmem>>, vector<32x48xbf16>
    %55 = arith.truncf %52 : vector<48x128xf32> to vector<48x128xbf16>
    %cst_31 = arith.constant dense<0.000000e+00> : vector<32x128xf32>
    %56 = tpu.matmul %54, %55, %cst_31 {dimension_numbers = #tpu.dot_dimension_numbers<[1], [0], [0], [1], [0, 0, 1, 1], [], []>} : vector<32x48xbf16>, vector<48x128xbf16>, vector<32x128xf32> -> vector<32x128xf32>
    %57 = vector.extract_strided_slice %53 {offsets = [0, 0], sizes = [32, 1], strides = [1, 1]} : vector<32x3xf32> to vector<32x1xf32>
    %58 = vector.broadcast %57 : vector<32x1xf32> to vector<32x128xf32>
    %59 = arith.addf %56, %58 : vector<32x128xf32>
    %cst_32 = arith.constant 0.000000e+00 : f32
    %60 = vector.broadcast %cst_32 : f32 to vector<32x128xf32>
    %61 = arith.maximumf %59, %60 : vector<32x128xf32>
    %62 = vector.extract_strided_slice %53 {offsets = [0, 1], sizes = [32, 1], strides = [1, 1]} : vector<32x3xf32> to vector<32x1xf32>
    %63 = vector.broadcast %62 : vector<32x1xf32> to vector<32x128xf32>
    %64 = arith.mulf %61, %63 : vector<32x128xf32>
    %65 = vector.extract_strided_slice %53 {offsets = [0, 2], sizes = [32, 1], strides = [1, 1]} : vector<32x3xf32> to vector<32x1xf32>
    %66 = vector.broadcast %65 : vector<32x1xf32> to vector<32x128xf32>
    %67 = arith.addf %64, %66 : vector<32x128xf32>
    %c0_33 = arith.constant 0 : index
    %c0_34 = arith.constant 0 : index
    %c0_35 = arith.constant 0 : index
    %68 = vector.load %arg12[%c0_33, %c0_34, %c0_35] : memref<2x32x6xf32, #tpu.memory_space<vmem>>, vector<1x32x6xf32>
    %69 = vector.shape_cast %68 : vector<1x32x6xf32> to vector<32x6xf32>
    %c0_36 = arith.constant 0 : index
    %c0_37 = arith.constant 0 : index
    %c0_38 = arith.constant 0 : index
    %70 = vector.load %arg6[%c0_36, %c0_37, %c0_38] : memref<2x96x32xbf16, #tpu.memory_space<vmem>>, vector<1x96x32xbf16>
    %71 = vector.shape_cast %70 : vector<1x96x32xbf16> to vector<96x32xbf16>
    %72 = arith.truncf %67 : vector<32x128xf32> to vector<32x128xbf16>
    %cst_39 = arith.constant dense<0.000000e+00> : vector<96x128xf32>
    %73 = tpu.matmul %71, %72, %cst_39 {dimension_numbers = #tpu.dot_dimension_numbers<[1], [0], [0], [1], [0, 0, 1, 1], [], []>} : vector<96x32xbf16>, vector<32x128xbf16>, vector<96x128xf32> -> vector<96x128xf32>
    %c0_40 = arith.constant 0 : index
    %c0_41 = arith.constant 0 : index
    %c0_42 = arith.constant 0 : index
    %74 = vector.load %arg7[%c0_40, %c0_41, %c0_42] : memref<2x96x1xf32, #tpu.memory_space<vmem>>, vector<1x96x1xf32>
    %75 = vector.shape_cast %74 : vector<1x96x1xf32> to vector<96x1xf32>
    %76 = vector.broadcast %75 : vector<96x1xf32> to vector<96x128xf32>
    %77 = arith.addf %73, %76 : vector<96x128xf32>
    %78 = vector.extract_strided_slice %77 {offsets = [0, 0], sizes = [32, 128], strides = [1, 1]} : vector<96x128xf32> to vector<32x128xf32>
    %79 = vector.extract_strided_slice %77 {offsets = [32, 0], sizes = [32, 128], strides = [1, 1]} : vector<96x128xf32> to vector<32x128xf32>
    %80 = vector.extract_strided_slice %77 {offsets = [64, 0], sizes = [32, 128], strides = [1, 1]} : vector<96x128xf32> to vector<32x128xf32>
    %81 = vector.extract_strided_slice %78 {offsets = [0, 0], sizes = [4, 128], strides = [1, 1]} : vector<32x128xf32> to vector<4x128xf32>
    %82 = tpu.transpose %81, [1, 0] : vector<4x128xf32> -> vector<128x4xf32>
    %83 = vector.extract_strided_slice %78 {offsets = [4, 0], sizes = [4, 128], strides = [1, 1]} : vector<32x128xf32> to vector<4x128xf32>
    %84 = tpu.transpose %83, [1, 0] : vector<4x128xf32> -> vector<128x4xf32>
    %85 = vector.extract_strided_slice %78 {offsets = [8, 0], sizes = [4, 128], strides = [1, 1]} : vector<32x128xf32> to vector<4x128xf32>
    %86 = tpu.transpose %85, [1, 0] : vector<4x128xf32> -> vector<128x4xf32>
    %87 = vector.extract_strided_slice %78 {offsets = [12, 0], sizes = [4, 128], strides = [1, 1]} : vector<32x128xf32> to vector<4x128xf32>
    %88 = tpu.transpose %87, [1, 0] : vector<4x128xf32> -> vector<128x4xf32>
    %89 = vector.extract_strided_slice %78 {offsets = [16, 0], sizes = [4, 128], strides = [1, 1]} : vector<32x128xf32> to vector<4x128xf32>
    %90 = tpu.transpose %89, [1, 0] : vector<4x128xf32> -> vector<128x4xf32>
    %91 = vector.extract_strided_slice %78 {offsets = [20, 0], sizes = [4, 128], strides = [1, 1]} : vector<32x128xf32> to vector<4x128xf32>
    %92 = tpu.transpose %91, [1, 0] : vector<4x128xf32> -> vector<128x4xf32>
    %93 = vector.extract_strided_slice %78 {offsets = [24, 0], sizes = [4, 128], strides = [1, 1]} : vector<32x128xf32> to vector<4x128xf32>
    %94 = tpu.transpose %93, [1, 0] : vector<4x128xf32> -> vector<128x4xf32>
    %95 = vector.extract_strided_slice %78 {offsets = [28, 0], sizes = [4, 128], strides = [1, 1]} : vector<32x128xf32> to vector<4x128xf32>
    %96 = tpu.transpose %95, [1, 0] : vector<4x128xf32> -> vector<128x4xf32>
    %97 = vector.shape_cast %82 : vector<128x4xf32> to vector<1x128x4xf32>
    %98 = vector.shape_cast %84 : vector<128x4xf32> to vector<1x128x4xf32>
    %99 = vector.shape_cast %86 : vector<128x4xf32> to vector<1x128x4xf32>
    %100 = vector.shape_cast %88 : vector<128x4xf32> to vector<1x128x4xf32>
    %101 = vector.shape_cast %90 : vector<128x4xf32> to vector<1x128x4xf32>
    %102 = vector.shape_cast %92 : vector<128x4xf32> to vector<1x128x4xf32>
    %103 = vector.shape_cast %94 : vector<128x4xf32> to vector<1x128x4xf32>
    %104 = vector.shape_cast %96 : vector<128x4xf32> to vector<1x128x4xf32>
    %105 = tpu.concatenate %97, %98, %99, %100, %101, %102, %103, %104 in 0 : vector<1x128x4xf32>, vector<1x128x4xf32>, vector<1x128x4xf32>, vector<1x128x4xf32>, vector<1x128x4xf32>, vector<1x128x4xf32>, vector<1x128x4xf32>, vector<1x128x4xf32> -> vector<8x128x4xf32>
    %106 = vector.extract_strided_slice %79 {offsets = [0, 0], sizes = [4, 128], strides = [1, 1]} : vector<32x128xf32> to vector<4x128xf32>
    %107 = vector.extract_strided_slice %79 {offsets = [4, 0], sizes = [4, 128], strides = [1, 1]} : vector<32x128xf32> to vector<4x128xf32>
    %108 = vector.extract_strided_slice %79 {offsets = [8, 0], sizes = [4, 128], strides = [1, 1]} : vector<32x128xf32> to vector<4x128xf32>
    %109 = vector.extract_strided_slice %79 {offsets = [12, 0], sizes = [4, 128], strides = [1, 1]} : vector<32x128xf32> to vector<4x128xf32>
    %110 = vector.extract_strided_slice %79 {offsets = [16, 0], sizes = [4, 128], strides = [1, 1]} : vector<32x128xf32> to vector<4x128xf32>
    %111 = vector.extract_strided_slice %79 {offsets = [20, 0], sizes = [4, 128], strides = [1, 1]} : vector<32x128xf32> to vector<4x128xf32>
    %112 = vector.extract_strided_slice %79 {offsets = [24, 0], sizes = [4, 128], strides = [1, 1]} : vector<32x128xf32> to vector<4x128xf32>
    %113 = vector.extract_strided_slice %79 {offsets = [28, 0], sizes = [4, 128], strides = [1, 1]} : vector<32x128xf32> to vector<4x128xf32>
    %114 = vector.shape_cast %106 : vector<4x128xf32> to vector<1x4x128xf32>
    %115 = vector.shape_cast %107 : vector<4x128xf32> to vector<1x4x128xf32>
    %116 = vector.shape_cast %108 : vector<4x128xf32> to vector<1x4x128xf32>
    %117 = vector.shape_cast %109 : vector<4x128xf32> to vector<1x4x128xf32>
    %118 = vector.shape_cast %110 : vector<4x128xf32> to vector<1x4x128xf32>
    %119 = vector.shape_cast %111 : vector<4x128xf32> to vector<1x4x128xf32>
    %120 = vector.shape_cast %112 : vector<4x128xf32> to vector<1x4x128xf32>
    %121 = vector.shape_cast %113 : vector<4x128xf32> to vector<1x4x128xf32>
    %122 = tpu.concatenate %114, %115, %116, %117, %118, %119, %120, %121 in 0 : vector<1x4x128xf32>, vector<1x4x128xf32>, vector<1x4x128xf32>, vector<1x4x128xf32>, vector<1x4x128xf32>, vector<1x4x128xf32>, vector<1x4x128xf32>, vector<1x4x128xf32> -> vector<8x4x128xf32>
    %123 = vector.extract_strided_slice %80 {offsets = [0, 0], sizes = [4, 128], strides = [1, 1]} : vector<32x128xf32> to vector<4x128xf32>
    %124 = vector.extract_strided_slice %80 {offsets = [4, 0], sizes = [4, 128], strides = [1, 1]} : vector<32x128xf32> to vector<4x128xf32>
    %125 = vector.extract_strided_slice %80 {offsets = [8, 0], sizes = [4, 128], strides = [1, 1]} : vector<32x128xf32> to vector<4x128xf32>
    %126 = vector.extract_strided_slice %80 {offsets = [12, 0], sizes = [4, 128], strides = [1, 1]} : vector<32x128xf32> to vector<4x128xf32>
    %127 = vector.extract_strided_slice %80 {offsets = [16, 0], sizes = [4, 128], strides = [1, 1]} : vector<32x128xf32> to vector<4x128xf32>
    %128 = vector.extract_strided_slice %80 {offsets = [20, 0], sizes = [4, 128], strides = [1, 1]} : vector<32x128xf32> to vector<4x128xf32>
    %129 = vector.extract_strided_slice %80 {offsets = [24, 0], sizes = [4, 128], strides = [1, 1]} : vector<32x128xf32> to vector<4x128xf32>
    %130 = vector.extract_strided_slice %80 {offsets = [28, 0], sizes = [4, 128], strides = [1, 1]} : vector<32x128xf32> to vector<4x128xf32>
    %131 = vector.shape_cast %123 : vector<4x128xf32> to vector<1x4x128xf32>
    %132 = vector.shape_cast %124 : vector<4x128xf32> to vector<1x4x128xf32>
    %133 = vector.shape_cast %125 : vector<4x128xf32> to vector<1x4x128xf32>
    %134 = vector.shape_cast %126 : vector<4x128xf32> to vector<1x4x128xf32>
    %135 = vector.shape_cast %127 : vector<4x128xf32> to vector<1x4x128xf32>
    %136 = vector.shape_cast %128 : vector<4x128xf32> to vector<1x4x128xf32>
    %137 = vector.shape_cast %129 : vector<4x128xf32> to vector<1x4x128xf32>
    %138 = vector.shape_cast %130 : vector<4x128xf32> to vector<1x4x128xf32>
    %139 = tpu.concatenate %131, %132, %133, %134, %135, %136, %137, %138 in 0 : vector<1x4x128xf32>, vector<1x4x128xf32>, vector<1x4x128xf32>, vector<1x4x128xf32>, vector<1x4x128xf32>, vector<1x4x128xf32>, vector<1x4x128xf32>, vector<1x4x128xf32> -> vector<8x4x128xf32>
    %140 = arith.truncf %105 : vector<8x128x4xf32> to vector<8x128x4xbf16>
    %141 = arith.truncf %122 : vector<8x4x128xf32> to vector<8x4x128xbf16>
    %cst_43 = arith.constant dense<0.000000e+00> : vector<8x128x128xf32>
    %142 = tpu.matmul %140, %141, %cst_43 {dimension_numbers = #tpu.dot_dimension_numbers<[2], [1], [1], [2], [0, 0, 0, 1, 1, 2], [0], [0]>} : vector<8x128x4xbf16>, vector<8x4x128xbf16>, vector<8x128x128xf32> -> vector<8x128x128xf32>
    %cst_44 = arith.constant dense<0xFF800000> : vector<8x128xf32>
    %143 = vector.multi_reduction <maximumf>, %142, %cst_44 [2] : vector<8x128x128xf32> to vector<8x128xf32>
    %144 = vector.shape_cast %143 : vector<8x128xf32> to vector<8x128x1xf32>
    %145 = vector.broadcast %144 : vector<8x128x1xf32> to vector<8x128x128xf32>
    %146 = arith.subf %142, %145 : vector<8x128x128xf32>
    %147 = math.exp %146 : vector<8x128x128xf32>
    %cst_45 = arith.constant dense<0.000000e+00> : vector<8x128xf32>
    %148 = vector.multi_reduction <add>, %147, %cst_45 [2] : vector<8x128x128xf32> to vector<8x128xf32>
    %149 = vector.shape_cast %148 : vector<8x128xf32> to vector<8x128x1xf32>
    %150 = tpu.reciprocal %149 {approx = true} : vector<8x128x1xf32> -> vector<8x128x1xf32>
    %151 = vector.broadcast %150 : vector<8x128x1xf32> to vector<8x128x128xf32>
    %152 = arith.mulf %147, %151 : vector<8x128x128xf32>
    %153 = arith.truncf %139 : vector<8x4x128xf32> to vector<8x4x128xbf16>
    %154 = arith.truncf %152 : vector<8x128x128xf32> to vector<8x128x128xbf16>
    %cst_46 = arith.constant dense<0.000000e+00> : vector<8x4x128xf32>
    %155 = tpu.matmul %153, %154, %cst_46 {dimension_numbers = #tpu.dot_dimension_numbers<[2], [2], [1], [1], [0, 0, 0, 1, 1, 1], [0], [0]>} : vector<8x4x128xbf16>, vector<8x128x128xbf16>, vector<8x4x128xf32> -> vector<8x4x128xf32>
    %156 = vector.extract_strided_slice %155 {offsets = [0, 0, 0], sizes = [1, 4, 128], strides = [1, 1, 1]} : vector<8x4x128xf32> to vector<1x4x128xf32>
    %157 = vector.shape_cast %156 : vector<1x4x128xf32> to vector<4x128xf32>
    %158 = vector.extract_strided_slice %155 {offsets = [1, 0, 0], sizes = [1, 4, 128], strides = [1, 1, 1]} : vector<8x4x128xf32> to vector<1x4x128xf32>
    %159 = vector.shape_cast %158 : vector<1x4x128xf32> to vector<4x128xf32>
    %160 = vector.extract_strided_slice %155 {offsets = [2, 0, 0], sizes = [1, 4, 128], strides = [1, 1, 1]} : vector<8x4x128xf32> to vector<1x4x128xf32>
    %161 = vector.shape_cast %160 : vector<1x4x128xf32> to vector<4x128xf32>
    %162 = vector.extract_strided_slice %155 {offsets = [3, 0, 0], sizes = [1, 4, 128], strides = [1, 1, 1]} : vector<8x4x128xf32> to vector<1x4x128xf32>
    %163 = vector.shape_cast %162 : vector<1x4x128xf32> to vector<4x128xf32>
    %164 = vector.extract_strided_slice %155 {offsets = [4, 0, 0], sizes = [1, 4, 128], strides = [1, 1, 1]} : vector<8x4x128xf32> to vector<1x4x128xf32>
    %165 = vector.shape_cast %164 : vector<1x4x128xf32> to vector<4x128xf32>
    %166 = vector.extract_strided_slice %155 {offsets = [5, 0, 0], sizes = [1, 4, 128], strides = [1, 1, 1]} : vector<8x4x128xf32> to vector<1x4x128xf32>
    %167 = vector.shape_cast %166 : vector<1x4x128xf32> to vector<4x128xf32>
    %168 = vector.extract_strided_slice %155 {offsets = [6, 0, 0], sizes = [1, 4, 128], strides = [1, 1, 1]} : vector<8x4x128xf32> to vector<1x4x128xf32>
    %169 = vector.shape_cast %168 : vector<1x4x128xf32> to vector<4x128xf32>
    %170 = vector.extract_strided_slice %155 {offsets = [7, 0, 0], sizes = [1, 4, 128], strides = [1, 1, 1]} : vector<8x4x128xf32> to vector<1x4x128xf32>
    %171 = vector.shape_cast %170 : vector<1x4x128xf32> to vector<4x128xf32>
    %172 = tpu.concatenate %157, %159, %161, %163, %165, %167, %169, %171 in 0 : vector<4x128xf32>, vector<4x128xf32>, vector<4x128xf32>, vector<4x128xf32>, vector<4x128xf32>, vector<4x128xf32>, vector<4x128xf32>, vector<4x128xf32> -> vector<32x128xf32>
    %c0_47 = arith.constant 0 : index
    %c0_48 = arith.constant 0 : index
    %c0_49 = arith.constant 0 : index
    %173 = vector.load %arg8[%c0_47, %c0_48, %c0_49] : memref<2x32x32xbf16, #tpu.memory_space<vmem>>, vector<1x32x32xbf16>
    %174 = vector.shape_cast %173 : vector<1x32x32xbf16> to vector<32x32xbf16>
    %175 = arith.truncf %172 : vector<32x128xf32> to vector<32x128xbf16>
    %cst_50 = arith.constant dense<0.000000e+00> : vector<32x128xf32>
    %176 = tpu.matmul %174, %175, %cst_50 {dimension_numbers = #tpu.dot_dimension_numbers<[1], [0], [0], [1], [0, 0, 1, 1], [], []>} : vector<32x32xbf16>, vector<32x128xbf16>, vector<32x128xf32> -> vector<32x128xf32>
    %177 = vector.extract_strided_slice %69 {offsets = [0, 0], sizes = [32, 1], strides = [1, 1]} : vector<32x6xf32> to vector<32x1xf32>
    %178 = vector.broadcast %177 : vector<32x1xf32> to vector<32x128xf32>
    %179 = arith.addf %176, %178 : vector<32x128xf32>
    %180 = arith.addf %67, %179 : vector<32x128xf32>
    %181 = vector.extract_strided_slice %69 {offsets = [0, 1], sizes = [32, 1], strides = [1, 1]} : vector<32x6xf32> to vector<32x1xf32>
    %182 = vector.extract_strided_slice %69 {offsets = [0, 2], sizes = [32, 1], strides = [1, 1]} : vector<32x6xf32> to vector<32x1xf32>
    %cst_51 = arith.constant dense<0.000000e+00> : vector<128xf32>
    %183 = vector.multi_reduction <add>, %180, %cst_51 [0] : vector<32x128xf32> to vector<128xf32>
    %184 = vector.shape_cast %183 : vector<128xf32> to vector<1x128xf32>
    %cst_52 = arith.constant 3.200000e+01 : f32
    %185 = vector.broadcast %cst_52 : f32 to vector<1x128xf32>
    %186 = arith.divf %184, %185 : vector<1x128xf32>
    %187 = vector.broadcast %186 : vector<1x128xf32> to vector<32x128xf32>
    %188 = arith.subf %180, %187 : vector<32x128xf32>
    %189 = arith.mulf %188, %188 : vector<32x128xf32>
    %cst_53 = arith.constant dense<0.000000e+00> : vector<128xf32>
    %190 = vector.multi_reduction <add>, %189, %cst_53 [0] : vector<32x128xf32> to vector<128xf32>
    %191 = vector.shape_cast %190 : vector<128xf32> to vector<1x128xf32>
    %cst_54 = arith.constant 3.200000e+01 : f32
    %192 = vector.broadcast %cst_54 : f32 to vector<1x128xf32>
    %193 = arith.divf %191, %192 : vector<1x128xf32>
    %cst_55 = arith.constant 9.99999974E-6 : f32
    %194 = vector.broadcast %cst_55 : f32 to vector<1x128xf32>
    %195 = arith.addf %193, %194 : vector<1x128xf32>
    %196 = math.rsqrt %195 : vector<1x128xf32>
    %197 = vector.broadcast %196 : vector<1x128xf32> to vector<32x128xf32>
    %198 = arith.mulf %188, %197 : vector<32x128xf32>
    %199 = vector.broadcast %181 : vector<32x1xf32> to vector<32x128xf32>
    %200 = arith.mulf %198, %199 : vector<32x128xf32>
    %201 = vector.broadcast %182 : vector<32x1xf32> to vector<32x128xf32>
    %202 = arith.addf %200, %201 : vector<32x128xf32>
    %c0_56 = arith.constant 0 : index
    %c0_57 = arith.constant 0 : index
    %c0_58 = arith.constant 0 : index
    %203 = vector.load %arg9[%c0_56, %c0_57, %c0_58] : memref<2x128x32xbf16, #tpu.memory_space<vmem>>, vector<1x128x32xbf16>
    %204 = vector.shape_cast %203 : vector<1x128x32xbf16> to vector<128x32xbf16>
    %205 = arith.truncf %202 : vector<32x128xf32> to vector<32x128xbf16>
    %cst_59 = arith.constant dense<0.000000e+00> : vector<128x128xf32>
    %206 = tpu.matmul %204, %205, %cst_59 {dimension_numbers = #tpu.dot_dimension_numbers<[1], [0], [0], [1], [0, 0, 1, 1], [], []>} : vector<128x32xbf16>, vector<32x128xbf16>, vector<128x128xf32> -> vector<128x128xf32>
    %c0_60 = arith.constant 0 : index
    %c0_61 = arith.constant 0 : index
    %c0_62 = arith.constant 0 : index
    %207 = vector.load %arg10[%c0_60, %c0_61, %c0_62] : memref<2x128x1xf32, #tpu.memory_space<vmem>>, vector<1x128x1xf32>
    %208 = vector.shape_cast %207 : vector<1x128x1xf32> to vector<128x1xf32>
    %209 = vector.broadcast %208 : vector<128x1xf32> to vector<128x128xf32>
    %210 = arith.addf %206, %209 : vector<128x128xf32>
    %cst_63 = arith.constant 0.000000e+00 : f32
    %211 = vector.broadcast %cst_63 : f32 to vector<128x128xf32>
    %212 = arith.maximumf %210, %211 : vector<128x128xf32>
    %c0_64 = arith.constant 0 : index
    %c0_65 = arith.constant 0 : index
    %c0_66 = arith.constant 0 : index
    %213 = vector.load %arg11[%c0_64, %c0_65, %c0_66] : memref<2x32x128xbf16, #tpu.memory_space<vmem>>, vector<1x32x128xbf16>
    %214 = vector.shape_cast %213 : vector<1x32x128xbf16> to vector<32x128xbf16>
    %215 = arith.truncf %212 : vector<128x128xf32> to vector<128x128xbf16>
    %cst_67 = arith.constant dense<0.000000e+00> : vector<32x128xf32>
    %216 = tpu.matmul %214, %215, %cst_67 {dimension_numbers = #tpu.dot_dimension_numbers<[1], [0], [0], [1], [0, 0, 1, 1], [], []>} : vector<32x128xbf16>, vector<128x128xbf16>, vector<32x128xf32> -> vector<32x128xf32>
    %217 = vector.extract_strided_slice %69 {offsets = [0, 3], sizes = [32, 1], strides = [1, 1]} : vector<32x6xf32> to vector<32x1xf32>
    %218 = vector.broadcast %217 : vector<32x1xf32> to vector<32x128xf32>
    %219 = arith.addf %216, %218 : vector<32x128xf32>
    %220 = arith.addf %202, %219 : vector<32x128xf32>
    %221 = vector.extract_strided_slice %69 {offsets = [0, 4], sizes = [32, 1], strides = [1, 1]} : vector<32x6xf32> to vector<32x1xf32>
    %222 = vector.extract_strided_slice %69 {offsets = [0, 5], sizes = [32, 1], strides = [1, 1]} : vector<32x6xf32> to vector<32x1xf32>
    %cst_68 = arith.constant dense<0.000000e+00> : vector<128xf32>
    %223 = vector.multi_reduction <add>, %220, %cst_68 [0] : vector<32x128xf32> to vector<128xf32>
    %224 = vector.shape_cast %223 : vector<128xf32> to vector<1x128xf32>
    %cst_69 = arith.constant 3.200000e+01 : f32
    %225 = vector.broadcast %cst_69 : f32 to vector<1x128xf32>
    %226 = arith.divf %224, %225 : vector<1x128xf32>
    %227 = vector.broadcast %226 : vector<1x128xf32> to vector<32x128xf32>
    %228 = arith.subf %220, %227 : vector<32x128xf32>
    %229 = arith.mulf %228, %228 : vector<32x128xf32>
    %cst_70 = arith.constant dense<0.000000e+00> : vector<128xf32>
    %230 = vector.multi_reduction <add>, %229, %cst_70 [0] : vector<32x128xf32> to vector<128xf32>
    %231 = vector.shape_cast %230 : vector<128xf32> to vector<1x128xf32>
    %cst_71 = arith.constant 3.200000e+01 : f32
    %232 = vector.broadcast %cst_71 : f32 to vector<1x128xf32>
    %233 = arith.divf %231, %232 : vector<1x128xf32>
    %cst_72 = arith.constant 9.99999974E-6 : f32
    %234 = vector.broadcast %cst_72 : f32 to vector<1x128xf32>
    %235 = arith.addf %233, %234 : vector<1x128xf32>
    %236 = math.rsqrt %235 : vector<1x128xf32>
    %237 = vector.broadcast %236 : vector<1x128xf32> to vector<32x128xf32>
    %238 = arith.mulf %228, %237 : vector<32x128xf32>
    %239 = vector.broadcast %221 : vector<32x1xf32> to vector<32x128xf32>
    %240 = arith.mulf %238, %239 : vector<32x128xf32>
    %241 = vector.broadcast %222 : vector<32x1xf32> to vector<32x128xf32>
    %242 = arith.addf %240, %241 : vector<32x128xf32>
    %c1_73 = arith.constant 1 : index
    %c0_74 = arith.constant 0 : index
    %c0_75 = arith.constant 0 : index
    %243 = vector.load %arg12[%c1_73, %c0_74, %c0_75] : memref<2x32x6xf32, #tpu.memory_space<vmem>>, vector<1x32x6xf32>
    %244 = vector.shape_cast %243 : vector<1x32x6xf32> to vector<32x6xf32>
    %c1_76 = arith.constant 1 : index
    %c0_77 = arith.constant 0 : index
    %c0_78 = arith.constant 0 : index
    %245 = vector.load %arg6[%c1_76, %c0_77, %c0_78] : memref<2x96x32xbf16, #tpu.memory_space<vmem>>, vector<1x96x32xbf16>
    %246 = vector.shape_cast %245 : vector<1x96x32xbf16> to vector<96x32xbf16>
    %247 = arith.truncf %242 : vector<32x128xf32> to vector<32x128xbf16>
    %cst_79 = arith.constant dense<0.000000e+00> : vector<96x128xf32>
    %248 = tpu.matmul %246, %247, %cst_79 {dimension_numbers = #tpu.dot_dimension_numbers<[1], [0], [0], [1], [0, 0, 1, 1], [], []>} : vector<96x32xbf16>, vector<32x128xbf16>, vector<96x128xf32> -> vector<96x128xf32>
    %c1_80 = arith.constant 1 : index
    %c0_81 = arith.constant 0 : index
    %c0_82 = arith.constant 0 : index
    %249 = vector.load %arg7[%c1_80, %c0_81, %c0_82] : memref<2x96x1xf32, #tpu.memory_space<vmem>>, vector<1x96x1xf32>
    %250 = vector.shape_cast %249 : vector<1x96x1xf32> to vector<96x1xf32>
    %251 = vector.broadcast %250 : vector<96x1xf32> to vector<96x128xf32>
    %252 = arith.addf %248, %251 : vector<96x128xf32>
    %253 = vector.extract_strided_slice %252 {offsets = [0, 0], sizes = [32, 128], strides = [1, 1]} : vector<96x128xf32> to vector<32x128xf32>
    %254 = vector.extract_strided_slice %252 {offsets = [32, 0], sizes = [32, 128], strides = [1, 1]} : vector<96x128xf32> to vector<32x128xf32>
    %255 = vector.extract_strided_slice %252 {offsets = [64, 0], sizes = [32, 128], strides = [1, 1]} : vector<96x128xf32> to vector<32x128xf32>
    %256 = vector.extract_strided_slice %253 {offsets = [0, 0], sizes = [4, 128], strides = [1, 1]} : vector<32x128xf32> to vector<4x128xf32>
    %257 = tpu.transpose %256, [1, 0] : vector<4x128xf32> -> vector<128x4xf32>
    %258 = vector.extract_strided_slice %253 {offsets = [4, 0], sizes = [4, 128], strides = [1, 1]} : vector<32x128xf32> to vector<4x128xf32>
    %259 = tpu.transpose %258, [1, 0] : vector<4x128xf32> -> vector<128x4xf32>
    %260 = vector.extract_strided_slice %253 {offsets = [8, 0], sizes = [4, 128], strides = [1, 1]} : vector<32x128xf32> to vector<4x128xf32>
    %261 = tpu.transpose %260, [1, 0] : vector<4x128xf32> -> vector<128x4xf32>
    %262 = vector.extract_strided_slice %253 {offsets = [12, 0], sizes = [4, 128], strides = [1, 1]} : vector<32x128xf32> to vector<4x128xf32>
    %263 = tpu.transpose %262, [1, 0] : vector<4x128xf32> -> vector<128x4xf32>
    %264 = vector.extract_strided_slice %253 {offsets = [16, 0], sizes = [4, 128], strides = [1, 1]} : vector<32x128xf32> to vector<4x128xf32>
    %265 = tpu.transpose %264, [1, 0] : vector<4x128xf32> -> vector<128x4xf32>
    %266 = vector.extract_strided_slice %253 {offsets = [20, 0], sizes = [4, 128], strides = [1, 1]} : vector<32x128xf32> to vector<4x128xf32>
    %267 = tpu.transpose %266, [1, 0] : vector<4x128xf32> -> vector<128x4xf32>
    %268 = vector.extract_strided_slice %253 {offsets = [24, 0], sizes = [4, 128], strides = [1, 1]} : vector<32x128xf32> to vector<4x128xf32>
    %269 = tpu.transpose %268, [1, 0] : vector<4x128xf32> -> vector<128x4xf32>
    %270 = vector.extract_strided_slice %253 {offsets = [28, 0], sizes = [4, 128], strides = [1, 1]} : vector<32x128xf32> to vector<4x128xf32>
    %271 = tpu.transpose %270, [1, 0] : vector<4x128xf32> -> vector<128x4xf32>
    %272 = vector.shape_cast %257 : vector<128x4xf32> to vector<1x128x4xf32>
    %273 = vector.shape_cast %259 : vector<128x4xf32> to vector<1x128x4xf32>
    %274 = vector.shape_cast %261 : vector<128x4xf32> to vector<1x128x4xf32>
    %275 = vector.shape_cast %263 : vector<128x4xf32> to vector<1x128x4xf32>
    %276 = vector.shape_cast %265 : vector<128x4xf32> to vector<1x128x4xf32>
    %277 = vector.shape_cast %267 : vector<128x4xf32> to vector<1x128x4xf32>
    %278 = vector.shape_cast %269 : vector<128x4xf32> to vector<1x128x4xf32>
    %279 = vector.shape_cast %271 : vector<128x4xf32> to vector<1x128x4xf32>
    %280 = tpu.concatenate %272, %273, %274, %275, %276, %277, %278, %279 in 0 : vector<1x128x4xf32>, vector<1x128x4xf32>, vector<1x128x4xf32>, vector<1x128x4xf32>, vector<1x128x4xf32>, vector<1x128x4xf32>, vector<1x128x4xf32>, vector<1x128x4xf32> -> vector<8x128x4xf32>
    %281 = vector.extract_strided_slice %254 {offsets = [0, 0], sizes = [4, 128], strides = [1, 1]} : vector<32x128xf32> to vector<4x128xf32>
    %282 = vector.extract_strided_slice %254 {offsets = [4, 0], sizes = [4, 128], strides = [1, 1]} : vector<32x128xf32> to vector<4x128xf32>
    %283 = vector.extract_strided_slice %254 {offsets = [8, 0], sizes = [4, 128], strides = [1, 1]} : vector<32x128xf32> to vector<4x128xf32>
    %284 = vector.extract_strided_slice %254 {offsets = [12, 0], sizes = [4, 128], strides = [1, 1]} : vector<32x128xf32> to vector<4x128xf32>
    %285 = vector.extract_strided_slice %254 {offsets = [16, 0], sizes = [4, 128], strides = [1, 1]} : vector<32x128xf32> to vector<4x128xf32>
    %286 = vector.extract_strided_slice %254 {offsets = [20, 0], sizes = [4, 128], strides = [1, 1]} : vector<32x128xf32> to vector<4x128xf32>
    %287 = vector.extract_strided_slice %254 {offsets = [24, 0], sizes = [4, 128], strides = [1, 1]} : vector<32x128xf32> to vector<4x128xf32>
    %288 = vector.extract_strided_slice %254 {offsets = [28, 0], sizes = [4, 128], strides = [1, 1]} : vector<32x128xf32> to vector<4x128xf32>
    %289 = vector.shape_cast %281 : vector<4x128xf32> to vector<1x4x128xf32>
    %290 = vector.shape_cast %282 : vector<4x128xf32> to vector<1x4x128xf32>
    %291 = vector.shape_cast %283 : vector<4x128xf32> to vector<1x4x128xf32>
    %292 = vector.shape_cast %284 : vector<4x128xf32> to vector<1x4x128xf32>
    %293 = vector.shape_cast %285 : vector<4x128xf32> to vector<1x4x128xf32>
    %294 = vector.shape_cast %286 : vector<4x128xf32> to vector<1x4x128xf32>
    %295 = vector.shape_cast %287 : vector<4x128xf32> to vector<1x4x128xf32>
    %296 = vector.shape_cast %288 : vector<4x128xf32> to vector<1x4x128xf32>
    %297 = tpu.concatenate %289, %290, %291, %292, %293, %294, %295, %296 in 0 : vector<1x4x128xf32>, vector<1x4x128xf32>, vector<1x4x128xf32>, vector<1x4x128xf32>, vector<1x4x128xf32>, vector<1x4x128xf32>, vector<1x4x128xf32>, vector<1x4x128xf32> -> vector<8x4x128xf32>
    %298 = vector.extract_strided_slice %255 {offsets = [0, 0], sizes = [4, 128], strides = [1, 1]} : vector<32x128xf32> to vector<4x128xf32>
    %299 = vector.extract_strided_slice %255 {offsets = [4, 0], sizes = [4, 128], strides = [1, 1]} : vector<32x128xf32> to vector<4x128xf32>
    %300 = vector.extract_strided_slice %255 {offsets = [8, 0], sizes = [4, 128], strides = [1, 1]} : vector<32x128xf32> to vector<4x128xf32>
    %301 = vector.extract_strided_slice %255 {offsets = [12, 0], sizes = [4, 128], strides = [1, 1]} : vector<32x128xf32> to vector<4x128xf32>
    %302 = vector.extract_strided_slice %255 {offsets = [16, 0], sizes = [4, 128], strides = [1, 1]} : vector<32x128xf32> to vector<4x128xf32>
    %303 = vector.extract_strided_slice %255 {offsets = [20, 0], sizes = [4, 128], strides = [1, 1]} : vector<32x128xf32> to vector<4x128xf32>
    %304 = vector.extract_strided_slice %255 {offsets = [24, 0], sizes = [4, 128], strides = [1, 1]} : vector<32x128xf32> to vector<4x128xf32>
    %305 = vector.extract_strided_slice %255 {offsets = [28, 0], sizes = [4, 128], strides = [1, 1]} : vector<32x128xf32> to vector<4x128xf32>
    %306 = vector.shape_cast %298 : vector<4x128xf32> to vector<1x4x128xf32>
    %307 = vector.shape_cast %299 : vector<4x128xf32> to vector<1x4x128xf32>
    %308 = vector.shape_cast %300 : vector<4x128xf32> to vector<1x4x128xf32>
    %309 = vector.shape_cast %301 : vector<4x128xf32> to vector<1x4x128xf32>
    %310 = vector.shape_cast %302 : vector<4x128xf32> to vector<1x4x128xf32>
    %311 = vector.shape_cast %303 : vector<4x128xf32> to vector<1x4x128xf32>
    %312 = vector.shape_cast %304 : vector<4x128xf32> to vector<1x4x128xf32>
    %313 = vector.shape_cast %305 : vector<4x128xf32> to vector<1x4x128xf32>
    %314 = tpu.concatenate %306, %307, %308, %309, %310, %311, %312, %313 in 0 : vector<1x4x128xf32>, vector<1x4x128xf32>, vector<1x4x128xf32>, vector<1x4x128xf32>, vector<1x4x128xf32>, vector<1x4x128xf32>, vector<1x4x128xf32>, vector<1x4x128xf32> -> vector<8x4x128xf32>
    %315 = arith.truncf %280 : vector<8x128x4xf32> to vector<8x128x4xbf16>
    %316 = arith.truncf %297 : vector<8x4x128xf32> to vector<8x4x128xbf16>
    %cst_83 = arith.constant dense<0.000000e+00> : vector<8x128x128xf32>
    %317 = tpu.matmul %315, %316, %cst_83 {dimension_numbers = #tpu.dot_dimension_numbers<[2], [1], [1], [2], [0, 0, 0, 1, 1, 2], [0], [0]>} : vector<8x128x4xbf16>, vector<8x4x128xbf16>, vector<8x128x128xf32> -> vector<8x128x128xf32>
    %cst_84 = arith.constant dense<0xFF800000> : vector<8x128xf32>
    %318 = vector.multi_reduction <maximumf>, %317, %cst_84 [2] : vector<8x128x128xf32> to vector<8x128xf32>
    %319 = vector.shape_cast %318 : vector<8x128xf32> to vector<8x128x1xf32>
    %320 = vector.broadcast %319 : vector<8x128x1xf32> to vector<8x128x128xf32>
    %321 = arith.subf %317, %320 : vector<8x128x128xf32>
    %322 = math.exp %321 : vector<8x128x128xf32>
    %cst_85 = arith.constant dense<0.000000e+00> : vector<8x128xf32>
    %323 = vector.multi_reduction <add>, %322, %cst_85 [2] : vector<8x128x128xf32> to vector<8x128xf32>
    %324 = vector.shape_cast %323 : vector<8x128xf32> to vector<8x128x1xf32>
    %325 = tpu.reciprocal %324 {approx = true} : vector<8x128x1xf32> -> vector<8x128x1xf32>
    %326 = vector.broadcast %325 : vector<8x128x1xf32> to vector<8x128x128xf32>
    %327 = arith.mulf %322, %326 : vector<8x128x128xf32>
    %328 = arith.truncf %314 : vector<8x4x128xf32> to vector<8x4x128xbf16>
    %329 = arith.truncf %327 : vector<8x128x128xf32> to vector<8x128x128xbf16>
    %cst_86 = arith.constant dense<0.000000e+00> : vector<8x4x128xf32>
    %330 = tpu.matmul %328, %329, %cst_86 {dimension_numbers = #tpu.dot_dimension_numbers<[2], [2], [1], [1], [0, 0, 0, 1, 1, 1], [0], [0]>} : vector<8x4x128xbf16>, vector<8x128x128xbf16>, vector<8x4x128xf32> -> vector<8x4x128xf32>
    %331 = vector.extract_strided_slice %330 {offsets = [0, 0, 0], sizes = [1, 4, 128], strides = [1, 1, 1]} : vector<8x4x128xf32> to vector<1x4x128xf32>
    %332 = vector.shape_cast %331 : vector<1x4x128xf32> to vector<4x128xf32>
    %333 = vector.extract_strided_slice %330 {offsets = [1, 0, 0], sizes = [1, 4, 128], strides = [1, 1, 1]} : vector<8x4x128xf32> to vector<1x4x128xf32>
    %334 = vector.shape_cast %333 : vector<1x4x128xf32> to vector<4x128xf32>
    %335 = vector.extract_strided_slice %330 {offsets = [2, 0, 0], sizes = [1, 4, 128], strides = [1, 1, 1]} : vector<8x4x128xf32> to vector<1x4x128xf32>
    %336 = vector.shape_cast %335 : vector<1x4x128xf32> to vector<4x128xf32>
    %337 = vector.extract_strided_slice %330 {offsets = [3, 0, 0], sizes = [1, 4, 128], strides = [1, 1, 1]} : vector<8x4x128xf32> to vector<1x4x128xf32>
    %338 = vector.shape_cast %337 : vector<1x4x128xf32> to vector<4x128xf32>
    %339 = vector.extract_strided_slice %330 {offsets = [4, 0, 0], sizes = [1, 4, 128], strides = [1, 1, 1]} : vector<8x4x128xf32> to vector<1x4x128xf32>
    %340 = vector.shape_cast %339 : vector<1x4x128xf32> to vector<4x128xf32>
    %341 = vector.extract_strided_slice %330 {offsets = [5, 0, 0], sizes = [1, 4, 128], strides = [1, 1, 1]} : vector<8x4x128xf32> to vector<1x4x128xf32>
    %342 = vector.shape_cast %341 : vector<1x4x128xf32> to vector<4x128xf32>
    %343 = vector.extract_strided_slice %330 {offsets = [6, 0, 0], sizes = [1, 4, 128], strides = [1, 1, 1]} : vector<8x4x128xf32> to vector<1x4x128xf32>
    %344 = vector.shape_cast %343 : vector<1x4x128xf32> to vector<4x128xf32>
    %345 = vector.extract_strided_slice %330 {offsets = [7, 0, 0], sizes = [1, 4, 128], strides = [1, 1, 1]} : vector<8x4x128xf32> to vector<1x4x128xf32>
    %346 = vector.shape_cast %345 : vector<1x4x128xf32> to vector<4x128xf32>
    %347 = tpu.concatenate %332, %334, %336, %338, %340, %342, %344, %346 in 0 : vector<4x128xf32>, vector<4x128xf32>, vector<4x128xf32>, vector<4x128xf32>, vector<4x128xf32>, vector<4x128xf32>, vector<4x128xf32>, vector<4x128xf32> -> vector<32x128xf32>
    %c1_87 = arith.constant 1 : index
    %c0_88 = arith.constant 0 : index
    %c0_89 = arith.constant 0 : index
    %348 = vector.load %arg8[%c1_87, %c0_88, %c0_89] : memref<2x32x32xbf16, #tpu.memory_space<vmem>>, vector<1x32x32xbf16>
    %349 = vector.shape_cast %348 : vector<1x32x32xbf16> to vector<32x32xbf16>
    %350 = arith.truncf %347 : vector<32x128xf32> to vector<32x128xbf16>
    %cst_90 = arith.constant dense<0.000000e+00> : vector<32x128xf32>
    %351 = tpu.matmul %349, %350, %cst_90 {dimension_numbers = #tpu.dot_dimension_numbers<[1], [0], [0], [1], [0, 0, 1, 1], [], []>} : vector<32x32xbf16>, vector<32x128xbf16>, vector<32x128xf32> -> vector<32x128xf32>
    %352 = vector.extract_strided_slice %244 {offsets = [0, 0], sizes = [32, 1], strides = [1, 1]} : vector<32x6xf32> to vector<32x1xf32>
    %353 = vector.broadcast %352 : vector<32x1xf32> to vector<32x128xf32>
    %354 = arith.addf %351, %353 : vector<32x128xf32>
    %355 = arith.addf %242, %354 : vector<32x128xf32>
    %356 = vector.extract_strided_slice %244 {offsets = [0, 1], sizes = [32, 1], strides = [1, 1]} : vector<32x6xf32> to vector<32x1xf32>
    %357 = vector.extract_strided_slice %244 {offsets = [0, 2], sizes = [32, 1], strides = [1, 1]} : vector<32x6xf32> to vector<32x1xf32>
    %cst_91 = arith.constant dense<0.000000e+00> : vector<128xf32>
    %358 = vector.multi_reduction <add>, %355, %cst_91 [0] : vector<32x128xf32> to vector<128xf32>
    %359 = vector.shape_cast %358 : vector<128xf32> to vector<1x128xf32>
    %cst_92 = arith.constant 3.200000e+01 : f32
    %360 = vector.broadcast %cst_92 : f32 to vector<1x128xf32>
    %361 = arith.divf %359, %360 : vector<1x128xf32>
    %362 = vector.broadcast %361 : vector<1x128xf32> to vector<32x128xf32>
    %363 = arith.subf %355, %362 : vector<32x128xf32>
    %364 = arith.mulf %363, %363 : vector<32x128xf32>
    %cst_93 = arith.constant dense<0.000000e+00> : vector<128xf32>
    %365 = vector.multi_reduction <add>, %364, %cst_93 [0] : vector<32x128xf32> to vector<128xf32>
    %366 = vector.shape_cast %365 : vector<128xf32> to vector<1x128xf32>
    %cst_94 = arith.constant 3.200000e+01 : f32
    %367 = vector.broadcast %cst_94 : f32 to vector<1x128xf32>
    %368 = arith.divf %366, %367 : vector<1x128xf32>
    %cst_95 = arith.constant 9.99999974E-6 : f32
    %369 = vector.broadcast %cst_95 : f32 to vector<1x128xf32>
    %370 = arith.addf %368, %369 : vector<1x128xf32>
    %371 = math.rsqrt %370 : vector<1x128xf32>
    %372 = vector.broadcast %371 : vector<1x128xf32> to vector<32x128xf32>
    %373 = arith.mulf %363, %372 : vector<32x128xf32>
    %374 = vector.broadcast %356 : vector<32x1xf32> to vector<32x128xf32>
    %375 = arith.mulf %373, %374 : vector<32x128xf32>
    %376 = vector.broadcast %357 : vector<32x1xf32> to vector<32x128xf32>
    %377 = arith.addf %375, %376 : vector<32x128xf32>
    %c1_96 = arith.constant 1 : index
    %c0_97 = arith.constant 0 : index
    %c0_98 = arith.constant 0 : index
    %378 = vector.load %arg9[%c1_96, %c0_97, %c0_98] : memref<2x128x32xbf16, #tpu.memory_space<vmem>>, vector<1x128x32xbf16>
    %379 = vector.shape_cast %378 : vector<1x128x32xbf16> to vector<128x32xbf16>
    %380 = arith.truncf %377 : vector<32x128xf32> to vector<32x128xbf16>
    %cst_99 = arith.constant dense<0.000000e+00> : vector<128x128xf32>
    %381 = tpu.matmul %379, %380, %cst_99 {dimension_numbers = #tpu.dot_dimension_numbers<[1], [0], [0], [1], [0, 0, 1, 1], [], []>} : vector<128x32xbf16>, vector<32x128xbf16>, vector<128x128xf32> -> vector<128x128xf32>
    %c1_100 = arith.constant 1 : index
    %c0_101 = arith.constant 0 : index
    %c0_102 = arith.constant 0 : index
    %382 = vector.load %arg10[%c1_100, %c0_101, %c0_102] : memref<2x128x1xf32, #tpu.memory_space<vmem>>, vector<1x128x1xf32>
    %383 = vector.shape_cast %382 : vector<1x128x1xf32> to vector<128x1xf32>
    %384 = vector.broadcast %383 : vector<128x1xf32> to vector<128x128xf32>
    %385 = arith.addf %381, %384 : vector<128x128xf32>
    %cst_103 = arith.constant 0.000000e+00 : f32
    %386 = vector.broadcast %cst_103 : f32 to vector<128x128xf32>
    %387 = arith.maximumf %385, %386 : vector<128x128xf32>
    %c1_104 = arith.constant 1 : index
    %c0_105 = arith.constant 0 : index
    %c0_106 = arith.constant 0 : index
    %388 = vector.load %arg11[%c1_104, %c0_105, %c0_106] : memref<2x32x128xbf16, #tpu.memory_space<vmem>>, vector<1x32x128xbf16>
    %389 = vector.shape_cast %388 : vector<1x32x128xbf16> to vector<32x128xbf16>
    %390 = arith.truncf %387 : vector<128x128xf32> to vector<128x128xbf16>
    %cst_107 = arith.constant dense<0.000000e+00> : vector<32x128xf32>
    %391 = tpu.matmul %389, %390, %cst_107 {dimension_numbers = #tpu.dot_dimension_numbers<[1], [0], [0], [1], [0, 0, 1, 1], [], []>} : vector<32x128xbf16>, vector<128x128xbf16>, vector<32x128xf32> -> vector<32x128xf32>
    %392 = vector.extract_strided_slice %244 {offsets = [0, 3], sizes = [32, 1], strides = [1, 1]} : vector<32x6xf32> to vector<32x1xf32>
    %393 = vector.broadcast %392 : vector<32x1xf32> to vector<32x128xf32>
    %394 = arith.addf %391, %393 : vector<32x128xf32>
    %395 = arith.addf %377, %394 : vector<32x128xf32>
    %396 = vector.extract_strided_slice %244 {offsets = [0, 4], sizes = [32, 1], strides = [1, 1]} : vector<32x6xf32> to vector<32x1xf32>
    %397 = vector.extract_strided_slice %244 {offsets = [0, 5], sizes = [32, 1], strides = [1, 1]} : vector<32x6xf32> to vector<32x1xf32>
    %cst_108 = arith.constant dense<0.000000e+00> : vector<128xf32>
    %398 = vector.multi_reduction <add>, %395, %cst_108 [0] : vector<32x128xf32> to vector<128xf32>
    %399 = vector.shape_cast %398 : vector<128xf32> to vector<1x128xf32>
    %cst_109 = arith.constant 3.200000e+01 : f32
    %400 = vector.broadcast %cst_109 : f32 to vector<1x128xf32>
    %401 = arith.divf %399, %400 : vector<1x128xf32>
    %402 = vector.broadcast %401 : vector<1x128xf32> to vector<32x128xf32>
    %403 = arith.subf %395, %402 : vector<32x128xf32>
    %404 = arith.mulf %403, %403 : vector<32x128xf32>
    %cst_110 = arith.constant dense<0.000000e+00> : vector<128xf32>
    %405 = vector.multi_reduction <add>, %404, %cst_110 [0] : vector<32x128xf32> to vector<128xf32>
    %406 = vector.shape_cast %405 : vector<128xf32> to vector<1x128xf32>
    %cst_111 = arith.constant 3.200000e+01 : f32
    %407 = vector.broadcast %cst_111 : f32 to vector<1x128xf32>
    %408 = arith.divf %406, %407 : vector<1x128xf32>
    %cst_112 = arith.constant 9.99999974E-6 : f32
    %409 = vector.broadcast %cst_112 : f32 to vector<1x128xf32>
    %410 = arith.addf %408, %409 : vector<1x128xf32>
    %411 = math.rsqrt %410 : vector<1x128xf32>
    %412 = vector.broadcast %411 : vector<1x128xf32> to vector<32x128xf32>
    %413 = arith.mulf %403, %412 : vector<32x128xf32>
    %414 = vector.broadcast %396 : vector<32x1xf32> to vector<32x128xf32>
    %415 = arith.mulf %413, %414 : vector<32x128xf32>
    %416 = vector.broadcast %397 : vector<32x1xf32> to vector<32x128xf32>
    %417 = arith.addf %415, %416 : vector<32x128xf32>
    %c0_113 = arith.constant 0 : index
    %c0_114 = arith.constant 0 : index
    %418 = vector.load %arg15[%c0_113, %c0_114] : memref<16x3xf32, #tpu.memory_space<vmem>>, vector<16x3xf32>
    %c127_i32 = arith.constant 127 : i32
    %419 = tpu.dynamic_rotate %417 by %c127_i32 dim 1 : vector<32x128xf32>, i32 -> vector<32x128xf32>
    %420 = tpu.iota {dimensions = array<i32: 1>} : vector<32x128xi32>
    %c127_i32_115 = arith.constant 127 : i32
    %421 = vector.broadcast %c127_i32_115 : i32 to vector<32x128xi32>
    %422 = arith.cmpi eq, %420, %421 : vector<32x128xi32>
    %cst_116 = arith.constant 0.000000e+00 : f32
    %423 = vector.broadcast %cst_116 : f32 to vector<32x128xf32>
    %424 = arith.select %422, %423, %419 : vector<32x128xi1>, vector<32x128xf32>
    %c0_117 = arith.constant 0 : index
    %c0_118 = arith.constant 0 : index
    %425 = vector.load %arg13[%c0_117, %c0_118] : memref<16x32xbf16, #tpu.memory_space<vmem>>, vector<16x32xbf16>
    %426 = arith.truncf %417 : vector<32x128xf32> to vector<32x128xbf16>
    %cst_119 = arith.constant dense<0.000000e+00> : vector<16x128xf32>
    %427 = tpu.matmul %425, %426, %cst_119 {dimension_numbers = #tpu.dot_dimension_numbers<[1], [0], [0], [1], [0, 0, 1, 1], [], []>} : vector<16x32xbf16>, vector<32x128xbf16>, vector<16x128xf32> -> vector<16x128xf32>
    %428 = vector.extract_strided_slice %418 {offsets = [0, 0], sizes = [16, 1], strides = [1, 1]} : vector<16x3xf32> to vector<16x1xf32>
    %429 = vector.broadcast %428 : vector<16x1xf32> to vector<16x128xf32>
    %430 = arith.addf %427, %429 : vector<16x128xf32>
    %c0_120 = arith.constant 0 : index
    %c0_121 = arith.constant 0 : index
    %431 = vector.load %arg14[%c0_120, %c0_121] : memref<16x64xbf16, #tpu.memory_space<vmem>>, vector<16x64xbf16>
    %432 = tpu.concatenate %417, %424 in 0 : vector<32x128xf32>, vector<32x128xf32> -> vector<64x128xf32>
    %433 = arith.truncf %432 : vector<64x128xf32> to vector<64x128xbf16>
    %cst_122 = arith.constant dense<0.000000e+00> : vector<16x128xf32>
    %434 = tpu.matmul %431, %433, %cst_122 {dimension_numbers = #tpu.dot_dimension_numbers<[1], [0], [0], [1], [0, 0, 1, 1], [], []>} : vector<16x64xbf16>, vector<64x128xbf16>, vector<16x128xf32> -> vector<16x128xf32>
    %435 = vector.extract_strided_slice %418 {offsets = [0, 0], sizes = [16, 1], strides = [1, 1]} : vector<16x3xf32> to vector<16x1xf32>
    %436 = vector.broadcast %435 : vector<16x1xf32> to vector<16x128xf32>
    %437 = arith.addf %434, %436 : vector<16x128xf32>
    %cst_123 = arith.constant 0.000000e+00 : f32
    %438 = vector.broadcast %cst_123 : f32 to vector<16x128xf32>
    %439 = arith.maximumf %430, %438 : vector<16x128xf32>
    %440 = vector.extract_strided_slice %418 {offsets = [0, 1], sizes = [16, 1], strides = [1, 1]} : vector<16x3xf32> to vector<16x1xf32>
    %441 = vector.broadcast %440 : vector<16x1xf32> to vector<16x128xf32>
    %442 = arith.mulf %439, %441 : vector<16x128xf32>
    %443 = vector.extract_strided_slice %418 {offsets = [0, 2], sizes = [16, 1], strides = [1, 1]} : vector<16x3xf32> to vector<16x1xf32>
    %444 = vector.broadcast %443 : vector<16x1xf32> to vector<16x128xf32>
    %445 = arith.addf %442, %444 : vector<16x128xf32>
    %cst_124 = arith.constant 0.000000e+00 : f32
    %446 = vector.broadcast %cst_124 : f32 to vector<16x128xf32>
    %447 = arith.maximumf %437, %446 : vector<16x128xf32>
    %448 = vector.extract_strided_slice %418 {offsets = [0, 1], sizes = [16, 1], strides = [1, 1]} : vector<16x3xf32> to vector<16x1xf32>
    %449 = vector.broadcast %448 : vector<16x1xf32> to vector<16x128xf32>
    %450 = arith.mulf %447, %449 : vector<16x128xf32>
    %451 = vector.extract_strided_slice %418 {offsets = [0, 2], sizes = [16, 1], strides = [1, 1]} : vector<16x3xf32> to vector<16x1xf32>
    %452 = vector.broadcast %451 : vector<16x1xf32> to vector<16x128xf32>
    %453 = arith.addf %450, %452 : vector<16x128xf32>
    %c0_125 = arith.constant 0 : index
    %c0_126 = arith.constant 0 : index
    %454 = vector.load %arg18[%c0_125, %c0_126] : memref<8x1xf32, #tpu.memory_space<vmem>>, vector<8x1xf32>
    %c127_i32_127 = arith.constant 127 : i32
    %455 = tpu.dynamic_rotate %445 by %c127_i32_127 dim 1 : vector<16x128xf32>, i32 -> vector<16x128xf32>
    %456 = tpu.iota {dimensions = array<i32: 1>} : vector<16x128xi32>
    %c127_i32_128 = arith.constant 127 : i32
    %457 = vector.broadcast %c127_i32_128 : i32 to vector<16x128xi32>
    %458 = arith.cmpi eq, %456, %457 : vector<16x128xi32>
    %cst_129 = arith.constant 0.000000e+00 : f32
    %459 = vector.broadcast %cst_129 : f32 to vector<16x128xf32>
    %460 = arith.select %458, %459, %455 : vector<16x128xi1>, vector<16x128xf32>
    %c0_130 = arith.constant 0 : index
    %c0_131 = arith.constant 0 : index
    %461 = vector.load %arg16[%c0_130, %c0_131] : memref<8x16xbf16, #tpu.memory_space<vmem>>, vector<8x16xbf16>
    %462 = arith.truncf %445 : vector<16x128xf32> to vector<16x128xbf16>
    %cst_132 = arith.constant dense<0.000000e+00> : vector<8x128xf32>
    %463 = tpu.matmul %461, %462, %cst_132 {dimension_numbers = #tpu.dot_dimension_numbers<[1], [0], [0], [1], [0, 0, 1, 1], [], []>} : vector<8x16xbf16>, vector<16x128xbf16>, vector<8x128xf32> -> vector<8x128xf32>
    %464 = vector.broadcast %454 : vector<8x1xf32> to vector<8x128xf32>
    %465 = arith.addf %463, %464 : vector<8x128xf32>
    %c0_133 = arith.constant 0 : index
    %c0_134 = arith.constant 0 : index
    %c0_135 = arith.constant 0 : index
    %c0_136 = arith.constant 0 : index
    %466 = vector.load %arg19[%c0_133, %c0_134, %c0_135, %c0_136] : memref<1x4x8x128xf32, #tpu.memory_space<vmem>>, vector<1x1x8x128xf32>
    %467 = vector.shape_cast %466 : vector<1x1x8x128xf32> to vector<8x128xf32>
    %468 = vector.shape_cast %465 : vector<8x128xf32> to vector<1x1x8x128xf32>
    tpu.vector_store %arg19[%c0_133, %c0_134, %c0_135, %c0_136], %468 {strides = array<i32>} : memref<1x4x8x128xf32, #tpu.memory_space<vmem>>, vector<1x1x8x128xf32>,
    %c0_137 = arith.constant 0 : index
    %c0_138 = arith.constant 0 : index
    %469 = vector.load %arg17[%c0_137, %c0_138] : memref<8x32xbf16, #tpu.memory_space<vmem>>, vector<8x32xbf16>
    %470 = tpu.concatenate %445, %453 in 0 : vector<16x128xf32>, vector<16x128xf32> -> vector<32x128xf32>
    %471 = arith.truncf %470 : vector<32x128xf32> to vector<32x128xbf16>
    %cst_139 = arith.constant dense<0.000000e+00> : vector<8x128xf32>
    %472 = tpu.matmul %469, %471, %cst_139 {dimension_numbers = #tpu.dot_dimension_numbers<[1], [0], [0], [1], [0, 0, 1, 1], [], []>} : vector<8x32xbf16>, vector<32x128xbf16>, vector<8x128xf32> -> vector<8x128xf32>
    %473 = vector.broadcast %454 : vector<8x1xf32> to vector<8x128xf32>
    %474 = arith.addf %472, %473 : vector<8x128xf32>
    %c0_140 = arith.constant 0 : index
    %c1_141 = arith.constant 1 : index
    %c0_142 = arith.constant 0 : index
    %c0_143 = arith.constant 0 : index
    %475 = vector.load %arg19[%c0_140, %c1_141, %c0_142, %c0_143] : memref<1x4x8x128xf32, #tpu.memory_space<vmem>>, vector<1x1x8x128xf32>
    %476 = vector.shape_cast %475 : vector<1x1x8x128xf32> to vector<8x128xf32>
    %477 = vector.shape_cast %474 : vector<8x128xf32> to vector<1x1x8x128xf32>
    tpu.vector_store %arg19[%c0_140, %c1_141, %c0_142, %c0_143], %477 {strides = array<i32>} : memref<1x4x8x128xf32, #tpu.memory_space<vmem>>, vector<1x1x8x128xf32>,
    %c0_144 = arith.constant 0 : index
    %c0_145 = arith.constant 0 : index
    %478 = vector.load %arg16[%c0_144, %c0_145] : memref<8x16xbf16, #tpu.memory_space<vmem>>, vector<8x16xbf16>
    %479 = arith.truncf %453 : vector<16x128xf32> to vector<16x128xbf16>
    %cst_146 = arith.constant dense<0.000000e+00> : vector<8x128xf32>
    %480 = tpu.matmul %478, %479, %cst_146 {dimension_numbers = #tpu.dot_dimension_numbers<[1], [0], [0], [1], [0, 0, 1, 1], [], []>} : vector<8x16xbf16>, vector<16x128xbf16>, vector<8x128xf32> -> vector<8x128xf32>
    %481 = vector.broadcast %454 : vector<8x1xf32> to vector<8x128xf32>
    %482 = arith.addf %480, %481 : vector<8x128xf32>
    %c0_147 = arith.constant 0 : index
    %c2_148 = arith.constant 2 : index
    %c0_149 = arith.constant 0 : index
    %c0_150 = arith.constant 0 : index
    %483 = vector.load %arg19[%c0_147, %c2_148, %c0_149, %c0_150] : memref<1x4x8x128xf32, #tpu.memory_space<vmem>>, vector<1x1x8x128xf32>
    %484 = vector.shape_cast %483 : vector<1x1x8x128xf32> to vector<8x128xf32>
    %485 = vector.shape_cast %482 : vector<8x128xf32> to vector<1x1x8x128xf32>
    tpu.vector_store %arg19[%c0_147, %c2_148, %c0_149, %c0_150], %485 {strides = array<i32>} : memref<1x4x8x128xf32, #tpu.memory_space<vmem>>, vector<1x1x8x128xf32>,
    %c0_151 = arith.constant 0 : index
    %c0_152 = arith.constant 0 : index
    %486 = vector.load %arg17[%c0_151, %c0_152] : memref<8x32xbf16, #tpu.memory_space<vmem>>, vector<8x32xbf16>
    %487 = tpu.concatenate %453, %460 in 0 : vector<16x128xf32>, vector<16x128xf32> -> vector<32x128xf32>
    %488 = arith.truncf %487 : vector<32x128xf32> to vector<32x128xbf16>
    %cst_153 = arith.constant dense<0.000000e+00> : vector<8x128xf32>
    %489 = tpu.matmul %486, %488, %cst_153 {dimension_numbers = #tpu.dot_dimension_numbers<[1], [0], [0], [1], [0, 0, 1, 1], [], []>} : vector<8x32xbf16>, vector<32x128xbf16>, vector<8x128xf32> -> vector<8x128xf32>
    %490 = vector.broadcast %454 : vector<8x1xf32> to vector<8x128xf32>
    %491 = arith.addf %489, %490 : vector<8x128xf32>
    %c0_154 = arith.constant 0 : index
    %c3_155 = arith.constant 3 : index
    %c0_156 = arith.constant 0 : index
    %c0_157 = arith.constant 0 : index
    %492 = vector.load %arg19[%c0_154, %c3_155, %c0_156, %c0_157] : memref<1x4x8x128xf32, #tpu.memory_space<vmem>>, vector<1x1x8x128xf32>
    %493 = vector.shape_cast %492 : vector<1x1x8x128xf32> to vector<8x128xf32>
    %494 = vector.shape_cast %491 : vector<8x128xf32> to vector<1x1x8x128xf32>
    tpu.vector_store %arg19[%c0_154, %c3_155, %c0_156, %c0_157], %494 {strides = array<i32>} : memref<1x4x8x128xf32, #tpu.memory_space<vmem>>, vector<1x1x8x128xf32>,
    return
  }
  func.func @transform_0(%arg0: i32) -> (i32, i32, i32, i32) {
    %c0_i32 = arith.constant 0 : i32
    %c0_i32_0 = arith.constant 0 : i32
    %c0_i32_1 = arith.constant 0 : i32
    %c0_i32_2 = arith.constant 0 : i32
    return %arg0, %c0_i32, %c0_i32_0, %c0_i32_1 : i32, i32, i32, i32
  }
  func.func @transform_1(%arg0: i32) -> (i32, i32) {
    %c0_i32 = arith.constant 0 : i32
    %c0_i32_0 = arith.constant 0 : i32
    %c0_i32_1 = arith.constant 0 : i32
    return %c0_i32, %c0_i32_0 : i32, i32
  }
  func.func @transform_2(%arg0: i32) -> (i32, i32) {
    %c0_i32 = arith.constant 0 : i32
    %c0_i32_0 = arith.constant 0 : i32
    %c0_i32_1 = arith.constant 0 : i32
    return %c0_i32, %c0_i32_0 : i32, i32
  }
  func.func @transform_3(%arg0: i32) -> (i32, i32) {
    %c0_i32 = arith.constant 0 : i32
    %c0_i32_0 = arith.constant 0 : i32
    %c0_i32_1 = arith.constant 0 : i32
    return %c0_i32, %c0_i32_0 : i32, i32
  }
  func.func @transform_4(%arg0: i32) -> (i32, i32) {
    %c0_i32 = arith.constant 0 : i32
    %c0_i32_0 = arith.constant 0 : i32
    %c0_i32_1 = arith.constant 0 : i32
    return %c0_i32, %c0_i32_0 : i32, i32
  }
  func.func @transform_5(%arg0: i32) -> (i32, i32, i32) {
    %c0_i32 = arith.constant 0 : i32
    %c0_i32_0 = arith.constant 0 : i32
    %c0_i32_1 = arith.constant 0 : i32
    %c0_i32_2 = arith.constant 0 : i32
    return %c0_i32, %c0_i32_0, %c0_i32_1 : i32, i32, i32
  }
  func.func @transform_6(%arg0: i32) -> (i32, i32, i32) {
    %c0_i32 = arith.constant 0 : i32
    %c0_i32_0 = arith.constant 0 : i32
    %c0_i32_1 = arith.constant 0 : i32
    %c0_i32_2 = arith.constant 0 : i32
    return %c0_i32, %c0_i32_0, %c0_i32_1 : i32, i32, i32
  }
  func.func @transform_7(%arg0: i32) -> (i32, i32, i32) {
    %c0_i32 = arith.constant 0 : i32
    %c0_i32_0 = arith.constant 0 : i32
    %c0_i32_1 = arith.constant 0 : i32
    %c0_i32_2 = arith.constant 0 : i32
    return %c0_i32, %c0_i32_0, %c0_i32_1 : i32, i32, i32
  }
  func.func @transform_8(%arg0: i32) -> (i32, i32, i32) {
    %c0_i32 = arith.constant 0 : i32
    %c0_i32_0 = arith.constant 0 : i32
    %c0_i32_1 = arith.constant 0 : i32
    %c0_i32_2 = arith.constant 0 : i32
    return %c0_i32, %c0_i32_0, %c0_i32_1 : i32, i32, i32
  }
  func.func @transform_9(%arg0: i32) -> (i32, i32, i32) {
    %c0_i32 = arith.constant 0 : i32
    %c0_i32_0 = arith.constant 0 : i32
    %c0_i32_1 = arith.constant 0 : i32
    %c0_i32_2 = arith.constant 0 : i32
    return %c0_i32, %c0_i32_0, %c0_i32_1 : i32, i32, i32
  }
  func.func @transform_10(%arg0: i32) -> (i32, i32, i32) {
    %c0_i32 = arith.constant 0 : i32
    %c0_i32_0 = arith.constant 0 : i32
    %c0_i32_1 = arith.constant 0 : i32
    %c0_i32_2 = arith.constant 0 : i32
    return %c0_i32, %c0_i32_0, %c0_i32_1 : i32, i32, i32
  }
  func.func @transform_11(%arg0: i32) -> (i32, i32, i32) {
    %c0_i32 = arith.constant 0 : i32
    %c0_i32_0 = arith.constant 0 : i32
    %c0_i32_1 = arith.constant 0 : i32
    %c0_i32_2 = arith.constant 0 : i32
    return %c0_i32, %c0_i32_0, %c0_i32_1 : i32, i32, i32
  }
  func.func @transform_12(%arg0: i32) -> (i32, i32) {
    %c0_i32 = arith.constant 0 : i32
    %c0_i32_0 = arith.constant 0 : i32
    %c0_i32_1 = arith.constant 0 : i32
    return %c0_i32, %c0_i32_0 : i32, i32
  }
  func.func @transform_13(%arg0: i32) -> (i32, i32) {
    %c0_i32 = arith.constant 0 : i32
    %c0_i32_0 = arith.constant 0 : i32
    %c0_i32_1 = arith.constant 0 : i32
    return %c0_i32, %c0_i32_0 : i32, i32
  }
  func.func @transform_14(%arg0: i32) -> (i32, i32) {
    %c0_i32 = arith.constant 0 : i32
    %c0_i32_0 = arith.constant 0 : i32
    %c0_i32_1 = arith.constant 0 : i32
    return %c0_i32, %c0_i32_0 : i32, i32
  }
  func.func @transform_15(%arg0: i32) -> (i32, i32) {
    %c0_i32 = arith.constant 0 : i32
    %c0_i32_0 = arith.constant 0 : i32
    %c0_i32_1 = arith.constant 0 : i32
    return %c0_i32, %c0_i32_0 : i32, i32
  }
  func.func @transform_16(%arg0: i32) -> (i32, i32) {
    %c0_i32 = arith.constant 0 : i32
    %c0_i32_0 = arith.constant 0 : i32
    %c0_i32_1 = arith.constant 0 : i32
    return %c0_i32, %c0_i32_0 : i32, i32
  }
  func.func @transform_17(%arg0: i32) -> (i32, i32) {
    %c0_i32 = arith.constant 0 : i32
    %c0_i32_0 = arith.constant 0 : i32
    %c0_i32_1 = arith.constant 0 : i32
    return %c0_i32, %c0_i32_0 : i32, i32
  }
  func.func @transform_18(%arg0: i32) -> (i32, i32, i32, i32) {
    %c0_i32 = arith.constant 0 : i32
    %c0_i32_0 = arith.constant 0 : i32
    %c0_i32_1 = arith.constant 0 : i32
    %c0_i32_2 = arith.constant 0 : i32
    return %arg0, %c0_i32, %c0_i32_0, %c0_i32_1 : i32, i32, i32, i32
  }
}

</mosaic_0001>

<llo_original>
// kernel: transformer_ae_forward.1
$region0: #{transformer_ae_forward.1}
  #allocation0 [shape = 'u32[]', space=smem, size = 0x4, offset = 0x4, fixed_abs, tag = 'smem constant byte address 0x4 - core index']
  #allocation1 [shape = 'u32[144,128]{1,0:T(1,128)}', space=vmem, size = 0x12000, scoped, tag = 'internal scratch']
  %s0 = inlined_call_operand.vmem [shape: f32[4,4,8,128], index: 0, kind: input, shape index: {}]
  %s1 = inlined_call_operand.vmem [shape: bf16[16,24], index: 1, kind: input, shape index: {}]
  %s2 = inlined_call_operand.vmem [shape: f32[16,3], index: 2, kind: input, shape index: {}]
  %s3 = inlined_call_operand.vmem [shape: bf16[32,48], index: 3, kind: input, shape index: {}]
  %s4 = inlined_call_operand.vmem [shape: f32[32,3], index: 4, kind: input, shape index: {}]
  %s5 = inlined_call_operand.vmem [shape: bf16[2,96,32], index: 5, kind: input, shape index: {}]
  %s6 = inlined_call_operand.vmem [shape: f32[2,96,1], index: 6, kind: input, shape index: {}]
  %s7 = inlined_call_operand.vmem [shape: bf16[2,32,32], index: 7, kind: input, shape index: {}]
  %s8 = inlined_call_operand.vmem [shape: bf16[2,128,32], index: 8, kind: input, shape index: {}]
  %s9 = inlined_call_operand.vmem [shape: f32[2,128,1], index: 9, kind: input, shape index: {}]
  %s10 = inlined_call_operand.vmem [shape: bf16[2,32,128], index: 10, kind: input, shape index: {}]
  %s11 = inlined_call_operand.vmem [shape: f32[2,32,6], index: 11, kind: input, shape index: {}]
  %s12 = inlined_call_operand.vmem [shape: bf16[16,32], index: 12, kind: input, shape index: {}]
  %s13 = inlined_call_operand.vmem [shape: bf16[16,64], index: 13, kind: input, shape index: {}]
  %s14 = inlined_call_operand.vmem [shape: f32[16,3], index: 14, kind: input, shape index: {}]
  %s15 = inlined_call_operand.vmem [shape: bf16[8,16], index: 15, kind: input, shape index: {}]
  %s16 = inlined_call_operand.vmem [shape: bf16[8,32], index: 16, kind: input, shape index: {}]
  %s17 = inlined_call_operand.vmem [shape: f32[8,1], index: 17, kind: input, shape index: {}]
  %s18 = inlined_call_operand.vmem [shape: f32[4,4,8,128], index: 18, kind: output, shape index: {}]
  %s19 = sld [smem:[#allocation0]]
  $region105: #{transformer_ae_forward.1} parent=0
    _
  %s21 = ssub.s32 1, %s19
  %s22 = scalar_select 0, %s21, %s19
  loop: start=0, step=1, limit=6
  $region2: #{transformer_ae_forward.1} parent=0 // loop_pre_header
    _
  $region3: #{transformer_ae_forward.1} parent=0 // loop_header
    %s24 = sphi 0, %s28
    %p25 = scmp.ge.s32.totalorder %s24, 6
    %s34 = sphi 0, %s36
    %s37 = sphi 0, %s34
    %s38 = sphi 0, %s37
    %s54 = sphi 0, %s38
    %s58 = sphi 0, %s58
    %s60 = sphi 0, %s58
    %s61 = sphi 0, %s60
    %s75 = sphi 0, %s61
    %s79 = sphi 0, %s79
    %s81 = sphi 0, %s79
    %s82 = sphi 0, %s81
    %s96 = sphi 0, %s82
    %s100 = sphi 0, %s100
    %s102 = sphi 0, %s100
    %s103 = sphi 0, %s102
    %s117 = sphi 0, %s103
    %s121 = sphi 0, %s121
    %s123 = sphi 0, %s121
    %s124 = sphi 0, %s123
    %s138 = sphi 0, %s124
    %s142 = sphi 0, %s142
    %s144 = sphi 0, %s142
    %s145 = sphi 0, %s144
    %s159 = sphi 0, %s145
    %s163 = sphi 0, %s163
    %s165 = sphi 0, %s163
    %s166 = sphi 0, %s165
    %s180 = sphi 0, %s166
    %s184 = sphi 0, %s184
    %s186 = sphi 0, %s184
    %s187 = sphi 0, %s186
    %s201 = sphi 0, %s187
    %s205 = sphi 0, %s205
    %s207 = sphi 0, %s205
    %s208 = sphi 0, %s207
    %s222 = sphi 0, %s208
    %s226 = sphi 0, %s226
    %s228 = sphi 0, %s226
    %s229 = sphi 0, %s228
    %s243 = sphi 0, %s229
    %s247 = sphi 0, %s247
    %s249 = sphi 0, %s247
    %s250 = sphi 0, %s249
    %s264 = sphi 0, %s250
    %s268 = sphi 0, %s268
    %s270 = sphi 0, %s268
    %s271 = sphi 0, %s270
    %s285 = sphi 0, %s271
    %s289 = sphi 0, %s289
    %s291 = sphi 0, %s289
    %s292 = sphi 0, %s291
    %s306 = sphi 0, %s292
    %s310 = sphi 0, %s310
    %s312 = sphi 0, %s310
    %s313 = sphi 0, %s312
    %s327 = sphi 0, %s313
    %s331 = sphi 0, %s331
    %s333 = sphi 0, %s331
    %s334 = sphi 0, %s333
    %s348 = sphi 0, %s334
    %s352 = sphi 0, %s352
    %s354 = sphi 0, %s352
    %s355 = sphi 0, %s354
    %s369 = sphi 0, %s355
    %s373 = sphi 0, %s373
    %s375 = sphi 0, %s373
    %s376 = sphi 0, %s375
    %s390 = sphi 0, %s376
    %s394 = sphi 0, %s394
    %s396 = sphi 0, %s394
    %s397 = sphi 0, %s396
    %s411 = sphi 0, %s397
    %s417 = sphi 0, %s419
    %s420 = sphi 0, %s417
    %s421 = sphi 0, %s420
    %s437 = sphi 0, %s421
  $region4: #{transformer_ae_forward.1} parent=0 // loop_header_branch
    %27 = sbr.rel (%p25) target = $region8
  $region5: #{transformer_ae_forward.1} parent=0 // loop_body
    %s29 = ssub.s32 %s24, 1
    %s30 = ssub.s32 %s24, 2
    %s31 = sadd.s32 %s24, 1
    %s32 = ssub.s32 %s24, %s31
    %p33 = scmp.eq.s32.totalorder %s32, 0
    %s35 = sadd.s32 %s34, 1
    %s36 = scalar_select %p33, %s34, %s35
    %p39 = pneg %p33
    %p40 = scmp.eq.s32.totalorder %s24, 3
    %p41 = por %p39, %p40
    %p42 = scmp.ne.s32.totalorder %s34, %s37
    %p43 = scmp.eq.s32.totalorder %s24, 0
    %p44 = por %p42, %p43
    %p45 = scmp.ne.s32.totalorder %s34, %s37
    %p46 = scmp.eq.s32.totalorder %s29, 3
    %p47 = por %p45, %p46
    %p48 = scmp.ne.s32.totalorder %s37, %s38
    %p49 = scmp.eq.s32.totalorder %s29, 0
    %p50 = por %p48, %p49
    %p51 = scmp.ne.s32.totalorder %s37, %s38
    %p52 = scmp.eq.s32.totalorder %s30, 3
    %p53 = por %p51, %p52
    %p55 = scmp.ne.s32.totalorder %s38, %s54
    %p56 = scmp.eq.s32.totalorder %s30, 0
    %p57 = por %p55, %p56
    %s59 = sadd.s32 %s58, 1
    %p62 = scmp.eq.s32.totalorder %s24, 3
    %p63 = scmp.ne.s32.totalorder %s58, %s60
    %p64 = scmp.eq.s32.totalorder %s24, 0
    %p65 = por %p63, %p64
    %p66 = scmp.ne.s32.totalorder %s58, %s60
    %p67 = scmp.eq.s32.totalorder %s29, 3
    %p68 = por %p66, %p67
    %p69 = scmp.ne.s32.totalorder %s60, %s61
    %p70 = scmp.eq.s32.totalorder %s29, 0
    %p71 = por %p69, %p70
    %p72 = scmp.ne.s32.totalorder %s60, %s61
    %p73 = scmp.eq.s32.totalorder %s30, 3
    %p74 = por %p72, %p73
    %p76 = scmp.ne.s32.totalorder %s61, %s75
    %p77 = scmp.eq.s32.totalorder %s30, 0
    %p78 = por %p76, %p77
    %s80 = sadd.s32 %s79, 1
    %p83 = scmp.eq.s32.totalorder %s24, 3
    %p84 = scmp.ne.s32.totalorder %s79, %s81
    %p85 = scmp.eq.s32.totalorder %s24, 0
    %p86 = por %p84, %p85
    %p87 = scmp.ne.s32.totalorder %s79, %s81
    %p88 = scmp.eq.s32.totalorder %s29, 3
    %p89 = por %p87, %p88
    %p90 = scmp.ne.s32.totalorder %s81, %s82
    %p91 = scmp.eq.s32.totalorder %s29, 0
    %p92 = por %p90, %p91
    %p93 = scmp.ne.s32.totalorder %s81, %s82
    %p94 = scmp.eq.s32.totalorder %s30, 3
    %p95 = por %p93, %p94
    %p97 = scmp.ne.s32.totalorder %s82, %s96
    %p98 = scmp.eq.s32.totalorder %s30, 0
    %p99 = por %p97, %p98
    %s101 = sadd.s32 %s100, 1
    %p104 = scmp.eq.s32.totalorder %s24, 3
    %p105 = scmp.ne.s32.totalorder %s100, %s102
    %p106 = scmp.eq.s32.totalorder %s24, 0
    %p107 = por %p105, %p106
    %p108 = scmp.ne.s32.totalorder %s100, %s102
    %p109 = scmp.eq.s32.totalorder %s29, 3
    %p110 = por %p108, %p109
    %p111 = scmp.ne.s32.totalorder %s102, %s103
    %p112 = scmp.eq.s32.totalorder %s29, 0
    %p113 = por %p111, %p112
    %p114 = scmp.ne.s32.totalorder %s102, %s103
    %p115 = scmp.eq.s32.totalorder %s30, 3
    %p116 = por %p114, %p115
    %p118 = scmp.ne.s32.totalorder %s103, %s117
    %p119 = scmp.eq.s32.totalorder %s30, 0
    %p120 = por %p118, %p119
    %s122 = sadd.s32 %s121, 1
    %p125 = scmp.eq.s32.totalorder %s24, 3
    %p126 = scmp.ne.s32.totalorder %s121, %s123
    %p127 = scmp.eq.s32.totalorder %s24, 0
    %p128 = por %p126, %p127
    %p129 = scmp.ne.s32.totalorder %s121, %s123
    %p130 = scmp.eq.s32.totalorder %s29, 3
    %p131 = por %p129, %p130
    %p132 = scmp.ne.s32.totalorder %s123, %s124
    %p133 = scmp.eq.s32.totalorder %s29, 0
    %p134 = por %p132, %p133
    %p135 = scmp.ne.s32.totalorder %s123, %s124
    %p136 = scmp.eq.s32.totalorder %s30, 3
    %p137 = por %p135, %p136
    %p139 = scmp.ne.s32.totalorder %s124, %s138
    %p140 = scmp.eq.s32.totalorder %s30, 0
    %p141 = por %p139, %p140
    %s143 = sadd.s32 %s142, 1
    %p146 = scmp.eq.s32.totalorder %s24, 3
    %p147 = scmp.ne.s32.totalorder %s142, %s144
    %p148 = scmp.eq.s32.totalorder %s24, 0
    %p149 = por %p147, %p148
    %p150 = scmp.ne.s32.totalorder %s142, %s144
    %p151 = scmp.eq.s32.totalorder %s29, 3
    %p152 = por %p150, %p151
    %p153 = scmp.ne.s32.totalorder %s144, %s145
    %p154 = scmp.eq.s32.totalorder %s29, 0
    %p155 = por %p153, %p154
    %p156 = scmp.ne.s32.totalorder %s144, %s145
    %p157 = scmp.eq.s32.totalorder %s30, 3
    %p158 = por %p156, %p157
    %p160 = scmp.ne.s32.totalorder %s145, %s159
    %p161 = scmp.eq.s32.totalorder %s30, 0
    %p162 = por %p160, %p161
    %s164 = sadd.s32 %s163, 1
    %p167 = scmp.eq.s32.totalorder %s24, 3
    %p168 = scmp.ne.s32.totalorder %s163, %s165
    %p169 = scmp.eq.s32.totalorder %s24, 0
    %p170 = por %p168, %p169
    %p171 = scmp.ne.s32.totalorder %s163, %s165
    %p172 = scmp.eq.s32.totalorder %s29, 3
    %p173 = por %p171, %p172
    %p174 = scmp.ne.s32.totalorder %s165, %s166
    %p175 = scmp.eq.s32.totalorder %s29, 0
    %p176 = por %p174, %p175
    %p177 = scmp.ne.s32.totalorder %s165, %s166
    %p178 = scmp.eq.s32.totalorder %s30, 3
    %p179 = por %p177, %p178
    %p181 = scmp.ne.s32.totalorder %s166, %s180
    %p182 = scmp.eq.s32.totalorder %s30, 0
    %p183 = por %p181, %p182
    %s185 = sadd.s32 %s184, 1
    %p188 = scmp.eq.s32.totalorder %s24, 3
    %p189 = scmp.ne.s32.totalorder %s184, %s186
    %p190 = scmp.eq.s32.totalorder %s24, 0
    %p191 = por %p189, %p190
    %p192 = scmp.ne.s32.totalorder %s184, %s186
    %p193 = scmp.eq.s32.totalorder %s29, 3
    %p194 = por %p192, %p193
    %p195 = scmp.ne.s32.totalorder %s186, %s187
    %p196 = scmp.eq.s32.totalorder %s29, 0
    %p197 = por %p195, %p196
    %p198 = scmp.ne.s32.totalorder %s186, %s187
    %p199 = scmp.eq.s32.totalorder %s30, 3
    %p200 = por %p198, %p199
    %p202 = scmp.ne.s32.totalorder %s187, %s201
    %p203 = scmp.eq.s32.totalorder %s30, 0
    %p204 = por %p202, %p203
    %s206 = sadd.s32 %s205, 1
    %p209 = scmp.eq.s32.totalorder %s24, 3
    %p210 = scmp.ne.s32.totalorder %s205, %s207
    %p211 = scmp.eq.s32.totalorder %s24, 0
    %p212 = por %p210, %p211
    %p213 = scmp.ne.s32.totalorder %s205, %s207
    %p214 = scmp.eq.s32.totalorder %s29, 3
    %p215 = por %p213, %p214
    %p216 = scmp.ne.s32.totalorder %s207, %s208
    %p217 = scmp.eq.s32.totalorder %s29, 0
    %p218 = por %p216, %p217
    %p219 = scmp.ne.s32.totalorder %s207, %s208
    %p220 = scmp.eq.s32.totalorder %s30, 3
    %p221 = por %p219, %p220
    %p223 = scmp.ne.s32.totalorder %s208, %s222
    %p224 = scmp.eq.s32.totalorder %s30, 0
    %p225 = por %p223, %p224
    %s227 = sadd.s32 %s226, 1
    %p230 = scmp.eq.s32.totalorder %s24, 3
    %p231 = scmp.ne.s32.totalorder %s226, %s228
    %p232 = scmp.eq.s32.totalorder %s24, 0
    %p233 = por %p231, %p232
    %p234 = scmp.ne.s32.totalorder %s226, %s228
    %p235 = scmp.eq.s32.totalorder %s29, 3
    %p236 = por %p234, %p235
    %p237 = scmp.ne.s32.totalorder %s228, %s229
    %p238 = scmp.eq.s32.totalorder %s29, 0
    %p239 = por %p237, %p238
    %p240 = scmp.ne.s32.totalorder %s228, %s229
    %p241 = scmp.eq.s32.totalorder %s30, 3
    %p242 = por %p240, %p241
    %p244 = scmp.ne.s32.totalorder %s229, %s243
    %p245 = scmp.eq.s32.totalorder %s30, 0
    %p246 = por %p244, %p245
    %s248 = sadd.s32 %s247, 1
    %p251 = scmp.eq.s32.totalorder %s24, 3
    %p252 = scmp.ne.s32.totalorder %s247, %s249
    %p253 = scmp.eq.s32.totalorder %s24, 0
    %p254 = por %p252, %p253
    %p255 = scmp.ne.s32.totalorder %s247, %s249
    %p256 = scmp.eq.s32.totalorder %s29, 3
    %p257 = por %p255, %p256
    %p258 = scmp.ne.s32.totalorder %s249, %s250
    %p259 = scmp.eq.s32.totalorder %s29, 0
    %p260 = por %p258, %p259
    %p261 = scmp.ne.s32.totalorder %s249, %s250
    %p262 = scmp.eq.s32.totalorder %s30, 3
    %p263 = por %p261, %p262
    %p265 = scmp.ne.s32.totalorder %s250, %s264
    %p266 = scmp.eq.s32.totalorder %s30, 0
    %p267 = por %p265, %p266
    %s269 = sadd.s32 %s268, 1
    %p272 = scmp.eq.s32.totalorder %s24, 3
    %p273 = scmp.ne.s32.totalorder %s268, %s270
    %p274 = scmp.eq.s32.totalorder %s24, 0
    %p275 = por %p273, %p274
    %p276 = scmp.ne.s32.totalorder %s268, %s270
    %p277 = scmp.eq.s32.totalorder %s29, 3
    %p278 = por %p276, %p277
    %p279 = scmp.ne.s32.totalorder %s270, %s271
    %p280 = scmp.eq.s32.totalorder %s29, 0
    %p281 = por %p279, %p280
    %p282 = scmp.ne.s32.totalorder %s270, %s271
    %p283 = scmp.eq.s32.totalorder %s30, 3
    %p284 = por %p282, %p283
    %p286 = scmp.ne.s32.totalorder %s271, %s285
    %p287 = scmp.eq.s32.totalorder %s30, 0
    %p288 = por %p286, %p287
    %s290 = sadd.s32 %s289, 1
    %p293 = scmp.eq.s32.totalorder %s24, 3
    %p294 = scmp.ne.s32.totalorder %s289, %s291
    %p295 = scmp.eq.s32.totalorder %s24, 0
    %p296 = por %p294, %p295
    %p297 = scmp.ne.s32.totalorder %s289, %s291
    %p298 = scmp.eq.s32.totalorder %s29, 3
    %p299 = por %p297, %p298
    %p300 = scmp.ne.s32.totalorder %s291, %s292
    %p301 = scmp.eq.s32.totalorder %s29, 0
    %p302 = por %p300, %p301
    %p303 = scmp.ne.s32.totalorder %s291, %s292
    %p304 = scmp.eq.s32.totalorder %s30, 3
    %p305 = por %p303, %p304
    %p307 = scmp.ne.s32.totalorder %s292, %s306
    %p308 = scmp.eq.s32.totalorder %s30, 0
    %p309 = por %p307, %p308
    %s311 = sadd.s32 %s310, 1
    %p314 = scmp.eq.s32.totalorder %s24, 3
    %p315 = scmp.ne.s32.totalorder %s310, %s312
    %p316 = scmp.eq.s32.totalorder %s24, 0
    %p317 = por %p315, %p316
    %p318 = scmp.ne.s32.totalorder %s310, %s312
    %p319 = scmp.eq.s32.totalorder %s29, 3
    %p320 = por %p318, %p319
    %p321 = scmp.ne.s32.totalorder %s312, %s313
    %p322 = scmp.eq.s32.totalorder %s29, 0
    %p323 = por %p321, %p322
    %p324 = scmp.ne.s32.totalorder %s312, %s313
    %p325 = scmp.eq.s32.totalorder %s30, 3
    %p326 = por %p324, %p325
    %p328 = scmp.ne.s32.totalorder %s313, %s327
    %p329 = scmp.eq.s32.totalorder %s30, 0
    %p330 = por %p328, %p329
    %s332 = sadd.s32 %s331, 1
    %p335 = scmp.eq.s32.totalorder %s24, 3
    %p336 = scmp.ne.s32.totalorder %s331, %s333
    %p337 = scmp.eq.s32.totalorder %s24, 0
    %p338 = por %p336, %p337
    %p339 = scmp.ne.s32.totalorder %s331, %s333
    %p340 = scmp.eq.s32.totalorder %s29, 3
    %p341 = por %p339, %p340
    %p342 = scmp.ne.s32.totalorder %s333, %s334
    %p343 = scmp.eq.s32.totalorder %s29, 0
    %p344 = por %p342, %p343
    %p345 = scmp.ne.s32.totalorder %s333, %s334
    %p346 = scmp.eq.s32.totalorder %s30, 3
    %p347 = por %p345, %p346
    %p349 = scmp.ne.s32.totalorder %s334, %s348
    %p350 = scmp.eq.s32.totalorder %s30, 0
    %p351 = por %p349, %p350
    %s353 = sadd.s32 %s352, 1
    %p356 = scmp.eq.s32.totalorder %s24, 3
    %p357 = scmp.ne.s32.totalorder %s352, %s354
    %p358 = scmp.eq.s32.totalorder %s24, 0
    %p359 = por %p357, %p358
    %p360 = scmp.ne.s32.totalorder %s352, %s354
    %p361 = scmp.eq.s32.totalorder %s29, 3
    %p362 = por %p360, %p361
    %p363 = scmp.ne.s32.totalorder %s354, %s355
    %p364 = scmp.eq.s32.totalorder %s29, 0
    %p365 = por %p363, %p364
    %p366 = scmp.ne.s32.totalorder %s354, %s355
    %p367 = scmp.eq.s32.totalorder %s30, 3
    %p368 = por %p366, %p367
    %p370 = scmp.ne.s32.totalorder %s355, %s369
    %p371 = scmp.eq.s32.totalorder %s30, 0
    %p372 = por %p370, %p371
    %s374 = sadd.s32 %s373, 1
    %p377 = scmp.eq.s32.totalorder %s24, 3
    %p378 = scmp.ne.s32.totalorder %s373, %s375
    %p379 = scmp.eq.s32.totalorder %s24, 0
    %p380 = por %p378, %p379
    %p381 = scmp.ne.s32.totalorder %s373, %s375
    %p382 = scmp.eq.s32.totalorder %s29, 3
    %p383 = por %p381, %p382
    %p384 = scmp.ne.s32.totalorder %s375, %s376
    %p385 = scmp.eq.s32.totalorder %s29, 0
    %p386 = por %p384, %p385
    %p387 = scmp.ne.s32.totalorder %s375, %s376
    %p388 = scmp.eq.s32.totalorder %s30, 3
    %p389 = por %p387, %p388
    %p391 = scmp.ne.s32.totalorder %s376, %s390
    %p392 = scmp.eq.s32.totalorder %s30, 0
    %p393 = por %p391, %p392
    %s395 = sadd.s32 %s394, 1
    %p398 = scmp.eq.s32.totalorder %s24, 3
    %p399 = scmp.ne.s32.totalorder %s394, %s396
    %p400 = scmp.eq.s32.totalorder %s24, 0
    %p401 = por %p399, %p400
    %p402 = scmp.ne.s32.totalorder %s394, %s396
    %p403 = scmp.eq.s32.totalorder %s29, 3
    %p404 = por %p402, %p403
    %p405 = scmp.ne.s32.totalorder %s396, %s397
    %p406 = scmp.eq.s32.totalorder %s29, 0
    %p407 = por %p405, %p406
    %p408 = scmp.ne.s32.totalorder %s396, %s397
    %p409 = scmp.eq.s32.totalorder %s30, 3
    %p410 = por %p408, %p409
    %p412 = scmp.ne.s32.totalorder %s397, %s411
    %p413 = scmp.eq.s32.totalorder %s30, 0
    %p414 = por %p412, %p413
    %s415 = ssub.s32 %s24, %s31
    %p416 = scmp.eq.s32.totalorder %s415, 0
    %s418 = sadd.s32 %s417, 1
    %s419 = scalar_select %p416, %s417, %s418
    %p422 = pneg %p416
    %p423 = scmp.eq.s32.totalorder %s24, 3
    %p424 = por %p422, %p423
    %p425 = scmp.ne.s32.totalorder %s417, %s420
    %p426 = scmp.eq.s32.totalorder %s24, 0
    %p427 = por %p425, %p426
    %p428 = scmp.ne.s32.totalorder %s417, %s420
    %p429 = scmp.eq.s32.totalorder %s29, 3
    %p430 = por %p428, %p429
    %p431 = scmp.ne.s32.totalorder %s420, %s421
    %p432 = scmp.eq.s32.totalorder %s29, 0
    %p433 = por %p431, %p432
    %p434 = scmp.ne.s32.totalorder %s420, %s421
    %p435 = scmp.eq.s32.totalorder %s30, 3
    %p436 = por %p434, %p435
    %p438 = scmp.ne.s32.totalorder %s421, %s437
    %p439 = scmp.eq.s32.totalorder %s30, 0
    %p440 = por %p438, %p439
    %p441 = scmp.le.s32.totalorder 1, %s24
    %p442 = scmp.lt.s32.totalorder %s24, 5
    %p443 = pnand %p441, %p442
    %p444 = pneg %p443
    // Predicated region
    $region9: #{transformer_ae_forward.1} parent=5 // pred_check
      _
    $region10: #{transformer_ae_forward.1} parent=5 // pred_check_branch
      %446 = sbr.rel (%p443) target = $region12
    $region11: #{transformer_ae_forward.1} parent=5 // pred_region
      %s447 = ssub.s32 %s24, 1
      // Predicated region
      $region13: #{transformer_ae_forward.1} parent=11 // pred_check
        %p448 = pneg %p71
      $region14: #{transformer_ae_forward.1} parent=11 // pred_check_branch
        %450 = sbr.rel (%p448) target = $region16
      $region15: #{transformer_ae_forward.1} parent=11 // pred_region
        _
      $region16: #{transformer_ae_forward.1} parent=11 // pred_fallthru
        _
      // Predicated region
      $region17: #{transformer_ae_forward.1} parent=11 // pred_check
        %p451 = pneg %p92
      $region18: #{transformer_ae_forward.1} parent=11 // pred_check_branch
        %453 = sbr.rel (%p451) target = $region20
      $region19: #{transformer_ae_forward.1} parent=11 // pred_region
        _
      $region20: #{transformer_ae_forward.1} parent=11 // pred_fallthru
        _
      // Predicated region
      $region21: #{transformer_ae_forward.1} parent=11 // pred_check
        %p454 = pneg %p113
      $region22: #{transformer_ae_forward.1} parent=11 // pred_check_branch
        %456 = sbr.rel (%p454) target = $region24
      $region23: #{transformer_ae_forward.1} parent=11 // pred_region
        _
      $region24: #{transformer_ae_forward.1} parent=11 // pred_fallthru
        _
      // Predicated region
      $region25: #{transformer_ae_forward.1} parent=11 // pred_check
        %p457 = pneg %p134
      $region26: #{transformer_ae_forward.1} parent=11 // pred_check_branch
        %459 = sbr.rel (%p457) target = $region28
      $region27: #{transformer_ae_forward.1} parent=11 // pred_region
        _
      $region28: #{transformer_ae_forward.1} parent=11 // pred_fallthru
        _
      // Predicated region
      $region29: #{transformer_ae_forward.1} parent=11 // pred_check
        %p460 = pneg %p155
      $region30: #{transformer_ae_forward.1} parent=11 // pred_check_branch
        %462 = sbr.rel (%p460) target = $region32
      $region31: #{transformer_ae_forward.1} parent=11 // pred_region
        _
      $region32: #{transformer_ae_forward.1} parent=11 // pred_fallthru
        _
      // Predicated region
      $region33: #{transformer_ae_forward.1} parent=11 // pred_check
        %p463 = pneg %p176
      $region34: #{transformer_ae_forward.1} parent=11 // pred_check_branch
        %465 = sbr.rel (%p463) target = $region36
      $region35: #{transformer_ae_forward.1} parent=11 // pred_region
        _
      $region36: #{transformer_ae_forward.1} parent=11 // pred_fallthru
        _
      // Predicated region
      $region37: #{transformer_ae_forward.1} parent=11 // pred_check
        %p466 = pneg %p197
      $region38: #{transformer_ae_forward.1} parent=11 // pred_check_branch
        %468 = sbr.rel (%p466) target = $region40
      $region39: #{transformer_ae_forward.1} parent=11 // pred_region
        _
      $region40: #{transformer_ae_forward.1} parent=11 // pred_fallthru
        _
      // Predicated region
      $region41: #{transformer_ae_forward.1} parent=11 // pred_check
        %p469 = pneg %p218
      $region42: #{transformer_ae_forward.1} parent=11 // pred_check_branch
        %471 = sbr.rel (%p469) target = $region44
      $region43: #{transformer_ae_forward.1} parent=11 // pred_region
        _
      $region44: #{transformer_ae_forward.1} parent=11 // pred_fallthru
        _
      // Predicated region
      $region45: #{transformer_ae_forward.1} parent=11 // pred_check
        %p472 = pneg %p239
      $region46: #{transformer_ae_forward.1} parent=11 // pred_check_branch
        %474 = sbr.rel (%p472) target = $region48
      $region47: #{transformer_ae_forward.1} parent=11 // pred_region
        _
      $region48: #{transformer_ae_forward.1} parent=11 // pred_fallthru
        _
      // Predicated region
      $region49: #{transformer_ae_forward.1} parent=11 // pred_check
        %p475 = pneg %p260
      $region50: #{transformer_ae_forward.1} parent=11 // pred_check_branch
        %477 = sbr.rel (%p475) target = $region52
      $region51: #{transformer_ae_forward.1} parent=11 // pred_region
        _
      $region52: #{transformer_ae_forward.1} parent=11 // pred_fallthru
        _
      // Predicated region
      $region53: #{transformer_ae_forward.1} parent=11 // pred_check
        %p478 = pneg %p281
      $region54: #{transformer_ae_forward.1} parent=11 // pred_check_branch
        %480 = sbr.rel (%p478) target = $region56
      $region55: #{transformer_ae_forward.1} parent=11 // pred_region
        _
      $region56: #{transformer_ae_forward.1} parent=11 // pred_fallthru
        _
      // Predicated region
      $region57: #{transformer_ae_forward.1} parent=11 // pred_check
        %p481 = pneg %p302
      $region58: #{transformer_ae_forward.1} parent=11 // pred_check_branch
        %483 = sbr.rel (%p481) target = $region60
      $region59: #{transformer_ae_forward.1} parent=11 // pred_region
        _
      $region60: #{transformer_ae_forward.1} parent=11 // pred_fallthru
        _
      // Predicated region
      $region61: #{transformer_ae_forward.1} parent=11 // pred_check
        %p484 = pneg %p323
      $region62: #{transformer_ae_forward.1} parent=11 // pred_check_branch
        %486 = sbr.rel (%p484) target = $region64
      $region63: #{transformer_ae_forward.1} parent=11 // pred_region
        _
      $region64: #{transformer_ae_forward.1} parent=11 // pred_fallthru
        _
      // Predicated region
      $region65: #{transformer_ae_forward.1} parent=11 // pred_check
        %p487 = pneg %p344
      $region66: #{transformer_ae_forward.1} parent=11 // pred_check_branch
        %489 = sbr.rel (%p487) target = $region68
      $region67: #{transformer_ae_forward.1} parent=11 // pred_region
        _
      $region68: #{transformer_ae_forward.1} parent=11 // pred_fallthru
        _
      // Predicated region
      $region69: #{transformer_ae_forward.1} parent=11 // pred_check
        %p490 = pneg %p365
      $region70: #{transformer_ae_forward.1} parent=11 // pred_check_branch
        %492 = sbr.rel (%p490) target = $region72
      $region71: #{transformer_ae_forward.1} parent=11 // pred_region
        _
      $region72: #{transformer_ae_forward.1} parent=11 // pred_fallthru
        _
      // Predicated region
      $region73: #{transformer_ae_forward.1} parent=11 // pred_check
        %p493 = pneg %p386
      $region74: #{transformer_ae_forward.1} parent=11 // pred_check_branch
        %495 = sbr.rel (%p493) target = $region76
      $region75: #{transformer_ae_forward.1} parent=11 // pred_region
        _
      $region76: #{transformer_ae_forward.1} parent=11 // pred_fallthru
        _
      // Predicated region
      $region77: #{transformer_ae_forward.1} parent=11 // pred_check
        %p496 = pneg %p407
      $region78: #{transformer_ae_forward.1} parent=11 // pred_check_branch
        %498 = sbr.rel (%p496) target = $region80
      $region79: #{transformer_ae_forward.1} parent=11 // pred_region
        _
      $region80: #{transformer_ae_forward.1} parent=11 // pred_fallthru
        _
    $region12: #{transformer_ae_forward.1} parent=5 // pred_fallthru
      _
    %p499 = scmp.lt.s32.totalorder %s24, 4
    // Predicated region
    $region81: #{transformer_ae_forward.1} parent=5 // pred_check
      %p500 = pneg %p499
    $region82: #{transformer_ae_forward.1} parent=5 // pred_check_branch
      %502 = sbr.rel (%p500) target = $region84
    $region83: #{transformer_ae_forward.1} parent=5 // pred_region
      // Predicated region
      $region85: #{transformer_ae_forward.1} parent=83 // pred_check
        %p503 = pneg %p44
      $region86: #{transformer_ae_forward.1} parent=83 // pred_check_branch
        %505 = sbr.rel (%p503) target = $region88
      $region87: #{transformer_ae_forward.1} parent=83 // pred_region
        %p506 = scmp.lt.s32.totalorder %s24, 3
        %s507 = scalar_select %p506, %s24, 3
        %s508 = smul.addr %s507, 4
        %s509 = smul.addr %s508, 8
        %s510 = scalar_lea.vmem %s0, %s509
      $region88: #{transformer_ae_forward.1} parent=83 // pred_fallthru
        _
    $region84: #{transformer_ae_forward.1} parent=5 // pred_fallthru
      _
    %p511 = scmp.le.s32.totalorder 1, %s24
    %p512 = scmp.lt.s32.totalorder %s24, 5
    %p513 = pnand %p511, %p512
    %p514 = pneg %p513
    // Predicated region
    $region89: #{transformer_ae_forward.1} parent=5 // pred_check
      _
    $region90: #{transformer_ae_forward.1} parent=5 // pred_check_branch
      %516 = sbr.rel (%p513) target = $region92
    $region91: #{transformer_ae_forward.1} parent=5 // pred_region
      %s517 = ssub.s32 %s24, 1
      %p518 = scmp.lt.s32.totalorder %s29, 3
      %s519 = scalar_select %p518, %s29, 3
      %s520 = smul.addr %s519, 4
      %s521 = smul.addr %s520, 8
      %s522 = scalar_lea.vmem %s0, %s521
      %p523 = pneg %p50
      %p524 = pneg %p47
      %p525 = pneg %p71
      %p526 = pneg %p68
      %p527 = pneg %p92
      %p528 = pneg %p89
      %p529 = pneg %p113
      %p530 = pneg %p110
      %p531 = pneg %p134
      %p532 = pneg %p131
      %p533 = pneg %p155
      %p534 = pneg %p152
      %p535 = pneg %p176
      %p536 = pneg %p173
      %p537 = pneg %p197
      %p538 = pneg %p194
      %p539 = pneg %p218
      %p540 = pneg %p215
      %p541 = pneg %p239
      %p542 = pneg %p236
      %p543 = pneg %p260
      %p544 = pneg %p257
      %p545 = pneg %p281
      %p546 = pneg %p278
      %p547 = pneg %p302
      %p548 = pneg %p299
      %p549 = pneg %p323
      %p550 = pneg %p320
      %p551 = pneg %p344
      %p552 = pneg %p341
      %p553 = pneg %p365
      %p554 = pneg %p362
      %p555 = pneg %p386
      %p556 = pneg %p383
      %p557 = pneg %p407
      %p558 = pneg %p404
      %p559 = pneg %p433
      %p560 = pneg %p430
      %p561 = scmp.lt.s32.totalorder %s29, 3
      %s562 = scalar_select %p561, %s29, 3
      %s563 = smul.addr %s562, 4
      %s564 = smul.addr %s563, 8
      %s565 = scalar_lea.vmem %s18, %s564
      %p566 = scmp.lt.s32.totalorder %s29, 3
      %s567 = scalar_select %p566, %s29, 3
      %s568 = smul.addr %s567, 4
      %s569 = smul.addr %s568, 8
      %s570 = scalar_lea.vmem %s0, %s569
      %p571 = scmp.lt.s32.totalorder %s29, 3
      %s572 = scalar_select %p571, %s29, 3
      %s573 = smul.addr %s572, 4
      %s574 = smul.addr %s573, 8
      %s575 = scalar_lea.vmem %s18, %s574
      %v577 = vld [vmem:[%s570] sm:$0xff]
      %s578 = scalar_lea.vmem %s570, 8
      %v579 = vld [vmem:[%s578] sm:$0xff]
      %s580 = scalar_lea.vmem %s570, 16
      %v581 = vld [vmem:[%s580] sm:$0xff]
      %s582 = scalar_lea.vmem %s570, 24
      %v583 = vld [vmem:[%s582] sm:$0xff]
      %584 = vrot.lane.b32.xlu0 %v583, 1
      %v585 = vpop.permute.xlu0 %584
      %v586 = vlaneseq
      %v587 = vand.u32 %v586, 127
      %vm588 = vcmp.eq.s32.totalorder %v587, 0
      %v589 = vsel %vm588, 0.0, %v585
      %v590 = vld [vmem:[%s2] sm:$0xff]
      %v591 = vld [vmem:[%s2 + $0x8] sm:$0xff]
      %v592 = vld [vmem:[%s1] sm:$0xf]
      %v593 = vld [vmem:[%s1 + $0x4] sm:$0xf]
      %v594 = vpack.c.bf16 %v577, %v589
      %v595 = vpack.c.bf16 %v579, %v579
      %597 = vset.pattern.permute.xlu0 0
      %598 = vperm.xlu0 %597, %v590
      %v599 = vpop.permute.xlu0 %598
      %602 = vset.pattern.permute.xlu0 0
      %603 = vperm.xlu0 %602, %v591
      %v604 = vpop.permute.xlu0 %603
      %v608 = vunpack.c.l.b16 %v592
      %v609 = vunpack.c.l.b16 %v593
      %v610 = vpack.c.b16 %v609, %v608
      %vm611 = vcmask 195584
      %v613 = vsel %vm611, %v610, 0
      %vm615 = vcmask 1043456
      %v617 = vsel %vm615, %v595, 0
      %619 = vmatprep.subr.bf16.mxu0 0
      %620 = vmatpush1.bf16.msra.mxu0 %v594
      %621 = vmatprep.subr.bf16.mxu0 0
      %622 = vmatpush1.bf16.msra.mxu0 %v617
      %623 = vmatprep.subr.bf16.mxu0 0
      %624 = vmatpush1.bf16.msra.mxu0 0
      %625 = vmatprep.subr.bf16.mxu0 0
      %626 = vmatpush1.bf16.msra.mxu0 0
      %627 = vmatprep.subr.bf16.mxu0 0
      %628 = vmatpush1.bf16.msra.mxu0 0
      %629 = vmatprep.subr.bf16.mxu0 0
      %630 = vmatpush1.bf16.msra.mxu0 0
      %631 = vmatprep.subr.bf16.mxu0 0
      %632 = vmatpush1.bf16.msra.mxu0 0
      %633 = vmatprep.subr.bf16.mxu0 0
      %634 = vmatpush1.bf16.msra.mxu0 0
      %635 = vmatprep.subr.bf16.mxu0 0
      %636 = vmatpush1.bf16.msra.mxu0 0
      %637 = vmatprep.subr.bf16.mxu0 0
      %638 = vmatpush1.bf16.msra.mxu0 0
      %639 = vmatprep.subr.bf16.mxu0 0
      %640 = vmatpush1.bf16.msra.mxu0 0
      %641 = vmatprep.subr.bf16.mxu0 0
      %642 = vmatpush1.bf16.msra.mxu0 0
      %643 = vmatprep.subr.bf16.mxu0 0
      %644 = vmatpush1.bf16.msra.mxu0 0
      %645 = vmatprep.subr.bf16.mxu0 0
      %646 = vmatpush1.bf16.msra.mxu0 0
      %647 = vmatprep.subr.bf16.mxu0 0
      %648 = vmatpush1.bf16.msra.mxu0 0
      %649 = vmatprep.subr.bf16.mxu0 0
      %650 = vmatpush1.bf16.msra.mxu0 0
      %651 = vmatprep.mubr.bf16.mxu0 0
      %652 = vmatmul.mubr.bf16.gmra.mrb[0].mxu0 %v613
      %v653 = vpop.f32.mrb[0].mxu0
      %v654 = vadd.f32 %v599, %v653
      %v655 = vpop.f32.mrb[0].mxu0
      %v656 = vpop.f32.mrb[0].mxu0
      %v657 = vadd.f32 %v604, %v656
      %v658 = vpop.f32.mrb[0].mxu0
      %659 = vdwg.mxu0
      %v660 = vmax.f32 %v654, 0.0
      %v661 = vmax.f32 %v657, 0.0
      %662 = vset.pattern.permute.xlu0 1
      %663 = vperm.xlu0 %662, %v590
      %v664 = vpop.permute.xlu0 %663
      %666 = vset.pattern.permute.xlu0 1
      %667 = vperm.xlu0 %666, %v591
      %v668 = vpop.permute.xlu0 %667
      %v670 = vmul.f32 %v660, %v664
      %v671 = vmul.f32 %v661, %v668
      %672 = vset.pattern.permute.xlu0 2
      %673 = vperm.xlu0 %672, %v590
      %v674 = vpop.permute.xlu0 %673
      %676 = vset.pattern.permute.xlu0 2
      %677 = vperm.xlu0 %676, %v591
      %v678 = vpop.permute.xlu0 %677
      %v680 = vadd.f32 %v670, %v674
      %v681 = vadd.f32 %v671, %v678
      %v682 = vpack.c.bf16 %v581, %v579
      %v683 = vpack.c.bf16 %v583, %v583
      %v685 = vsel %vm615, %v683, 0
      %687 = vmatprep.subr.bf16.mxu0 0
      %688 = vmatpush1.bf16.msra.mxu0 %v682
      %689 = vmatprep.subr.bf16.mxu0 0
      %690 = vmatpush1.bf16.msra.mxu0 %v685
      %691 = vmatprep.subr.bf16.mxu0 0
      %692 = vmatpush1.bf16.msra.mxu0 0
      %693 = vmatprep.subr.bf16.mxu0 0
      %694 = vmatpush1.bf16.msra.mxu0 0
      %695 = vmatprep.subr.bf16.mxu0 0
      %696 = vmatpush1.bf16.msra.mxu0 0
      %697 = vmatprep.subr.bf16.mxu0 0
      %698 = vmatpush1.bf16.msra.mxu0 0
      %699 = vmatprep.subr.bf16.mxu0 0
      %700 = vmatpush1.bf16.msra.mxu0 0
      %701 = vmatprep.subr.bf16.mxu0 0
      %702 = vmatpush1.bf16.msra.mxu0 0
      %703 = vmatprep.subr.bf16.mxu0 0
      %704 = vmatpush1.bf16.msra.mxu0 0
      %705 = vmatprep.subr.bf16.mxu0 0
      %706 = vmatpush1.bf16.msra.mxu0 0
      %707 = vmatprep.subr.bf16.mxu0 0
      %708 = vmatpush1.bf16.msra.mxu0 0
      %709 = vmatprep.subr.bf16.mxu0 0
      %710 = vmatpush1.bf16.msra.mxu0 0
      %711 = vmatprep.subr.bf16.mxu0 0
      %712 = vmatpush1.bf16.msra.mxu0 0
      %713 = vmatprep.subr.bf16.mxu0 0
      %714 = vmatpush1.bf16.msra.mxu0 0
      %715 = vmatprep.subr.bf16.mxu0 0
      %716 = vmatpush1.bf16.msra.mxu0 0
      %717 = vmatprep.subr.bf16.mxu0 0
      %718 = vmatpush1.bf16.msra.mxu0 0
      %719 = vmatprep.mubr.bf16.mxu0 0
      %720 = vmatmul.mubr.bf16.gmra.mrb[0].mxu0 %v613
      %v721 = vpop.f32.mrb[0].mxu0
      %v722 = vadd.f32 %v599, %v721
      %v723 = vpop.f32.mrb[0].mxu0
      %v724 = vpop.f32.mrb[0].mxu0
      %v725 = vadd.f32 %v604, %v724
      %v726 = vpop.f32.mrb[0].mxu0
      %727 = vdwg.mxu0
      %v728 = vmax.f32 %v722, 0.0
      %v729 = vmax.f32 %v725, 0.0
      %v730 = vmul.f32 %v728, %v664
      %v731 = vmul.f32 %v729, %v668
      %v732 = vadd.f32 %v730, %v674
      %v733 = vadd.f32 %v731, %v678
      %734 = vrot.lane.b32.xlu0 %v732, 1
      %v735 = vpop.permute.xlu0 %734
      %736 = vrot.lane.b32.xlu0 %v733, 1
      %v737 = vpop.permute.xlu0 %736
      %v738 = vsel %vm588, 0.0, %v735
      %v739 = vsel %vm588, 0.0, %v737
      %v740 = vld [vmem:[%s4] sm:$0xff]
      %v741 = vld [vmem:[%s4 + $0x8] sm:$0xff]
      %v742 = vld [vmem:[%s4 + $0x10] sm:$0xff]
      %v743 = vld [vmem:[%s4 + $0x18] sm:$0xff]
      %v744 = vld [vmem:[%s3] sm:$0xf]
      %v745 = vld [vmem:[%s3 + $0x4] sm:$0xf]
      %v746 = vld [vmem:[%s3 + $0x8] sm:$0xf]
      %v747 = vld [vmem:[%s3 + $0xc] sm:$0xf]
      %v748 = vpack.c.bf16 %v739, %v738
      %v749 = vpack.c.bf16 %v681, %v680
      %v750 = vpack.c.bf16 %v733, %v732
      %752 = vset.pattern.permute.xlu0 0
      %753 = vperm.xlu0 %752, %v740
      %v754 = vpop.permute.xlu0 %753
      %757 = vset.pattern.permute.xlu0 0
      %758 = vperm.xlu0 %757, %v741
      %v759 = vpop.permute.xlu0 %758
      %762 = vset.pattern.permute.xlu0 0
      %763 = vperm.xlu0 %762, %v742
      %v764 = vpop.permute.xlu0 %763
      %767 = vset.pattern.permute.xlu0 0
      %768 = vperm.xlu0 %767, %v743
      %v769 = vpop.permute.xlu0 %768
      %v775 = vunpack.c.l.b16 %v744
      %v776 = vunpack.c.l.b16 %v745
      %v777 = vunpack.c.l.b16 %v746
      %v778 = vunpack.c.l.b16 %v747
      %v779 = vpack.c.b16 %v776, %v775
      %v780 = vpack.c.b16 %v778, %v777
      %vm781 = vcmask 392192
      %v783 = vsel %vm781, %v779, 0
      %v786 = vsel %vm781, %v780, 0
      %788 = vmatprep.subr.bf16.mxu0 0
      %789 = vmatpush1.bf16.msra.mxu0 %v748
      %790 = vmatprep.subr.bf16.mxu0 0
      %791 = vmatpush1.bf16.msra.mxu0 %v749
      %792 = vmatprep.subr.bf16.mxu0 0
      %793 = vmatpush1.bf16.msra.mxu0 %v750
      %794 = vmatprep.subr.bf16.mxu0 0
      %795 = vmatpush1.bf16.msra.mxu0 0
      %796 = vmatprep.subr.bf16.mxu0 0
      %797 = vmatpush1.bf16.msra.mxu0 0
      %798 = vmatprep.subr.bf16.mxu0 0
      %799 = vmatpush1.bf16.msra.mxu0 0
      %800 = vmatprep.subr.bf16.mxu0 0
      %801 = vmatpush1.bf16.msra.mxu0 0
      %802 = vmatprep.subr.bf16.mxu0 0
      %803 = vmatpush1.bf16.msra.mxu0 0
      %804 = vmatprep.subr.bf16.mxu0 0
      %805 = vmatpush1.bf16.msra.mxu0 0
      %806 = vmatprep.subr.bf16.mxu0 0
      %807 = vmatpush1.bf16.msra.mxu0 0
      %808 = vmatprep.subr.bf16.mxu0 0
      %809 = vmatpush1.bf16.msra.mxu0 0
      %810 = vmatprep.subr.bf16.mxu0 0
      %811 = vmatpush1.bf16.msra.mxu0 0
      %812 = vmatprep.subr.bf16.mxu0 0
      %813 = vmatpush1.bf16.msra.mxu0 0
      %814 = vmatprep.subr.bf16.mxu0 0
      %815 = vmatpush1.bf16.msra.mxu0 0
      %816 = vmatprep.subr.bf16.mxu0 0
      %817 = vmatpush1.bf16.msra.mxu0 0
      %818 = vmatprep.subr.bf16.mxu0 0
      %819 = vmatpush1.bf16.msra.mxu0 0
      %820 = vmatprep.mubr.bf16.mxu0 0
      %821 = vmatmul.mubr.bf16.gmra.mrb[0].mxu0 %v783
      %v822 = vpop.f32.mrb[0].mxu0
      %v823 = vadd.f32 %v754, %v822
      %v824 = vpop.f32.mrb[0].mxu0
      %v825 = vpop.f32.mrb[0].mxu0
      %v826 = vadd.f32 %v759, %v825
      %v827 = vpop.f32.mrb[0].mxu0
      %828 = vmatprep.mubr.bf16.mxu0 0
      %829 = vmatmul.mubr.bf16.gmra.mrb[0].mxu0 %v786
      %v830 = vpop.f32.mrb[0].mxu0
      %v831 = vadd.f32 %v764, %v830
      %v832 = vpop.f32.mrb[0].mxu0
      %v833 = vpop.f32.mrb[0].mxu0
      %v834 = vadd.f32 %v769, %v833
      %v835 = vpop.f32.mrb[0].mxu0
      %836 = vdwg.mxu0
      %v837 = vmax.f32 %v823, 0.0
      %v838 = vmax.f32 %v826, 0.0
      %v839 = vmax.f32 %v831, 0.0
      %v840 = vmax.f32 %v834, 0.0
      %841 = vset.pattern.permute.xlu0 1
      %842 = vperm.xlu0 %841, %v740
      %v843 = vpop.permute.xlu0 %842
      %845 = vset.pattern.permute.xlu0 1
      %846 = vperm.xlu0 %845, %v741
      %v847 = vpop.permute.xlu0 %846
      %849 = vset.pattern.permute.xlu0 1
      %850 = vperm.xlu0 %849, %v742
      %v851 = vpop.permute.xlu0 %850
      %853 = vset.pattern.permute.xlu0 1
      %854 = vperm.xlu0 %853, %v743
      %v855 = vpop.permute.xlu0 %854
      %v857 = vmul.f32 %v837, %v843
      %v858 = vmul.f32 %v838, %v847
      %v859 = vmul.f32 %v839, %v851
      %v860 = vmul.f32 %v840, %v855
      %861 = vset.pattern.permute.xlu0 2
      %862 = vperm.xlu0 %861, %v740
      %v863 = vpop.permute.xlu0 %862
      %865 = vset.pattern.permute.xlu0 2
      %866 = vperm.xlu0 %865, %v741
      %v867 = vpop.permute.xlu0 %866
      %869 = vset.pattern.permute.xlu0 2
      %870 = vperm.xlu0 %869, %v742
      %v871 = vpop.permute.xlu0 %870
      %873 = vset.pattern.permute.xlu0 2
      %874 = vperm.xlu0 %873, %v743
      %v875 = vpop.permute.xlu0 %874
      %v877 = vadd.f32 %v857, %v863
      %v878 = vadd.f32 %v858, %v867
      %v879 = vadd.f32 %v859, %v871
      %v880 = vadd.f32 %v860, %v875
      %v881 = vld [vmem:[%s11] sm:$0xff]
      %v882 = vld [vmem:[%s11 + $0x8] sm:$0xff]
      %v883 = vld [vmem:[%s11 + $0x10] sm:$0xff]
      %v884 = vld [vmem:[%s11 + $0x18] sm:$0xff]
      %v885 = vld [vmem:[%s5] sm:$0xf]
      %v886 = vld [vmem:[%s5 + $0x4] sm:$0xf]
      %v887 = vld [vmem:[%s5 + $0x8] sm:$0xf]
      %v888 = vld [vmem:[%s5 + $0xc] sm:$0xf]
      %v889 = vld [vmem:[%s5 + $0x10] sm:$0xf]
      %v890 = vld [vmem:[%s5 + $0x14] sm:$0xf]
      %v891 = vld [vmem:[%s5 + $0x18] sm:$0xf]
      %v892 = vld [vmem:[%s5 + $0x1c] sm:$0xf]
      %v893 = vld [vmem:[%s5 + $0x20] sm:$0xf]
      %v894 = vld [vmem:[%s5 + $0x24] sm:$0xf]
      %v895 = vld [vmem:[%s5 + $0x28] sm:$0xf]
      %v896 = vld [vmem:[%s5 + $0x2c] sm:$0xf]
      %v897 = vpack.c.bf16 %v878, %v877
      %v898 = vpack.c.bf16 %v880, %v879
      %v899 = vld [vmem:[%s6] sm:$0xff]
      %v900 = vld [vmem:[%s6 + $0x8] sm:$0xff]
      %v901 = vld [vmem:[%s6 + $0x10] sm:$0xff]
      %v902 = vld [vmem:[%s6 + $0x18] sm:$0xff]
      %v903 = vld [vmem:[%s6 + $0x20] sm:$0xff]
      %v904 = vld [vmem:[%s6 + $0x28] sm:$0xff]
      %v905 = vld [vmem:[%s6 + $0x30] sm:$0xff]
      %v906 = vld [vmem:[%s6 + $0x38] sm:$0xff]
      %v907 = vld [vmem:[%s6 + $0x40] sm:$0xff]
      %v908 = vld [vmem:[%s6 + $0x48] sm:$0xff]
      %v909 = vld [vmem:[%s6 + $0x50] sm:$0xff]
      %v910 = vld [vmem:[%s6 + $0x58] sm:$0xff]
      %912 = vset.pattern.permute.xlu0 0
      %913 = vperm.xlu0 %912, %v899
      %v914 = vpop.permute.xlu0 %913
      %917 = vset.pattern.permute.xlu0 0
      %918 = vperm.xlu0 %917, %v900
      %v919 = vpop.permute.xlu0 %918
      %922 = vset.pattern.permute.xlu0 0
      %923 = vperm.xlu0 %922, %v901
      %v924 = vpop.permute.xlu0 %923
      %927 = vset.pattern.permute.xlu0 0
      %928 = vperm.xlu0 %927, %v902
      %v929 = vpop.permute.xlu0 %928
      %932 = vset.pattern.permute.xlu0 0
      %933 = vperm.xlu0 %932, %v903
      %v934 = vpop.permute.xlu0 %933
      %937 = vset.pattern.permute.xlu0 0
      %938 = vperm.xlu0 %937, %v904
      %v939 = vpop.permute.xlu0 %938
      %942 = vset.pattern.permute.xlu0 0
      %943 = vperm.xlu0 %942, %v905
      %v944 = vpop.permute.xlu0 %943
      %947 = vset.pattern.permute.xlu0 0
      %948 = vperm.xlu0 %947, %v906
      %v949 = vpop.permute.xlu0 %948
      %952 = vset.pattern.permute.xlu0 0
      %953 = vperm.xlu0 %952, %v907
      %v954 = vpop.permute.xlu0 %953
      %957 = vset.pattern.permute.xlu0 0
      %958 = vperm.xlu0 %957, %v908
      %v959 = vpop.permute.xlu0 %958
      %962 = vset.pattern.permute.xlu0 0
      %963 = vperm.xlu0 %962, %v909
      %v964 = vpop.permute.xlu0 %963
      %967 = vset.pattern.permute.xlu0 0
      %968 = vperm.xlu0 %967, %v910
      %v969 = vpop.permute.xlu0 %968
      %v983 = vunpack.c.l.b16 %v885
      %v984 = vunpack.c.l.b16 %v886
      %v985 = vunpack.c.l.b16 %v887
      %v986 = vunpack.c.l.b16 %v888
      %v987 = vunpack.c.l.b16 %v889
      %v988 = vunpack.c.l.b16 %v890
      %v989 = vunpack.c.l.b16 %v891
      %v990 = vunpack.c.l.b16 %v892
      %v991 = vunpack.c.l.b16 %v893
      %v992 = vunpack.c.l.b16 %v894
      %v993 = vunpack.c.l.b16 %v895
      %v994 = vunpack.c.l.b16 %v896
      %v995 = vpack.c.b16 %v984, %v983
      %v996 = vpack.c.b16 %v986, %v985
      %v997 = vpack.c.b16 %v988, %v987
      %v998 = vpack.c.b16 %v990, %v989
      %v999 = vpack.c.b16 %v992, %v991
      %v1000 = vpack.c.b16 %v994, %v993
      %vm1001 = vcmask 261120
      %v1003 = vsel %vm1001, %v995, 0
      %v1006 = vsel %vm1001, %v996, 0
      %v1009 = vsel %vm1001, %v997, 0
      %v1012 = vsel %vm1001, %v998, 0
      %v1015 = vsel %vm1001, %v999, 0
      %v1018 = vsel %vm1001, %v1000, 0
      %1020 = vmatprep.subr.bf16.mxu0 0
      %1021 = vmatpush1.bf16.msra.mxu0 %v897
      %1022 = vmatprep.subr.bf16.mxu0 0
      %1023 = vmatpush1.bf16.msra.mxu0 %v898
      %1024 = vmatprep.subr.bf16.mxu0 0
      %1025 = vmatpush1.bf16.msra.mxu0 0
      %1026 = vmatprep.subr.bf16.mxu0 0
      %1027 = vmatpush1.bf16.msra.mxu0 0
      %1028 = vmatprep.subr.bf16.mxu0 0
      %1029 = vmatpush1.bf16.msra.mxu0 0
      %1030 = vmatprep.subr.bf16.mxu0 0
      %1031 = vmatpush1.bf16.msra.mxu0 0
      %1032 = vmatprep.subr.bf16.mxu0 0
      %1033 = vmatpush1.bf16.msra.mxu0 0
      %1034 = vmatprep.subr.bf16.mxu0 0
      %1035 = vmatpush1.bf16.msra.mxu0 0
      %1036 = vmatprep.subr.bf16.mxu0 0
      %1037 = vmatpush1.bf16.msra.mxu0 0
      %1038 = vmatprep.subr.bf16.mxu0 0
      %1039 = vmatpush1.bf16.msra.mxu0 0
      %1040 = vmatprep.subr.bf16.mxu0 0
      %1041 = vmatpush1.bf16.msra.mxu0 0
      %1042 = vmatprep.subr.bf16.mxu0 0
      %1043 = vmatpush1.bf16.msra.mxu0 0
      %1044 = vmatprep.subr.bf16.mxu0 0
      %1045 = vmatpush1.bf16.msra.mxu0 0
      %1046 = vmatprep.subr.bf16.mxu0 0
      %1047 = vmatpush1.bf16.msra.mxu0 0
      %1048 = vmatprep.subr.bf16.mxu0 0
      %1049 = vmatpush1.bf16.msra.mxu0 0
      %1050 = vmatprep.subr.bf16.mxu0 0
      %1051 = vmatpush1.bf16.msra.mxu0 0
      %1052 = vmatprep.mubr.bf16.mxu0 0
      %1053 = vmatmul.mubr.bf16.gmra.mrb[0].mxu0 %v1003
      %v1054 = vpop.f32.mrb[0].mxu0
      %v1055 = vadd.f32 %v914, %v1054
      %v1056 = vpop.f32.mrb[0].mxu0
      %v1057 = vpop.f32.mrb[0].mxu0
      %v1058 = vadd.f32 %v919, %v1057
      %v1059 = vpop.f32.mrb[0].mxu0
      %1060 = vmatprep.mubr.bf16.mxu0 0
      %1061 = vmatmul.mubr.bf16.gmra.mrb[0].mxu0 %v1006
      %v1062 = vpop.f32.mrb[0].mxu0
      %v1063 = vadd.f32 %v924, %v1062
      %v1064 = vpop.f32.mrb[0].mxu0
      %v1065 = vpop.f32.mrb[0].mxu0
      %v1066 = vadd.f32 %v929, %v1065
      %v1067 = vpop.f32.mrb[0].mxu0
      %1068 = vmatprep.mubr.bf16.mxu0 0
      %1069 = vmatmul.mubr.bf16.gmra.mrb[0].mxu0 %v1009
      %v1070 = vpop.f32.mrb[0].mxu0
      %v1071 = vadd.f32 %v934, %v1070
      %v1072 = vpop.f32.mrb[0].mxu0
      %v1073 = vpop.f32.mrb[0].mxu0
      %v1074 = vadd.f32 %v939, %v1073
      %v1075 = vpop.f32.mrb[0].mxu0
      %1076 = vmatprep.mubr.bf16.mxu0 0
      %1077 = vmatmul.mubr.bf16.gmra.mrb[0].mxu0 %v1012
      %v1078 = vpop.f32.mrb[0].mxu0
      %v1079 = vadd.f32 %v944, %v1078
      %v1080 = vpop.f32.mrb[0].mxu0
      %v1081 = vpop.f32.mrb[0].mxu0
      %v1082 = vadd.f32 %v949, %v1081
      %v1083 = vpop.f32.mrb[0].mxu0
      %1084 = vmatprep.mubr.bf16.mxu0 0
      %1085 = vmatmul.mubr.bf16.gmra.mrb[0].mxu0 %v1015
      %v1086 = vpop.f32.mrb[0].mxu0
      %v1087 = vadd.f32 %v954, %v1086
      %v1088 = vpop.f32.mrb[0].mxu0
      %v1089 = vpop.f32.mrb[0].mxu0
      %v1090 = vadd.f32 %v959, %v1089
      %v1091 = vpop.f32.mrb[0].mxu0
      %1092 = vmatprep.mubr.bf16.mxu0 0
      %1093 = vmatmul.mubr.bf16.gmra.mrb[0].mxu0 %v1018
      %v1094 = vpop.f32.mrb[0].mxu0
      %v1095 = vadd.f32 %v964, %v1094
      %v1096 = vpop.f32.mrb[0].mxu0
      %v1097 = vpop.f32.mrb[0].mxu0
      %v1098 = vadd.f32 %v969, %v1097
      %v1099 = vpop.f32.mrb[0].mxu0
      %1100 = vdwg.mxu0
      %1101 = vxpose.xlu0.b32.start [1/16] %v1055, 128
      %1102 = vxpose.xlu0.b32.cont [2/16] 0.0, 128
      %1103 = vxpose.xlu0.b32.cont [3/16] 0.0, 128
      %1104 = vxpose.xlu0.b32.cont [4/16] 0.0, 128
      %1105 = vxpose.xlu0.b32.cont [5/16] 0.0, 128
      %1106 = vxpose.xlu0.b32.cont [6/16] 0.0, 128
      %1107 = vxpose.xlu0.b32.cont [7/16] 0.0, 128
      %1108 = vxpose.xlu0.b32.cont [8/16] 0.0, 128
      %1109 = vxpose.xlu0.b32.cont [9/16] 0.0, 128
      %1110 = vxpose.xlu0.b32.cont [10/16] 0.0, 128
      %1111 = vxpose.xlu0.b32.cont [11/16] 0.0, 128
      %1112 = vxpose.xlu0.b32.cont [12/16] 0.0, 128
      %1113 = vxpose.xlu0.b32.cont [13/16] 0.0, 128
      %1114 = vxpose.xlu0.b32.cont [14/16] 0.0, 128
      %1115 = vxpose.xlu0.b32.cont [15/16] 0.0, 128
      %1116 = vxpose.xlu0.b32.end [16/16] 0.0, 128
      %v1117 = vpop.trf.xlu0
      %v1118 = vpop.trf.xlu0
      %v1119 = vpop.trf.xlu0
      %v1120 = vpop.trf.xlu0
      %v1121 = vpop.trf.xlu0
      %v1122 = vpop.trf.xlu0
      %v1123 = vpop.trf.xlu0
      %v1124 = vpop.trf.xlu0
      %v1125 = vpop.trf.xlu0
      %v1126 = vpop.trf.xlu0
      %v1127 = vpop.trf.xlu0
      %v1128 = vpop.trf.xlu0
      %v1129 = vpop.trf.xlu0
      %v1130 = vpop.trf.xlu0
      %v1131 = vpop.trf.xlu0
      %v1132 = vpop.trf.xlu0
      %v1134 = vrot.slane %v1055, 4
      %1136 = vxpose.xlu0.b32.start [1/16] %v1134, 128
      %1137 = vxpose.xlu0.b32.cont [2/16] 0.0, 128
      %1138 = vxpose.xlu0.b32.cont [3/16] 0.0, 128
      %1139 = vxpose.xlu0.b32.cont [4/16] 0.0, 128
      %1140 = vxpose.xlu0.b32.cont [5/16] 0.0, 128
      %1141 = vxpose.xlu0.b32.cont [6/16] 0.0, 128
      %1142 = vxpose.xlu0.b32.cont [7/16] 0.0, 128
      %1143 = vxpose.xlu0.b32.cont [8/16] 0.0, 128
      %1144 = vxpose.xlu0.b32.cont [9/16] 0.0, 128
      %1145 = vxpose.xlu0.b32.cont [10/16] 0.0, 128
      %1146 = vxpose.xlu0.b32.cont [11/16] 0.0, 128
      %1147 = vxpose.xlu0.b32.cont [12/16] 0.0, 128
      %1148 = vxpose.xlu0.b32.cont [13/16] 0.0, 128
      %1149 = vxpose.xlu0.b32.cont [14/16] 0.0, 128
      %1150 = vxpose.xlu0.b32.cont [15/16] 0.0, 128
      %1151 = vxpose.xlu0.b32.end [16/16] 0.0, 128
      %v1152 = vpop.trf.xlu0
      %v1153 = vpop.trf.xlu0
      %v1154 = vpop.trf.xlu0
      %v1155 = vpop.trf.xlu0
      %v1156 = vpop.trf.xlu0
      %v1157 = vpop.trf.xlu0
      %v1158 = vpop.trf.xlu0
      %v1159 = vpop.trf.xlu0
      %v1160 = vpop.trf.xlu0
      %v1161 = vpop.trf.xlu0
      %v1162 = vpop.trf.xlu0
      %v1163 = vpop.trf.xlu0
      %v1164 = vpop.trf.xlu0
      %v1165 = vpop.trf.xlu0
      %v1166 = vpop.trf.xlu0
      %v1167 = vpop.trf.xlu0
      %1168 = vxpose.xlu0.b32.start [1/16] %v1058, 128
      %1169 = vxpose.xlu0.b32.cont [2/16] 0.0, 128
      %1170 = vxpose.xlu0.b32.cont [3/16] 0.0, 128
      %1171 = vxpose.xlu0.b32.cont [4/16] 0.0, 128
      %1172 = vxpose.xlu0.b32.cont [5/16] 0.0, 128
      %1173 = vxpose.xlu0.b32.cont [6/16] 0.0, 128
      %1174 = vxpose.xlu0.b32.cont [7/16] 0.0, 128
      %1175 = vxpose.xlu0.b32.cont [8/16] 0.0, 128
      %1176 = vxpose.xlu0.b32.cont [9/16] 0.0, 128
      %1177 = vxpose.xlu0.b32.cont [10/16] 0.0, 128
      %1178 = vxpose.xlu0.b32.cont [11/16] 0.0, 128
      %1179 = vxpose.xlu0.b32.cont [12/16] 0.0, 128
      %1180 = vxpose.xlu0.b32.cont [13/16] 0.0, 128
      %1181 = vxpose.xlu0.b32.cont [14/16] 0.0, 128
      %1182 = vxpose.xlu0.b32.cont [15/16] 0.0, 128
      %1183 = vxpose.xlu0.b32.end [16/16] 0.0, 128
      %v1184 = vpop.trf.xlu0
      %v1185 = vpop.trf.xlu0
      %v1186 = vpop.trf.xlu0
      %v1187 = vpop.trf.xlu0
      %v1188 = vpop.trf.xlu0
      %v1189 = vpop.trf.xlu0
      %v1190 = vpop.trf.xlu0
      %v1191 = vpop.trf.xlu0
      %v1192 = vpop.trf.xlu0
      %v1193 = vpop.trf.xlu0
      %v1194 = vpop.trf.xlu0
      %v1195 = vpop.trf.xlu0
      %v1196 = vpop.trf.xlu0
      %v1197 = vpop.trf.xlu0
      %v1198 = vpop.trf.xlu0
      %v1199 = vpop.trf.xlu0
      %v1201 = vrot.slane %v1058, 4
      %1203 = vxpose.xlu0.b32.start [1/16] %v1201, 128
      %1204 = vxpose.xlu0.b32.cont [2/16] 0.0, 128
      %1205 = vxpose.xlu0.b32.cont [3/16] 0.0, 128
      %1206 = vxpose.xlu0.b32.cont [4/16] 0.0, 128
      %1207 = vxpose.xlu0.b32.cont [5/16] 0.0, 128
      %1208 = vxpose.xlu0.b32.cont [6/16] 0.0, 128
      %1209 = vxpose.xlu0.b32.cont [7/16] 0.0, 128
      %1210 = vxpose.xlu0.b32.cont [8/16] 0.0, 128
      %1211 = vxpose.xlu0.b32.cont [9/16] 0.0, 128
      %1212 = vxpose.xlu0.b32.cont [10/16] 0.0, 128
      %1213 = vxpose.xlu0.b32.cont [11/16] 0.0, 128
      %1214 = vxpose.xlu0.b32.cont [12/16] 0.0, 128
      %1215 = vxpose.xlu0.b32.cont [13/16] 0.0, 128
      %1216 = vxpose.xlu0.b32.cont [14/16] 0.0, 128
      %1217 = vxpose.xlu0.b32.cont [15/16] 0.0, 128
      %1218 = vxpose.xlu0.b32.end [16/16] 0.0, 128
      %v1219 = vpop.trf.xlu0
      %v1220 = vpop.trf.xlu0
      %v1221 = vpop.trf.xlu0
      %v1222 = vpop.trf.xlu0
      %v1223 = vpop.trf.xlu0
      %v1224 = vpop.trf.xlu0
      %v1225 = vpop.trf.xlu0
      %v1226 = vpop.trf.xlu0
      %v1227 = vpop.trf.xlu0
      %v1228 = vpop.trf.xlu0
      %v1229 = vpop.trf.xlu0
      %v1230 = vpop.trf.xlu0
      %v1231 = vpop.trf.xlu0
      %v1232 = vpop.trf.xlu0
      %v1233 = vpop.trf.xlu0
      %v1234 = vpop.trf.xlu0
      %1235 = vxpose.xlu0.b32.start [1/16] %v1063, 128
      %1236 = vxpose.xlu0.b32.cont [2/16] 0.0, 128
      %1237 = vxpose.xlu0.b32.cont [3/16] 0.0, 128
      %1238 = vxpose.xlu0.b32.cont [4/16] 0.0, 128
      %1239 = vxpose.xlu0.b32.cont [5/16] 0.0, 128
      %1240 = vxpose.xlu0.b32.cont [6/16] 0.0, 128
      %1241 = vxpose.xlu0.b32.cont [7/16] 0.0, 128
      %1242 = vxpose.xlu0.b32.cont [8/16] 0.0, 128
      %1243 = vxpose.xlu0.b32.cont [9/16] 0.0, 128
      %1244 = vxpose.xlu0.b32.cont [10/16] 0.0, 128
      %1245 = vxpose.xlu0.b32.cont [11/16] 0.0, 128
      %1246 = vxpose.xlu0.b32.cont [12/16] 0.0, 128
      %1247 = vxpose.xlu0.b32.cont [13/16] 0.0, 128
      %1248 = vxpose.xlu0.b32.cont [14/16] 0.0, 128
      %1249 = vxpose.xlu0.b32.cont [15/16] 0.0, 128
      %1250 = vxpose.xlu0.b32.end [16/16] 0.0, 128
      %v1251 = vpop.trf.xlu0
      %v1252 = vpop.trf.xlu0
      %v1253 = vpop.trf.xlu0
      %v1254 = vpop.trf.xlu0
      %v1255 = vpop.trf.xlu0
      %v1256 = vpop.trf.xlu0
      %v1257 = vpop.trf.xlu0
      %v1258 = vpop.trf.xlu0
      %v1259 = vpop.trf.xlu0
      %v1260 = vpop.trf.xlu0
      %v1261 = vpop.trf.xlu0
      %v1262 = vpop.trf.xlu0
      %v1263 = vpop.trf.xlu0
      %v1264 = vpop.trf.xlu0
      %v1265 = vpop.trf.xlu0
      %v1266 = vpop.trf.xlu0
      %v1268 = vrot.slane %v1063, 4
      %1270 = vxpose.xlu0.b32.start [1/16] %v1268, 128
      %1271 = vxpose.xlu0.b32.cont [2/16] 0.0, 128
      %1272 = vxpose.xlu0.b32.cont [3/16] 0.0, 128
      %1273 = vxpose.xlu0.b32.cont [4/16] 0.0, 128
      %1274 = vxpose.xlu0.b32.cont [5/16] 0.0, 128
      %1275 = vxpose.xlu0.b32.cont [6/16] 0.0, 128
      %1276 = vxpose.xlu0.b32.cont [7/16] 0.0, 128
      %1277 = vxpose.xlu0.b32.cont [8/16] 0.0, 128
      %1278 = vxpose.xlu0.b32.cont [9/16] 0.0, 128
      %1279 = vxpose.xlu0.b32.cont [10/16] 0.0, 128
      %1280 = vxpose.xlu0.b32.cont [11/16] 0.0, 128
      %1281 = vxpose.xlu0.b32.cont [12/16] 0.0, 128
      %1282 = vxpose.xlu0.b32.cont [13/16] 0.0, 128
      %1283 = vxpose.xlu0.b32.cont [14/16] 0.0, 128
      %1284 = vxpose.xlu0.b32.cont [15/16] 0.0, 128
      %1285 = vxpose.xlu0.b32.end [16/16] 0.0, 128
      %v1286 = vpop.trf.xlu0
      %v1287 = vpop.trf.xlu0
      %v1288 = vpop.trf.xlu0
      %v1289 = vpop.trf.xlu0
      %v1290 = vpop.trf.xlu0
      %v1291 = vpop.trf.xlu0
      %v1292 = vpop.trf.xlu0
      %v1293 = vpop.trf.xlu0
      %v1294 = vpop.trf.xlu0
      %v1295 = vpop.trf.xlu0
      %v1296 = vpop.trf.xlu0
      %v1297 = vpop.trf.xlu0
      %v1298 = vpop.trf.xlu0
      %v1299 = vpop.trf.xlu0
      %v1300 = vpop.trf.xlu0
      %v1301 = vpop.trf.xlu0
      %1302 = vxpose.xlu0.b32.start [1/16] %v1066, 128
      %1303 = vxpose.xlu0.b32.cont [2/16] 0.0, 128
      %1304 = vxpose.xlu0.b32.cont [3/16] 0.0, 128
      %1305 = vxpose.xlu0.b32.cont [4/16] 0.0, 128
      %1306 = vxpose.xlu0.b32.cont [5/16] 0.0, 128
      %1307 = vxpose.xlu0.b32.cont [6/16] 0.0, 128
      %1308 = vxpose.xlu0.b32.cont [7/16] 0.0, 128
      %1309 = vxpose.xlu0.b32.cont [8/16] 0.0, 128
      %1310 = vxpose.xlu0.b32.cont [9/16] 0.0, 128
      %1311 = vxpose.xlu0.b32.cont [10/16] 0.0, 128
      %1312 = vxpose.xlu0.b32.cont [11/16] 0.0, 128
      %1313 = vxpose.xlu0.b32.cont [12/16] 0.0, 128
      %1314 = vxpose.xlu0.b32.cont [13/16] 0.0, 128
      %1315 = vxpose.xlu0.b32.cont [14/16] 0.0, 128
      %1316 = vxpose.xlu0.b32.cont [15/16] 0.0, 128
      %1317 = vxpose.xlu0.b32.end [16/16] 0.0, 128
      %v1318 = vpop.trf.xlu0
      %v1319 = vpop.trf.xlu0
      %v1320 = vpop.trf.xlu0
      %v1321 = vpop.trf.xlu0
      %v1322 = vpop.trf.xlu0
      %v1323 = vpop.trf.xlu0
      %v1324 = vpop.trf.xlu0
      %v1325 = vpop.trf.xlu0
      %v1326 = vpop.trf.xlu0
      %v1327 = vpop.trf.xlu0
      %v1328 = vpop.trf.xlu0
      %v1329 = vpop.trf.xlu0
      %v1330 = vpop.trf.xlu0
      %v1331 = vpop.trf.xlu0
      %v1332 = vpop.trf.xlu0
      %v1333 = vpop.trf.xlu0
      %v1335 = vrot.slane %v1066, 4
      %1337 = vxpose.xlu0.b32.start [1/16] %v1335, 128
      %1338 = vxpose.xlu0.b32.cont [2/16] 0.0, 128
      %1339 = vxpose.xlu0.b32.cont [3/16] 0.0, 128
      %1340 = vxpose.xlu0.b32.cont [4/16] 0.0, 128
      %1341 = vxpose.xlu0.b32.cont [5/16] 0.0, 128
      %1342 = vxpose.xlu0.b32.cont [6/16] 0.0, 128
      %1343 = vxpose.xlu0.b32.cont [7/16] 0.0, 128
      %1344 = vxpose.xlu0.b32.cont [8/16] 0.0, 128
      %1345 = vxpose.xlu0.b32.cont [9/16] 0.0, 128
      %1346 = vxpose.xlu0.b32.cont [10/16] 0.0, 128
      %1347 = vxpose.xlu0.b32.cont [11/16] 0.0, 128
      %1348 = vxpose.xlu0.b32.cont [12/16] 0.0, 128
      %1349 = vxpose.xlu0.b32.cont [13/16] 0.0, 128
      %1350 = vxpose.xlu0.b32.cont [14/16] 0.0, 128
      %1351 = vxpose.xlu0.b32.cont [15/16] 0.0, 128
      %1352 = vxpose.xlu0.b32.end [16/16] 0.0, 128
      %v1353 = vpop.trf.xlu0
      %v1354 = vpop.trf.xlu0
      %v1355 = vpop.trf.xlu0
      %v1356 = vpop.trf.xlu0
      %v1357 = vpop.trf.xlu0
      %v1358 = vpop.trf.xlu0
      %v1359 = vpop.trf.xlu0
      %v1360 = vpop.trf.xlu0
      %v1361 = vpop.trf.xlu0
      %v1362 = vpop.trf.xlu0
      %v1363 = vpop.trf.xlu0
      %v1364 = vpop.trf.xlu0
      %v1365 = vpop.trf.xlu0
      %v1366 = vpop.trf.xlu0
      %v1367 = vpop.trf.xlu0
      %v1368 = vpop.trf.xlu0
      %v1370 = vrot.slane %v1071, 4
      %v1373 = vrot.slane %v1074, 4
      %v1376 = vrot.slane %v1079, 4
      %v1379 = vrot.slane %v1082, 4
      %v1382 = vrot.slane %v1087, 4
      %v1385 = vrot.slane %v1090, 4
      %v1388 = vrot.slane %v1095, 4
      %v1391 = vrot.slane %v1098, 4
      %v1393 = vpack.c.bf16 %v1118, %v1117
      %v1394 = vpack.c.bf16 %v1120, %v1119
      %v1395 = vpack.c.bf16 %v1122, %v1121
      %v1396 = vpack.c.bf16 %v1124, %v1123
      %v1397 = vpack.c.bf16 %v1126, %v1125
      %v1398 = vpack.c.bf16 %v1128, %v1127
      %v1399 = vpack.c.bf16 %v1130, %v1129
      %v1400 = vpack.c.bf16 %v1132, %v1131
      %v1401 = vpack.c.bf16 %v1153, %v1152
      %v1402 = vpack.c.bf16 %v1155, %v1154
      %v1403 = vpack.c.bf16 %v1157, %v1156
      %v1404 = vpack.c.bf16 %v1159, %v1158
      %v1405 = vpack.c.bf16 %v1161, %v1160
      %v1406 = vpack.c.bf16 %v1163, %v1162
      %v1407 = vpack.c.bf16 %v1165, %v1164
      %v1408 = vpack.c.bf16 %v1167, %v1166
      %v1409 = vpack.c.bf16 %v1185, %v1184
      %v1410 = vpack.c.bf16 %v1187, %v1186
      %v1411 = vpack.c.bf16 %v1189, %v1188
      %v1412 = vpack.c.bf16 %v1191, %v1190
      %v1413 = vpack.c.bf16 %v1193, %v1192
      %v1414 = vpack.c.bf16 %v1195, %v1194
      %v1415 = vpack.c.bf16 %v1197, %v1196
      %v1416 = vpack.c.bf16 %v1199, %v1198
      %v1417 = vpack.c.bf16 %v1220, %v1219
      %v1418 = vpack.c.bf16 %v1222, %v1221
      %v1419 = vpack.c.bf16 %v1224, %v1223
      %v1420 = vpack.c.bf16 %v1226, %v1225
      %v1421 = vpack.c.bf16 %v1228, %v1227
      %v1422 = vpack.c.bf16 %v1230, %v1229
      %v1423 = vpack.c.bf16 %v1232, %v1231
      %v1424 = vpack.c.bf16 %v1234, %v1233
      %v1425 = vpack.c.bf16 %v1252, %v1251
      %v1426 = vpack.c.bf16 %v1254, %v1253
      %v1427 = vpack.c.bf16 %v1256, %v1255
      %v1428 = vpack.c.bf16 %v1258, %v1257
      %v1429 = vpack.c.bf16 %v1260, %v1259
      %v1430 = vpack.c.bf16 %v1262, %v1261
      %v1431 = vpack.c.bf16 %v1264, %v1263
      %v1432 = vpack.c.bf16 %v1266, %v1265
      %v1433 = vpack.c.bf16 %v1287, %v1286
      %v1434 = vpack.c.bf16 %v1289, %v1288
      %v1435 = vpack.c.bf16 %v1291, %v1290
      %v1436 = vpack.c.bf16 %v1293, %v1292
      %v1437 = vpack.c.bf16 %v1295, %v1294
      %v1438 = vpack.c.bf16 %v1297, %v1296
      %v1439 = vpack.c.bf16 %v1299, %v1298
      %v1440 = vpack.c.bf16 %v1301, %v1300
      %v1441 = vpack.c.bf16 %v1319, %v1318
      %v1442 = vpack.c.bf16 %v1321, %v1320
      %v1443 = vpack.c.bf16 %v1323, %v1322
      %v1444 = vpack.c.bf16 %v1325, %v1324
      %v1445 = vpack.c.bf16 %v1327, %v1326
      %v1446 = vpack.c.bf16 %v1329, %v1328
      %v1447 = vpack.c.bf16 %v1331, %v1330
      %v1448 = vpack.c.bf16 %v1333, %v1332
      %v1449 = vpack.c.bf16 %v1354, %v1353
      %v1450 = vpack.c.bf16 %v1356, %v1355
      %v1451 = vpack.c.bf16 %v1358, %v1357
      %v1452 = vpack.c.bf16 %v1360, %v1359
      %v1453 = vpack.c.bf16 %v1362, %v1361
      %v1454 = vpack.c.bf16 %v1364, %v1363
      %v1455 = vpack.c.bf16 %v1366, %v1365
      %v1456 = vpack.c.bf16 %v1368, %v1367
      %v1457 = vpack.c.bf16 %v1071, %v1071
      %v1458 = vpack.c.bf16 %v1370, %v1370
      %v1459 = vpack.c.bf16 %v1074, %v1074
      %v1460 = vpack.c.bf16 %v1373, %v1373
      %v1461 = vpack.c.bf16 %v1079, %v1079
      %v1462 = vpack.c.bf16 %v1376, %v1376
      %v1463 = vpack.c.bf16 %v1082, %v1082
      %v1464 = vpack.c.bf16 %v1379, %v1379
      %vm1465 = vcmask 31744
      %v1467 = vsel %vm1465, %v1393, 0
      %v1470 = vsel %vm1465, %v1394, 0
      %v1473 = vsel %vm1465, %v1395, 0
      %v1476 = vsel %vm1465, %v1396, 0
      %v1479 = vsel %vm1465, %v1397, 0
      %v1482 = vsel %vm1465, %v1398, 0
      %v1485 = vsel %vm1465, %v1399, 0
      %v1488 = vsel %vm1465, %v1400, 0
      %vm1490 = vcmask 1041408
      %v1492 = vsel %vm1490, %v1457, 0
      %1494 = vmatprep.subr.bf16.mxu0 0
      %1495 = vmatpush1.bf16.msra.mxu0 %v1492
      %1496 = vmatprep.subr.bf16.mxu0 0
      %1497 = vmatpush1.bf16.msra.mxu0 0
      %1498 = vmatprep.subr.bf16.mxu0 0
      %1499 = vmatpush1.bf16.msra.mxu0 0
      %1500 = vmatprep.subr.bf16.mxu0 0
      %1501 = vmatpush1.bf16.msra.mxu0 0
      %1502 = vmatprep.subr.bf16.mxu0 0
      %1503 = vmatpush1.bf16.msra.mxu0 0
      %1504 = vmatprep.subr.bf16.mxu0 0
      %1505 = vmatpush1.bf16.msra.mxu0 0
      %1506 = vmatprep.subr.bf16.mxu0 0
      %1507 = vmatpush1.bf16.msra.mxu0 0
      %1508 = vmatprep.subr.bf16.mxu0 0
      %1509 = vmatpush1.bf16.msra.mxu0 0
      %1510 = vmatprep.subr.bf16.mxu0 0
      %1511 = vmatpush1.bf16.msra.mxu0 0
      %1512 = vmatprep.subr.bf16.mxu0 0
      %1513 = vmatpush1.bf16.msra.mxu0 0
      %1514 = vmatprep.subr.bf16.mxu0 0
      %1515 = vmatpush1.bf16.msra.mxu0 0
      %1516 = vmatprep.subr.bf16.mxu0 0
      %1517 = vmatpush1.bf16.msra.mxu0 0
      %1518 = vmatprep.subr.bf16.mxu0 0
      %1519 = vmatpush1.bf16.msra.mxu0 0
      %1520 = vmatprep.subr.bf16.mxu0 0
      %1521 = vmatpush1.bf16.msra.mxu0 0
      %1522 = vmatprep.subr.bf16.mxu0 0
      %1523 = vmatpush1.bf16.msra.mxu0 0
      %1524 = vmatprep.subr.bf16.mxu0 0
      %1525 = vmatpush1.bf16.msra.mxu0 0
      %1526 = vmatprep.mubr.bf16.mxu0 0
      %1527 = vmatmul.mubr.bf16.gmra.mrb[0].mxu0 %v1467
      %v1528 = vpop.f32.mrb[0].mxu0
      %v1529 = vadd.f32 0.0, %v1528
      %v1530 = vpop.f32.mrb[0].mxu0
      %v1531 = vpop.f32.mrb[0].mxu0
      %v1532 = vadd.f32 0.0, %v1531
      %v1533 = vpop.f32.mrb[0].mxu0
      %1534 = vmatprep.mubr.bf16.mxu0 0
      %1535 = vmatmul.mubr.bf16.gmra.mrb[0].mxu0 %v1470
      %v1536 = vpop.f32.mrb[0].mxu0
      %v1537 = vadd.f32 0.0, %v1536
      %v1538 = vpop.f32.mrb[0].mxu0
      %v1539 = vpop.f32.mrb[0].mxu0
      %v1540 = vadd.f32 0.0, %v1539
      %v1541 = vpop.f32.mrb[0].mxu0
      %1542 = vmatprep.mubr.bf16.mxu0 0
      %1543 = vmatmul.mubr.bf16.gmra.mrb[0].mxu0 %v1473
      %v1544 = vpop.f32.mrb[0].mxu0
      %v1545 = vadd.f32 0.0, %v1544
      %v1546 = vpop.f32.mrb[0].mxu0
      %v1547 = vpop.f32.mrb[0].mxu0
      %v1548 = vadd.f32 0.0, %v1547
      %v1549 = vpop.f32.mrb[0].mxu0
      %1550 = vmatprep.mubr.bf16.mxu0 0
      %1551 = vmatmul.mubr.bf16.gmra.mrb[0].mxu0 %v1476
      %v1552 = vpop.f32.mrb[0].mxu0
      %v1553 = vadd.f32 0.0, %v1552
      %v1554 = vpop.f32.mrb[0].mxu0
      %v1555 = vpop.f32.mrb[0].mxu0
      %v1556 = vadd.f32 0.0, %v1555
      %v1557 = vpop.f32.mrb[0].mxu0
      %1558 = vmatprep.mubr.bf16.mxu0 0
      %1559 = vmatmul.mubr.bf16.gmra.mrb[0].mxu0 %v1479
      %v1560 = vpop.f32.mrb[0].mxu0
      %v1561 = vadd.f32 0.0, %v1560
      %v1562 = vpop.f32.mrb[0].mxu0
      %v1563 = vpop.f32.mrb[0].mxu0
      %v1564 = vadd.f32 0.0, %v1563
      %v1565 = vpop.f32.mrb[0].mxu0
      %1566 = vmatprep.mubr.bf16.mxu0 0
      %1567 = vmatmul.mubr.bf16.gmra.mrb[0].mxu0 %v1482
      %v1568 = vpop.f32.mrb[0].mxu0
      %v1569 = vadd.f32 0.0, %v1568
      %v1570 = vpop.f32.mrb[0].mxu0
      %v1571 = vpop.f32.mrb[0].mxu0
      %v1572 = vadd.f32 0.0, %v1571
      %v1573 = vpop.f32.mrb[0].mxu0
      %1574 = vmatprep.mubr.bf16.mxu0 0
      %1575 = vmatmul.mubr.bf16.gmra.mrb[0].mxu0 %v1485
      %v1576 = vpop.f32.mrb[0].mxu0
      %v1577 = vadd.f32 0.0, %v1576
      %v1578 = vpop.f32.mrb[0].mxu0
      %v1579 = vpop.f32.mrb[0].mxu0
      %v1580 = vadd.f32 0.0, %v1579
      %v1581 = vpop.f32.mrb[0].mxu0
      %1582 = vmatprep.mubr.bf16.mxu0 0
      %1583 = vmatmul.mubr.bf16.gmra.mrb[0].mxu0 %v1488
      %v1584 = vpop.f32.mrb[0].mxu0
      %v1585 = vadd.f32 0.0, %v1584
      %v1586 = vpop.f32.mrb[0].mxu0
      %v1587 = vpop.f32.mrb[0].mxu0
      %v1588 = vadd.f32 0.0, %v1587
      %v1589 = vpop.f32.mrb[0].mxu0
      %1590 = vdwg.mxu0
      %v1592 = vsel %vm1465, %v1401, 0
      %v1595 = vsel %vm1465, %v1402, 0
      %v1598 = vsel %vm1465, %v1403, 0
      %v1601 = vsel %vm1465, %v1404, 0
      %v1604 = vsel %vm1465, %v1405, 0
      %v1607 = vsel %vm1465, %v1406, 0
      %v1610 = vsel %vm1465, %v1407, 0
      %v1613 = vsel %vm1465, %v1408, 0
      %v1616 = vsel %vm1490, %v1458, 0
      %1618 = vmatprep.subr.bf16.mxu0 0
      %1619 = vmatpush1.bf16.msra.mxu0 %v1616
      %1620 = vmatprep.subr.bf16.mxu0 0
      %1621 = vmatpush1.bf16.msra.mxu0 0
      %1622 = vmatprep.subr.bf16.mxu0 0
      %1623 = vmatpush1.bf16.msra.mxu0 0
      %1624 = vmatprep.subr.bf16.mxu0 0
      %1625 = vmatpush1.bf16.msra.mxu0 0
      %1626 = vmatprep.subr.bf16.mxu0 0
      %1627 = vmatpush1.bf16.msra.mxu0 0
      %1628 = vmatprep.subr.bf16.mxu0 0
      %1629 = vmatpush1.bf16.msra.mxu0 0
      %1630 = vmatprep.subr.bf16.mxu0 0
      %1631 = vmatpush1.bf16.msra.mxu0 0
      %1632 = vmatprep.subr.bf16.mxu0 0
      %1633 = vmatpush1.bf16.msra.mxu0 0
      %1634 = vmatprep.subr.bf16.mxu0 0
      %1635 = vmatpush1.bf16.msra.mxu0 0
      %1636 = vmatprep.subr.bf16.mxu0 0
      %1637 = vmatpush1.bf16.msra.mxu0 0
      %1638 = vmatprep.subr.bf16.mxu0 0
      %1639 = vmatpush1.bf16.msra.mxu0 0
      %1640 = vmatprep.subr.bf16.mxu0 0
      %1641 = vmatpush1.bf16.msra.mxu0 0
      %1642 = vmatprep.subr.bf16.mxu0 0
      %1643 = vmatpush1.bf16.msra.mxu0 0
      %1644 = vmatprep.subr.bf16.mxu0 0
      %1645 = vmatpush1.bf16.msra.mxu0 0
      %1646 = vmatprep.subr.bf16.mxu0 0
      %1647 = vmatpush1.bf16.msra.mxu0 0
      %1648 = vmatprep.subr.bf16.mxu0 0
      %1649 = vmatpush1.bf16.msra.mxu0 0
      %1650 = vmatprep.mubr.bf16.mxu0 0
      %1651 = vmatmul.mubr.bf16.gmra.mrb[0].mxu0 %v1592
      %v1652 = vpop.f32.mrb[0].mxu0
      %v1653 = vadd.f32 0.0, %v1652
      %v1654 = vpop.f32.mrb[0].mxu0
      %v1655 = vpop.f32.mrb[0].mxu0
      %v1656 = vadd.f32 0.0, %v1655
      %v1657 = vpop.f32.mrb[0].mxu0
      %1658 = vmatprep.mubr.bf16.mxu0 0
      %1659 = vmatmul.mubr.bf16.gmra.mrb[0].mxu0 %v1595
      %v1660 = vpop.f32.mrb[0].mxu0
      %v1661 = vadd.f32 0.0, %v1660
      %v1662 = vpop.f32.mrb[0].mxu0
      %v1663 = vpop.f32.mrb[0].mxu0
      %v1664 = vadd.f32 0.0, %v1663
      %v1665 = vpop.f32.mrb[0].mxu0
      %1666 = vmatprep.mubr.bf16.mxu0 0
      %1667 = vmatmul.mubr.bf16.gmra.mrb[0].mxu0 %v1598
      %v1668 = vpop.f32.mrb[0].mxu0
      %v1669 = vadd.f32 0.0, %v1668
      %v1670 = vpop.f32.mrb[0].mxu0
      %v1671 = vpop.f32.mrb[0].mxu0
      %v1672 = vadd.f32 0.0, %v1671
      %v1673 = vpop.f32.mrb[0].mxu0
      %1674 = vmatprep.mubr.bf16.mxu0 0
      %1675 = vmatmul.mubr.bf16.gmra.mrb[0].mxu0 %v1601
      %v1676 = vpop.f32.mrb[0].mxu0
      %v1677 = vadd.f32 0.0, %v1676
      %v1678 = vpop.f32.mrb[0].mxu0
      %v1679 = vpop.f32.mrb[0].mxu0
      %v1680 = vadd.f32 0.0, %v1679
      %v1681 = vpop.f32.mrb[0].mxu0
      %1682 = vmatprep.mubr.bf16.mxu0 0
      %1683 = vmatmul.mubr.bf16.gmra.mrb[0].mxu0 %v1604
      %v1684 = vpop.f32.mrb[0].mxu0
      %v1685 = vadd.f32 0.0, %v1684
      %v1686 = vpop.f32.mrb[0].mxu0
      %v1687 = vpop.f32.mrb[0].mxu0
      %v1688 = vadd.f32 0.0, %v1687
      %v1689 = vpop.f32.mrb[0].mxu0
      %1690 = vmatprep.mubr.bf16.mxu0 0
      %1691 = vmatmul.mubr.bf16.gmra.mrb[0].mxu0 %v1607
      %v1692 = vpop.f32.mrb[0].mxu0
      %v1693 = vadd.f32 0.0, %v1692
      %v1694 = vpop.f32.mrb[0].mxu0
      %v1695 = vpop.f32.mrb[0].mxu0
      %v1696 = vadd.f32 0.0, %v1695
      %v1697 = vpop.f32.mrb[0].mxu0
      %1698 = vmatprep.mubr.bf16.mxu0 0
      %1699 = vmatmul.mubr.bf16.gmra.mrb[0].mxu0 %v1610
      %v1700 = vpop.f32.mrb[0].mxu0
      %v1701 = vadd.f32 0.0, %v1700
      %v1702 = vpop.f32.mrb[0].mxu0
      %v1703 = vpop.f32.mrb[0].mxu0
      %v1704 = vadd.f32 0.0, %v1703
      %v1705 = vpop.f32.mrb[0].mxu0
      %1706 = vmatprep.mubr.bf16.mxu0 0
      %1707 = vmatmul.mubr.bf16.gmra.mrb[0].mxu0 %v1613
      %v1708 = vpop.f32.mrb[0].mxu0
      %v1709 = vadd.f32 0.0, %v1708
      %v1710 = vpop.f32.mrb[0].mxu0
      %v1711 = vpop.f32.mrb[0].mxu0
      %v1712 = vadd.f32 0.0, %v1711
      %v1713 = vpop.f32.mrb[0].mxu0
      %1714 = vdwg.mxu0
      %v1716 = vsel %vm1465, %v1409, 0
      %v1719 = vsel %vm1465, %v1410, 0
      %v1722 = vsel %vm1465, %v1411, 0
      %v1725 = vsel %vm1465, %v1412, 0
      %v1728 = vsel %vm1465, %v1413, 0
      %v1731 = vsel %vm1465, %v1414, 0
      %v1734 = vsel %vm1465, %v1415, 0
      %v1737 = vsel %vm1465, %v1416, 0
      %v1740 = vsel %vm1490, %v1459, 0
      %1742 = vmatprep.subr.bf16.mxu0 0
      %1743 = vmatpush1.bf16.msra.mxu0 %v1740
      %1744 = vmatprep.subr.bf16.mxu0 0
      %1745 = vmatpush1.bf16.msra.mxu0 0
      %1746 = vmatprep.subr.bf16.mxu0 0
      %1747 = vmatpush1.bf16.msra.mxu0 0
      %1748 = vmatprep.subr.bf16.mxu0 0
      %1749 = vmatpush1.bf16.msra.mxu0 0
      %1750 = vmatprep.subr.bf16.mxu0 0
      %1751 = vmatpush1.bf16.msra.mxu0 0
      %1752 = vmatprep.subr.bf16.mxu0 0
      %1753 = vmatpush1.bf16.msra.mxu0 0
      %1754 = vmatprep.subr.bf16.mxu0 0
      %1755 = vmatpush1.bf16.msra.mxu0 0
      %1756 = vmatprep.subr.bf16.mxu0 0
      %1757 = vmatpush1.bf16.msra.mxu0 0
      %1758 = vmatprep.subr.bf16.mxu0 0
      %1759 = vmatpush1.bf16.msra.mxu0 0
      %1760 = vmatprep.subr.bf16.mxu0 0
      %1761 = vmatpush1.bf16.msra.mxu0 0
      %1762 = vmatprep.subr.bf16.mxu0 0
      %1763 = vmatpush1.bf16.msra.mxu0 0
      %1764 = vmatprep.subr.bf16.mxu0 0
      %1765 = vmatpush1.bf16.msra.mxu0 0
      %1766 = vmatprep.subr.bf16.mxu0 0
      %1767 = vmatpush1.bf16.msra.mxu0 0
      %1768 = vmatprep.subr.bf16.mxu0 0
      %1769 = vmatpush1.bf16.msra.mxu0 0
      %1770 = vmatprep.subr.bf16.mxu0 0
      %1771 = vmatpush1.bf16.msra.mxu0 0
      %1772 = vmatprep.subr.bf16.mxu0 0
      %1773 = vmatpush1.bf16.msra.mxu0 0
      %1774 = vmatprep.mubr.bf16.mxu0 0
      %1775 = vmatmul.mubr.bf16.gmra.mrb[0].mxu0 %v1716
      %v1776 = vpop.f32.mrb[0].mxu0
      %v1777 = vadd.f32 0.0, %v1776
      %v1778 = vpop.f32.mrb[0].mxu0
      %v1779 = vpop.f32.mrb[0].mxu0
      %v1780 = vadd.f32 0.0, %v1779
      %v1781 = vpop.f32.mrb[0].mxu0
      %1782 = vmatprep.mubr.bf16.mxu0 0
      %1783 = vmatmul.mubr.bf16.gmra.mrb[0].mxu0 %v1719
      %v1784 = vpop.f32.mrb[0].mxu0
      %v1785 = vadd.f32 0.0, %v1784
      %v1786 = vpop.f32.mrb[0].mxu0
      %v1787 = vpop.f32.mrb[0].mxu0
      %v1788 = vadd.f32 0.0, %v1787
      %v1789 = vpop.f32.mrb[0].mxu0
      %1790 = vmatprep.mubr.bf16.mxu0 0
      %1791 = vmatmul.mubr.bf16.gmra.mrb[0].mxu0 %v1722
      %v1792 = vpop.f32.mrb[0].mxu0
      %v1793 = vadd.f32 0.0, %v1792
      %v1794 = vpop.f32.mrb[0].mxu0
      %v1795 = vpop.f32.mrb[0].mxu0
      %v1796 = vadd.f32 0.0, %v1795
      %v1797 = vpop.f32.mrb[0].mxu0
      %1798 = vmatprep.mubr.bf16.mxu0 0
      %1799 = vmatmul.mubr.bf16.gmra.mrb[0].mxu0 %v1725
      %v1800 = vpop.f32.mrb[0].mxu0
      %v1801 = vadd.f32 0.0, %v1800
      %v1802 = vpop.f32.mrb[0].mxu0
      %v1803 = vpop.f32.mrb[0].mxu0
      %v1804 = vadd.f32 0.0, %v1803
      %v1805 = vpop.f32.mrb[0].mxu0
      %1806 = vmatprep.mubr.bf16.mxu0 0
      %1807 = vmatmul.mubr.bf16.gmra.mrb[0].mxu0 %v1728
      %v1808 = vpop.f32.mrb[0].mxu0
      %v1809 = vadd.f32 0.0, %v1808
      %v1810 = vpop.f32.mrb[0].mxu0
      %v1811 = vpop.f32.mrb[0].mxu0
      %v1812 = vadd.f32 0.0, %v1811
      %v1813 = vpop.f32.mrb[0].mxu0
      %1814 = vmatprep.mubr.bf16.mxu0 0
      %1815 = vmatmul.mubr.bf16.gmra.mrb[0].mxu0 %v1731
      %v1816 = vpop.f32.mrb[0].mxu0
      %v1817 = vadd.f32 0.0, %v1816
      %v1818 = vpop.f32.mrb[0].mxu0
      %v1819 = vpop.f32.mrb[0].mxu0
      %v1820 = vadd.f32 0.0, %v1819
      %v1821 = vpop.f32.mrb[0].mxu0
      %1822 = vmatprep.mubr.bf16.mxu0 0
      %1823 = vmatmul.mubr.bf16.gmra.mrb[0].mxu0 %v1734
      %v1824 = vpop.f32.mrb[0].mxu0
      %v1825 = vadd.f32 0.0, %v1824
      %v1826 = vpop.f32.mrb[0].mxu0
      %v1827 = vpop.f32.mrb[0].mxu0
      %v1828 = vadd.f32 0.0, %v1827
      %v1829 = vpop.f32.mrb[0].mxu0
      %1830 = vmatprep.mubr.bf16.mxu0 0
      %1831 = vmatmul.mubr.bf16.gmra.mrb[0].mxu0 %v1737
      %v1832 = vpop.f32.mrb[0].mxu0
      %v1833 = vadd.f32 0.0, %v1832
      %v1834 = vpop.f32.mrb[0].mxu0
      %v1835 = vpop.f32.mrb[0].mxu0
      %v1836 = vadd.f32 0.0, %v1835
      %v1837 = vpop.f32.mrb[0].mxu0
      %1838 = vdwg.mxu0
      %v1840 = vsel %vm1465, %v1417, 0
      %v1843 = vsel %vm1465, %v1418, 0
      %v1846 = vsel %vm1465, %v1419, 0
      %v1849 = vsel %vm1465, %v1420, 0
      %v1852 = vsel %vm1465, %v1421, 0
      %v1855 = vsel %vm1465, %v1422, 0
      %v1858 = vsel %vm1465, %v1423, 0
      %v1861 = vsel %vm1465, %v1424, 0
      %v1864 = vsel %vm1490, %v1460, 0
      %1866 = vmatprep.subr.bf16.mxu0 0
      %1867 = vmatpush1.bf16.msra.mxu0 %v1864
      %1868 = vmatprep.subr.bf16.mxu0 0
      %1869 = vmatpush1.bf16.msra.mxu0 0
      %1870 = vmatprep.subr.bf16.mxu0 0
      %1871 = vmatpush1.bf16.msra.mxu0 0
      %1872 = vmatprep.subr.bf16.mxu0 0
      %1873 = vmatpush1.bf16.msra.mxu0 0
      %1874 = vmatprep.subr.bf16.mxu0 0
      %1875 = vmatpush1.bf16.msra.mxu0 0
      %1876 = vmatprep.subr.bf16.mxu0 0
      %1877 = vmatpush1.bf16.msra.mxu0 0
      %1878 = vmatprep.subr.bf16.mxu0 0
      %1879 = vmatpush1.bf16.msra.mxu0 0
      %1880 = vmatprep.subr.bf16.mxu0 0
      %1881 = vmatpush1.bf16.msra.mxu0 0
      %1882 = vmatprep.subr.bf16.mxu0 0
      %1883 = vmatpush1.bf16.msra.mxu0 0
      %1884 = vmatprep.subr.bf16.mxu0 0
      %1885 = vmatpush1.bf16.msra.mxu0 0
      %1886 = vmatprep.subr.bf16.mxu0 0
      %1887 = vmatpush1.bf16.msra.mxu0 0
      %1888 = vmatprep.subr.bf16.mxu0 0
      %1889 = vmatpush1.bf16.msra.mxu0 0
      %1890 = vmatprep.subr.bf16.mxu0 0
      %1891 = vmatpush1.bf16.msra.mxu0 0
      %1892 = vmatprep.subr.bf16.mxu0 0
      %1893 = vmatpush1.bf16.msra.mxu0 0
      %1894 = vmatprep.subr.bf16.mxu0 0
      %1895 = vmatpush1.bf16.msra.mxu0 0
      %1896 = vmatprep.subr.bf16.mxu0 0
      %1897 = vmatpush1.bf16.msra.mxu0 0
      %1898 = vmatprep.mubr.bf16.mxu0 0
      %1899 = vmatmul.mubr.bf16.gmra.mrb[0].mxu0 %v1840
      %v1900 = vpop.f32.mrb[0].mxu0
      %v1901 = vadd.f32 0.0, %v1900
      %v1902 = vpop.f32.mrb[0].mxu0
      %v1903 = vpop.f32.mrb[0].mxu0
      %v1904 = vadd.f32 0.0, %v1903
      %v1905 = vpop.f32.mrb[0].mxu0
      %1906 = vmatprep.mubr.bf16.mxu0 0
      %1907 = vmatmul.mubr.bf16.gmra.mrb[0].mxu0 %v1843
      %v1908 = vpop.f32.mrb[0].mxu0
      %v1909 = vadd.f32 0.0, %v1908
      %v1910 = vpop.f32.mrb[0].mxu0
      %v1911 = vpop.f32.mrb[0].mxu0
      %v1912 = vadd.f32 0.0, %v1911
      %v1913 = vpop.f32.mrb[0].mxu0
      %1914 = vmatprep.mubr.bf16.mxu0 0
      %1915 = vmatmul.mubr.bf16.gmra.mrb[0].mxu0 %v1846
      %v1916 = vpop.f32.mrb[0].mxu0
      %v1917 = vadd.f32 0.0, %v1916
      %v1918 = vpop.f32.mrb[0].mxu0
      %v1919 = vpop.f32.mrb[0].mxu0
      %v1920 = vadd.f32 0.0, %v1919
      %v1921 = vpop.f32.mrb[0].mxu0
      %1922 = vmatprep.mubr.bf16.mxu0 0
      %1923 = vmatmul.mubr.bf16.gmra.mrb[0].mxu0 %v1849
      %v1924 = vpop.f32.mrb[0].mxu0
      %v1925 = vadd.f32 0.0, %v1924
      %v1926 = vpop.f32.mrb[0].mxu0
      %v1927 = vpop.f32.mrb[0].mxu0
      %v1928 = vadd.f32 0.0, %v1927
      %v1929 = vpop.f32.mrb[0].mxu0
      %1930 = vmatprep.mubr.bf16.mxu0 0
      %1931 = vmatmul.mubr.bf16.gmra.mrb[0].mxu0 %v1852
      %v1932 = vpop.f32.mrb[0].mxu0
      %v1933 = vadd.f32 0.0, %v1932
      %v1934 = vpop.f32.mrb[0].mxu0
      %v1935 = vpop.f32.mrb[0].mxu0
      %v1936 = vadd.f32 0.0, %v1935
      %v1937 = vpop.f32.mrb[0].mxu0
      %1938 = vmatprep.mubr.bf16.mxu0 0
      %1939 = vmatmul.mubr.bf16.gmra.mrb[0].mxu0 %v1855
      %v1940 = vpop.f32.mrb[0].mxu0
      %v1941 = vadd.f32 0.0, %v1940
      %v1942 = vpop.f32.mrb[0].mxu0
      %v1943 = vpop.f32.mrb[0].mxu0
      %v1944 = vadd.f32 0.0, %v1943
      %v1945 = vpop.f32.mrb[0].mxu0
      %1946 = vmatprep.mubr.bf16.mxu0 0
      %1947 = vmatmul.mubr.bf16.gmra.mrb[0].mxu0 %v1858
      %v1948 = vpop.f32.mrb[0].mxu0
      %v1949 = vadd.f32 0.0, %v1948
      %v1950 = vpop.f32.mrb[0].mxu0
      %v1951 = vpop.f32.mrb[0].mxu0
      %v1952 = vadd.f32 0.0, %v1951
      %v1953 = vpop.f32.mrb[0].mxu0
      %1954 = vmatprep.mubr.bf16.mxu0 0
      %1955 = vmatmul.mubr.bf16.gmra.mrb[0].mxu0 %v1861
      %v1956 = vpop.f32.mrb[0].mxu0
      %v1957 = vadd.f32 0.0, %v1956
      %v1958 = vpop.f32.mrb[0].mxu0
      %v1959 = vpop.f32.mrb[0].mxu0
      %v1960 = vadd.f32 0.0, %v1959
      %v1961 = vpop.f32.mrb[0].mxu0
      %1962 = vdwg.mxu0
      %v1964 = vsel %vm1465, %v1425, 0
      %v1967 = vsel %vm1465, %v1426, 0
      %v1970 = vsel %vm1465, %v1427, 0
      %v1973 = vsel %vm1465, %v1428, 0
      %v1976 = vsel %vm1465, %v1429, 0
      %v1979 = vsel %vm1465, %v1430, 0
      %v1982 = vsel %vm1465, %v1431, 0
      %v1985 = vsel %vm1465, %v1432, 0
      %v1988 = vsel %vm1490, %v1461, 0
      %1990 = vmatprep.subr.bf16.mxu0 0
      %1991 = vmatpush1.bf16.msra.mxu0 %v1988
      %1992 = vmatprep.subr.bf16.mxu0 0
      %1993 = vmatpush1.bf16.msra.mxu0 0
      %1994 = vmatprep.subr.bf16.mxu0 0
      %1995 = vmatpush1.bf16.msra.mxu0 0
      %1996 = vmatprep.subr.bf16.mxu0 0
      %1997 = vmatpush1.bf16.msra.mxu0 0
      %1998 = vmatprep.subr.bf16.mxu0 0
      %1999 = vmatpush1.bf16.msra.mxu0 0
      %2000 = vmatprep.subr.bf16.mxu0 0
      %2001 = vmatpush1.bf16.msra.mxu0 0
      %2002 = vmatprep.subr.bf16.mxu0 0
      %2003 = vmatpush1.bf16.msra.mxu0 0
      %2004 = vmatprep.subr.bf16.mxu0 0
      %2005 = vmatpush1.bf16.msra.mxu0 0
      %2006 = vmatprep.subr.bf16.mxu0 0
      %2007 = vmatpush1.bf16.msra.mxu0 0
      %2008 = vmatprep.subr.bf16.mxu0 0
      %2009 = vmatpush1.bf16.msra.mxu0 0
      %2010 = vmatprep.subr.bf16.mxu0 0
      %2011 = vmatpush1.bf16.msra.mxu0 0
      %2012 = vmatprep.subr.bf16.mxu0 0
      %2013 = vmatpush1.bf16.msra.mxu0 0
      %2014 = vmatprep.subr.bf16.mxu0 0
      %2015 = vmatpush1.bf16.msra.mxu0 0
      %2016 = vmatprep.subr.bf16.mxu0 0
      %2017 = vmatpush1.bf16.msra.mxu0 0
      %2018 = vmatprep.subr.bf16.mxu0 0
      %2019 = vmatpush1.bf16.msra.mxu0 0
      %2020 = vmatprep.subr.bf16.mxu0 0
      %2021 = vmatpush1.bf16.msra.mxu0 0
      %2022 = vmatprep.mubr.bf16.mxu0 0
      %2023 = vmatmul.mubr.bf16.gmra.mrb[0].mxu0 %v1964
      %v2024 = vpop.f32.mrb[0].mxu0
      %v2025 = vadd.f32 0.0, %v2024
      %v2026 = vpop.f32.mrb[0].mxu0
      %v2027 = vpop.f32.mrb[0].mxu0
      %v2028 = vadd.f32 0.0, %v2027
      %v2029 = vpop.f32.mrb[0].mxu0
      %2030 = vmatprep.mubr.bf16.mxu0 0
      %2031 = vmatmul.mubr.bf16.gmra.mrb[0].mxu0 %v1967
      %v2032 = vpop.f32.mrb[0].mxu0
      %v2033 = vadd.f32 0.0, %v2032
      %v2034 = vpop.f32.mrb[0].mxu0
      %v2035 = vpop.f32.mrb[0].mxu0
      %v2036 = vadd.f32 0.0, %v2035
      %v2037 = vpop.f32.mrb[0].mxu0
      %2038 = vmatprep.mubr.bf16.mxu0 0
      %2039 = vmatmul.mubr.bf16.gmra.mrb[0].mxu0 %v1970
      %v2040 = vpop.f32.mrb[0].mxu0
      %v2041 = vadd.f32 0.0, %v2040
      %v2042 = vpop.f32.mrb[0].mxu0
      %v2043 = vpop.f32.mrb[0].mxu0
      %v2044 = vadd.f32 0.0, %v2043
      %v2045 = vpop.f32.mrb[0].mxu0
      %2046 = vmatprep.mubr.bf16.mxu0 0
      %2047 = vmatmul.mubr.bf16.gmra.mrb[0].mxu0 %v1973
      %v2048 = vpop.f32.mrb[0].mxu0
      %v2049 = vadd.f32 0.0, %v2048
      %v2050 = vpop.f32.mrb[0].mxu0
      %v2051 = vpop.f32.mrb[0].mxu0
      %v2052 = vadd.f32 0.0, %v2051
      %v2053 = vpop.f32.mrb[0].mxu0
      %2054 = vmatprep.mubr.bf16.mxu0 0
      %2055 = vmatmul.mubr.bf16.gmra.mrb[0].mxu0 %v1976
      %v2056 = vpop.f32.mrb[0].mxu0
      %v2057 = vadd.f32 0.0, %v2056
      %v2058 = vpop.f32.mrb[0].mxu0
      %v2059 = vpop.f32.mrb[0].mxu0
      %v2060 = vadd.f32 0.0, %v2059
      %v2061 = vpop.f32.mrb[0].mxu0
      %2062 = vmatprep.mubr.bf16.mxu0 0
      %2063 = vmatmul.mubr.bf16.gmra.mrb[0].mxu0 %v1979
      %v2064 = vpop.f32.mrb[0].mxu0
      %v2065 = vadd.f32 0.0, %v2064
      %v2066 = vpop.f32.mrb[0].mxu0
      %v2067 = vpop.f32.mrb[0].mxu0
      %v2068 = vadd.f32 0.0, %v2067
      %v2069 = vpop.f32.mrb[0].mxu0
      %2070 = vmatprep.mubr.bf16.mxu0 0
      %2071 = vmatmul.mubr.bf16.gmra.mrb[0].mxu0 %v1982
      %v2072 = vpop.f32.mrb[0].mxu0
      %v2073 = vadd.f32 0.0, %v2072
      %v2074 = vpop.f32.mrb[0].mxu0
      %v2075 = vpop.f32.mrb[0].mxu0
      %v2076 = vadd.f32 0.0, %v2075
      %v2077 = vpop.f32.mrb[0].mxu0
      %2078 = vmatprep.mubr.bf16.mxu0 0
      %2079 = vmatmul.mubr.bf16.gmra.mrb[0].mxu0 %v1985
      %v2080 = vpop.f32.mrb[0].mxu0
      %v2081 = vadd.f32 0.0, %v2080
      %v2082 = vpop.f32.mrb[0].mxu0
      %v2083 = vpop.f32.mrb[0].mxu0
      %v2084 = vadd.f32 0.0, %v2083
      %v2085 = vpop.f32.mrb[0].mxu0
      %2086 = vdwg.mxu0
      %v2088 = vsel %vm1465, %v1433, 0
      %v2091 = vsel %vm1465, %v1434, 0
      %v2094 = vsel %vm1465, %v1435, 0
      %v2097 = vsel %vm1465, %v1436, 0
      %v2100 = vsel %vm1465, %v1437, 0
      %v2103 = vsel %vm1465, %v1438, 0
      %v2106 = vsel %vm1465, %v1439, 0
      %v2109 = vsel %vm1465, %v1440, 0
      %v2112 = vsel %vm1490, %v1462, 0
      %2114 = vmatprep.subr.bf16.mxu0 0
      %2115 = vmatpush1.bf16.msra.mxu0 %v2112
      %2116 = vmatprep.subr.bf16.mxu0 0
      %2117 = vmatpush1.bf16.msra.mxu0 0
      %2118 = vmatprep.subr.bf16.mxu0 0
      %2119 = vmatpush1.bf16.msra.mxu0 0
      %2120 = vmatprep.subr.bf16.mxu0 0
      %2121 = vmatpush1.bf16.msra.mxu0 0
      %2122 = vmatprep.subr.bf16.mxu0 0
      %2123 = vmatpush1.bf16.msra.mxu0 0
      %2124 = vmatprep.subr.bf16.mxu0 0
      %2125 = vmatpush1.bf16.msra.mxu0 0
      %2126 = vmatprep.subr.bf16.mxu0 0
      %2127 = vmatpush1.bf16.msra.mxu0 0
      %2128 = vmatprep.subr.bf16.mxu0 0
      %2129 = vmatpush1.bf16.msra.mxu0 0
      %2130 = vmatprep.subr.bf16.mxu0 0
      %2131 = vmatpush1.bf16.msra.mxu0 0
      %2132 = vmatprep.subr.bf16.mxu0 0
      %2133 = vmatpush1.bf16.msra.mxu0 0
      %2134 = vmatprep.subr.bf16.mxu0 0
      %2135 = vmatpush1.bf16.msra.mxu0 0
      %2136 = vmatprep.subr.bf16.mxu0 0
      %2137 = vmatpush1.bf16.msra.mxu0 0
      %2138 = vmatprep.subr.bf16.mxu0 0
      %2139 = vmatpush1.bf16.msra.mxu0 0
      %2140 = vmatprep.subr.bf16.mxu0 0
      %2141 = vmatpush1.bf16.msra.mxu0 0
      %2142 = vmatprep.subr.bf16.mxu0 0
      %2143 = vmatpush1.bf16.msra.mxu0 0
      %2144 = vmatprep.subr.bf16.mxu0 0
      %2145 = vmatpush1.bf16.msra.mxu0 0
      %2146 = vmatprep.mubr.bf16.mxu0 0
      %2147 = vmatmul.mubr.bf16.gmra.mrb[0].mxu0 %v2088
      %v2148 = vpop.f32.mrb[0].mxu0
      %v2149 = vadd.f32 0.0, %v2148
      %v2150 = vpop.f32.mrb[0].mxu0
      %v2151 = vpop.f32.mrb[0].mxu0
      %v2152 = vadd.f32 0.0, %v2151
      %v2153 = vpop.f32.mrb[0].mxu0
      %2154 = vmatprep.mubr.bf16.mxu0 0
      %2155 = vmatmul.mubr.bf16.gmra.mrb[0].mxu0 %v2091
      %v2156 = vpop.f32.mrb[0].mxu0
      %v2157 = vadd.f32 0.0, %v2156
      %v2158 = vpop.f32.mrb[0].mxu0
      %v2159 = vpop.f32.mrb[0].mxu0
      %v2160 = vadd.f32 0.0, %v2159
      %v2161 = vpop.f32.mrb[0].mxu0
      %2162 = vmatprep.mubr.bf16.mxu0 0
      %2163 = vmatmul.mubr.bf16.gmra.mrb[0].mxu0 %v2094
      %v2164 = vpop.f32.mrb[0].mxu0
      %v2165 = vadd.f32 0.0, %v2164
      %v2166 = vpop.f32.mrb[0].mxu0
      %v2167 = vpop.f32.mrb[0].mxu0
      %v2168 = vadd.f32 0.0, %v2167
      %v2169 = vpop.f32.mrb[0].mxu0
      %2170 = vmatprep.mubr.bf16.mxu0 0
      %2171 = vmatmul.mubr.bf16.gmra.mrb[0].mxu0 %v2097
      %v2172 = vpop.f32.mrb[0].mxu0
      %v2173 = vadd.f32 0.0, %v2172
      %v2174 = vpop.f32.mrb[0].mxu0
      %v2175 = vpop.f32.mrb[0].mxu0
      %v2176 = vadd.f32 0.0, %v2175
      %v2177 = vpop.f32.mrb[0].mxu0
      %2178 = vmatprep.mubr.bf16.mxu0 0
      %2179 = vmatmul.mubr.bf16.gmra.mrb[0].mxu0 %v2100
      %v2180 = vpop.f32.mrb[0].mxu0
      %v2181 = vadd.f32 0.0, %v2180
      %v2182 = vpop.f32.mrb[0].mxu0
      %v2183 = vpop.f32.mrb[0].mxu0
      %v2184 = vadd.f32 0.0, %v2183
      %v2185 = vpop.f32.mrb[0].mxu0
      %2186 = vmatprep.mubr.bf16.mxu0 0
      %2187 = vmatmul.mubr.bf16.gmra.mrb[0].mxu0 %v2103
      %v2188 = vpop.f32.mrb[0].mxu0
      %v2189 = vadd.f32 0.0, %v2188
      %v2190 = vpop.f32.mrb[0].mxu0
      %v2191 = vpop.f32.mrb[0].mxu0
      %v2192 = vadd.f32 0.0, %v2191
      %v2193 = vpop.f32.mrb[0].mxu0
      %2194 = vmatprep.mubr.bf16.mxu0 0
      %2195 = vmatmul.mubr.bf16.gmra.mrb[0].mxu0 %v2106
      %v2196 = vpop.f32.mrb[0].mxu0
      %v2197 = vadd.f32 0.0, %v2196
      %v2198 = vpop.f32.mrb[0].mxu0
      %v2199 = vpop.f32.mrb[0].mxu0
      %v2200 = vadd.f32 0.0, %v2199
      %v2201 = vpop.f32.mrb[0].mxu0
      %2202 = vmatprep.mubr.bf16.mxu0 0
      %2203 = vmatmul.mubr.bf16.gmra.mrb[0].mxu0 %v2109
      %v2204 = vpop.f32.mrb[0].mxu0
      %v2205 = vadd.f32 0.0, %v2204
      %v2206 = vpop.f32.mrb[0].mxu0
      %v2207 = vpop.f32.mrb[0].mxu0
      %v2208 = vadd.f32 0.0, %v2207
      %v2209 = vpop.f32.mrb[0].mxu0
      %2210 = vdwg.mxu0
      %v2212 = vsel %vm1465, %v1441, 0
      %v2215 = vsel %vm1465, %v1442, 0
      %v2218 = vsel %vm1465, %v1443, 0
      %v2221 = vsel %vm1465, %v1444, 0
      %v2224 = vsel %vm1465, %v1445, 0
      %v2227 = vsel %vm1465, %v1446, 0
      %v2230 = vsel %vm1465, %v1447, 0
      %v2233 = vsel %vm1465, %v1448, 0
      %v2236 = vsel %vm1490, %v1463, 0
      %2238 = vmatprep.subr.bf16.mxu0 0
      %2239 = vmatpush1.bf16.msra.mxu0 %v2236
      %2240 = vmatprep.subr.bf16.mxu0 0
      %2241 = vmatpush1.bf16.msra.mxu0 0
      %2242 = vmatprep.subr.bf16.mxu0 0
      %2243 = vmatpush1.bf16.msra.mxu0 0
      %2244 = vmatprep.subr.bf16.mxu0 0
      %2245 = vmatpush1.bf16.msra.mxu0 0
      %2246 = vmatprep.subr.bf16.mxu0 0
      %2247 = vmatpush1.bf16.msra.mxu0 0
      %2248 = vmatprep.subr.bf16.mxu0 0
      %2249 = vmatpush1.bf16.msra.mxu0 0
      %2250 = vmatprep.subr.bf16.mxu0 0
      %2251 = vmatpush1.bf16.msra.mxu0 0
      %2252 = vmatprep.subr.bf16.mxu0 0
      %2253 = vmatpush1.bf16.msra.mxu0 0
      %2254 = vmatprep.subr.bf16.mxu0 0
      %2255 = vmatpush1.bf16.msra.mxu0 0
      %2256 = vmatprep.subr.bf16.mxu0 0
      %2257 = vmatpush1.bf16.msra.mxu0 0
      %2258 = vmatprep.subr.bf16.mxu0 0
      %2259 = vmatpush1.bf16.msra.mxu0 0
      %2260 = vmatprep.subr.bf16.mxu0 0
      %2261 = vmatpush1.bf16.msra.mxu0 0
      %2262 = vmatprep.subr.bf16.mxu0 0
      %2263 = vmatpush1.bf16.msra.mxu0 0
      %2264 = vmatprep.subr.bf16.mxu0 0
      %2265 = vmatpush1.bf16.msra.mxu0 0
      %2266 = vmatprep.subr.bf16.mxu0 0
      %2267 = vmatpush1.bf16.msra.mxu0 0
      %2268 = vmatprep.subr.bf16.mxu0 0
      %2269 = vmatpush1.bf16.msra.mxu0 0
      %2270 = vmatprep.mubr.bf16.mxu0 0
      %2271 = vmatmul.mubr.bf16.gmra.mrb[0].mxu0 %v2212
      %v2272 = vpop.f32.mrb[0].mxu0
      %v2273 = vadd.f32 0.0, %v2272
      %v2274 = vpop.f32.mrb[0].mxu0
      %v2275 = vpop.f32.mrb[0].mxu0
      %v2276 = vadd.f32 0.0, %v2275
      %v2277 = vpop.f32.mrb[0].mxu0
      %2278 = vmatprep.mubr.bf16.mxu0 0
      %2279 = vmatmul.mubr.bf16.gmra.mrb[0].mxu0 %v2215
      %v2280 = vpop.f32.mrb[0].mxu0
      %v2281 = vadd.f32 0.0, %v2280
      %v2282 = vpop.f32.mrb[0].mxu0
      %v2283 = vpop.f32.mrb[0].mxu0
      %v2284 = vadd.f32 0.0, %v2283
      %v2285 = vpop.f32.mrb[0].mxu0
      %2286 = vmatprep.mubr.bf16.mxu0 0
      %2287 = vmatmul.mubr.bf16.gmra.mrb[0].mxu0 %v2218
      %v2288 = vpop.f32.mrb[0].mxu0
      %v2289 = vadd.f32 0.0, %v2288
      %v2290 = vpop.f32.mrb[0].mxu0
      %v2291 = vpop.f32.mrb[0].mxu0
      %v2292 = vadd.f32 0.0, %v2291
      %v2293 = vpop.f32.mrb[0].mxu0
      %2294 = vmatprep.mubr.bf16.mxu0 0
      %2295 = vmatmul.mubr.bf16.gmra.mrb[0].mxu0 %v2221
      %v2296 = vpop.f32.mrb[0].mxu0
      %v2297 = vadd.f32 0.0, %v2296
      %v2298 = vpop.f32.mrb[0].mxu0
      %v2299 = vpop.f32.mrb[0].mxu0
      %v2300 = vadd.f32 0.0, %v2299
      %v2301 = vpop.f32.mrb[0].mxu0
      %2302 = vmatprep.mubr.bf16.mxu0 0
      %2303 = vmatmul.mubr.bf16.gmra.mrb[0].mxu0 %v2224
      %v2304 = vpop.f32.mrb[0].mxu0
      %v2305 = vadd.f32 0.0, %v2304
      %v2306 = vpop.f32.mrb[0].mxu0
      %v2307 = vpop.f32.mrb[0].mxu0
      %v2308 = vadd.f32 0.0, %v2307
      %v2309 = vpop.f32.mrb[0].mxu0
      %2310 = vmatprep.mubr.bf16.mxu0 0
      %2311 = vmatmul.mubr.bf16.gmra.mrb[0].mxu0 %v2227
      %v2312 = vpop.f32.mrb[0].mxu0
      %v2313 = vadd.f32 0.0, %v2312
      %v2314 = vpop.f32.mrb[0].mxu0
      %v2315 = vpop.f32.mrb[0].mxu0
      %v2316 = vadd.f32 0.0, %v2315
      %v2317 = vpop.f32.mrb[0].mxu0
      %2318 = vmatprep.mubr.bf16.mxu0 0
      %2319 = vmatmul.mubr.bf16.gmra.mrb[0].mxu0 %v2230
      %v2320 = vpop.f32.mrb[0].mxu0
      %v2321 = vadd.f32 0.0, %v2320
      %v2322 = vpop.f32.mrb[0].mxu0
      %v2323 = vpop.f32.mrb[0].mxu0
      %v2324 = vadd.f32 0.0, %v2323
      %v2325 = vpop.f32.mrb[0].mxu0
      %2326 = vmatprep.mubr.bf16.mxu0 0
      %2327 = vmatmul.mubr.bf16.gmra.mrb[0].mxu0 %v2233
      %v2328 = vpop.f32.mrb[0].mxu0
      %v2329 = vadd.f32 0.0, %v2328
      %v2330 = vpop.f32.mrb[0].mxu0
      %v2331 = vpop.f32.mrb[0].mxu0
      %v2332 = vadd.f32 0.0, %v2331
      %v2333 = vpop.f32.mrb[0].mxu0
      %2334 = vdwg.mxu0
      %v2336 = vsel %vm1465, %v1449, 0
      %v2339 = vsel %vm1465, %v1450, 0
      %v2342 = vsel %vm1465, %v1451, 0
      %v2345 = vsel %vm1465, %v1452, 0
      %v2348 = vsel %vm1465, %v1453, 0
      %v2351 = vsel %vm1465, %v1454, 0
      %v2354 = vsel %vm1465, %v1455, 0
      %v2357 = vsel %vm1465, %v1456, 0
      %v2360 = vsel %vm1490, %v1464, 0
      %2362 = vmatprep.subr.bf16.mxu0 0
      %2363 = vmatpush1.bf16.msra.mxu0 %v2360
      %2364 = vmatprep.subr.bf16.mxu0 0
      %2365 = vmatpush1.bf16.msra.mxu0 0
      %2366 = vmatprep.subr.bf16.mxu0 0
      %2367 = vmatpush1.bf16.msra.mxu0 0
      %2368 = vmatprep.subr.bf16.mxu0 0
      %2369 = vmatpush1.bf16.msra.mxu0 0
      %2370 = vmatprep.subr.bf16.mxu0 0
      %2371 = vmatpush1.bf16.msra.mxu0 0
      %2372 = vmatprep.subr.bf16.mxu0 0
      %2373 = vmatpush1.bf16.msra.mxu0 0
      %2374 = vmatprep.subr.bf16.mxu0 0
      %2375 = vmatpush1.bf16.msra.mxu0 0
      %2376 = vmatprep.subr.bf16.mxu0 0
      %2377 = vmatpush1.bf16.msra.mxu0 0
      %2378 = vmatprep.subr.bf16.mxu0 0
      %2379 = vmatpush1.bf16.msra.mxu0 0
      %2380 = vmatprep.subr.bf16.mxu0 0
      %2381 = vmatpush1.bf16.msra.mxu0 0
      %2382 = vmatprep.subr.bf16.mxu0 0
      %2383 = vmatpush1.bf16.msra.mxu0 0
      %2384 = vmatprep.subr.bf16.mxu0 0
      %2385 = vmatpush1.bf16.msra.mxu0 0
      %2386 = vmatprep.subr.bf16.mxu0 0
      %2387 = vmatpush1.bf16.msra.mxu0 0
      %2388 = vmatprep.subr.bf16.mxu0 0
      %2389 = vmatpush1.bf16.msra.mxu0 0
      %2390 = vmatprep.subr.bf16.mxu0 0
      %2391 = vmatpush1.bf16.msra.mxu0 0
      %2392 = vmatprep.subr.bf16.mxu0 0
      %2393 = vmatpush1.bf16.msra.mxu0 0
      %2394 = vmatprep.mubr.bf16.mxu0 0
      %2395 = vmatmul.mubr.bf16.gmra.mrb[0].mxu0 %v2336
      %v2396 = vpop.f32.mrb[0].mxu0
      %v2397 = vadd.f32 0.0, %v2396
      %v2398 = vpop.f32.mrb[0].mxu0
      %v2399 = vpop.f32.mrb[0].mxu0
      %v2400 = vadd.f32 0.0, %v2399
      %v2401 = vpop.f32.mrb[0].mxu0
      %2402 = vmatprep.mubr.bf16.mxu0 0
      %2403 = vmatmul.mubr.bf16.gmra.mrb[0].mxu0 %v2339
      %v2404 = vpop.f32.mrb[0].mxu0
      %v2405 = vadd.f32 0.0, %v2404
      %v2406 = vpop.f32.mrb[0].mxu0
      %v2407 = vpop.f32.mrb[0].mxu0
      %v2408 = vadd.f32 0.0, %v2407
      %v2409 = vpop.f32.mrb[0].mxu0
      %2410 = vmatprep.mubr.bf16.mxu0 0
      %2411 = vmatmul.mubr.bf16.gmra.mrb[0].mxu0 %v2342
      %v2412 = vpop.f32.mrb[0].mxu0
      %v2413 = vadd.f32 0.0, %v2412
      %v2414 = vpop.f32.mrb[0].mxu0
      %v2415 = vpop.f32.mrb[0].mxu0
      %v2416 = vadd.f32 0.0, %v2415
      %v2417 = vpop.f32.mrb[0].mxu0
      %2418 = vmatprep.mubr.bf16.mxu0 0
      %2419 = vmatmul.mubr.bf16.gmra.mrb[0].mxu0 %v2345
      %v2420 = vpop.f32.mrb[0].mxu0
      %v2421 = vadd.f32 0.0, %v2420
      %v2422 = vpop.f32.mrb[0].mxu0
      %v2423 = vpop.f32.mrb[0].mxu0
      %v2424 = vadd.f32 0.0, %v2423
      %v2425 = vpop.f32.mrb[0].mxu0
      %2426 = vmatprep.mubr.bf16.mxu0 0
      %2427 = vmatmul.mubr.bf16.gmra.mrb[0].mxu0 %v2348
      %v2428 = vpop.f32.mrb[0].mxu0
      %v2429 = vadd.f32 0.0, %v2428
      %v2430 = vpop.f32.mrb[0].mxu0
      %v2431 = vpop.f32.mrb[0].mxu0
      %v2432 = vadd.f32 0.0, %v2431
      %v2433 = vpop.f32.mrb[0].mxu0
      %2434 = vmatprep.mubr.bf16.mxu0 0
      %2435 = vmatmul.mubr.bf16.gmra.mrb[0].mxu0 %v2351
      %v2436 = vpop.f32.mrb[0].mxu0
      %v2437 = vadd.f32 0.0, %v2436
      %v2438 = vpop.f32.mrb[0].mxu0
      %v2439 = vpop.f32.mrb[0].mxu0
      %v2440 = vadd.f32 0.0, %v2439
      %v2441 = vpop.f32.mrb[0].mxu0
      %2442 = vmatprep.mubr.bf16.mxu0 0
      %2443 = vmatmul.mubr.bf16.gmra.mrb[0].mxu0 %v2354
      %v2444 = vpop.f32.mrb[0].mxu0
      %v2445 = vadd.f32 0.0, %v2444
      %v2446 = vpop.f32.mrb[0].mxu0
      %v2447 = vpop.f32.mrb[0].mxu0
      %v2448 = vadd.f32 0.0, %v2447
      %v2449 = vpop.f32.mrb[0].mxu0
      %2450 = vmatprep.mubr.bf16.mxu0 0
      %2451 = vmatmul.mubr.bf16.gmra.mrb[0].mxu0 %v2357
      %v2452 = vpop.f32.mrb[0].mxu0
      %v2453 = vadd.f32 0.0, %v2452
      %v2454 = vpop.f32.mrb[0].mxu0
      %v2455 = vpop.f32.mrb[0].mxu0
      %v2456 = vadd.f32 0.0, %v2455
      %v2457 = vpop.f32.mrb[0].mxu0
      %2458 = vdwg.mxu0
      %2459 = vmax.xlane.f32.xlu0 %v1529
      %v2460 = vpop.xlane.xlu0 %2459
      %2461 = vmax.xlane.f32.xlu0 %v1532
      %v2462 = vpop.xlane.xlu0 %2461
      %2463 = vmax.xlane.f32.xlu0 %v1537
      %v2464 = vpop.xlane.xlu0 %2463
      %2465 = vmax.xlane.f32.xlu0 %v1540
      %v2466 = vpop.xlane.xlu0 %2465
      %2467 = vmax.xlane.f32.xlu0 %v1545
      %v2468 = vpop.xlane.xlu0 %2467
      %2469 = vmax.xlane.f32.xlu0 %v1548
      %v2470 = vpop.xlane.xlu0 %2469
      %2471 = vmax.xlane.f32.xlu0 %v1553
      %v2472 = vpop.xlane.xlu0 %2471
      %2473 = vmax.xlane.f32.xlu0 %v1556
      %v2474 = vpop.xlane.xlu0 %2473
      %2475 = vmax.xlane.f32.xlu0 %v1561
      %v2476 = vpop.xlane.xlu0 %2475
      %2477 = vmax.xlane.f32.xlu0 %v1564
      %v2478 = vpop.xlane.xlu0 %2477
      %2479 = vmax.xlane.f32.xlu0 %v1569
      %v2480 = vpop.xlane.xlu0 %2479
      %2481 = vmax.xlane.f32.xlu0 %v1572
      %v2482 = vpop.xlane.xlu0 %2481
      %2483 = vmax.xlane.f32.xlu0 %v1577
      %v2484 = vpop.xlane.xlu0 %2483
      %2485 = vmax.xlane.f32.xlu0 %v1580
      %v2486 = vpop.xlane.xlu0 %2485
      %2487 = vmax.xlane.f32.xlu0 %v1585
      %v2488 = vpop.xlane.xlu0 %2487
      %2489 = vmax.xlane.f32.xlu0 %v1588
      %v2490 = vpop.xlane.xlu0 %2489
      %2491 = vmax.xlane.f32.xlu0 %v1653
      %v2492 = vpop.xlane.xlu0 %2491
      %2493 = vmax.xlane.f32.xlu0 %v1656
      %v2494 = vpop.xlane.xlu0 %2493
      %2495 = vmax.xlane.f32.xlu0 %v1661
      %v2496 = vpop.xlane.xlu0 %2495
      %2497 = vmax.xlane.f32.xlu0 %v1664
      %v2498 = vpop.xlane.xlu0 %2497
      %2499 = vmax.xlane.f32.xlu0 %v1669
      %v2500 = vpop.xlane.xlu0 %2499
      %2501 = vmax.xlane.f32.xlu0 %v1672
      %v2502 = vpop.xlane.xlu0 %2501
      %2503 = vmax.xlane.f32.xlu0 %v1677
      %v2504 = vpop.xlane.xlu0 %2503
      %2505 = vmax.xlane.f32.xlu0 %v1680
      %v2506 = vpop.xlane.xlu0 %2505
      %2507 = vmax.xlane.f32.xlu0 %v1685
      %v2508 = vpop.xlane.xlu0 %2507
      %2509 = vmax.xlane.f32.xlu0 %v1688
      %v2510 = vpop.xlane.xlu0 %2509
      %2511 = vmax.xlane.f32.xlu0 %v1693
      %v2512 = vpop.xlane.xlu0 %2511
      %2513 = vmax.xlane.f32.xlu0 %v1696
      %v2514 = vpop.xlane.xlu0 %2513
      %2515 = vmax.xlane.f32.xlu0 %v1701
      %v2516 = vpop.xlane.xlu0 %2515
      %2517 = vmax.xlane.f32.xlu0 %v1704
      %v2518 = vpop.xlane.xlu0 %2517
      %2519 = vmax.xlane.f32.xlu0 %v1709
      %v2520 = vpop.xlane.xlu0 %2519
      %2521 = vmax.xlane.f32.xlu0 %v1712
      %v2522 = vpop.xlane.xlu0 %2521
      %2523 = vmax.xlane.f32.xlu0 %v1777
      %v2524 = vpop.xlane.xlu0 %2523
      %2525 = vmax.xlane.f32.xlu0 %v1780
      %v2526 = vpop.xlane.xlu0 %2525
      %2527 = vmax.xlane.f32.xlu0 %v1785
      %v2528 = vpop.xlane.xlu0 %2527
      %2529 = vmax.xlane.f32.xlu0 %v1788
      %v2530 = vpop.xlane.xlu0 %2529
      %2531 = vmax.xlane.f32.xlu0 %v1793
      %v2532 = vpop.xlane.xlu0 %2531
      %2533 = vmax.xlane.f32.xlu0 %v1796
      %v2534 = vpop.xlane.xlu0 %2533
      %2535 = vmax.xlane.f32.xlu0 %v1801
      %v2536 = vpop.xlane.xlu0 %2535
      %2537 = vmax.xlane.f32.xlu0 %v1804
      %v2538 = vpop.xlane.xlu0 %2537
      %2539 = vmax.xlane.f32.xlu0 %v1809
      %v2540 = vpop.xlane.xlu0 %2539
      %2541 = vmax.xlane.f32.xlu0 %v1812
      %v2542 = vpop.xlane.xlu0 %2541
      %2543 = vmax.xlane.f32.xlu0 %v1817
      %v2544 = vpop.xlane.xlu0 %2543
      %2545 = vmax.xlane.f32.xlu0 %v1820
      %v2546 = vpop.xlane.xlu0 %2545
      %2547 = vmax.xlane.f32.xlu0 %v1825
      %v2548 = vpop.xlane.xlu0 %2547
      %2549 = vmax.xlane.f32.xlu0 %v1828
      %v2550 = vpop.xlane.xlu0 %2549
      %2551 = vmax.xlane.f32.xlu0 %v1833
      %v2552 = vpop.xlane.xlu0 %2551
      %2553 = vmax.xlane.f32.xlu0 %v1836
      %v2554 = vpop.xlane.xlu0 %2553
      %2555 = vmax.xlane.f32.xlu0 %v1901
      %v2556 = vpop.xlane.xlu0 %2555
      %2557 = vmax.xlane.f32.xlu0 %v1904
      %v2558 = vpop.xlane.xlu0 %2557
      %2559 = vmax.xlane.f32.xlu0 %v1909
      %v2560 = vpop.xlane.xlu0 %2559
      %2561 = vmax.xlane.f32.xlu0 %v1912
      %v2562 = vpop.xlane.xlu0 %2561
      %2563 = vmax.xlane.f32.xlu0 %v1917
      %v2564 = vpop.xlane.xlu0 %2563
      %2565 = vmax.xlane.f32.xlu0 %v1920
      %v2566 = vpop.xlane.xlu0 %2565
      %2567 = vmax.xlane.f32.xlu0 %v1925
      %v2568 = vpop.xlane.xlu0 %2567
      %2569 = vmax.xlane.f32.xlu0 %v1928
      %v2570 = vpop.xlane.xlu0 %2569
      %2571 = vmax.xlane.f32.xlu0 %v1933
      %v2572 = vpop.xlane.xlu0 %2571
      %2573 = vmax.xlane.f32.xlu0 %v1936
      %v2574 = vpop.xlane.xlu0 %2573
      %2575 = vmax.xlane.f32.xlu0 %v1941
      %v2576 = vpop.xlane.xlu0 %2575
      %2577 = vmax.xlane.f32.xlu0 %v1944
      %v2578 = vpop.xlane.xlu0 %2577
      %2579 = vmax.xlane.f32.xlu0 %v1949
      %v2580 = vpop.xlane.xlu0 %2579
      %2581 = vmax.xlane.f32.xlu0 %v1952
      %v2582 = vpop.xlane.xlu0 %2581
      %2583 = vmax.xlane.f32.xlu0 %v1957
      %v2584 = vpop.xlane.xlu0 %2583
      %2585 = vmax.xlane.f32.xlu0 %v1960
      %v2586 = vpop.xlane.xlu0 %2585
      %2587 = vmax.xlane.f32.xlu0 %v2025
      %v2588 = vpop.xlane.xlu0 %2587
      %2589 = vmax.xlane.f32.xlu0 %v2028
      %v2590 = vpop.xlane.xlu0 %2589
      %2591 = vmax.xlane.f32.xlu0 %v2033
      %v2592 = vpop.xlane.xlu0 %2591
      %2593 = vmax.xlane.f32.xlu0 %v2036
      %v2594 = vpop.xlane.xlu0 %2593
      %2595 = vmax.xlane.f32.xlu0 %v2041
      %v2596 = vpop.xlane.xlu0 %2595
      %2597 = vmax.xlane.f32.xlu0 %v2044
      %v2598 = vpop.xlane.xlu0 %2597
      %2599 = vmax.xlane.f32.xlu0 %v2049
      %v2600 = vpop.xlane.xlu0 %2599
      %2601 = vmax.xlane.f32.xlu0 %v2052
      %v2602 = vpop.xlane.xlu0 %2601
      %2603 = vmax.xlane.f32.xlu0 %v2057
      %v2604 = vpop.xlane.xlu0 %2603
      %2605 = vmax.xlane.f32.xlu0 %v2060
      %v2606 = vpop.xlane.xlu0 %2605
      %2607 = vmax.xlane.f32.xlu0 %v2065
      %v2608 = vpop.xlane.xlu0 %2607
      %2609 = vmax.xlane.f32.xlu0 %v2068
      %v2610 = vpop.xlane.xlu0 %2609
      %2611 = vmax.xlane.f32.xlu0 %v2073
      %v2612 = vpop.xlane.xlu0 %2611
      %2613 = vmax.xlane.f32.xlu0 %v2076
      %v2614 = vpop.xlane.xlu0 %2613
      %2615 = vmax.xlane.f32.xlu0 %v2081
      %v2616 = vpop.xlane.xlu0 %2615
      %2617 = vmax.xlane.f32.xlu0 %v2084
      %v2618 = vpop.xlane.xlu0 %2617
      %2619 = vmax.xlane.f32.xlu0 %v2149
      %v2620 = vpop.xlane.xlu0 %2619
      %2621 = vmax.xlane.f32.xlu0 %v2152
      %v2622 = vpop.xlane.xlu0 %2621
      %2623 = vmax.xlane.f32.xlu0 %v2157
      %v2624 = vpop.xlane.xlu0 %2623
      %2625 = vmax.xlane.f32.xlu0 %v2160
      %v2626 = vpop.xlane.xlu0 %2625
      %2627 = vmax.xlane.f32.xlu0 %v2165
      %v2628 = vpop.xlane.xlu0 %2627
      %2629 = vmax.xlane.f32.xlu0 %v2168
      %v2630 = vpop.xlane.xlu0 %2629
      %2631 = vmax.xlane.f32.xlu0 %v2173
      %v2632 = vpop.xlane.xlu0 %2631
      %2633 = vmax.xlane.f32.xlu0 %v2176
      %v2634 = vpop.xlane.xlu0 %2633
      %2635 = vmax.xlane.f32.xlu0 %v2181
      %v2636 = vpop.xlane.xlu0 %2635
      %2637 = vmax.xlane.f32.xlu0 %v2184
      %v2638 = vpop.xlane.xlu0 %2637
      %2639 = vmax.xlane.f32.xlu0 %v2189
      %v2640 = vpop.xlane.xlu0 %2639
      %2641 = vmax.xlane.f32.xlu0 %v2192
      %v2642 = vpop.xlane.xlu0 %2641
      %2643 = vmax.xlane.f32.xlu0 %v2197
      %v2644 = vpop.xlane.xlu0 %2643
      %2645 = vmax.xlane.f32.xlu0 %v2200
      %v2646 = vpop.xlane.xlu0 %2645
      %2647 = vmax.xlane.f32.xlu0 %v2205
      %v2648 = vpop.xlane.xlu0 %2647
      %2649 = vmax.xlane.f32.xlu0 %v2208
      %v2650 = vpop.xlane.xlu0 %2649
      %2651 = vmax.xlane.f32.xlu0 %v2273
      %v2652 = vpop.xlane.xlu0 %2651
      %2653 = vmax.xlane.f32.xlu0 %v2276
      %v2654 = vpop.xlane.xlu0 %2653
      %2655 = vmax.xlane.f32.xlu0 %v2281
      %v2656 = vpop.xlane.xlu0 %2655
      %2657 = vmax.xlane.f32.xlu0 %v2284
      %v2658 = vpop.xlane.xlu0 %2657
      %2659 = vmax.xlane.f32.xlu0 %v2289
      %v2660 = vpop.xlane.xlu0 %2659
      %2661 = vmax.xlane.f32.xlu0 %v2292
      %v2662 = vpop.xlane.xlu0 %2661
      %2663 = vmax.xlane.f32.xlu0 %v2297
      %v2664 = vpop.xlane.xlu0 %2663
      %2665 = vmax.xlane.f32.xlu0 %v2300
      %v2666 = vpop.xlane.xlu0 %2665
      %2667 = vmax.xlane.f32.xlu0 %v2305
      %v2668 = vpop.xlane.xlu0 %2667
      %2669 = vmax.xlane.f32.xlu0 %v2308
      %v2670 = vpop.xlane.xlu0 %2669
      %2671 = vmax.xlane.f32.xlu0 %v2313
      %v2672 = vpop.xlane.xlu0 %2671
      %2673 = vmax.xlane.f32.xlu0 %v2316
      %v2674 = vpop.xlane.xlu0 %2673
      %2675 = vmax.xlane.f32.xlu0 %v2321
      %v2676 = vpop.xlane.xlu0 %2675
      %2677 = vmax.xlane.f32.xlu0 %v2324
      %v2678 = vpop.xlane.xlu0 %2677
      %2679 = vmax.xlane.f32.xlu0 %v2329
      %v2680 = vpop.xlane.xlu0 %2679
      %2681 = vmax.xlane.f32.xlu0 %v2332
      %v2682 = vpop.xlane.xlu0 %2681
      %2683 = vmax.xlane.f32.xlu0 %v2397
      %v2684 = vpop.xlane.xlu0 %2683
      %2685 = vmax.xlane.f32.xlu0 %v2400
      %v2686 = vpop.xlane.xlu0 %2685
      %2687 = vmax.xlane.f32.xlu0 %v2405
      %v2688 = vpop.xlane.xlu0 %2687
      %2689 = vmax.xlane.f32.xlu0 %v2408
      %v2690 = vpop.xlane.xlu0 %2689
      %2691 = vmax.xlane.f32.xlu0 %v2413
      %v2692 = vpop.xlane.xlu0 %2691
      %2693 = vmax.xlane.f32.xlu0 %v2416
      %v2694 = vpop.xlane.xlu0 %2693
      %2695 = vmax.xlane.f32.xlu0 %v2421
      %v2696 = vpop.xlane.xlu0 %2695
      %2697 = vmax.xlane.f32.xlu0 %v2424
      %v2698 = vpop.xlane.xlu0 %2697
      %2699 = vmax.xlane.f32.xlu0 %v2429
      %v2700 = vpop.xlane.xlu0 %2699
      %2701 = vmax.xlane.f32.xlu0 %v2432
      %v2702 = vpop.xlane.xlu0 %2701
      %2703 = vmax.xlane.f32.xlu0 %v2437
      %v2704 = vpop.xlane.xlu0 %2703
      %2705 = vmax.xlane.f32.xlu0 %v2440
      %v2706 = vpop.xlane.xlu0 %2705
      %2707 = vmax.xlane.f32.xlu0 %v2445
      %v2708 = vpop.xlane.xlu0 %2707
      %2709 = vmax.xlane.f32.xlu0 %v2448
      %v2710 = vpop.xlane.xlu0 %2709
      %2711 = vmax.xlane.f32.xlu0 %v2453
      %v2712 = vpop.xlane.xlu0 %2711
      %2713 = vmax.xlane.f32.xlu0 %v2456
      %v2714 = vpop.xlane.xlu0 %2713
      %v2715 = vsub.f32 %v1529, %v2460
      %v2716 = vsub.f32 %v1532, %v2462
      %v2717 = vsub.f32 %v1537, %v2464
      %v2718 = vsub.f32 %v1540, %v2466
      %v2719 = vsub.f32 %v1545, %v2468
      %v2720 = vsub.f32 %v1548, %v2470
      %v2721 = vsub.f32 %v1553, %v2472
      %v2722 = vsub.f32 %v1556, %v2474
      %v2723 = vsub.f32 %v1561, %v2476
      %v2724 = vsub.f32 %v1564, %v2478
      %v2725 = vsub.f32 %v1569, %v2480
      %v2726 = vsub.f32 %v1572, %v2482
      %v2727 = vsub.f32 %v1577, %v2484
      %v2728 = vsub.f32 %v1580, %v2486
      %v2729 = vsub.f32 %v1585, %v2488
      %v2730 = vsub.f32 %v1588, %v2490
      %v2731 = vsub.f32 %v1653, %v2492
      %v2732 = vsub.f32 %v1656, %v2494
      %v2733 = vsub.f32 %v1661, %v2496
      %v2734 = vsub.f32 %v1664, %v2498
      %v2735 = vsub.f32 %v1669, %v2500
      %v2736 = vsub.f32 %v1672, %v2502
      %v2737 = vsub.f32 %v1677, %v2504
      %v2738 = vsub.f32 %v1680, %v2506
      %v2739 = vsub.f32 %v1685, %v2508
      %v2740 = vsub.f32 %v1688, %v2510
      %v2741 = vsub.f32 %v1693, %v2512
      %v2742 = vsub.f32 %v1696, %v2514
      %v2743 = vsub.f32 %v1701, %v2516
      %v2744 = vsub.f32 %v1704, %v2518
      %v2745 = vsub.f32 %v1709, %v2520
      %v2746 = vsub.f32 %v1712, %v2522
      %v2747 = vsub.f32 %v1777, %v2524
      %v2748 = vsub.f32 %v1780, %v2526
      %v2749 = vsub.f32 %v1785, %v2528
      %v2750 = vsub.f32 %v1788, %v2530
      %v2751 = vsub.f32 %v1793, %v2532
      %v2752 = vsub.f32 %v1796, %v2534
      %v2753 = vsub.f32 %v1801, %v2536
      %v2754 = vsub.f32 %v1804, %v2538
      %v2755 = vsub.f32 %v1809, %v2540
      %v2756 = vsub.f32 %v1812, %v2542
      %v2757 = vsub.f32 %v1817, %v2544
      %v2758 = vsub.f32 %v1820, %v2546
      %v2759 = vsub.f32 %v1825, %v2548
      %v2760 = vsub.f32 %v1828, %v2550
      %v2761 = vsub.f32 %v1833, %v2552
      %v2762 = vsub.f32 %v1836, %v2554
      %v2763 = vsub.f32 %v1901, %v2556
      %v2764 = vsub.f32 %v1904, %v2558
      %v2765 = vsub.f32 %v1909, %v2560
      %v2766 = vsub.f32 %v1912, %v2562
      %v2767 = vsub.f32 %v1917, %v2564
      %v2768 = vsub.f32 %v1920, %v2566
      %v2769 = vsub.f32 %v1925, %v2568
      %v2770 = vsub.f32 %v1928, %v2570
      %v2771 = vsub.f32 %v1933, %v2572
      %v2772 = vsub.f32 %v1936, %v2574
      %v2773 = vsub.f32 %v1941, %v2576
      %v2774 = vsub.f32 %v1944, %v2578
      %v2775 = vsub.f32 %v1949, %v2580
      %v2776 = vsub.f32 %v1952, %v2582
      %v2777 = vsub.f32 %v1957, %v2584
      %v2778 = vsub.f32 %v1960, %v2586
      %v2779 = vsub.f32 %v2025, %v2588
      %v2780 = vsub.f32 %v2028, %v2590
      %v2781 = vsub.f32 %v2033, %v2592
      %v2782 = vsub.f32 %v2036, %v2594
      %v2783 = vsub.f32 %v2041, %v2596
      %v2784 = vsub.f32 %v2044, %v2598
      %v2785 = vsub.f32 %v2049, %v2600
      %v2786 = vsub.f32 %v2052, %v2602
      %v2787 = vsub.f32 %v2057, %v2604
      %v2788 = vsub.f32 %v2060, %v2606
      %v2789 = vsub.f32 %v2065, %v2608
      %v2790 = vsub.f32 %v2068, %v2610
      %v2791 = vsub.f32 %v2073, %v2612
      %v2792 = vsub.f32 %v2076, %v2614
      %v2793 = vsub.f32 %v2081, %v2616
      %v2794 = vsub.f32 %v2084, %v2618
      %v2795 = vsub.f32 %v2149, %v2620
      %v2796 = vsub.f32 %v2152, %v2622
      %v2797 = vsub.f32 %v2157, %v2624
      %v2798 = vsub.f32 %v2160, %v2626
      %v2799 = vsub.f32 %v2165, %v2628
      %v2800 = vsub.f32 %v2168, %v2630
      %v2801 = vsub.f32 %v2173, %v2632
      %v2802 = vsub.f32 %v2176, %v2634
      %v2803 = vsub.f32 %v2181, %v2636
      %v2804 = vsub.f32 %v2184, %v2638
      %v2805 = vsub.f32 %v2189, %v2640
      %v2806 = vsub.f32 %v2192, %v2642
      %v2807 = vsub.f32 %v2197, %v2644
      %v2808 = vsub.f32 %v2200, %v2646
      %v2809 = vsub.f32 %v2205, %v2648
      %v2810 = vsub.f32 %v2208, %v2650
      %v2811 = vsub.f32 %v2273, %v2652
      %v2812 = vsub.f32 %v2276, %v2654
      %v2813 = vsub.f32 %v2281, %v2656
      %v2814 = vsub.f32 %v2284, %v2658
      %v2815 = vsub.f32 %v2289, %v2660
      %v2816 = vsub.f32 %v2292, %v2662
      %v2817 = vsub.f32 %v2297, %v2664
      %v2818 = vsub.f32 %v2300, %v2666
      %v2819 = vsub.f32 %v2305, %v2668
      %v2820 = vsub.f32 %v2308, %v2670
      %v2821 = vsub.f32 %v2313, %v2672
      %v2822 = vsub.f32 %v2316, %v2674
      %v2823 = vsub.f32 %v2321, %v2676
      %v2824 = vsub.f32 %v2324, %v2678
      %v2825 = vsub.f32 %v2329, %v2680
      %v2826 = vsub.f32 %v2332, %v2682
      %v2827 = vsub.f32 %v2397, %v2684
      %v2828 = vsub.f32 %v2400, %v2686
      %v2829 = vsub.f32 %v2405, %v2688
      %v2830 = vsub.f32 %v2408, %v2690
      %v2831 = vsub.f32 %v2413, %v2692
      %v2832 = vsub.f32 %v2416, %v2694
      %v2833 = vsub.f32 %v2421, %v2696
      %v2834 = vsub.f32 %v2424, %v2698
      %v2835 = vsub.f32 %v2429, %v2700
      %v2836 = vsub.f32 %v2432, %v2702
      %v2837 = vsub.f32 %v2437, %v2704
      %v2838 = vsub.f32 %v2440, %v2706
      %v2839 = vsub.f32 %v2445, %v2708
      %v2840 = vsub.f32 %v2448, %v2710
      %v2841 = vsub.f32 %v2453, %v2712
      %v2842 = vsub.f32 %v2456, %v2714
      %v2843 = vmul.f32 %v2715, 1.442695
      %v2844 = vpow.pop %v2843
      %v2845 = vmul.f32 %v2716, 1.442695
      %v2846 = vpow.pop %v2845
      %v2847 = vmul.f32 %v2717, 1.442695
      %v2848 = vpow.pop %v2847
      %v2849 = vmul.f32 %v2718, 1.442695
      %v2850 = vpow.pop %v2849
      %v2851 = vmul.f32 %v2719, 1.442695
      %v2852 = vpow.pop %v2851
      %v2853 = vmul.f32 %v2720, 1.442695
      %v2854 = vpow.pop %v2853
      %v2855 = vmul.f32 %v2721, 1.442695
      %v2856 = vpow.pop %v2855
      %v2857 = vmul.f32 %v2722, 1.442695
      %v2858 = vpow.pop %v2857
      %v2859 = vmul.f32 %v2723, 1.442695
      %v2860 = vpow.pop %v2859
      %v2861 = vmul.f32 %v2724, 1.442695
      %v2862 = vpow.pop %v2861
      %v2863 = vmul.f32 %v2725, 1.442695
      %v2864 = vpow.pop %v2863
      %v2865 = vmul.f32 %v2726, 1.442695
      %v2866 = vpow.pop %v2865
      %v2867 = vmul.f32 %v2727, 1.442695
      %v2868 = vpow.pop %v2867
      %v2869 = vmul.f32 %v2728, 1.442695
      %v2870 = vpow.pop %v2869
      %v2871 = vmul.f32 %v2729, 1.442695
      %v2872 = vpow.pop %v2871
      %v2873 = vmul.f32 %v2730, 1.442695
      %v2874 = vpow.pop %v2873
      %v2875 = vmul.f32 %v2731, 1.442695
      %v2876 = vpow.pop %v2875
      %v2877 = vmul.f32 %v2732, 1.442695
      %v2878 = vpow.pop %v2877
      %v2879 = vmul.f32 %v2733, 1.442695
      %v2880 = vpow.pop %v2879
      %v2881 = vmul.f32 %v2734, 1.442695
      %v2882 = vpow.pop %v2881
      %v2883 = vmul.f32 %v2735, 1.442695
      %v2884 = vpow.pop %v2883
      %v2885 = vmul.f32 %v2736, 1.442695
      %v2886 = vpow.pop %v2885
      %v2887 = vmul.f32 %v2737, 1.442695
      %v2888 = vpow.pop %v2887
      %v2889 = vmul.f32 %v2738, 1.442695
      %v2890 = vpow.pop %v2889
      %v2891 = vmul.f32 %v2739, 1.442695
      %v2892 = vpow.pop %v2891
      %v2893 = vmul.f32 %v2740, 1.442695
      %v2894 = vpow.pop %v2893
      %v2895 = vmul.f32 %v2741, 1.442695
      %v2896 = vpow.pop %v2895
      %v2897 = vmul.f32 %v2742, 1.442695
      %v2898 = vpow.pop %v2897
      %v2899 = vmul.f32 %v2743, 1.442695
      %v2900 = vpow.pop %v2899
      %v2901 = vmul.f32 %v2744, 1.442695
      %v2902 = vpow.pop %v2901
      %v2903 = vmul.f32 %v2745, 1.442695
      %v2904 = vpow.pop %v2903
      %v2905 = vmul.f32 %v2746, 1.442695
      %v2906 = vpow.pop %v2905
      %v2907 = vmul.f32 %v2747, 1.442695
      %v2908 = vpow.pop %v2907
      %v2909 = vmul.f32 %v2748, 1.442695
      %v2910 = vpow.pop %v2909
      %v2911 = vmul.f32 %v2749, 1.442695
      %v2912 = vpow.pop %v2911
      %v2913 = vmul.f32 %v2750, 1.442695
      %v2914 = vpow.pop %v2913
      %v2915 = vmul.f32 %v2751, 1.442695
      %v2916 = vpow.pop %v2915
      %v2917 = vmul.f32 %v2752, 1.442695
      %v2918 = vpow.pop %v2917
      %v2919 = vmul.f32 %v2753, 1.442695
      %v2920 = vpow.pop %v2919
      %v2921 = vmul.f32 %v2754, 1.442695
      %v2922 = vpow.pop %v2921
      %v2923 = vmul.f32 %v2755, 1.442695
      %v2924 = vpow.pop %v2923
      %v2925 = vmul.f32 %v2756, 1.442695
      %v2926 = vpow.pop %v2925
      %v2927 = vmul.f32 %v2757, 1.442695
      %v2928 = vpow.pop %v2927
      %v2929 = vmul.f32 %v2758, 1.442695
      %v2930 = vpow.pop %v2929
      %v2931 = vmul.f32 %v2759, 1.442695
      %v2932 = vpow.pop %v2931
      %v2933 = vmul.f32 %v2760, 1.442695
      %v2934 = vpow.pop %v2933
      %v2935 = vmul.f32 %v2761, 1.442695
      %v2936 = vpow.pop %v2935
      %v2937 = vmul.f32 %v2762, 1.442695
      %v2938 = vpow.pop %v2937
      %v2939 = vmul.f32 %v2763, 1.442695
      %v2940 = vpow.pop %v2939
      %v2941 = vmul.f32 %v2764, 1.442695
      %v2942 = vpow.pop %v2941
      %v2943 = vmul.f32 %v2765, 1.442695
      %v2944 = vpow.pop %v2943
      %v2945 = vmul.f32 %v2766, 1.442695
      %v2946 = vpow.pop %v2945
      %v2947 = vmul.f32 %v2767, 1.442695
      %v2948 = vpow.pop %v2947
      %v2949 = vmul.f32 %v2768, 1.442695
      %v2950 = vpow.pop %v2949
      %v2951 = vmul.f32 %v2769, 1.442695
      %v2952 = vpow.pop %v2951
      %v2953 = vmul.f32 %v2770, 1.442695
      %v2954 = vpow.pop %v2953
      %v2955 = vmul.f32 %v2771, 1.442695
      %v2956 = vpow.pop %v2955
      %v2957 = vmul.f32 %v2772, 1.442695
      %v2958 = vpow.pop %v2957
      %v2959 = vmul.f32 %v2773, 1.442695
      %v2960 = vpow.pop %v2959
      %v2961 = vmul.f32 %v2774, 1.442695
      %v2962 = vpow.pop %v2961
      %v2963 = vmul.f32 %v2775, 1.442695
      %v2964 = vpow.pop %v2963
      %v2965 = vmul.f32 %v2776, 1.442695
      %v2966 = vpow.pop %v2965
      %v2967 = vmul.f32 %v2777, 1.442695
      %v2968 = vpow.pop %v2967
      %v2969 = vmul.f32 %v2778, 1.442695
      %v2970 = vpow.pop %v2969
      %v2971 = vmul.f32 %v2779, 1.442695
      %v2972 = vpow.pop %v2971
      %v2973 = vmul.f32 %v2780, 1.442695
      %v2974 = vpow.pop %v2973
      %v2975 = vmul.f32 %v2781, 1.442695
      %v2976 = vpow.pop %v2975
      %v2977 = vmul.f32 %v2782, 1.442695
      %v2978 = vpow.pop %v2977
      %v2979 = vmul.f32 %v2783, 1.442695
      %v2980 = vpow.pop %v2979
      %v2981 = vmul.f32 %v2784, 1.442695
      %v2982 = vpow.pop %v2981
      %v2983 = vmul.f32 %v2785, 1.442695
      %v2984 = vpow.pop %v2983
      %v2985 = vmul.f32 %v2786, 1.442695
      %v2986 = vpow.pop %v2985
      %v2987 = vmul.f32 %v2787, 1.442695
      %v2988 = vpow.pop %v2987
      %v2989 = vmul.f32 %v2788, 1.442695
      %v2990 = vpow.pop %v2989
      %v2991 = vmul.f32 %v2789, 1.442695
      %v2992 = vpow.pop %v2991
      %v2993 = vmul.f32 %v2790, 1.442695
      %v2994 = vpow.pop %v2993
      %v2995 = vmul.f32 %v2791, 1.442695
      %v2996 = vpow.pop %v2995
      %v2997 = vmul.f32 %v2792, 1.442695
      %v2998 = vpow.pop %v2997
      %v2999 = vmul.f32 %v2793, 1.442695
      %v3000 = vpow.pop %v2999
      %v3001 = vmul.f32 %v2794, 1.442695
      %v3002 = vpow.pop %v3001
      %v3003 = vmul.f32 %v2795, 1.442695
      %v3004 = vpow.pop %v3003
      %v3005 = vmul.f32 %v2796, 1.442695
      %v3006 = vpow.pop %v3005
      %v3007 = vmul.f32 %v2797, 1.442695
      %v3008 = vpow.pop %v3007
      %v3009 = vmul.f32 %v2798, 1.442695
      %v3010 = vpow.pop %v3009
      %v3011 = vmul.f32 %v2799, 1.442695
      %v3012 = vpow.pop %v3011
      %v3013 = vmul.f32 %v2800, 1.442695
      %v3014 = vpow.pop %v3013
      %v3015 = vmul.f32 %v2801, 1.442695
      %v3016 = vpow.pop %v3015
      %v3017 = vmul.f32 %v2802, 1.442695
      %v3018 = vpow.pop %v3017
      %v3019 = vmul.f32 %v2803, 1.442695
      %v3020 = vpow.pop %v3019
      %v3021 = vmul.f32 %v2804, 1.442695
      %v3022 = vpow.pop %v3021
      %v3023 = vmul.f32 %v2805, 1.442695
      %v3024 = vpow.pop %v3023
      %v3025 = vmul.f32 %v2806, 1.442695
      %v3026 = vpow.pop %v3025
      %v3027 = vmul.f32 %v2807, 1.442695
      %v3028 = vpow.pop %v3027
      %v3029 = vmul.f32 %v2808, 1.442695
      %v3030 = vpow.pop %v3029
      %v3031 = vmul.f32 %v2809, 1.442695
      %v3032 = vpow.pop %v3031
      %v3033 = vmul.f32 %v2810, 1.442695
      %v3034 = vpow.pop %v3033
      %v3035 = vmul.f32 %v2811, 1.442695
      %v3036 = vpow.pop %v3035
      %v3037 = vmul.f32 %v2812, 1.442695
      %v3038 = vpow.pop %v3037
      %v3039 = vmul.f32 %v2813, 1.442695
      %v3040 = vpow.pop %v3039
      %v3041 = vmul.f32 %v2814, 1.442695
      %v3042 = vpow.pop %v3041
      %v3043 = vmul.f32 %v2815, 1.442695
      %v3044 = vpow.pop %v3043
      %v3045 = vmul.f32 %v2816, 1.442695
      %v3046 = vpow.pop %v3045
      %v3047 = vmul.f32 %v2817, 1.442695
      %v3048 = vpow.pop %v3047
      %v3049 = vmul.f32 %v2818, 1.442695
      %v3050 = vpow.pop %v3049
      %v3051 = vmul.f32 %v2819, 1.442695
      %v3052 = vpow.pop %v3051
      %v3053 = vmul.f32 %v2820, 1.442695
      %v3054 = vpow.pop %v3053
      %v3055 = vmul.f32 %v2821, 1.442695
      %v3056 = vpow.pop %v3055
      %v3057 = vmul.f32 %v2822, 1.442695
      %v3058 = vpow.pop %v3057
      %v3059 = vmul.f32 %v2823, 1.442695
      %v3060 = vpow.pop %v3059
      %v3061 = vmul.f32 %v2824, 1.442695
      %v3062 = vpow.pop %v3061
      %v3063 = vmul.f32 %v2825, 1.442695
      %v3064 = vpow.pop %v3063
      %v3065 = vmul.f32 %v2826, 1.442695
      %v3066 = vpow.pop %v3065
      %v3067 = vmul.f32 %v2827, 1.442695
      %v3068 = vpow.pop %v3067
      %v3069 = vmul.f32 %v2828, 1.442695
      %v3070 = vpow.pop %v3069
      %v3071 = vmul.f32 %v2829, 1.442695
      %v3072 = vpow.pop %v3071
      %v3073 = vmul.f32 %v2830, 1.442695
      %v3074 = vpow.pop %v3073
      %v3075 = vmul.f32 %v2831, 1.442695
      %v3076 = vpow.pop %v3075
      %v3077 = vmul.f32 %v2832, 1.442695
      %v3078 = vpow.pop %v3077
      %v3079 = vmul.f32 %v2833, 1.442695
      %v3080 = vpow.pop %v3079
      %v3081 = vmul.f32 %v2834, 1.442695
      %v3082 = vpow.pop %v3081
      %v3083 = vmul.f32 %v2835, 1.442695
      %v3084 = vpow.pop %v3083
      %v3085 = vmul.f32 %v2836, 1.442695
      %v3086 = vpow.pop %v3085
      %v3087 = vmul.f32 %v2837, 1.442695
      %v3088 = vpow.pop %v3087
      %v3089 = vmul.f32 %v2838, 1.442695
      %v3090 = vpow.pop %v3089
      %v3091 = vmul.f32 %v2839, 1.442695
      %v3092 = vpow.pop %v3091
      %v3093 = vmul.f32 %v2840, 1.442695
      %v3094 = vpow.pop %v3093
      %v3095 = vmul.f32 %v2841, 1.442695
      %v3096 = vpow.pop %v3095
      %v3097 = vmul.f32 %v2842, 1.442695
      %v3098 = vpow.pop %v3097
      %3099 = vadd.xlane.f32.xlu0 %v2844
      %v3100 = vpop.xlane.xlu0 %3099
      %3101 = vadd.xlane.f32.xlu0 %v2846
      %v3102 = vpop.xlane.xlu0 %3101
      %3103 = vadd.xlane.f32.xlu0 %v2848
      %v3104 = vpop.xlane.xlu0 %3103
      %3105 = vadd.xlane.f32.xlu0 %v2850
      %v3106 = vpop.xlane.xlu0 %3105
      %3107 = vadd.xlane.f32.xlu0 %v2852
      %v3108 = vpop.xlane.xlu0 %3107
      %3109 = vadd.xlane.f32.xlu0 %v2854
      %v3110 = vpop.xlane.xlu0 %3109
      %3111 = vadd.xlane.f32.xlu0 %v2856
      %v3112 = vpop.xlane.xlu0 %3111
      %3113 = vadd.xlane.f32.xlu0 %v2858
      %v3114 = vpop.xlane.xlu0 %3113
      %3115 = vadd.xlane.f32.xlu0 %v2860
      %v3116 = vpop.xlane.xlu0 %3115
      %3117 = vadd.xlane.f32.xlu0 %v2862
      %v3118 = vpop.xlane.xlu0 %3117
      %3119 = vadd.xlane.f32.xlu0 %v2864
      %v3120 = vpop.xlane.xlu0 %3119
      %3121 = vadd.xlane.f32.xlu0 %v2866
      %v3122 = vpop.xlane.xlu0 %3121
      %3123 = vadd.xlane.f32.xlu0 %v2868
      %v3124 = vpop.xlane.xlu0 %3123
      %3125 = vadd.xlane.f32.xlu0 %v2870
      %v3126 = vpop.xlane.xlu0 %3125
      %3127 = vadd.xlane.f32.xlu0 %v2872
      %v3128 = vpop.xlane.xlu0 %3127
      %3129 = vadd.xlane.f32.xlu0 %v2874
      %v3130 = vpop.xlane.xlu0 %3129
      %3131 = vadd.xlane.f32.xlu0 %v2876
      %v3132 = vpop.xlane.xlu0 %3131
      %3133 = vadd.xlane.f32.xlu0 %v2878
      %v3134 = vpop.xlane.xlu0 %3133
      %3135 = vadd.xlane.f32.xlu0 %v2880
      %v3136 = vpop.xlane.xlu0 %3135
      %3137 = vadd.xlane.f32.xlu0 %v2882
      %v3138 = vpop.xlane.xlu0 %3137
      %3139 = vadd.xlane.f32.xlu0 %v2884
      %v3140 = vpop.xlane.xlu0 %3139
      %3141 = vadd.xlane.f32.xlu0 %v2886
      %v3142 = vpop.xlane.xlu0 %3141
      %3143 = vadd.xlane.f32.xlu0 %v2888
      %v3144 = vpop.xlane.xlu0 %3143
      %3145 = vadd.xlane.f32.xlu0 %v2890
      %v3146 = vpop.xlane.xlu0 %3145
      %3147 = vadd.xlane.f32.xlu0 %v2892
      %v3148 = vpop.xlane.xlu0 %3147
      %3149 = vadd.xlane.f32.xlu0 %v2894
      %v3150 = vpop.xlane.xlu0 %3149
      %3151 = vadd.xlane.f32.xlu0 %v2896
      %v3152 = vpop.xlane.xlu0 %3151
      %3153 = vadd.xlane.f32.xlu0 %v2898
      %v3154 = vpop.xlane.xlu0 %3153
      %3155 = vadd.xlane.f32.xlu0 %v2900
      %v3156 = vpop.xlane.xlu0 %3155
      %3157 = vadd.xlane.f32.xlu0 %v2902
      %v3158 = vpop.xlane.xlu0 %3157
      %3159 = vadd.xlane.f32.xlu0 %v2904
      %v3160 = vpop.xlane.xlu0 %3159
      %3161 = vadd.xlane.f32.xlu0 %v2906
      %v3162 = vpop.xlane.xlu0 %3161
      %3163 = vadd.xlane.f32.xlu0 %v2908
      %v3164 = vpop.xlane.xlu0 %3163
      %3165 = vadd.xlane.f32.xlu0 %v2910
      %v3166 = vpop.xlane.xlu0 %3165
      %3167 = vadd.xlane.f32.xlu0 %v2912
      %v3168 = vpop.xlane.xlu0 %3167
      %3169 = vadd.xlane.f32.xlu0 %v2914
      %v3170 = vpop.xlane.xlu0 %3169
      %3171 = vadd.xlane.f32.xlu0 %v2916
      %v3172 = vpop.xlane.xlu0 %3171
      %3173 = vadd.xlane.f32.xlu0 %v2918
      %v3174 = vpop.xlane.xlu0 %3173
      %3175 = vadd.xlane.f32.xlu0 %v2920
      %v3176 = vpop.xlane.xlu0 %3175
      %3177 = vadd.xlane.f32.xlu0 %v2922
      %v3178 = vpop.xlane.xlu0 %3177
      %3179 = vadd.xlane.f32.xlu0 %v2924
      %v3180 = vpop.xlane.xlu0 %3179
      %3181 = vadd.xlane.f32.xlu0 %v2926
      %v3182 = vpop.xlane.xlu0 %3181
      %3183 = vadd.xlane.f32.xlu0 %v2928
      %v3184 = vpop.xlane.xlu0 %3183
      %3185 = vadd.xlane.f32.xlu0 %v2930
      %v3186 = vpop.xlane.xlu0 %3185
      %3187 = vadd.xlane.f32.xlu0 %v2932
      %v3188 = vpop.xlane.xlu0 %3187
      %3189 = vadd.xlane.f32.xlu0 %v2934
      %v3190 = vpop.xlane.xlu0 %3189
      %3191 = vadd.xlane.f32.xlu0 %v2936
      %v3192 = vpop.xlane.xlu0 %3191
      %3193 = vadd.xlane.f32.xlu0 %v2938
      %v3194 = vpop.xlane.xlu0 %3193
      %3195 = vadd.xlane.f32.xlu0 %v2940
      %v3196 = vpop.xlane.xlu0 %3195
      %3197 = vadd.xlane.f32.xlu0 %v2942
      %v3198 = vpop.xlane.xlu0 %3197
      %3199 = vadd.xlane.f32.xlu0 %v2944
      %v3200 = vpop.xlane.xlu0 %3199
      %3201 = vadd.xlane.f32.xlu0 %v2946
      %v3202 = vpop.xlane.xlu0 %3201
      %3203 = vadd.xlane.f32.xlu0 %v2948
      %v3204 = vpop.xlane.xlu0 %3203
      %3205 = vadd.xlane.f32.xlu0 %v2950
      %v3206 = vpop.xlane.xlu0 %3205
      %3207 = vadd.xlane.f32.xlu0 %v2952
      %v3208 = vpop.xlane.xlu0 %3207
      %3209 = vadd.xlane.f32.xlu0 %v2954
      %v3210 = vpop.xlane.xlu0 %3209
      %3211 = vadd.xlane.f32.xlu0 %v2956
      %v3212 = vpop.xlane.xlu0 %3211
      %3213 = vadd.xlane.f32.xlu0 %v2958
      %v3214 = vpop.xlane.xlu0 %3213
      %3215 = vadd.xlane.f32.xlu0 %v2960
      %v3216 = vpop.xlane.xlu0 %3215
      %3217 = vadd.xlane.f32.xlu0 %v2962
      %v3218 = vpop.xlane.xlu0 %3217
      %3219 = vadd.xlane.f32.xlu0 %v2964
      %v3220 = vpop.xlane.xlu0 %3219
      %3221 = vadd.xlane.f32.xlu0 %v2966
      %v3222 = vpop.xlane.xlu0 %3221
      %3223 = vadd.xlane.f32.xlu0 %v2968
      %v3224 = vpop.xlane.xlu0 %3223
      %3225 = vadd.xlane.f32.xlu0 %v2970
      %v3226 = vpop.xlane.xlu0 %3225
      %3227 = vadd.xlane.f32.xlu0 %v2972
      %v3228 = vpop.xlane.xlu0 %3227
      %3229 = vadd.xlane.f32.xlu0 %v2974
      %v3230 = vpop.xlane.xlu0 %3229
      %3231 = vadd.xlane.f32.xlu0 %v2976
      %v3232 = vpop.xlane.xlu0 %3231
      %3233 = vadd.xlane.f32.xlu0 %v2978
      %v3234 = vpop.xlane.xlu0 %3233
      %3235 = vadd.xlane.f32.xlu0 %v2980
      %v3236 = vpop.xlane.xlu0 %3235
      %3237 = vadd.xlane.f32.xlu0 %v2982
      %v3238 = vpop.xlane.xlu0 %3237
      %3239 = vadd.xlane.f32.xlu0 %v2984
      %v3240 = vpop.xlane.xlu0 %3239
      %3241 = vadd.xlane.f32.xlu0 %v2986
      %v3242 = vpop.xlane.xlu0 %3241
      %3243 = vadd.xlane.f32.xlu0 %v2988
      %v3244 = vpop.xlane.xlu0 %3243
      %3245 = vadd.xlane.f32.xlu0 %v2990
      %v3246 = vpop.xlane.xlu0 %3245
      %3247 = vadd.xlane.f32.xlu0 %v2992
      %v3248 = vpop.xlane.xlu0 %3247
      %3249 = vadd.xlane.f32.xlu0 %v2994
      %v3250 = vpop.xlane.xlu0 %3249
      %3251 = vadd.xlane.f32.xlu0 %v2996
      %v3252 = vpop.xlane.xlu0 %3251
      %3253 = vadd.xlane.f32.xlu0 %v2998
      %v3254 = vpop.xlane.xlu0 %3253
      %3255 = vadd.xlane.f32.xlu0 %v3000
      %v3256 = vpop.xlane.xlu0 %3255
      %3257 = vadd.xlane.f32.xlu0 %v3002
      %v3258 = vpop.xlane.xlu0 %3257
      %3259 = vadd.xlane.f32.xlu0 %v3004
      %v3260 = vpop.xlane.xlu0 %3259
      %3261 = vadd.xlane.f32.xlu0 %v3006
      %v3262 = vpop.xlane.xlu0 %3261
      %3263 = vadd.xlane.f32.xlu0 %v3008
      %v3264 = vpop.xlane.xlu0 %3263
      %3265 = vadd.xlane.f32.xlu0 %v3010
      %v3266 = vpop.xlane.xlu0 %3265
      %3267 = vadd.xlane.f32.xlu0 %v3012
      %v3268 = vpop.xlane.xlu0 %3267
      %3269 = vadd.xlane.f32.xlu0 %v3014
      %v3270 = vpop.xlane.xlu0 %3269
      %3271 = vadd.xlane.f32.xlu0 %v3016
      %v3272 = vpop.xlane.xlu0 %3271
      %3273 = vadd.xlane.f32.xlu0 %v3018
      %v3274 = vpop.xlane.xlu0 %3273
      %3275 = vadd.xlane.f32.xlu0 %v3020
      %v3276 = vpop.xlane.xlu0 %3275
      %3277 = vadd.xlane.f32.xlu0 %v3022
      %v3278 = vpop.xlane.xlu0 %3277
      %3279 = vadd.xlane.f32.xlu0 %v3024
      %v3280 = vpop.xlane.xlu0 %3279
      %3281 = vadd.xlane.f32.xlu0 %v3026
      %v3282 = vpop.xlane.xlu0 %3281
      %3283 = vadd.xlane.f32.xlu0 %v3028
      %v3284 = vpop.xlane.xlu0 %3283
      %3285 = vadd.xlane.f32.xlu0 %v3030
      %v3286 = vpop.xlane.xlu0 %3285
      %3287 = vadd.xlane.f32.xlu0 %v3032
      %v3288 = vpop.xlane.xlu0 %3287
      %3289 = vadd.xlane.f32.xlu0 %v3034
      %v3290 = vpop.xlane.xlu0 %3289
      %3291 = vadd.xlane.f32.xlu0 %v3036
      %v3292 = vpop.xlane.xlu0 %3291
      %3293 = vadd.xlane.f32.xlu0 %v3038
      %v3294 = vpop.xlane.xlu0 %3293
      %3295 = vadd.xlane.f32.xlu0 %v3040
      %v3296 = vpop.xlane.xlu0 %3295
      %3297 = vadd.xlane.f32.xlu0 %v3042
      %v3298 = vpop.xlane.xlu0 %3297
      %3299 = vadd.xlane.f32.xlu0 %v3044
      %v3300 = vpop.xlane.xlu0 %3299
      %3301 = vadd.xlane.f32.xlu0 %v3046
      %v3302 = vpop.xlane.xlu0 %3301
      %3303 = vadd.xlane.f32.xlu0 %v3048
      %v3304 = vpop.xlane.xlu0 %3303
      %3305 = vadd.xlane.f32.xlu0 %v3050
      %v3306 = vpop.xlane.xlu0 %3305
      %3307 = vadd.xlane.f32.xlu0 %v3052
      %v3308 = vpop.xlane.xlu0 %3307
      %3309 = vadd.xlane.f32.xlu0 %v3054
      %v3310 = vpop.xlane.xlu0 %3309
      %3311 = vadd.xlane.f32.xlu0 %v3056
      %v3312 = vpop.xlane.xlu0 %3311
      %3313 = vadd.xlane.f32.xlu0 %v3058
      %v3314 = vpop.xlane.xlu0 %3313
      %3315 = vadd.xlane.f32.xlu0 %v3060
      %v3316 = vpop.xlane.xlu0 %3315
      %3317 = vadd.xlane.f32.xlu0 %v3062
      %v3318 = vpop.xlane.xlu0 %3317
      %3319 = vadd.xlane.f32.xlu0 %v3064
      %v3320 = vpop.xlane.xlu0 %3319
      %3321 = vadd.xlane.f32.xlu0 %v3066
      %v3322 = vpop.xlane.xlu0 %3321
      %3323 = vadd.xlane.f32.xlu0 %v3068
      %v3324 = vpop.xlane.xlu0 %3323
      %3325 = vadd.xlane.f32.xlu0 %v3070
      %v3326 = vpop.xlane.xlu0 %3325
      %3327 = vadd.xlane.f32.xlu0 %v3072
      %v3328 = vpop.xlane.xlu0 %3327
      %3329 = vadd.xlane.f32.xlu0 %v3074
      %v3330 = vpop.xlane.xlu0 %3329
      %3331 = vadd.xlane.f32.xlu0 %v3076
      %v3332 = vpop.xlane.xlu0 %3331
      %3333 = vadd.xlane.f32.xlu0 %v3078
      %v3334 = vpop.xlane.xlu0 %3333
      %3335 = vadd.xlane.f32.xlu0 %v3080
      %v3336 = vpop.xlane.xlu0 %3335
      %3337 = vadd.xlane.f32.xlu0 %v3082
      %v3338 = vpop.xlane.xlu0 %3337
      %3339 = vadd.xlane.f32.xlu0 %v3084
      %v3340 = vpop.xlane.xlu0 %3339
      %3341 = vadd.xlane.f32.xlu0 %v3086
      %v3342 = vpop.xlane.xlu0 %3341
      %3343 = vadd.xlane.f32.xlu0 %v3088
      %v3344 = vpop.xlane.xlu0 %3343
      %3345 = vadd.xlane.f32.xlu0 %v3090
      %v3346 = vpop.xlane.xlu0 %3345
      %3347 = vadd.xlane.f32.xlu0 %v3092
      %v3348 = vpop.xlane.xlu0 %3347
      %3349 = vadd.xlane.f32.xlu0 %v3094
      %v3350 = vpop.xlane.xlu0 %3349
      %3351 = vadd.xlane.f32.xlu0 %v3096
      %v3352 = vpop.xlane.xlu0 %3351
      %3353 = vadd.xlane.f32.xlu0 %v3098
      %v3354 = vpop.xlane.xlu0 %3353
      %v3355 = vrcp.pop %v3100
      %v3356 = vrcp.pop %v3102
      %v3357 = vrcp.pop %v3104
      %v3358 = vrcp.pop %v3106
      %v3359 = vrcp.pop %v3108
      %v3360 = vrcp.pop %v3110
      %v3361 = vrcp.pop %v3112
      %v3362 = vrcp.pop %v3114
      %v3363 = vrcp.pop %v3116
      %v3364 = vrcp.pop %v3118
      %v3365 = vrcp.pop %v3120
      %v3366 = vrcp.pop %v3122
      %v3367 = vrcp.pop %v3124
      %v3368 = vrcp.pop %v3126
      %v3369 = vrcp.pop %v3128
      %v3370 = vrcp.pop %v3130
      %v3371 = vrcp.pop %v3132
      %v3372 = vrcp.pop %v3134
      %v3373 = vrcp.pop %v3136
      %v3374 = vrcp.pop %v3138
      %v3375 = vrcp.pop %v3140
      %v3376 = vrcp.pop %v3142
      %v3377 = vrcp.pop %v3144
      %v3378 = vrcp.pop %v3146
      %v3379 = vrcp.pop %v3148
      %v3380 = vrcp.pop %v3150
      %v3381 = vrcp.pop %v3152
      %v3382 = vrcp.pop %v3154
      %v3383 = vrcp.pop %v3156
      %v3384 = vrcp.pop %v3158
      %v3385 = vrcp.pop %v3160
      %v3386 = vrcp.pop %v3162
      %v3387 = vrcp.pop %v3164
      %v3388 = vrcp.pop %v3166
      %v3389 = vrcp.pop %v3168
      %v3390 = vrcp.pop %v3170
      %v3391 = vrcp.pop %v3172
      %v3392 = vrcp.pop %v3174
      %v3393 = vrcp.pop %v3176
      %v3394 = vrcp.pop %v3178
      %v3395 = vrcp.pop %v3180
      %v3396 = vrcp.pop %v3182
      %v3397 = vrcp.pop %v3184
      %v3398 = vrcp.pop %v3186
      %v3399 = vrcp.pop %v3188
      %v3400 = vrcp.pop %v3190
      %v3401 = vrcp.pop %v3192
      %v3402 = vrcp.pop %v3194
      %v3403 = vrcp.pop %v3196
      %v3404 = vrcp.pop %v3198
      %v3405 = vrcp.pop %v3200
      %v3406 = vrcp.pop %v3202
      %v3407 = vrcp.pop %v3204
      %v3408 = vrcp.pop %v3206
      %v3409 = vrcp.pop %v3208
      %v3410 = vrcp.pop %v3210
      %v3411 = vrcp.pop %v3212
      %v3412 = vrcp.pop %v3214
      %v3413 = vrcp.pop %v3216
      %v3414 = vrcp.pop %v3218
      %v3415 = vrcp.pop %v3220
      %v3416 = vrcp.pop %v3222
      %v3417 = vrcp.pop %v3224
      %v3418 = vrcp.pop %v3226
      %v3419 = vrcp.pop %v3228
      %v3420 = vrcp.pop %v3230
      %v3421 = vrcp.pop %v3232
      %v3422 = vrcp.pop %v3234
      %v3423 = vrcp.pop %v3236
      %v3424 = vrcp.pop %v3238
      %v3425 = vrcp.pop %v3240
      %v3426 = vrcp.pop %v3242
      %v3427 = vrcp.pop %v3244
      %v3428 = vrcp.pop %v3246
      %v3429 = vrcp.pop %v3248
      %v3430 = vrcp.pop %v3250
      %v3431 = vrcp.pop %v3252
      %v3432 = vrcp.pop %v3254
      %v3433 = vrcp.pop %v3256
      %v3434 = vrcp.pop %v3258
      %v3435 = vrcp.pop %v3260
      %v3436 = vrcp.pop %v3262
      %v3437 = vrcp.pop %v3264
      %v3438 = vrcp.pop %v3266
      %v3439 = vrcp.pop %v3268
      %v3440 = vrcp.pop %v3270
      %v3441 = vrcp.pop %v3272
      %v3442 = vrcp.pop %v3274
      %v3443 = vrcp.pop %v3276
      %v3444 = vrcp.pop %v3278
      %v3445 = vrcp.pop %v3280
      %v3446 = vrcp.pop %v3282
      %v3447 = vrcp.pop %v3284
      %v3448 = vrcp.pop %v3286
      %v3449 = vrcp.pop %v3288
      %v3450 = vrcp.pop %v3290
      %v3451 = vrcp.pop %v3292
      %v3452 = vrcp.pop %v3294
      %v3453 = vrcp.pop %v3296
      %v3454 = vrcp.pop %v3298
      %v3455 = vrcp.pop %v3300
      %v3456 = vrcp.pop %v3302
      %v3457 = vrcp.pop %v3304
      %v3458 = vrcp.pop %v3306
      %v3459 = vrcp.pop %v3308
      %v3460 = vrcp.pop %v3310
      %v3461 = vrcp.pop %v3312
      %v3462 = vrcp.pop %v3314
      %v3463 = vrcp.pop %v3316
      %v3464 = vrcp.pop %v3318
      %v3465 = vrcp.pop %v3320
      %v3466 = vrcp.pop %v3322
      %v3467 = vrcp.pop %v3324
      %v3468 = vrcp.pop %v3326
      %v3469 = vrcp.pop %v3328
      %v3470 = vrcp.pop %v3330
      %v3471 = vrcp.pop %v3332
      %v3472 = vrcp.pop %v3334
      %v3473 = vrcp.pop %v3336
      %v3474 = vrcp.pop %v3338
      %v3475 = vrcp.pop %v3340
      %v3476 = vrcp.pop %v3342
      %v3477 = vrcp.pop %v3344
      %v3478 = vrcp.pop %v3346
      %v3479 = vrcp.pop %v3348
      %v3480 = vrcp.pop %v3350
      %v3481 = vrcp.pop %v3352
      %v3482 = vrcp.pop %v3354
      %v3483 = vmul.f32 %v2844, %v3355
      %v3484 = vmul.f32 %v2846, %v3356
      %v3485 = vmul.f32 %v2848, %v3357
      %v3486 = vmul.f32 %v2850, %v3358
      %v3487 = vmul.f32 %v2852, %v3359
      %v3488 = vmul.f32 %v2854, %v3360
      %v3489 = vmul.f32 %v2856, %v3361
      %v3490 = vmul.f32 %v2858, %v3362
      %v3491 = vmul.f32 %v2860, %v3363
      %v3492 = vmul.f32 %v2862, %v3364
      %v3493 = vmul.f32 %v2864, %v3365
      %v3494 = vmul.f32 %v2866, %v3366
      %v3495 = vmul.f32 %v2868, %v3367
      %v3496 = vmul.f32 %v2870, %v3368
      %v3497 = vmul.f32 %v2872, %v3369
      %v3498 = vmul.f32 %v2874, %v3370
      %v3499 = vmul.f32 %v2876, %v3371
      %v3500 = vmul.f32 %v2878, %v3372
      %v3501 = vmul.f32 %v2880, %v3373
      %v3502 = vmul.f32 %v2882, %v3374
      %v3503 = vmul.f32 %v2884, %v3375
      %v3504 = vmul.f32 %v2886, %v3376
      %v3505 = vmul.f32 %v2888, %v3377
      %v3506 = vmul.f32 %v2890, %v3378
      %v3507 = vmul.f32 %v2892, %v3379
      %v3508 = vmul.f32 %v2894, %v3380
      %v3509 = vmul.f32 %v2896, %v3381
      %v3510 = vmul.f32 %v2898, %v3382
      %v3511 = vmul.f32 %v2900, %v3383
      %v3512 = vmul.f32 %v2902, %v3384
      %v3513 = vmul.f32 %v2904, %v3385
      %v3514 = vmul.f32 %v2906, %v3386
      %v3515 = vmul.f32 %v2908, %v3387
      %v3516 = vmul.f32 %v2910, %v3388
      %v3517 = vmul.f32 %v2912, %v3389
      %v3518 = vmul.f32 %v2914, %v3390
      %v3519 = vmul.f32 %v2916, %v3391
      %v3520 = vmul.f32 %v2918, %v3392
      %v3521 = vmul.f32 %v2920, %v3393
      %v3522 = vmul.f32 %v2922, %v3394
      %v3523 = vmul.f32 %v2924, %v3395
      %v3524 = vmul.f32 %v2926, %v3396
      %v3525 = vmul.f32 %v2928, %v3397
      %v3526 = vmul.f32 %v2930, %v3398
      %v3527 = vmul.f32 %v2932, %v3399
      %v3528 = vmul.f32 %v2934, %v3400
      %v3529 = vmul.f32 %v2936, %v3401
      %v3530 = vmul.f32 %v2938, %v3402
      %v3531 = vmul.f32 %v2940, %v3403
      %v3532 = vmul.f32 %v2942, %v3404
      %v3533 = vmul.f32 %v2944, %v3405
      %v3534 = vmul.f32 %v2946, %v3406
      %v3535 = vmul.f32 %v2948, %v3407
      %v3536 = vmul.f32 %v2950, %v3408
      %v3537 = vmul.f32 %v2952, %v3409
      %v3538 = vmul.f32 %v2954, %v3410
      %v3539 = vmul.f32 %v2956, %v3411
      %v3540 = vmul.f32 %v2958, %v3412
      %v3541 = vmul.f32 %v2960, %v3413
      %v3542 = vmul.f32 %v2962, %v3414
      %v3543 = vmul.f32 %v2964, %v3415
      %v3544 = vmul.f32 %v2966, %v3416
      %v3545 = vmul.f32 %v2968, %v3417
      %v3546 = vmul.f32 %v2970, %v3418
      %v3547 = vmul.f32 %v2972, %v3419
      %v3548 = vmul.f32 %v2974, %v3420
      %v3549 = vmul.f32 %v2976, %v3421
      %v3550 = vmul.f32 %v2978, %v3422
      %v3551 = vmul.f32 %v2980, %v3423
      %v3552 = vmul.f32 %v2982, %v3424
      %v3553 = vmul.f32 %v2984, %v3425
      %v3554 = vmul.f32 %v2986, %v3426
      %v3555 = vmul.f32 %v2988, %v3427
      %v3556 = vmul.f32 %v2990, %v3428
      %v3557 = vmul.f32 %v2992, %v3429
      %v3558 = vmul.f32 %v2994, %v3430
      %v3559 = vmul.f32 %v2996, %v3431
      %v3560 = vmul.f32 %v2998, %v3432
      %v3561 = vmul.f32 %v3000, %v3433
      %v3562 = vmul.f32 %v3002, %v3434
      %v3563 = vmul.f32 %v3004, %v3435
      %v3564 = vmul.f32 %v3006, %v3436
      %v3565 = vmul.f32 %v3008, %v3437
      %v3566 = vmul.f32 %v3010, %v3438
      %v3567 = vmul.f32 %v3012, %v3439
      %v3568 = vmul.f32 %v3014, %v3440
      %v3569 = vmul.f32 %v3016, %v3441
      %v3570 = vmul.f32 %v3018, %v3442
      %v3571 = vmul.f32 %v3020, %v3443
      %v3572 = vmul.f32 %v3022, %v3444
      %v3573 = vmul.f32 %v3024, %v3445
      %v3574 = vmul.f32 %v3026, %v3446
      %v3575 = vmul.f32 %v3028, %v3447
      %v3576 = vmul.f32 %v3030, %v3448
      %v3577 = vmul.f32 %v3032, %v3449
      %v3578 = vmul.f32 %v3034, %v3450
      %v3579 = vmul.f32 %v3036, %v3451
      %v3580 = vmul.f32 %v3038, %v3452
      %v3581 = vmul.f32 %v3040, %v3453
      %v3582 = vmul.f32 %v3042, %v3454
      %v3583 = vmul.f32 %v3044, %v3455
      %v3584 = vmul.f32 %v3046, %v3456
      %v3585 = vmul.f32 %v3048, %v3457
      %v3586 = vmul.f32 %v3050, %v3458
      %v3587 = vmul.f32 %v3052, %v3459
      %v3588 = vmul.f32 %v3054, %v3460
      %v3589 = vmul.f32 %v3056, %v3461
      %v3590 = vmul.f32 %v3058, %v3462
      %v3591 = vmul.f32 %v3060, %v3463
      %v3592 = vmul.f32 %v3062, %v3464
      %v3593 = vmul.f32 %v3064, %v3465
      %v3594 = vmul.f32 %v3066, %v3466
      %v3595 = vmul.f32 %v3068, %v3467
      %v3596 = vmul.f32 %v3070, %v3468
      %v3597 = vmul.f32 %v3072, %v3469
      %v3598 = vmul.f32 %v3074, %v3470
      %v3599 = vmul.f32 %v3076, %v3471
      %v3600 = vmul.f32 %v3078, %v3472
      %v3601 = vmul.f32 %v3080, %v3473
      %v3602 = vmul.f32 %v3082, %v3474
      %v3603 = vmul.f32 %v3084, %v3475
      %v3604 = vmul.f32 %v3086, %v3476
      %v3605 = vmul.f32 %v3088, %v3477
      %v3606 = vmul.f32 %v3090, %v3478
      %v3607 = vmul.f32 %v3092, %v3479
      %v3608 = vmul.f32 %v3094, %v3480
      %v3609 = vmul.f32 %v3096, %v3481
      %v3610 = vmul.f32 %v3098, %v3482
      %v3611 = vpack.c.bf16 %v1087, %v1087
      %v3612 = vpack.c.bf16 %v1382, %v1382
      %v3613 = vpack.c.bf16 %v1090, %v1090
      %v3614 = vpack.c.bf16 %v1385, %v1385
      %v3615 = vpack.c.bf16 %v1095, %v1095
      %v3616 = vpack.c.bf16 %v1388, %v1388
      %v3617 = vpack.c.bf16 %v1098, %v1098
      %v3618 = vpack.c.bf16 %v1391, %v1391
      %v3619 = vpack.c.bf16 %v3484, %v3483
      %v3620 = vpack.c.bf16 %v3486, %v3485
      %v3621 = vpack.c.bf16 %v3488, %v3487
      %v3622 = vpack.c.bf16 %v3490, %v3489
      %v3623 = vpack.c.bf16 %v3492, %v3491
      %v3624 = vpack.c.bf16 %v3494, %v3493
      %v3625 = vpack.c.bf16 %v3496, %v3495
      %v3626 = vpack.c.bf16 %v3498, %v3497
      %v3627 = vpack.c.bf16 %v3500, %v3499
      %v3628 = vpack.c.bf16 %v3502, %v3501
      %v3629 = vpack.c.bf16 %v3504, %v3503
      %v3630 = vpack.c.bf16 %v3506, %v3505
      %v3631 = vpack.c.bf16 %v3508, %v3507
      %v3632 = vpack.c.bf16 %v3510, %v3509
      %v3633 = vpack.c.bf16 %v3512, %v3511
      %v3634 = vpack.c.bf16 %v3514, %v3513
      %v3635 = vpack.c.bf16 %v3516, %v3515
      %v3636 = vpack.c.bf16 %v3518, %v3517
      %v3637 = vpack.c.bf16 %v3520, %v3519
      %v3638 = vpack.c.bf16 %v3522, %v3521
      %v3639 = vpack.c.bf16 %v3524, %v3523
      %v3640 = vpack.c.bf16 %v3526, %v3525
      %v3641 = vpack.c.bf16 %v3528, %v3527
      %v3642 = vpack.c.bf16 %v3530, %v3529
      %v3643 = vpack.c.bf16 %v3532, %v3531
      %v3644 = vpack.c.bf16 %v3534, %v3533
      %v3645 = vpack.c.bf16 %v3536, %v3535
      %v3646 = vpack.c.bf16 %v3538, %v3537
      %v3647 = vpack.c.bf16 %v3540, %v3539
      %v3648 = vpack.c.bf16 %v3542, %v3541
      %v3649 = vpack.c.bf16 %v3544, %v3543
      %v3650 = vpack.c.bf16 %v3546, %v3545
      %v3651 = vpack.c.bf16 %v3548, %v3547
      %v3652 = vpack.c.bf16 %v3550, %v3549
      %v3653 = vpack.c.bf16 %v3552, %v3551
      %v3654 = vpack.c.bf16 %v3554, %v3553
      %v3655 = vpack.c.bf16 %v3556, %v3555
      %v3656 = vpack.c.bf16 %v3558, %v3557
      %v3657 = vpack.c.bf16 %v3560, %v3559
      %v3658 = vpack.c.bf16 %v3562, %v3561
      %v3659 = vpack.c.bf16 %v3564, %v3563
      %v3660 = vpack.c.bf16 %v3566, %v3565
      %v3661 = vpack.c.bf16 %v3568, %v3567
      %v3662 = vpack.c.bf16 %v3570, %v3569
      %v3663 = vpack.c.bf16 %v3572, %v3571
      %v3664 = vpack.c.bf16 %v3574, %v3573
      %v3665 = vpack.c.bf16 %v3576, %v3575
      %v3666 = vpack.c.bf16 %v3578, %v3577
      %v3667 = vpack.c.bf16 %v3580, %v3579
      %v3668 = vpack.c.bf16 %v3582, %v3581
      %v3669 = vpack.c.bf16 %v3584, %v3583
      %v3670 = vpack.c.bf16 %v3586, %v3585
      %v3671 = vpack.c.bf16 %v3588, %v3587
      %v3672 = vpack.c.bf16 %v3590, %v3589
      %v3673 = vpack.c.bf16 %v3592, %v3591
      %v3674 = vpack.c.bf16 %v3594, %v3593
      %v3675 = vpack.c.bf16 %v3596, %v3595
      %v3676 = vpack.c.bf16 %v3598, %v3597
      %v3677 = vpack.c.bf16 %v3600, %v3599
      %v3678 = vpack.c.bf16 %v3602, %v3601
      %v3679 = vpack.c.bf16 %v3604, %v3603
      %v3680 = vpack.c.bf16 %v3606, %v3605
      %v3681 = vpack.c.bf16 %v3608, %v3607
      %v3682 = vpack.c.bf16 %v3610, %v3609
      %3683 = vmatprep.subr.bf16.mxu0 0
      %3684 = vmatpush1.bf16.xpose.msra.mxu0 %v3619
      %3685 = vmatprep.subr.bf16.mxu0 0
      %3686 = vmatpush1.bf16.xpose.msra.mxu0 %v3620
      %3687 = vmatprep.subr.bf16.mxu0 0
      %3688 = vmatpush1.bf16.xpose.msra.mxu0 %v3621
      %3689 = vmatprep.subr.bf16.mxu0 0
      %3690 = vmatpush1.bf16.xpose.msra.mxu0 %v3622
      %3691 = vmatprep.subr.bf16.mxu0 0
      %3692 = vmatpush1.bf16.xpose.msra.mxu0 %v3623
      %3693 = vmatprep.subr.bf16.mxu0 0
      %3694 = vmatpush1.bf16.xpose.msra.mxu0 %v3624
      %3695 = vmatprep.subr.bf16.mxu0 0
      %3696 = vmatpush1.bf16.xpose.msra.mxu0 %v3625
      %3697 = vmatprep.subr.bf16.mxu0 0
      %3698 = vmatpush1.bf16.xpose.msra.mxu0 %v3626
      %3699 = vmatprep.subr.bf16.mxu0 0
      %3700 = vmatpush1.bf16.xpose.msra.mxu0 0
      %3701 = vmatprep.subr.bf16.mxu0 0
      %3702 = vmatpush1.bf16.xpose.msra.mxu0 0
      %3703 = vmatprep.subr.bf16.mxu0 0
      %3704 = vmatpush1.bf16.xpose.msra.mxu0 0
      %3705 = vmatprep.subr.bf16.mxu0 0
      %3706 = vmatpush1.bf16.xpose.msra.mxu0 0
      %3707 = vmatprep.subr.bf16.mxu0 0
      %3708 = vmatpush1.bf16.xpose.msra.mxu0 0
      %3709 = vmatprep.subr.bf16.mxu0 0
      %3710 = vmatpush1.bf16.xpose.msra.mxu0 0
      %3711 = vmatprep.subr.bf16.mxu0 0
      %3712 = vmatpush1.bf16.xpose.msra.mxu0 0
      %3713 = vmatprep.subr.bf16.mxu0 0
      %3714 = vmatpush1.bf16.xpose.msra.mxu0 0
      %3715 = vmatprep.mubr.bf16.mxu0 0
      %3716 = vmatmul.mubr.bf16.gmra.mrb[0].mxu0 %v3611
      %v3717 = vpop.f32.mrb[0].mxu0
      %v3718 = vadd.f32 0.0, %v3717
      %v3719 = vpop.f32.mrb[0].mxu0
      %v3720 = vpop.f32.mrb[0].mxu0
      %v3721 = vpop.f32.mrb[0].mxu0
      %3722 = vdwg.mxu0
      %3723 = vmatprep.subr.bf16.mxu0 0
      %3724 = vmatpush1.bf16.xpose.msra.mxu0 %v3627
      %3725 = vmatprep.subr.bf16.mxu0 0
      %3726 = vmatpush1.bf16.xpose.msra.mxu0 %v3628
      %3727 = vmatprep.subr.bf16.mxu0 0
      %3728 = vmatpush1.bf16.xpose.msra.mxu0 %v3629
      %3729 = vmatprep.subr.bf16.mxu0 0
      %3730 = vmatpush1.bf16.xpose.msra.mxu0 %v3630
      %3731 = vmatprep.subr.bf16.mxu0 0
      %3732 = vmatpush1.bf16.xpose.msra.mxu0 %v3631
      %3733 = vmatprep.subr.bf16.mxu0 0
      %3734 = vmatpush1.bf16.xpose.msra.mxu0 %v3632
      %3735 = vmatprep.subr.bf16.mxu0 0
      %3736 = vmatpush1.bf16.xpose.msra.mxu0 %v3633
      %3737 = vmatprep.subr.bf16.mxu0 0
      %3738 = vmatpush1.bf16.xpose.msra.mxu0 %v3634
      %3739 = vmatprep.subr.bf16.mxu0 0
      %3740 = vmatpush1.bf16.xpose.msra.mxu0 0
      %3741 = vmatprep.subr.bf16.mxu0 0
      %3742 = vmatpush1.bf16.xpose.msra.mxu0 0
      %3743 = vmatprep.subr.bf16.mxu0 0
      %3744 = vmatpush1.bf16.xpose.msra.mxu0 0
      %3745 = vmatprep.subr.bf16.mxu0 0
      %3746 = vmatpush1.bf16.xpose.msra.mxu0 0
      %3747 = vmatprep.subr.bf16.mxu0 0
      %3748 = vmatpush1.bf16.xpose.msra.mxu0 0
      %3749 = vmatprep.subr.bf16.mxu0 0
      %3750 = vmatpush1.bf16.xpose.msra.mxu0 0
      %3751 = vmatprep.subr.bf16.mxu0 0
      %3752 = vmatpush1.bf16.xpose.msra.mxu0 0
      %3753 = vmatprep.subr.bf16.mxu0 0
      %3754 = vmatpush1.bf16.xpose.msra.mxu0 0
      %3755 = vmatprep.mubr.bf16.mxu0 0
      %3756 = vmatmul.mubr.bf16.gmra.mrb[0].mxu0 %v3612
      %v3757 = vpop.f32.mrb[0].mxu0
      %v3758 = vadd.f32 0.0, %v3757
      %v3759 = vpop.f32.mrb[0].mxu0
      %v3760 = vpop.f32.mrb[0].mxu0
      %v3761 = vpop.f32.mrb[0].mxu0
      %3762 = vdwg.mxu0
      %3763 = vmatprep.subr.bf16.mxu0 0
      %3764 = vmatpush1.bf16.xpose.msra.mxu0 %v3635
      %3765 = vmatprep.subr.bf16.mxu0 0
      %3766 = vmatpush1.bf16.xpose.msra.mxu0 %v3636
      %3767 = vmatprep.subr.bf16.mxu0 0
      %3768 = vmatpush1.bf16.xpose.msra.mxu0 %v3637
      %3769 = vmatprep.subr.bf16.mxu0 0
      %3770 = vmatpush1.bf16.xpose.msra.mxu0 %v3638
      %3771 = vmatprep.subr.bf16.mxu0 0
      %3772 = vmatpush1.bf16.xpose.msra.mxu0 %v3639
      %3773 = vmatprep.subr.bf16.mxu0 0
      %3774 = vmatpush1.bf16.xpose.msra.mxu0 %v3640
      %3775 = vmatprep.subr.bf16.mxu0 0
      %3776 = vmatpush1.bf16.xpose.msra.mxu0 %v3641
      %3777 = vmatprep.subr.bf16.mxu0 0
      %3778 = vmatpush1.bf16.xpose.msra.mxu0 %v3642
      %3779 = vmatprep.subr.bf16.mxu0 0
      %3780 = vmatpush1.bf16.xpose.msra.mxu0 0
      %3781 = vmatprep.subr.bf16.mxu0 0
      %3782 = vmatpush1.bf16.xpose.msra.mxu0 0
      %3783 = vmatprep.subr.bf16.mxu0 0
      %3784 = vmatpush1.bf16.xpose.msra.mxu0 0
      %3785 = vmatprep.subr.bf16.mxu0 0
      %3786 = vmatpush1.bf16.xpose.msra.mxu0 0
      %3787 = vmatprep.subr.bf16.mxu0 0
      %3788 = vmatpush1.bf16.xpose.msra.mxu0 0
      %3789 = vmatprep.subr.bf16.mxu0 0
      %3790 = vmatpush1.bf16.xpose.msra.mxu0 0
      %3791 = vmatprep.subr.bf16.mxu0 0
      %3792 = vmatpush1.bf16.xpose.msra.mxu0 0
      %3793 = vmatprep.subr.bf16.mxu0 0
      %3794 = vmatpush1.bf16.xpose.msra.mxu0 0
      %3795 = vmatprep.mubr.bf16.mxu0 0
      %3796 = vmatmul.mubr.bf16.gmra.mrb[0].mxu0 %v3613
      %v3797 = vpop.f32.mrb[0].mxu0
      %v3798 = vadd.f32 0.0, %v3797
      %v3799 = vpop.f32.mrb[0].mxu0
      %v3800 = vpop.f32.mrb[0].mxu0
      %v3801 = vpop.f32.mrb[0].mxu0
      %3802 = vdwg.mxu0
      %3803 = vmatprep.subr.bf16.mxu0 0
      %3804 = vmatpush1.bf16.xpose.msra.mxu0 %v3643
      %3805 = vmatprep.subr.bf16.mxu0 0
      %3806 = vmatpush1.bf16.xpose.msra.mxu0 %v3644
      %3807 = vmatprep.subr.bf16.mxu0 0
      %3808 = vmatpush1.bf16.xpose.msra.mxu0 %v3645
      %3809 = vmatprep.subr.bf16.mxu0 0
      %3810 = vmatpush1.bf16.xpose.msra.mxu0 %v3646
      %3811 = vmatprep.subr.bf16.mxu0 0
      %3812 = vmatpush1.bf16.xpose.msra.mxu0 %v3647
      %3813 = vmatprep.subr.bf16.mxu0 0
      %3814 = vmatpush1.bf16.xpose.msra.mxu0 %v3648
      %3815 = vmatprep.subr.bf16.mxu0 0
      %3816 = vmatpush1.bf16.xpose.msra.mxu0 %v3649
      %3817 = vmatprep.subr.bf16.mxu0 0
      %3818 = vmatpush1.bf16.xpose.msra.mxu0 %v3650
      %3819 = vmatprep.subr.bf16.mxu0 0
      %3820 = vmatpush1.bf16.xpose.msra.mxu0 0
      %3821 = vmatprep.subr.bf16.mxu0 0
      %3822 = vmatpush1.bf16.xpose.msra.mxu0 0
      %3823 = vmatprep.subr.bf16.mxu0 0
      %3824 = vmatpush1.bf16.xpose.msra.mxu0 0
      %3825 = vmatprep.subr.bf16.mxu0 0
      %3826 = vmatpush1.bf16.xpose.msra.mxu0 0
      %3827 = vmatprep.subr.bf16.mxu0 0
      %3828 = vmatpush1.bf16.xpose.msra.mxu0 0
      %3829 = vmatprep.subr.bf16.mxu0 0
      %3830 = vmatpush1.bf16.xpose.msra.mxu0 0
      %3831 = vmatprep.subr.bf16.mxu0 0
      %3832 = vmatpush1.bf16.xpose.msra.mxu0 0
      %3833 = vmatprep.subr.bf16.mxu0 0
      %3834 = vmatpush1.bf16.xpose.msra.mxu0 0
      %3835 = vmatprep.mubr.bf16.mxu0 0
      %3836 = vmatmul.mubr.bf16.gmra.mrb[0].mxu0 %v3614
      %v3837 = vpop.f32.mrb[0].mxu0
      %v3838 = vadd.f32 0.0, %v3837
      %v3839 = vpop.f32.mrb[0].mxu0
      %v3840 = vpop.f32.mrb[0].mxu0
      %v3841 = vpop.f32.mrb[0].mxu0
      %3842 = vdwg.mxu0
      %3843 = vmatprep.subr.bf16.mxu0 0
      %3844 = vmatpush1.bf16.xpose.msra.mxu0 %v3651
      %3845 = vmatprep.subr.bf16.mxu0 0
      %3846 = vmatpush1.bf16.xpose.msra.mxu0 %v3652
      %3847 = vmatprep.subr.bf16.mxu0 0
      %3848 = vmatpush1.bf16.xpose.msra.mxu0 %v3653
      %3849 = vmatprep.subr.bf16.mxu0 0
      %3850 = vmatpush1.bf16.xpose.msra.mxu0 %v3654
      %3851 = vmatprep.subr.bf16.mxu0 0
      %3852 = vmatpush1.bf16.xpose.msra.mxu0 %v3655
      %3853 = vmatprep.subr.bf16.mxu0 0
      %3854 = vmatpush1.bf16.xpose.msra.mxu0 %v3656
      %3855 = vmatprep.subr.bf16.mxu0 0
      %3856 = vmatpush1.bf16.xpose.msra.mxu0 %v3657
      %3857 = vmatprep.subr.bf16.mxu0 0
      %3858 = vmatpush1.bf16.xpose.msra.mxu0 %v3658
      %3859 = vmatprep.subr.bf16.mxu0 0
      %3860 = vmatpush1.bf16.xpose.msra.mxu0 0
      %3861 = vmatprep.subr.bf16.mxu0 0
      %3862 = vmatpush1.bf16.xpose.msra.mxu0 0
      %3863 = vmatprep.subr.bf16.mxu0 0
      %3864 = vmatpush1.bf16.xpose.msra.mxu0 0
      %3865 = vmatprep.subr.bf16.mxu0 0
      %3866 = vmatpush1.bf16.xpose.msra.mxu0 0
      %3867 = vmatprep.subr.bf16.mxu0 0
      %3868 = vmatpush1.bf16.xpose.msra.mxu0 0
      %3869 = vmatprep.subr.bf16.mxu0 0
      %3870 = vmatpush1.bf16.xpose.msra.mxu0 0
      %3871 = vmatprep.subr.bf16.mxu0 0
      %3872 = vmatpush1.bf16.xpose.msra.mxu0 0
      %3873 = vmatprep.subr.bf16.mxu0 0
      %3874 = vmatpush1.bf16.xpose.msra.mxu0 0
      %3875 = vmatprep.mubr.bf16.mxu0 0
      %3876 = vmatmul.mubr.bf16.gmra.mrb[0].mxu0 %v3615
      %v3877 = vpop.f32.mrb[0].mxu0
      %v3878 = vadd.f32 0.0, %v3877
      %v3879 = vpop.f32.mrb[0].mxu0
      %v3880 = vpop.f32.mrb[0].mxu0
      %v3881 = vpop.f32.mrb[0].mxu0
      %3882 = vdwg.mxu0
      %3883 = vmatprep.subr.bf16.mxu0 0
      %3884 = vmatpush1.bf16.xpose.msra.mxu0 %v3659
      %3885 = vmatprep.subr.bf16.mxu0 0
      %3886 = vmatpush1.bf16.xpose.msra.mxu0 %v3660
      %3887 = vmatprep.subr.bf16.mxu0 0
      %3888 = vmatpush1.bf16.xpose.msra.mxu0 %v3661
      %3889 = vmatprep.subr.bf16.mxu0 0
      %3890 = vmatpush1.bf16.xpose.msra.mxu0 %v3662
      %3891 = vmatprep.subr.bf16.mxu0 0
      %3892 = vmatpush1.bf16.xpose.msra.mxu0 %v3663
      %3893 = vmatprep.subr.bf16.mxu0 0
      %3894 = vmatpush1.bf16.xpose.msra.mxu0 %v3664
      %3895 = vmatprep.subr.bf16.mxu0 0
      %3896 = vmatpush1.bf16.xpose.msra.mxu0 %v3665
      %3897 = vmatprep.subr.bf16.mxu0 0
      %3898 = vmatpush1.bf16.xpose.msra.mxu0 %v3666
      %3899 = vmatprep.subr.bf16.mxu0 0
      %3900 = vmatpush1.bf16.xpose.msra.mxu0 0
      %3901 = vmatprep.subr.bf16.mxu0 0
      %3902 = vmatpush1.bf16.xpose.msra.mxu0 0
      %3903 = vmatprep.subr.bf16.mxu0 0
      %3904 = vmatpush1.bf16.xpose.msra.mxu0 0
      %3905 = vmatprep.subr.bf16.mxu0 0
      %3906 = vmatpush1.bf16.xpose.msra.mxu0 0
      %3907 = vmatprep.subr.bf16.mxu0 0
      %3908 = vmatpush1.bf16.xpose.msra.mxu0 0
      %3909 = vmatprep.subr.bf16.mxu0 0
      %3910 = vmatpush1.bf16.xpose.msra.mxu0 0
      %3911 = vmatprep.subr.bf16.mxu0 0
      %3912 = vmatpush1.bf16.xpose.msra.mxu0 0
      %3913 = vmatprep.subr.bf16.mxu0 0
      %3914 = vmatpush1.bf16.xpose.msra.mxu0 0
      %3915 = vmatprep.mubr.bf16.mxu0 0
      %3916 = vmatmul.mubr.bf16.gmra.mrb[0].mxu0 %v3616
      %v3917 = vpop.f32.mrb[0].mxu0
      %v3918 = vadd.f32 0.0, %v3917
      %v3919 = vpop.f32.mrb[0].mxu0
      %v3920 = vpop.f32.mrb[0].mxu0
      %v3921 = vpop.f32.mrb[0].mxu0
      %3922 = vdwg.mxu0
      %3923 = vmatprep.subr.bf16.mxu0 0
      %3924 = vmatpush1.bf16.xpose.msra.mxu0 %v3667
      %3925 = vmatprep.subr.bf16.mxu0 0
      %3926 = vmatpush1.bf16.xpose.msra.mxu0 %v3668
      %3927 = vmatprep.subr.bf16.mxu0 0
      %3928 = vmatpush1.bf16.xpose.msra.mxu0 %v3669
      %3929 = vmatprep.subr.bf16.mxu0 0
      %3930 = vmatpush1.bf16.xpose.msra.mxu0 %v3670
      %3931 = vmatprep.subr.bf16.mxu0 0
      %3932 = vmatpush1.bf16.xpose.msra.mxu0 %v3671
      %3933 = vmatprep.subr.bf16.mxu0 0
      %3934 = vmatpush1.bf16.xpose.msra.mxu0 %v3672
      %3935 = vmatprep.subr.bf16.mxu0 0
      %3936 = vmatpush1.bf16.xpose.msra.mxu0 %v3673
      %3937 = vmatprep.subr.bf16.mxu0 0
      %3938 = vmatpush1.bf16.xpose.msra.mxu0 %v3674
      %3939 = vmatprep.subr.bf16.mxu0 0
      %3940 = vmatpush1.bf16.xpose.msra.mxu0 0
      %3941 = vmatprep.subr.bf16.mxu0 0
      %3942 = vmatpush1.bf16.xpose.msra.mxu0 0
      %3943 = vmatprep.subr.bf16.mxu0 0
      %3944 = vmatpush1.bf16.xpose.msra.mxu0 0
      %3945 = vmatprep.subr.bf16.mxu0 0
      %3946 = vmatpush1.bf16.xpose.msra.mxu0 0
      %3947 = vmatprep.subr.bf16.mxu0 0
      %3948 = vmatpush1.bf16.xpose.msra.mxu0 0
      %3949 = vmatprep.subr.bf16.mxu0 0
      %3950 = vmatpush1.bf16.xpose.msra.mxu0 0
      %3951 = vmatprep.subr.bf16.mxu0 0
      %3952 = vmatpush1.bf16.xpose.msra.mxu0 0
      %3953 = vmatprep.subr.bf16.mxu0 0
      %3954 = vmatpush1.bf16.xpose.msra.mxu0 0
      %3955 = vmatprep.mubr.bf16.mxu0 0
      %3956 = vmatmul.mubr.bf16.gmra.mrb[0].mxu0 %v3617
      %v3957 = vpop.f32.mrb[0].mxu0
      %v3958 = vadd.f32 0.0, %v3957
      %v3959 = vpop.f32.mrb[0].mxu0
      %v3960 = vpop.f32.mrb[0].mxu0
      %v3961 = vpop.f32.mrb[0].mxu0
      %3962 = vdwg.mxu0
      %3963 = vmatprep.subr.bf16.mxu0 0
      %3964 = vmatpush1.bf16.xpose.msra.mxu0 %v3675
      %3965 = vmatprep.subr.bf16.mxu0 0
      %3966 = vmatpush1.bf16.xpose.msra.mxu0 %v3676
      %3967 = vmatprep.subr.bf16.mxu0 0
      %3968 = vmatpush1.bf16.xpose.msra.mxu0 %v3677
      %3969 = vmatprep.subr.bf16.mxu0 0
      %3970 = vmatpush1.bf16.xpose.msra.mxu0 %v3678
      %3971 = vmatprep.subr.bf16.mxu0 0
      %3972 = vmatpush1.bf16.xpose.msra.mxu0 %v3679
      %3973 = vmatprep.subr.bf16.mxu0 0
      %3974 = vmatpush1.bf16.xpose.msra.mxu0 %v3680
      %3975 = vmatprep.subr.bf16.mxu0 0
      %3976 = vmatpush1.bf16.xpose.msra.mxu0 %v3681
      %3977 = vmatprep.subr.bf16.mxu0 0
      %3978 = vmatpush1.bf16.xpose.msra.mxu0 %v3682
      %3979 = vmatprep.subr.bf16.mxu0 0
      %3980 = vmatpush1.bf16.xpose.msra.mxu0 0
      %3981 = vmatprep.subr.bf16.mxu0 0
      %3982 = vmatpush1.bf16.xpose.msra.mxu0 0
      %3983 = vmatprep.subr.bf16.mxu0 0
      %3984 = vmatpush1.bf16.xpose.msra.mxu0 0
      %3985 = vmatprep.subr.bf16.mxu0 0
      %3986 = vmatpush1.bf16.xpose.msra.mxu0 0
      %3987 = vmatprep.subr.bf16.mxu0 0
      %3988 = vmatpush1.bf16.xpose.msra.mxu0 0
      %3989 = vmatprep.subr.bf16.mxu0 0
      %3990 = vmatpush1.bf16.xpose.msra.mxu0 0
      %3991 = vmatprep.subr.bf16.mxu0 0
      %3992 = vmatpush1.bf16.xpose.msra.mxu0 0
      %3993 = vmatprep.subr.bf16.mxu0 0
      %3994 = vmatpush1.bf16.xpose.msra.mxu0 0
      %3995 = vmatprep.mubr.bf16.mxu0 0
      %3996 = vmatmul.mubr.bf16.gmra.mrb[0].mxu0 %v3618
      %v3997 = vpop.f32.mrb[0].mxu0
      %v3998 = vadd.f32 0.0, %v3997
      %v3999 = vpop.f32.mrb[0].mxu0
      %v4000 = vpop.f32.mrb[0].mxu0
      %v4001 = vpop.f32.mrb[0].mxu0
      %4002 = vdwg.mxu0
      %v4004 = vrot.slane %v3758, 4
      %v4007 = vrot.slane %v3838, 4
      %v4010 = vrot.slane %v3918, 4
      %v4013 = vrot.slane %v3998, 4
      %v4015 = vsel %vm615, %v3718, %v4004
      %v4016 = vsel %vm615, %v3798, %v4007
      %v4017 = vsel %vm615, %v3878, %v4010
      %v4018 = vsel %vm615, %v3958, %v4013
      %v4019 = vld [vmem:[%s7] sm:$0xf]
      %v4020 = vld [vmem:[%s7 + $0x4] sm:$0xf]
      %v4021 = vld [vmem:[%s7 + $0x8] sm:$0xf]
      %v4022 = vld [vmem:[%s7 + $0xc] sm:$0xf]
      %v4023 = vpack.c.bf16 %v4016, %v4015
      %v4024 = vpack.c.bf16 %v4018, %v4017
      %4026 = vset.pattern.permute.xlu0 0
      %4027 = vperm.xlu0 %4026, %v881
      %v4028 = vpop.permute.xlu0 %4027
      %4031 = vset.pattern.permute.xlu0 0
      %4032 = vperm.xlu0 %4031, %v882
      %v4033 = vpop.permute.xlu0 %4032
      %4036 = vset.pattern.permute.xlu0 0
      %4037 = vperm.xlu0 %4036, %v883
      %v4038 = vpop.permute.xlu0 %4037
      %4041 = vset.pattern.permute.xlu0 0
      %4042 = vperm.xlu0 %4041, %v884
      %v4043 = vpop.permute.xlu0 %4042
      %v4049 = vunpack.c.l.b16 %v4019
      %v4050 = vunpack.c.l.b16 %v4020
      %v4051 = vunpack.c.l.b16 %v4021
      %v4052 = vunpack.c.l.b16 %v4022
      %v4053 = vpack.c.b16 %v4050, %v4049
      %v4054 = vpack.c.b16 %v4052, %v4051
      %v4056 = vsel %vm1001, %v4053, 0
      %v4059 = vsel %vm1001, %v4054, 0
      %4061 = vmatprep.subr.bf16.mxu0 0
      %4062 = vmatpush1.bf16.msra.mxu0 %v4023
      %4063 = vmatprep.subr.bf16.mxu0 0
      %4064 = vmatpush1.bf16.msra.mxu0 %v4024
      %4065 = vmatprep.subr.bf16.mxu0 0
      %4066 = vmatpush1.bf16.msra.mxu0 0
      %4067 = vmatprep.subr.bf16.mxu0 0
      %4068 = vmatpush1.bf16.msra.mxu0 0
      %4069 = vmatprep.subr.bf16.mxu0 0
      %4070 = vmatpush1.bf16.msra.mxu0 0
      %4071 = vmatprep.subr.bf16.mxu0 0
      %4072 = vmatpush1.bf16.msra.mxu0 0
      %4073 = vmatprep.subr.bf16.mxu0 0
      %4074 = vmatpush1.bf16.msra.mxu0 0
      %4075 = vmatprep.subr.bf16.mxu0 0
      %4076 = vmatpush1.bf16.msra.mxu0 0
      %4077 = vmatprep.subr.bf16.mxu0 0
      %4078 = vmatpush1.bf16.msra.mxu0 0
      %4079 = vmatprep.subr.bf16.mxu0 0
      %4080 = vmatpush1.bf16.msra.mxu0 0
      %4081 = vmatprep.subr.bf16.mxu0 0
      %4082 = vmatpush1.bf16.msra.mxu0 0
      %4083 = vmatprep.subr.bf16.mxu0 0
      %4084 = vmatpush1.bf16.msra.mxu0 0
      %4085 = vmatprep.subr.bf16.mxu0 0
      %4086 = vmatpush1.bf16.msra.mxu0 0
      %4087 = vmatprep.subr.bf16.mxu0 0
      %4088 = vmatpush1.bf16.msra.mxu0 0
      %4089 = vmatprep.subr.bf16.mxu0 0
      %4090 = vmatpush1.bf16.msra.mxu0 0
      %4091 = vmatprep.subr.bf16.mxu0 0
      %4092 = vmatpush1.bf16.msra.mxu0 0
      %4093 = vmatprep.mubr.bf16.mxu0 0
      %4094 = vmatmul.mubr.bf16.gmra.mrb[0].mxu0 %v4056
      %v4095 = vpop.f32.mrb[0].mxu0
      %v4096 = vadd.f32 %v4028, %v4095
      %v4097 = vpop.f32.mrb[0].mxu0
      %v4098 = vpop.f32.mrb[0].mxu0
      %v4099 = vadd.f32 %v4033, %v4098
      %v4100 = vpop.f32.mrb[0].mxu0
      %4101 = vmatprep.mubr.bf16.mxu0 0
      %4102 = vmatmul.mubr.bf16.gmra.mrb[0].mxu0 %v4059
      %v4103 = vpop.f32.mrb[0].mxu0
      %v4104 = vadd.f32 %v4038, %v4103
      %v4105 = vpop.f32.mrb[0].mxu0
      %v4106 = vpop.f32.mrb[0].mxu0
      %v4107 = vadd.f32 %v4043, %v4106
      %v4108 = vpop.f32.mrb[0].mxu0
      %4109 = vdwg.mxu0
      %v4110 = vadd.f32 %v877, %v4096
      %v4111 = vadd.f32 %v878, %v4099
      %v4112 = vadd.f32 %v879, %v4104
      %v4113 = vadd.f32 %v880, %v4107
      %v4114 = vadd.f32 %v4110, %v4111
      %v4115 = vadd.f32 %v4114, %v4112
      %v4116 = vadd.f32 %v4115, %v4113
      %v4117 = vrot.slane %v4116, 4
      %v4118 = vadd.f32 %v4116, %v4117
      %v4119 = vrot.slane %v4118, 2
      %v4120 = vadd.f32 %v4118, %v4119
      %v4121 = vrot.slane %v4120, 1
      %v4122 = vadd.f32 %v4120, %v4121
      %v4123 = vrcp.pop 32.0
      %v4124 = vmul.f32 %v4122, %v4123
      %v4125 = vsub.f32 %v4110, %v4124
      %v4126 = vsub.f32 %v4111, %v4124
      %v4127 = vsub.f32 %v4112, %v4124
      %v4128 = vsub.f32 %v4113, %v4124
      %v4129 = vmul.f32 %v4125, %v4125
      %v4130 = vmul.f32 %v4126, %v4126
      %v4131 = vmul.f32 %v4127, %v4127
      %v4132 = vmul.f32 %v4128, %v4128
      %v4133 = vadd.f32 %v4129, %v4130
      %v4134 = vadd.f32 %v4133, %v4131
      %v4135 = vadd.f32 %v4134, %v4132
      %v4136 = vrot.slane %v4135, 4
      %v4137 = vadd.f32 %v4135, %v4136
      %v4138 = vrot.slane %v4137, 2
      %v4139 = vadd.f32 %v4137, %v4138
      %v4140 = vrot.slane %v4139, 1
      %v4141 = vadd.f32 %v4139, %v4140
      %v4142 = vmul.f32 %v4141, %v4123
      %v4143 = vadd.f32 %v4142, 1e-05
      %v4144 = vrsqrt.pop %v4143
      %v4145 = vmul.f32 %v4125, %v4144
      %v4146 = vmul.f32 %v4126, %v4144
      %v4147 = vmul.f32 %v4127, %v4144
      %v4148 = vmul.f32 %v4128, %v4144
      %4149 = vset.pattern.permute.xlu0 1
      %4150 = vperm.xlu0 %4149, %v881
      %v4151 = vpop.permute.xlu0 %4150
      %4153 = vset.pattern.permute.xlu0 1
      %4154 = vperm.xlu0 %4153, %v882
      %v4155 = vpop.permute.xlu0 %4154
      %4157 = vset.pattern.permute.xlu0 1
      %4158 = vperm.xlu0 %4157, %v883
      %v4159 = vpop.permute.xlu0 %4158
      %4161 = vset.pattern.permute.xlu0 1
      %4162 = vperm.xlu0 %4161, %v884
      %v4163 = vpop.permute.xlu0 %4162
      %v4165 = vmul.f32 %v4145, %v4151
      %v4166 = vmul.f32 %v4146, %v4155
      %v4167 = vmul.f32 %v4147, %v4159
      %v4168 = vmul.f32 %v4148, %v4163
      %4169 = vset.pattern.permute.xlu0 2
      %4170 = vperm.xlu0 %4169, %v881
      %v4171 = vpop.permute.xlu0 %4170
      %4173 = vset.pattern.permute.xlu0 2
      %4174 = vperm.xlu0 %4173, %v882
      %v4175 = vpop.permute.xlu0 %4174
      %4177 = vset.pattern.permute.xlu0 2
      %4178 = vperm.xlu0 %4177, %v883
      %v4179 = vpop.permute.xlu0 %4178
      %4181 = vset.pattern.permute.xlu0 2
      %4182 = vperm.xlu0 %4181, %v884
      %v4183 = vpop.permute.xlu0 %4182
      %v4185 = vadd.f32 %v4165, %v4171
      %v4186 = vadd.f32 %v4166, %v4175
      %v4187 = vadd.f32 %v4167, %v4179
      %v4188 = vadd.f32 %v4168, %v4183
      %v4189 = vld [vmem:[%s8] sm:$0xf]
      %v4190 = vld [vmem:[%s8 + $0x4] sm:$0xf]
      %v4191 = vld [vmem:[%s8 + $0x8] sm:$0xf]
      %v4192 = vld [vmem:[%s8 + $0xc] sm:$0xf]
      %v4193 = vld [vmem:[%s8 + $0x10] sm:$0xf]
      %v4194 = vld [vmem:[%s8 + $0x14] sm:$0xf]
      %v4195 = vld [vmem:[%s8 + $0x18] sm:$0xf]
      %v4196 = vld [vmem:[%s8 + $0x1c] sm:$0xf]
      %v4197 = vld [vmem:[%s8 + $0x20] sm:$0xf]
      %v4198 = vld [vmem:[%s8 + $0x24] sm:$0xf]
      %v4199 = vld [vmem:[%s8 + $0x28] sm:$0xf]
      %v4200 = vld [vmem:[%s8 + $0x2c] sm:$0xf]
      %v4201 = vld [vmem:[%s8 + $0x30] sm:$0xf]
      %v4202 = vld [vmem:[%s8 + $0x34] sm:$0xf]
      %v4203 = vld [vmem:[%s8 + $0x38] sm:$0xf]
      %v4204 = vld [vmem:[%s8 + $0x3c] sm:$0xf]
      %v4205 = vpack.c.bf16 %v4186, %v4185
      %v4206 = vpack.c.bf16 %v4188, %v4187
      %v4207 = vld [vmem:[%s9] sm:$0xff]
      %v4208 = vld [vmem:[%s9 + $0x8] sm:$0xff]
      %v4209 = vld [vmem:[%s9 + $0x10] sm:$0xff]
      %v4210 = vld [vmem:[%s9 + $0x18] sm:$0xff]
      %v4211 = vld [vmem:[%s9 + $0x20] sm:$0xff]
      %v4212 = vld [vmem:[%s9 + $0x28] sm:$0xff]
      %v4213 = vld [vmem:[%s9 + $0x30] sm:$0xff]
      %v4214 = vld [vmem:[%s9 + $0x38] sm:$0xff]
      %v4215 = vld [vmem:[%s9 + $0x40] sm:$0xff]
      %v4216 = vld [vmem:[%s9 + $0x48] sm:$0xff]
      %v4217 = vld [vmem:[%s9 + $0x50] sm:$0xff]
      %v4218 = vld [vmem:[%s9 + $0x58] sm:$0xff]
      %v4219 = vld [vmem:[%s9 + $0x60] sm:$0xff]
      %v4220 = vld [vmem:[%s9 + $0x68] sm:$0xff]
      %v4221 = vld [vmem:[%s9 + $0x70] sm:$0xff]
      %v4222 = vld [vmem:[%s9 + $0x78] sm:$0xff]
      %4224 = vset.pattern.permute.xlu0 0
      %4225 = vperm.xlu0 %4224, %v4207
      %v4226 = vpop.permute.xlu0 %4225
      %4229 = vset.pattern.permute.xlu0 0
      %4230 = vperm.xlu0 %4229, %v4208
      %v4231 = vpop.permute.xlu0 %4230
      %4234 = vset.pattern.permute.xlu0 0
      %4235 = vperm.xlu0 %4234, %v4209
      %v4236 = vpop.permute.xlu0 %4235
      %4239 = vset.pattern.permute.xlu0 0
      %4240 = vperm.xlu0 %4239, %v4210
      %v4241 = vpop.permute.xlu0 %4240
      %4244 = vset.pattern.permute.xlu0 0
      %4245 = vperm.xlu0 %4244, %v4211
      %v4246 = vpop.permute.xlu0 %4245
      %4249 = vset.pattern.permute.xlu0 0
      %4250 = vperm.xlu0 %4249, %v4212
      %v4251 = vpop.permute.xlu0 %4250
      %4254 = vset.pattern.permute.xlu0 0
      %4255 = vperm.xlu0 %4254, %v4213
      %v4256 = vpop.permute.xlu0 %4255
      %4259 = vset.pattern.permute.xlu0 0
      %4260 = vperm.xlu0 %4259, %v4214
      %v4261 = vpop.permute.xlu0 %4260
      %4264 = vset.pattern.permute.xlu0 0
      %4265 = vperm.xlu0 %4264, %v4215
      %v4266 = vpop.permute.xlu0 %4265
      %4269 = vset.pattern.permute.xlu0 0
      %4270 = vperm.xlu0 %4269, %v4216
      %v4271 = vpop.permute.xlu0 %4270
      %4274 = vset.pattern.permute.xlu0 0
      %4275 = vperm.xlu0 %4274, %v4217
      %v4276 = vpop.permute.xlu0 %4275
      %4279 = vset.pattern.permute.xlu0 0
      %4280 = vperm.xlu0 %4279, %v4218
      %v4281 = vpop.permute.xlu0 %4280
      %4284 = vset.pattern.permute.xlu0 0
      %4285 = vperm.xlu0 %4284, %v4219
      %v4286 = vpop.permute.xlu0 %4285
      %4289 = vset.pattern.permute.xlu0 0
      %4290 = vperm.xlu0 %4289, %v4220
      %v4291 = vpop.permute.xlu0 %4290
      %4294 = vset.pattern.permute.xlu0 0
      %4295 = vperm.xlu0 %4294, %v4221
      %v4296 = vpop.permute.xlu0 %4295
      %4299 = vset.pattern.permute.xlu0 0
      %4300 = vperm.xlu0 %4299, %v4222
      %v4301 = vpop.permute.xlu0 %4300
      %v4319 = vunpack.c.l.b16 %v4189
      %v4320 = vunpack.c.l.b16 %v4190
      %v4321 = vunpack.c.l.b16 %v4191
      %v4322 = vunpack.c.l.b16 %v4192
      %v4323 = vunpack.c.l.b16 %v4193
      %v4324 = vunpack.c.l.b16 %v4194
      %v4325 = vunpack.c.l.b16 %v4195
      %v4326 = vunpack.c.l.b16 %v4196
      %v4327 = vunpack.c.l.b16 %v4197
      %v4328 = vunpack.c.l.b16 %v4198
      %v4329 = vunpack.c.l.b16 %v4199
      %v4330 = vunpack.c.l.b16 %v4200
      %v4331 = vunpack.c.l.b16 %v4201
      %v4332 = vunpack.c.l.b16 %v4202
      %v4333 = vunpack.c.l.b16 %v4203
      %v4334 = vunpack.c.l.b16 %v4204
      %v4335 = vpack.c.b16 %v4320, %v4319
      %v4336 = vpack.c.b16 %v4322, %v4321
      %v4337 = vpack.c.b16 %v4324, %v4323
      %v4338 = vpack.c.b16 %v4326, %v4325
      %v4339 = vpack.c.b16 %v4328, %v4327
      %v4340 = vpack.c.b16 %v4330, %v4329
      %v4341 = vpack.c.b16 %v4332, %v4331
      %v4342 = vpack.c.b16 %v4334, %v4333
      %v4344 = vsel %vm1001, %v4335, 0
      %v4347 = vsel %vm1001, %v4336, 0
      %v4350 = vsel %vm1001, %v4337, 0
      %v4353 = vsel %vm1001, %v4338, 0
      %v4356 = vsel %vm1001, %v4339, 0
      %v4359 = vsel %vm1001, %v4340, 0
      %v4362 = vsel %vm1001, %v4341, 0
      %v4365 = vsel %vm1001, %v4342, 0
      %4367 = vmatprep.subr.bf16.mxu0 0
      %4368 = vmatpush1.bf16.msra.mxu0 %v4205
      %4369 = vmatprep.subr.bf16.mxu0 0
      %4370 = vmatpush1.bf16.msra.mxu0 %v4206
      %4371 = vmatprep.subr.bf16.mxu0 0
      %4372 = vmatpush1.bf16.msra.mxu0 0
      %4373 = vmatprep.subr.bf16.mxu0 0
      %4374 = vmatpush1.bf16.msra.mxu0 0
      %4375 = vmatprep.subr.bf16.mxu0 0
      %4376 = vmatpush1.bf16.msra.mxu0 0
      %4377 = vmatprep.subr.bf16.mxu0 0
      %4378 = vmatpush1.bf16.msra.mxu0 0
      %4379 = vmatprep.subr.bf16.mxu0 0
      %4380 = vmatpush1.bf16.msra.mxu0 0
      %4381 = vmatprep.subr.bf16.mxu0 0
      %4382 = vmatpush1.bf16.msra.mxu0 0
      %4383 = vmatprep.subr.bf16.mxu0 0
      %4384 = vmatpush1.bf16.msra.mxu0 0
      %4385 = vmatprep.subr.bf16.mxu0 0
      %4386 = vmatpush1.bf16.msra.mxu0 0
      %4387 = vmatprep.subr.bf16.mxu0 0
      %4388 = vmatpush1.bf16.msra.mxu0 0
      %4389 = vmatprep.subr.bf16.mxu0 0
      %4390 = vmatpush1.bf16.msra.mxu0 0
      %4391 = vmatprep.subr.bf16.mxu0 0
      %4392 = vmatpush1.bf16.msra.mxu0 0
      %4393 = vmatprep.subr.bf16.mxu0 0
      %4394 = vmatpush1.bf16.msra.mxu0 0
      %4395 = vmatprep.subr.bf16.mxu0 0
      %4396 = vmatpush1.bf16.msra.mxu0 0
      %4397 = vmatprep.subr.bf16.mxu0 0
      %4398 = vmatpush1.bf16.msra.mxu0 0
      %4399 = vmatprep.mubr.bf16.mxu0 0
      %4400 = vmatmul.mubr.bf16.gmra.mrb[0].mxu0 %v4344
      %v4401 = vpop.f32.mrb[0].mxu0
      %v4402 = vadd.f32 %v4226, %v4401
      %v4403 = vpop.f32.mrb[0].mxu0
      %v4404 = vpop.f32.mrb[0].mxu0
      %v4405 = vadd.f32 %v4231, %v4404
      %v4406 = vpop.f32.mrb[0].mxu0
      %4407 = vmatprep.mubr.bf16.mxu0 0
      %4408 = vmatmul.mubr.bf16.gmra.mrb[0].mxu0 %v4347
      %v4409 = vpop.f32.mrb[0].mxu0
      %v4410 = vadd.f32 %v4236, %v4409
      %v4411 = vpop.f32.mrb[0].mxu0
      %v4412 = vpop.f32.mrb[0].mxu0
      %v4413 = vadd.f32 %v4241, %v4412
      %v4414 = vpop.f32.mrb[0].mxu0
      %4415 = vmatprep.mubr.bf16.mxu0 0
      %4416 = vmatmul.mubr.bf16.gmra.mrb[0].mxu0 %v4350
      %v4417 = vpop.f32.mrb[0].mxu0
      %v4418 = vadd.f32 %v4246, %v4417
      %v4419 = vpop.f32.mrb[0].mxu0
      %v4420 = vpop.f32.mrb[0].mxu0
      %v4421 = vadd.f32 %v4251, %v4420
      %v4422 = vpop.f32.mrb[0].mxu0
      %4423 = vmatprep.mubr.bf16.mxu0 0
      %4424 = vmatmul.mubr.bf16.gmra.mrb[0].mxu0 %v4353
      %v4425 = vpop.f32.mrb[0].mxu0
      %v4426 = vadd.f32 %v4256, %v4425
      %v4427 = vpop.f32.mrb[0].mxu0
      %v4428 = vpop.f32.mrb[0].mxu0
      %v4429 = vadd.f32 %v4261, %v4428
      %v4430 = vpop.f32.mrb[0].mxu0
      %4431 = vmatprep.mubr.bf16.mxu0 0
      %4432 = vmatmul.mubr.bf16.gmra.mrb[0].mxu0 %v4356
      %v4433 = vpop.f32.mrb[0].mxu0
      %v4434 = vadd.f32 %v4266, %v4433
      %v4435 = vpop.f32.mrb[0].mxu0
      %v4436 = vpop.f32.mrb[0].mxu0
      %v4437 = vadd.f32 %v4271, %v4436
      %v4438 = vpop.f32.mrb[0].mxu0
      %4439 = vmatprep.mubr.bf16.mxu0 0
      %4440 = vmatmul.mubr.bf16.gmra.mrb[0].mxu0 %v4359
      %v4441 = vpop.f32.mrb[0].mxu0
      %v4442 = vadd.f32 %v4276, %v4441
      %v4443 = vpop.f32.mrb[0].mxu0
      %v4444 = vpop.f32.mrb[0].mxu0
      %v4445 = vadd.f32 %v4281, %v4444
      %v4446 = vpop.f32.mrb[0].mxu0
      %4447 = vmatprep.mubr.bf16.mxu0 0
      %4448 = vmatmul.mubr.bf16.gmra.mrb[0].mxu0 %v4362
      %v4449 = vpop.f32.mrb[0].mxu0
      %v4450 = vadd.f32 %v4286, %v4449
      %v4451 = vpop.f32.mrb[0].mxu0
      %v4452 = vpop.f32.mrb[0].mxu0
      %v4453 = vadd.f32 %v4291, %v4452
      %v4454 = vpop.f32.mrb[0].mxu0
      %4455 = vmatprep.mubr.bf16.mxu0 0
      %4456 = vmatmul.mubr.bf16.gmra.mrb[0].mxu0 %v4365
      %v4457 = vpop.f32.mrb[0].mxu0
      %v4458 = vadd.f32 %v4296, %v4457
      %v4459 = vpop.f32.mrb[0].mxu0
      %v4460 = vpop.f32.mrb[0].mxu0
      %v4461 = vadd.f32 %v4301, %v4460
      %v4462 = vpop.f32.mrb[0].mxu0
      %4463 = vdwg.mxu0
      %v4464 = vmax.f32 %v4402, 0.0
      %v4465 = vmax.f32 %v4405, 0.0
      %v4466 = vmax.f32 %v4410, 0.0
      %v4467 = vmax.f32 %v4413, 0.0
      %v4468 = vmax.f32 %v4418, 0.0
      %v4469 = vmax.f32 %v4421, 0.0
      %v4470 = vmax.f32 %v4426, 0.0
      %v4471 = vmax.f32 %v4429, 0.0
      %v4472 = vmax.f32 %v4434, 0.0
      %v4473 = vmax.f32 %v4437, 0.0
      %v4474 = vmax.f32 %v4442, 0.0
      %v4475 = vmax.f32 %v4445, 0.0
      %v4476 = vmax.f32 %v4450, 0.0
      %v4477 = vmax.f32 %v4453, 0.0
      %v4478 = vmax.f32 %v4458, 0.0
      %v4479 = vmax.f32 %v4461, 0.0
      %v4480 = vld [vmem:[%s10] sm:$0xf]
      %v4481 = vld [vmem:[%s10 + $0x4] sm:$0xf]
      %v4482 = vld [vmem:[%s10 + $0x8] sm:$0xf]
      %v4483 = vld [vmem:[%s10 + $0xc] sm:$0xf]
      %v4484 = vpack.c.bf16 %v4465, %v4464
      %v4485 = vpack.c.bf16 %v4467, %v4466
      %v4486 = vpack.c.bf16 %v4469, %v4468
      %v4487 = vpack.c.bf16 %v4471, %v4470
      %v4488 = vpack.c.bf16 %v4473, %v4472
      %v4489 = vpack.c.bf16 %v4475, %v4474
      %v4490 = vpack.c.bf16 %v4477, %v4476
      %v4491 = vpack.c.bf16 %v4479, %v4478
      %4492 = vset.pattern.permute.xlu0 3
      %4493 = vperm.xlu0 %4492, %v881
      %v4494 = vpop.permute.xlu0 %4493
      %4496 = vset.pattern.permute.xlu0 3
      %4497 = vperm.xlu0 %4496, %v882
      %v4498 = vpop.permute.xlu0 %4497
      %4500 = vset.pattern.permute.xlu0 3
      %4501 = vperm.xlu0 %4500, %v883
      %v4502 = vpop.permute.xlu0 %4501
      %4504 = vset.pattern.permute.xlu0 3
      %4505 = vperm.xlu0 %4504, %v884
      %v4506 = vpop.permute.xlu0 %4505
      %v4512 = vunpack.c.l.b16 %v4480
      %v4513 = vunpack.c.l.b16 %v4481
      %v4514 = vunpack.c.l.b16 %v4482
      %v4515 = vunpack.c.l.b16 %v4483
      %v4516 = vpack.c.b16 %v4513, %v4512
      %v4517 = vpack.c.b16 %v4515, %v4514
      %4520 = vmatprep.subr.bf16.mxu0 0
      %4521 = vmatpush1.bf16.msra.mxu0 %v4484
      %4522 = vmatprep.subr.bf16.mxu0 0
      %4523 = vmatpush1.bf16.msra.mxu0 %v4485
      %4524 = vmatprep.subr.bf16.mxu0 0
      %4525 = vmatpush1.bf16.msra.mxu0 %v4486
      %4526 = vmatprep.subr.bf16.mxu0 0
      %4527 = vmatpush1.bf16.msra.mxu0 %v4487
      %4528 = vmatprep.subr.bf16.mxu0 0
      %4529 = vmatpush1.bf16.msra.mxu0 %v4488
      %4530 = vmatprep.subr.bf16.mxu0 0
      %4531 = vmatpush1.bf16.msra.mxu0 %v4489
      %4532 = vmatprep.subr.bf16.mxu0 0
      %4533 = vmatpush1.bf16.msra.mxu0 %v4490
      %4534 = vmatprep.subr.bf16.mxu0 0
      %4535 = vmatpush1.bf16.msra.mxu0 %v4491
      %4536 = vmatprep.subr.bf16.mxu0 0
      %4537 = vmatpush1.bf16.msra.mxu0 0
      %4538 = vmatprep.subr.bf16.mxu0 0
      %4539 = vmatpush1.bf16.msra.mxu0 0
      %4540 = vmatprep.subr.bf16.mxu0 0
      %4541 = vmatpush1.bf16.msra.mxu0 0
      %4542 = vmatprep.subr.bf16.mxu0 0
      %4543 = vmatpush1.bf16.msra.mxu0 0
      %4544 = vmatprep.subr.bf16.mxu0 0
      %4545 = vmatpush1.bf16.msra.mxu0 0
      %4546 = vmatprep.subr.bf16.mxu0 0
      %4547 = vmatpush1.bf16.msra.mxu0 0
      %4548 = vmatprep.subr.bf16.mxu0 0
      %4549 = vmatpush1.bf16.msra.mxu0 0
      %4550 = vmatprep.subr.bf16.mxu0 0
      %4551 = vmatpush1.bf16.msra.mxu0 0
      %4552 = vmatprep.mubr.bf16.mxu0 0
      %4553 = vmatmul.mubr.bf16.gmra.mrb[0].mxu0 %v4516
      %v4554 = vpop.f32.mrb[0].mxu0
      %v4555 = vadd.f32 %v4494, %v4554
      %v4556 = vpop.f32.mrb[0].mxu0
      %v4557 = vpop.f32.mrb[0].mxu0
      %v4558 = vadd.f32 %v4498, %v4557
      %v4559 = vpop.f32.mrb[0].mxu0
      %4560 = vmatprep.mubr.bf16.mxu0 0
      %4561 = vmatmul.mubr.bf16.gmra.mrb[0].mxu0 %v4517
      %v4562 = vpop.f32.mrb[0].mxu0
      %v4563 = vadd.f32 %v4502, %v4562
      %v4564 = vpop.f32.mrb[0].mxu0
      %v4565 = vpop.f32.mrb[0].mxu0
      %v4566 = vadd.f32 %v4506, %v4565
      %v4567 = vpop.f32.mrb[0].mxu0
      %4568 = vdwg.mxu0
      %v4569 = vadd.f32 %v4185, %v4555
      %v4570 = vadd.f32 %v4186, %v4558
      %v4571 = vadd.f32 %v4187, %v4563
      %v4572 = vadd.f32 %v4188, %v4566
      %v4573 = vadd.f32 %v4569, %v4570
      %v4574 = vadd.f32 %v4573, %v4571
      %v4575 = vadd.f32 %v4574, %v4572
      %v4576 = vrot.slane %v4575, 4
      %v4577 = vadd.f32 %v4575, %v4576
      %v4578 = vrot.slane %v4577, 2
      %v4579 = vadd.f32 %v4577, %v4578
      %v4580 = vrot.slane %v4579, 1
      %v4581 = vadd.f32 %v4579, %v4580
      %v4582 = vmul.f32 %v4581, %v4123
      %v4583 = vsub.f32 %v4569, %v4582
      %v4584 = vsub.f32 %v4570, %v4582
      %v4585 = vsub.f32 %v4571, %v4582
      %v4586 = vsub.f32 %v4572, %v4582
      %v4587 = vmul.f32 %v4583, %v4583
      %v4588 = vmul.f32 %v4584, %v4584
      %v4589 = vmul.f32 %v4585, %v4585
      %v4590 = vmul.f32 %v4586, %v4586
      %v4591 = vadd.f32 %v4587, %v4588
      %v4592 = vadd.f32 %v4591, %v4589
      %v4593 = vadd.f32 %v4592, %v4590
      %v4594 = vrot.slane %v4593, 4
      %v4595 = vadd.f32 %v4593, %v4594
      %v4596 = vrot.slane %v4595, 2
      %v4597 = vadd.f32 %v4595, %v4596
      %v4598 = vrot.slane %v4597, 1
      %v4599 = vadd.f32 %v4597, %v4598
      %v4600 = vmul.f32 %v4599, %v4123
      %v4601 = vadd.f32 %v4600, 1e-05
      %v4602 = vrsqrt.pop %v4601
      %v4603 = vmul.f32 %v4583, %v4602
      %v4604 = vmul.f32 %v4584, %v4602
      %v4605 = vmul.f32 %v4585, %v4602
      %v4606 = vmul.f32 %v4586, %v4602
      %4607 = vset.pattern.permute.xlu0 4
      %4608 = vperm.xlu0 %4607, %v881
      %v4609 = vpop.permute.xlu0 %4608
      %4611 = vset.pattern.permute.xlu0 4
      %4612 = vperm.xlu0 %4611, %v882
      %v4613 = vpop.permute.xlu0 %4612
      %4615 = vset.pattern.permute.xlu0 4
      %4616 = vperm.xlu0 %4615, %v883
      %v4617 = vpop.permute.xlu0 %4616
      %4619 = vset.pattern.permute.xlu0 4
      %4620 = vperm.xlu0 %4619, %v884
      %v4621 = vpop.permute.xlu0 %4620
      %v4623 = vmul.f32 %v4603, %v4609
      %v4624 = vmul.f32 %v4604, %v4613
      %v4625 = vmul.f32 %v4605, %v4617
      %v4626 = vmul.f32 %v4606, %v4621
      %4627 = vset.pattern.permute.xlu0 5
      %4628 = vperm.xlu0 %4627, %v881
      %v4629 = vpop.permute.xlu0 %4628
      %4631 = vset.pattern.permute.xlu0 5
      %4632 = vperm.xlu0 %4631, %v882
      %v4633 = vpop.permute.xlu0 %4632
      %4635 = vset.pattern.permute.xlu0 5
      %4636 = vperm.xlu0 %4635, %v883
      %v4637 = vpop.permute.xlu0 %4636
      %4639 = vset.pattern.permute.xlu0 5
      %4640 = vperm.xlu0 %4639, %v884
      %v4641 = vpop.permute.xlu0 %4640
      %v4643 = vadd.f32 %v4623, %v4629
      %v4644 = vadd.f32 %v4624, %v4633
      %v4645 = vadd.f32 %v4625, %v4637
      %v4646 = vadd.f32 %v4626, %v4641
      %s4647 = scalar_lea.vmem %s11, 32
      %v4648 = vld [vmem:[%s4647] sm:$0xff]
      %v4649 = vld [vmem:[%s4647 + $0x8] sm:$0xff]
      %v4650 = vld [vmem:[%s4647 + $0x10] sm:$0xff]
      %v4651 = vld [vmem:[%s4647 + $0x18] sm:$0xff]
      %s4652 = scalar_lea.vmem %s5, 48
      %v4653 = vld [vmem:[%s4652] sm:$0xf]
      %v4654 = vld [vmem:[%s4652 + $0x4] sm:$0xf]
      %v4655 = vld [vmem:[%s4652 + $0x8] sm:$0xf]
      %v4656 = vld [vmem:[%s4652 + $0xc] sm:$0xf]
      %v4657 = vld [vmem:[%s4652 + $0x10] sm:$0xf]
      %v4658 = vld [vmem:[%s4652 + $0x14] sm:$0xf]
      %v4659 = vld [vmem:[%s4652 + $0x18] sm:$0xf]
      %v4660 = vld [vmem:[%s4652 + $0x1c] sm:$0xf]
      %v4661 = vld [vmem:[%s4652 + $0x20] sm:$0xf]
      %v4662 = vld [vmem:[%s4652 + $0x24] sm:$0xf]
      %v4663 = vld [vmem:[%s4652 + $0x28] sm:$0xf]
      %v4664 = vld [vmem:[%s4652 + $0x2c] sm:$0xf]
      %v4665 = vpack.c.bf16 %v4644, %v4643
      %v4666 = vpack.c.bf16 %v4646, %v4645
      %s4667 = scalar_lea.vmem %s6, 96
      %v4668 = vld [vmem:[%s4667] sm:$0xff]
      %v4669 = vld [vmem:[%s4667 + $0x8] sm:$0xff]
      %v4670 = vld [vmem:[%s4667 + $0x10] sm:$0xff]
      %v4671 = vld [vmem:[%s4667 + $0x18] sm:$0xff]
      %v4672 = vld [vmem:[%s4667 + $0x20] sm:$0xff]
      %v4673 = vld [vmem:[%s4667 + $0x28] sm:$0xff]
      %v4674 = vld [vmem:[%s4667 + $0x30] sm:$0xff]
      %v4675 = vld [vmem:[%s4667 + $0x38] sm:$0xff]
      %v4676 = vld [vmem:[%s4667 + $0x40] sm:$0xff]
      %v4677 = vld [vmem:[%s4667 + $0x48] sm:$0xff]
      %v4678 = vld [vmem:[%s4667 + $0x50] sm:$0xff]
      %v4679 = vld [vmem:[%s4667 + $0x58] sm:$0xff]
      %4681 = vset.pattern.permute.xlu0 0
      %4682 = vperm.xlu0 %4681, %v4668
      %v4683 = vpop.permute.xlu0 %4682
      %4686 = vset.pattern.permute.xlu0 0
      %4687 = vperm.xlu0 %4686, %v4669
      %v4688 = vpop.permute.xlu0 %4687
      %4691 = vset.pattern.permute.xlu0 0
      %4692 = vperm.xlu0 %4691, %v4670
      %v4693 = vpop.permute.xlu0 %4692
      %4696 = vset.pattern.permute.xlu0 0
      %4697 = vperm.xlu0 %4696, %v4671
      %v4698 = vpop.permute.xlu0 %4697
      %4701 = vset.pattern.permute.xlu0 0
      %4702 = vperm.xlu0 %4701, %v4672
      %v4703 = vpop.permute.xlu0 %4702
      %4706 = vset.pattern.permute.xlu0 0
      %4707 = vperm.xlu0 %4706, %v4673
      %v4708 = vpop.permute.xlu0 %4707
      %4711 = vset.pattern.permute.xlu0 0
      %4712 = vperm.xlu0 %4711, %v4674
      %v4713 = vpop.permute.xlu0 %4712
      %4716 = vset.pattern.permute.xlu0 0
      %4717 = vperm.xlu0 %4716, %v4675
      %v4718 = vpop.permute.xlu0 %4717
      %4721 = vset.pattern.permute.xlu0 0
      %4722 = vperm.xlu0 %4721, %v4676
      %v4723 = vpop.permute.xlu0 %4722
      %4726 = vset.pattern.permute.xlu0 0
      %4727 = vperm.xlu0 %4726, %v4677
      %v4728 = vpop.permute.xlu0 %4727
      %4731 = vset.pattern.permute.xlu0 0
      %4732 = vperm.xlu0 %4731, %v4678
      %v4733 = vpop.permute.xlu0 %4732
      %4736 = vset.pattern.permute.xlu0 0
      %4737 = vperm.xlu0 %4736, %v4679
      %v4738 = vpop.permute.xlu0 %4737
      %v4752 = vunpack.c.l.b16 %v4653
      %v4753 = vunpack.c.l.b16 %v4654
      %v4754 = vunpack.c.l.b16 %v4655
      %v4755 = vunpack.c.l.b16 %v4656
      %v4756 = vunpack.c.l.b16 %v4657
      %v4757 = vunpack.c.l.b16 %v4658
      %v4758 = vunpack.c.l.b16 %v4659
      %v4759 = vunpack.c.l.b16 %v4660
      %v4760 = vunpack.c.l.b16 %v4661
      %v4761 = vunpack.c.l.b16 %v4662
      %v4762 = vunpack.c.l.b16 %v4663
      %v4763 = vunpack.c.l.b16 %v4664
      %v4764 = vpack.c.b16 %v4753, %v4752
      %v4765 = vpack.c.b16 %v4755, %v4754
      %v4766 = vpack.c.b16 %v4757, %v4756
      %v4767 = vpack.c.b16 %v4759, %v4758
      %v4768 = vpack.c.b16 %v4761, %v4760
      %v4769 = vpack.c.b16 %v4763, %v4762
      %v4771 = vsel %vm1001, %v4764, 0
      %v4774 = vsel %vm1001, %v4765, 0
      %v4777 = vsel %vm1001, %v4766, 0
      %v4780 = vsel %vm1001, %v4767, 0
      %v4783 = vsel %vm1001, %v4768, 0
      %v4786 = vsel %vm1001, %v4769, 0
      %4788 = vmatprep.subr.bf16.mxu0 0
      %4789 = vmatpush1.bf16.msra.mxu0 %v4665
      %4790 = vmatprep.subr.bf16.mxu0 0
      %4791 = vmatpush1.bf16.msra.mxu0 %v4666
      %4792 = vmatprep.subr.bf16.mxu0 0
      %4793 = vmatpush1.bf16.msra.mxu0 0
      %4794 = vmatprep.subr.bf16.mxu0 0
      %4795 = vmatpush1.bf16.msra.mxu0 0
      %4796 = vmatprep.subr.bf16.mxu0 0
      %4797 = vmatpush1.bf16.msra.mxu0 0
      %4798 = vmatprep.subr.bf16.mxu0 0
      %4799 = vmatpush1.bf16.msra.mxu0 0
      %4800 = vmatprep.subr.bf16.mxu0 0
      %4801 = vmatpush1.bf16.msra.mxu0 0
      %4802 = vmatprep.subr.bf16.mxu0 0
      %4803 = vmatpush1.bf16.msra.mxu0 0
      %4804 = vmatprep.subr.bf16.mxu0 0
      %4805 = vmatpush1.bf16.msra.mxu0 0
      %4806 = vmatprep.subr.bf16.mxu0 0
      %4807 = vmatpush1.bf16.msra.mxu0 0
      %4808 = vmatprep.subr.bf16.mxu0 0
      %4809 = vmatpush1.bf16.msra.mxu0 0
      %4810 = vmatprep.subr.bf16.mxu0 0
      %4811 = vmatpush1.bf16.msra.mxu0 0
      %4812 = vmatprep.subr.bf16.mxu0 0
      %4813 = vmatpush1.bf16.msra.mxu0 0
      %4814 = vmatprep.subr.bf16.mxu0 0
      %4815 = vmatpush1.bf16.msra.mxu0 0
      %4816 = vmatprep.subr.bf16.mxu0 0
      %4817 = vmatpush1.bf16.msra.mxu0 0
      %4818 = vmatprep.subr.bf16.mxu0 0
      %4819 = vmatpush1.bf16.msra.mxu0 0
      %4820 = vmatprep.mubr.bf16.mxu0 0
      %4821 = vmatmul.mubr.bf16.gmra.mrb[0].mxu0 %v4771
      %v4822 = vpop.f32.mrb[0].mxu0
      %v4823 = vadd.f32 %v4683, %v4822
      %v4824 = vpop.f32.mrb[0].mxu0
      %v4825 = vpop.f32.mrb[0].mxu0
      %v4826 = vadd.f32 %v4688, %v4825
      %v4827 = vpop.f32.mrb[0].mxu0
      %4828 = vmatprep.mubr.bf16.mxu0 0
      %4829 = vmatmul.mubr.bf16.gmra.mrb[0].mxu0 %v4774
      %v4830 = vpop.f32.mrb[0].mxu0
      %v4831 = vadd.f32 %v4693, %v4830
      %v4832 = vpop.f32.mrb[0].mxu0
      %v4833 = vpop.f32.mrb[0].mxu0
      %v4834 = vadd.f32 %v4698, %v4833
      %v4835 = vpop.f32.mrb[0].mxu0
      %4836 = vmatprep.mubr.bf16.mxu0 0
      %4837 = vmatmul.mubr.bf16.gmra.mrb[0].mxu0 %v4777
      %v4838 = vpop.f32.mrb[0].mxu0
      %v4839 = vadd.f32 %v4703, %v4838
      %v4840 = vpop.f32.mrb[0].mxu0
      %v4841 = vpop.f32.mrb[0].mxu0
      %v4842 = vadd.f32 %v4708, %v4841
      %v4843 = vpop.f32.mrb[0].mxu0
      %4844 = vmatprep.mubr.bf16.mxu0 0
      %4845 = vmatmul.mubr.bf16.gmra.mrb[0].mxu0 %v4780
      %v4846 = vpop.f32.mrb[0].mxu0
      %v4847 = vadd.f32 %v4713, %v4846
      %v4848 = vpop.f32.mrb[0].mxu0
      %v4849 = vpop.f32.mrb[0].mxu0
      %v4850 = vadd.f32 %v4718, %v4849
      %v4851 = vpop.f32.mrb[0].mxu0
      %4852 = vmatprep.mubr.bf16.mxu0 0
      %4853 = vmatmul.mubr.bf16.gmra.mrb[0].mxu0 %v4783
      %v4854 = vpop.f32.mrb[0].mxu0
      %v4855 = vadd.f32 %v4723, %v4854
      %v4856 = vpop.f32.mrb[0].mxu0
      %v4857 = vpop.f32.mrb[0].mxu0
      %v4858 = vadd.f32 %v4728, %v4857
      %v4859 = vpop.f32.mrb[0].mxu0
      %4860 = vmatprep.mubr.bf16.mxu0 0
      %4861 = vmatmul.mubr.bf16.gmra.mrb[0].mxu0 %v4786
      %v4862 = vpop.f32.mrb[0].mxu0
      %v4863 = vadd.f32 %v4733, %v4862
      %v4864 = vpop.f32.mrb[0].mxu0
      %v4865 = vpop.f32.mrb[0].mxu0
      %v4866 = vadd.f32 %v4738, %v4865
      %v4867 = vpop.f32.mrb[0].mxu0
      %4868 = vdwg.mxu0
      %4869 = vxpose.xlu0.b32.start [1/16] %v4823, 128
      %4870 = vxpose.xlu0.b32.cont [2/16] 0.0, 128
      %4871 = vxpose.xlu0.b32.cont [3/16] 0.0, 128
      %4872 = vxpose.xlu0.b32.cont [4/16] 0.0, 128
      %4873 = vxpose.xlu0.b32.cont [5/16] 0.0, 128
      %4874 = vxpose.xlu0.b32.cont [6/16] 0.0, 128
      %4875 = vxpose.xlu0.b32.cont [7/16] 0.0, 128
      %4876 = vxpose.xlu0.b32.cont [8/16] 0.0, 128
      %4877 = vxpose.xlu0.b32.cont [9/16] 0.0, 128
      %4878 = vxpose.xlu0.b32.cont [10/16] 0.0, 128
      %4879 = vxpose.xlu0.b32.cont [11/16] 0.0, 128
      %4880 = vxpose.xlu0.b32.cont [12/16] 0.0, 128
      %4881 = vxpose.xlu0.b32.cont [13/16] 0.0, 128
      %4882 = vxpose.xlu0.b32.cont [14/16] 0.0, 128
      %4883 = vxpose.xlu0.b32.cont [15/16] 0.0, 128
      %4884 = vxpose.xlu0.b32.end [16/16] 0.0, 128
      %v4885 = vpop.trf.xlu0
      %v4886 = vpop.trf.xlu0
      %v4887 = vpop.trf.xlu0
      %v4888 = vpop.trf.xlu0
      %v4889 = vpop.trf.xlu0
      %v4890 = vpop.trf.xlu0
      %v4891 = vpop.trf.xlu0
      %v4892 = vpop.trf.xlu0
      %v4893 = vpop.trf.xlu0
      %v4894 = vpop.trf.xlu0
      %v4895 = vpop.trf.xlu0
      %v4896 = vpop.trf.xlu0
      %v4897 = vpop.trf.xlu0
      %v4898 = vpop.trf.xlu0
      %v4899 = vpop.trf.xlu0
      %v4900 = vpop.trf.xlu0
      %v4902 = vrot.slane %v4823, 4
      %4904 = vxpose.xlu0.b32.start [1/16] %v4902, 128
      %4905 = vxpose.xlu0.b32.cont [2/16] 0.0, 128
      %4906 = vxpose.xlu0.b32.cont [3/16] 0.0, 128
      %4907 = vxpose.xlu0.b32.cont [4/16] 0.0, 128
      %4908 = vxpose.xlu0.b32.cont [5/16] 0.0, 128
      %4909 = vxpose.xlu0.b32.cont [6/16] 0.0, 128
      %4910 = vxpose.xlu0.b32.cont [7/16] 0.0, 128
      %4911 = vxpose.xlu0.b32.cont [8/16] 0.0, 128
      %4912 = vxpose.xlu0.b32.cont [9/16] 0.0, 128
      %4913 = vxpose.xlu0.b32.cont [10/16] 0.0, 128
      %4914 = vxpose.xlu0.b32.cont [11/16] 0.0, 128
      %4915 = vxpose.xlu0.b32.cont [12/16] 0.0, 128
      %4916 = vxpose.xlu0.b32.cont [13/16] 0.0, 128
      %4917 = vxpose.xlu0.b32.cont [14/16] 0.0, 128
      %4918 = vxpose.xlu0.b32.cont [15/16] 0.0, 128
      %4919 = vxpose.xlu0.b32.end [16/16] 0.0, 128
      %v4920 = vpop.trf.xlu0
      %v4921 = vpop.trf.xlu0
      %v4922 = vpop.trf.xlu0
      %v4923 = vpop.trf.xlu0
      %v4924 = vpop.trf.xlu0
      %v4925 = vpop.trf.xlu0
      %v4926 = vpop.trf.xlu0
      %v4927 = vpop.trf.xlu0
      %v4928 = vpop.trf.xlu0
      %v4929 = vpop.trf.xlu0
      %v4930 = vpop.trf.xlu0
      %v4931 = vpop.trf.xlu0
      %v4932 = vpop.trf.xlu0
      %v4933 = vpop.trf.xlu0
      %v4934 = vpop.trf.xlu0
      %v4935 = vpop.trf.xlu0
      %4936 = vxpose.xlu0.b32.start [1/16] %v4826, 128
      %4937 = vxpose.xlu0.b32.cont [2/16] 0.0, 128
      %4938 = vxpose.xlu0.b32.cont [3/16] 0.0, 128
      %4939 = vxpose.xlu0.b32.cont [4/16] 0.0, 128
      %4940 = vxpose.xlu0.b32.cont [5/16] 0.0, 128
      %4941 = vxpose.xlu0.b32.cont [6/16] 0.0, 128
      %4942 = vxpose.xlu0.b32.cont [7/16] 0.0, 128
      %4943 = vxpose.xlu0.b32.cont [8/16] 0.0, 128
      %4944 = vxpose.xlu0.b32.cont [9/16] 0.0, 128
      %4945 = vxpose.xlu0.b32.cont [10/16] 0.0, 128
      %4946 = vxpose.xlu0.b32.cont [11/16] 0.0, 128
      %4947 = vxpose.xlu0.b32.cont [12/16] 0.0, 128
      %4948 = vxpose.xlu0.b32.cont [13/16] 0.0, 128
      %4949 = vxpose.xlu0.b32.cont [14/16] 0.0, 128
      %4950 = vxpose.xlu0.b32.cont [15/16] 0.0, 128
      %4951 = vxpose.xlu0.b32.end [16/16] 0.0, 128
      %v4952 = vpop.trf.xlu0
      %v4953 = vpop.trf.xlu0
      %v4954 = vpop.trf.xlu0
      %v4955 = vpop.trf.xlu0
      %v4956 = vpop.trf.xlu0
      %v4957 = vpop.trf.xlu0
      %v4958 = vpop.trf.xlu0
      %v4959 = vpop.trf.xlu0
      %v4960 = vpop.trf.xlu0
      %v4961 = vpop.trf.xlu0
      %v4962 = vpop.trf.xlu0
      %v4963 = vpop.trf.xlu0
      %v4964 = vpop.trf.xlu0
      %v4965 = vpop.trf.xlu0
      %v4966 = vpop.trf.xlu0
      %v4967 = vpop.trf.xlu0
      %v4969 = vrot.slane %v4826, 4
      %4971 = vxpose.xlu0.b32.start [1/16] %v4969, 128
      %4972 = vxpose.xlu0.b32.cont [2/16] 0.0, 128
      %4973 = vxpose.xlu0.b32.cont [3/16] 0.0, 128
      %4974 = vxpose.xlu0.b32.cont [4/16] 0.0, 128
      %4975 = vxpose.xlu0.b32.cont [5/16] 0.0, 128
      %4976 = vxpose.xlu0.b32.cont [6/16] 0.0, 128
      %4977 = vxpose.xlu0.b32.cont [7/16] 0.0, 128
      %4978 = vxpose.xlu0.b32.cont [8/16] 0.0, 128
      %4979 = vxpose.xlu0.b32.cont [9/16] 0.0, 128
      %4980 = vxpose.xlu0.b32.cont [10/16] 0.0, 128
      %4981 = vxpose.xlu0.b32.cont [11/16] 0.0, 128
      %4982 = vxpose.xlu0.b32.cont [12/16] 0.0, 128
      %4983 = vxpose.xlu0.b32.cont [13/16] 0.0, 128
      %4984 = vxpose.xlu0.b32.cont [14/16] 0.0, 128
      %4985 = vxpose.xlu0.b32.cont [15/16] 0.0, 128
      %4986 = vxpose.xlu0.b32.end [16/16] 0.0, 128
      %v4987 = vpop.trf.xlu0
      %v4988 = vpop.trf.xlu0
      %v4989 = vpop.trf.xlu0
      %v4990 = vpop.trf.xlu0
      %v4991 = vpop.trf.xlu0
      %v4992 = vpop.trf.xlu0
      %v4993 = vpop.trf.xlu0
      %v4994 = vpop.trf.xlu0
      %v4995 = vpop.trf.xlu0
      %v4996 = vpop.trf.xlu0
      %v4997 = vpop.trf.xlu0
      %v4998 = vpop.trf.xlu0
      %v4999 = vpop.trf.xlu0
      %v5000 = vpop.trf.xlu0
      %v5001 = vpop.trf.xlu0
      %v5002 = vpop.trf.xlu0
      %5003 = vxpose.xlu0.b32.start [1/16] %v4831, 128
      %5004 = vxpose.xlu0.b32.cont [2/16] 0.0, 128
      %5005 = vxpose.xlu0.b32.cont [3/16] 0.0, 128
      %5006 = vxpose.xlu0.b32.cont [4/16] 0.0, 128
      %5007 = vxpose.xlu0.b32.cont [5/16] 0.0, 128
      %5008 = vxpose.xlu0.b32.cont [6/16] 0.0, 128
      %5009 = vxpose.xlu0.b32.cont [7/16] 0.0, 128
      %5010 = vxpose.xlu0.b32.cont [8/16] 0.0, 128
      %5011 = vxpose.xlu0.b32.cont [9/16] 0.0, 128
      %5012 = vxpose.xlu0.b32.cont [10/16] 0.0, 128
      %5013 = vxpose.xlu0.b32.cont [11/16] 0.0, 128
      %5014 = vxpose.xlu0.b32.cont [12/16] 0.0, 128
      %5015 = vxpose.xlu0.b32.cont [13/16] 0.0, 128
      %5016 = vxpose.xlu0.b32.cont [14/16] 0.0, 128
      %5017 = vxpose.xlu0.b32.cont [15/16] 0.0, 128
      %5018 = vxpose.xlu0.b32.end [16/16] 0.0, 128
      %v5019 = vpop.trf.xlu0
      %v5020 = vpop.trf.xlu0
      %v5021 = vpop.trf.xlu0
      %v5022 = vpop.trf.xlu0
      %v5023 = vpop.trf.xlu0
      %v5024 = vpop.trf.xlu0
      %v5025 = vpop.trf.xlu0
      %v5026 = vpop.trf.xlu0
      %v5027 = vpop.trf.xlu0
      %v5028 = vpop.trf.xlu0
      %v5029 = vpop.trf.xlu0
      %v5030 = vpop.trf.xlu0
      %v5031 = vpop.trf.xlu0
      %v5032 = vpop.trf.xlu0
      %v5033 = vpop.trf.xlu0
      %v5034 = vpop.trf.xlu0
      %v5036 = vrot.slane %v4831, 4
      %5038 = vxpose.xlu0.b32.start [1/16] %v5036, 128
      %5039 = vxpose.xlu0.b32.cont [2/16] 0.0, 128
      %5040 = vxpose.xlu0.b32.cont [3/16] 0.0, 128
      %5041 = vxpose.xlu0.b32.cont [4/16] 0.0, 128
      %5042 = vxpose.xlu0.b32.cont [5/16] 0.0, 128
      %5043 = vxpose.xlu0.b32.cont [6/16] 0.0, 128
      %5044 = vxpose.xlu0.b32.cont [7/16] 0.0, 128
      %5045 = vxpose.xlu0.b32.cont [8/16] 0.0, 128
      %5046 = vxpose.xlu0.b32.cont [9/16] 0.0, 128
      %5047 = vxpose.xlu0.b32.cont [10/16] 0.0, 128
      %5048 = vxpose.xlu0.b32.cont [11/16] 0.0, 128
      %5049 = vxpose.xlu0.b32.cont [12/16] 0.0, 128
      %5050 = vxpose.xlu0.b32.cont [13/16] 0.0, 128
      %5051 = vxpose.xlu0.b32.cont [14/16] 0.0, 128
      %5052 = vxpose.xlu0.b32.cont [15/16] 0.0, 128
      %5053 = vxpose.xlu0.b32.end [16/16] 0.0, 128
      %v5054 = vpop.trf.xlu0
      %v5055 = vpop.trf.xlu0
      %v5056 = vpop.trf.xlu0
      %v5057 = vpop.trf.xlu0
      %v5058 = vpop.trf.xlu0
      %v5059 = vpop.trf.xlu0
      %v5060 = vpop.trf.xlu0
      %v5061 = vpop.trf.xlu0
      %v5062 = vpop.trf.xlu0
      %v5063 = vpop.trf.xlu0
      %v5064 = vpop.trf.xlu0
      %v5065 = vpop.trf.xlu0
      %v5066 = vpop.trf.xlu0
      %v5067 = vpop.trf.xlu0
      %v5068 = vpop.trf.xlu0
      %v5069 = vpop.trf.xlu0
      %5070 = vxpose.xlu0.b32.start [1/16] %v4834, 128
      %5071 = vxpose.xlu0.b32.cont [2/16] 0.0, 128
      %5072 = vxpose.xlu0.b32.cont [3/16] 0.0, 128
      %5073 = vxpose.xlu0.b32.cont [4/16] 0.0, 128
      %5074 = vxpose.xlu0.b32.cont [5/16] 0.0, 128
      %5075 = vxpose.xlu0.b32.cont [6/16] 0.0, 128
      %5076 = vxpose.xlu0.b32.cont [7/16] 0.0, 128
      %5077 = vxpose.xlu0.b32.cont [8/16] 0.0, 128
      %5078 = vxpose.xlu0.b32.cont [9/16] 0.0, 128
      %5079 = vxpose.xlu0.b32.cont [10/16] 0.0, 128
      %5080 = vxpose.xlu0.b32.cont [11/16] 0.0, 128
      %5081 = vxpose.xlu0.b32.cont [12/16] 0.0, 128
      %5082 = vxpose.xlu0.b32.cont [13/16] 0.0, 128
      %5083 = vxpose.xlu0.b32.cont [14/16] 0.0, 128
      %5084 = vxpose.xlu0.b32.cont [15/16] 0.0, 128
      %5085 = vxpose.xlu0.b32.end [16/16] 0.0, 128
      %v5086 = vpop.trf.xlu0
      %v5087 = vpop.trf.xlu0
      %v5088 = vpop.trf.xlu0
      %v5089 = vpop.trf.xlu0
      %v5090 = vpop.trf.xlu0
      %v5091 = vpop.trf.xlu0
      %v5092 = vpop.trf.xlu0
      %v5093 = vpop.trf.xlu0
      %v5094 = vpop.trf.xlu0
      %v5095 = vpop.trf.xlu0
      %v5096 = vpop.trf.xlu0
      %v5097 = vpop.trf.xlu0
      %v5098 = vpop.trf.xlu0
      %v5099 = vpop.trf.xlu0
      %v5100 = vpop.trf.xlu0
      %v5101 = vpop.trf.xlu0
      %v5103 = vrot.slane %v4834, 4
      %5105 = vxpose.xlu0.b32.start [1/16] %v5103, 128
      %5106 = vxpose.xlu0.b32.cont [2/16] 0.0, 128
      %5107 = vxpose.xlu0.b32.cont [3/16] 0.0, 128
      %5108 = vxpose.xlu0.b32.cont [4/16] 0.0, 128
      %5109 = vxpose.xlu0.b32.cont [5/16] 0.0, 128
      %5110 = vxpose.xlu0.b32.cont [6/16] 0.0, 128
      %5111 = vxpose.xlu0.b32.cont [7/16] 0.0, 128
      %5112 = vxpose.xlu0.b32.cont [8/16] 0.0, 128
      %5113 = vxpose.xlu0.b32.cont [9/16] 0.0, 128
      %5114 = vxpose.xlu0.b32.cont [10/16] 0.0, 128
      %5115 = vxpose.xlu0.b32.cont [11/16] 0.0, 128
      %5116 = vxpose.xlu0.b32.cont [12/16] 0.0, 128
      %5117 = vxpose.xlu0.b32.cont [13/16] 0.0, 128
      %5118 = vxpose.xlu0.b32.cont [14/16] 0.0, 128
      %5119 = vxpose.xlu0.b32.cont [15/16] 0.0, 128
      %5120 = vxpose.xlu0.b32.end [16/16] 0.0, 128
      %v5121 = vpop.trf.xlu0
      %v5122 = vpop.trf.xlu0
      %v5123 = vpop.trf.xlu0
      %v5124 = vpop.trf.xlu0
      %v5125 = vpop.trf.xlu0
      %v5126 = vpop.trf.xlu0
      %v5127 = vpop.trf.xlu0
      %v5128 = vpop.trf.xlu0
      %v5129 = vpop.trf.xlu0
      %v5130 = vpop.trf.xlu0
      %v5131 = vpop.trf.xlu0
      %v5132 = vpop.trf.xlu0
      %v5133 = vpop.trf.xlu0
      %v5134 = vpop.trf.xlu0
      %v5135 = vpop.trf.xlu0
      %v5136 = vpop.trf.xlu0
      %v5138 = vrot.slane %v4839, 4
      %v5141 = vrot.slane %v4842, 4
      %v5144 = vrot.slane %v4847, 4
      %v5147 = vrot.slane %v4850, 4
      %v5150 = vrot.slane %v4855, 4
      %v5153 = vrot.slane %v4858, 4
      %v5156 = vrot.slane %v4863, 4
      %v5159 = vrot.slane %v4866, 4
      %v5161 = vpack.c.bf16 %v4886, %v4885
      %v5162 = vpack.c.bf16 %v4888, %v4887
      %v5163 = vpack.c.bf16 %v4890, %v4889
      %v5164 = vpack.c.bf16 %v4892, %v4891
      %v5165 = vpack.c.bf16 %v4894, %v4893
      %v5166 = vpack.c.bf16 %v4896, %v4895
      %v5167 = vpack.c.bf16 %v4898, %v4897
      %v5168 = vpack.c.bf16 %v4900, %v4899
      %v5169 = vpack.c.bf16 %v4921, %v4920
      %v5170 = vpack.c.bf16 %v4923, %v4922
      %v5171 = vpack.c.bf16 %v4925, %v4924
      %v5172 = vpack.c.bf16 %v4927, %v4926
      %v5173 = vpack.c.bf16 %v4929, %v4928
      %v5174 = vpack.c.bf16 %v4931, %v4930
      %v5175 = vpack.c.bf16 %v4933, %v4932
      %v5176 = vpack.c.bf16 %v4935, %v4934
      %v5177 = vpack.c.bf16 %v4953, %v4952
      %v5178 = vpack.c.bf16 %v4955, %v4954
      %v5179 = vpack.c.bf16 %v4957, %v4956
      %v5180 = vpack.c.bf16 %v4959, %v4958
      %v5181 = vpack.c.bf16 %v4961, %v4960
      %v5182 = vpack.c.bf16 %v4963, %v4962
      %v5183 = vpack.c.bf16 %v4965, %v4964
      %v5184 = vpack.c.bf16 %v4967, %v4966
      %v5185 = vpack.c.bf16 %v4988, %v4987
      %v5186 = vpack.c.bf16 %v4990, %v4989
      %v5187 = vpack.c.bf16 %v4992, %v4991
      %v5188 = vpack.c.bf16 %v4994, %v4993
      %v5189 = vpack.c.bf16 %v4996, %v4995
      %v5190 = vpack.c.bf16 %v4998, %v4997
      %v5191 = vpack.c.bf16 %v5000, %v4999
      %v5192 = vpack.c.bf16 %v5002, %v5001
      %v5193 = vpack.c.bf16 %v5020, %v5019
      %v5194 = vpack.c.bf16 %v5022, %v5021
      %v5195 = vpack.c.bf16 %v5024, %v5023
      %v5196 = vpack.c.bf16 %v5026, %v5025
      %v5197 = vpack.c.bf16 %v5028, %v5027
      %v5198 = vpack.c.bf16 %v5030, %v5029
      %v5199 = vpack.c.bf16 %v5032, %v5031
      %v5200 = vpack.c.bf16 %v5034, %v5033
      %v5201 = vpack.c.bf16 %v5055, %v5054
      %v5202 = vpack.c.bf16 %v5057, %v5056
      %v5203 = vpack.c.bf16 %v5059, %v5058
      %v5204 = vpack.c.bf16 %v5061, %v5060
      %v5205 = vpack.c.bf16 %v5063, %v5062
      %v5206 = vpack.c.bf16 %v5065, %v5064
      %v5207 = vpack.c.bf16 %v5067, %v5066
      %v5208 = vpack.c.bf16 %v5069, %v5068
      %v5209 = vpack.c.bf16 %v5087, %v5086
      %v5210 = vpack.c.bf16 %v5089, %v5088
      %v5211 = vpack.c.bf16 %v5091, %v5090
      %v5212 = vpack.c.bf16 %v5093, %v5092
      %v5213 = vpack.c.bf16 %v5095, %v5094
      %v5214 = vpack.c.bf16 %v5097, %v5096
      %v5215 = vpack.c.bf16 %v5099, %v5098
      %v5216 = vpack.c.bf16 %v5101, %v5100
      %v5217 = vpack.c.bf16 %v5122, %v5121
      %v5218 = vpack.c.bf16 %v5124, %v5123
      %v5219 = vpack.c.bf16 %v5126, %v5125
      %v5220 = vpack.c.bf16 %v5128, %v5127
      %v5221 = vpack.c.bf16 %v5130, %v5129
      %v5222 = vpack.c.bf16 %v5132, %v5131
      %v5223 = vpack.c.bf16 %v5134, %v5133
      %v5224 = vpack.c.bf16 %v5136, %v5135
      %v5225 = vpack.c.bf16 %v4839, %v4839
      %v5226 = vpack.c.bf16 %v5138, %v5138
      %v5227 = vpack.c.bf16 %v4842, %v4842
      %v5228 = vpack.c.bf16 %v5141, %v5141
      %v5229 = vpack.c.bf16 %v4847, %v4847
      %v5230 = vpack.c.bf16 %v5144, %v5144
      %v5231 = vpack.c.bf16 %v4850, %v4850
      %v5232 = vpack.c.bf16 %v5147, %v5147
      %v5234 = vsel %vm1465, %v5161, 0
      %v5237 = vsel %vm1465, %v5162, 0
      %v5240 = vsel %vm1465, %v5163, 0
      %v5243 = vsel %vm1465, %v5164, 0
      %v5246 = vsel %vm1465, %v5165, 0
      %v5249 = vsel %vm1465, %v5166, 0
      %v5252 = vsel %vm1465, %v5167, 0
      %v5255 = vsel %vm1465, %v5168, 0
      %v5258 = vsel %vm1490, %v5225, 0
      %5260 = vmatprep.subr.bf16.mxu0 0
      %5261 = vmatpush1.bf16.msra.mxu0 %v5258
      %5262 = vmatprep.subr.bf16.mxu0 0
      %5263 = vmatpush1.bf16.msra.mxu0 0
      %5264 = vmatprep.subr.bf16.mxu0 0
      %5265 = vmatpush1.bf16.msra.mxu0 0
      %5266 = vmatprep.subr.bf16.mxu0 0
      %5267 = vmatpush1.bf16.msra.mxu0 0
      %5268 = vmatprep.subr.bf16.mxu0 0
      %5269 = vmatpush1.bf16.msra.mxu0 0
      %5270 = vmatprep.subr.bf16.mxu0 0
      %5271 = vmatpush1.bf16.msra.mxu0 0
      %5272 = vmatprep.subr.bf16.mxu0 0
      %5273 = vmatpush1.bf16.msra.mxu0 0
      %5274 = vmatprep.subr.bf16.mxu0 0
      %5275 = vmatpush1.bf16.msra.mxu0 0
      %5276 = vmatprep.subr.bf16.mxu0 0
      %5277 = vmatpush1.bf16.msra.mxu0 0
      %5278 = vmatprep.subr.bf16.mxu0 0
      %5279 = vmatpush1.bf16.msra.mxu0 0
      %5280 = vmatprep.subr.bf16.mxu0 0
      %5281 = vmatpush1.bf16.msra.mxu0 0
      %5282 = vmatprep.subr.bf16.mxu0 0
      %5283 = vmatpush1.bf16.msra.mxu0 0
      %5284 = vmatprep.subr.bf16.mxu0 0
      %5285 = vmatpush1.bf16.msra.mxu0 0
      %5286 = vmatprep.subr.bf16.mxu0 0
      %5287 = vmatpush1.bf16.msra.mxu0 0
      %5288 = vmatprep.subr.bf16.mxu0 0
      %5289 = vmatpush1.bf16.msra.mxu0 0
      %5290 = vmatprep.subr.bf16.mxu0 0
      %5291 = vmatpush1.bf16.msra.mxu0 0
      %5292 = vmatprep.mubr.bf16.mxu0 0
      %5293 = vmatmul.mubr.bf16.gmra.mrb[0].mxu0 %v5234
      %v5294 = vpop.f32.mrb[0].mxu0
      %v5295 = vadd.f32 0.0, %v5294
      %v5296 = vpop.f32.mrb[0].mxu0
      %v5297 = vpop.f32.mrb[0].mxu0
      %v5298 = vadd.f32 0.0, %v5297
      %v5299 = vpop.f32.mrb[0].mxu0
      %5300 = vmatprep.mubr.bf16.mxu0 0
      %5301 = vmatmul.mubr.bf16.gmra.mrb[0].mxu0 %v5237
      %v5302 = vpop.f32.mrb[0].mxu0
      %v5303 = vadd.f32 0.0, %v5302
      %v5304 = vpop.f32.mrb[0].mxu0
      %v5305 = vpop.f32.mrb[0].mxu0
      %v5306 = vadd.f32 0.0, %v5305
      %v5307 = vpop.f32.mrb[0].mxu0
      %5308 = vmatprep.mubr.bf16.mxu0 0
      %5309 = vmatmul.mubr.bf16.gmra.mrb[0].mxu0 %v5240
      %v5310 = vpop.f32.mrb[0].mxu0
      %v5311 = vadd.f32 0.0, %v5310
      %v5312 = vpop.f32.mrb[0].mxu0
      %v5313 = vpop.f32.mrb[0].mxu0
      %v5314 = vadd.f32 0.0, %v5313
      %v5315 = vpop.f32.mrb[0].mxu0
      %5316 = vmatprep.mubr.bf16.mxu0 0
      %5317 = vmatmul.mubr.bf16.gmra.mrb[0].mxu0 %v5243
      %v5318 = vpop.f32.mrb[0].mxu0
      %v5319 = vadd.f32 0.0, %v5318
      %v5320 = vpop.f32.mrb[0].mxu0
      %v5321 = vpop.f32.mrb[0].mxu0
      %v5322 = vadd.f32 0.0, %v5321
      %v5323 = vpop.f32.mrb[0].mxu0
      %5324 = vmatprep.mubr.bf16.mxu0 0
      %5325 = vmatmul.mubr.bf16.gmra.mrb[0].mxu0 %v5246
      %v5326 = vpop.f32.mrb[0].mxu0
      %v5327 = vadd.f32 0.0, %v5326
      %v5328 = vpop.f32.mrb[0].mxu0
      %v5329 = vpop.f32.mrb[0].mxu0
      %v5330 = vadd.f32 0.0, %v5329
      %v5331 = vpop.f32.mrb[0].mxu0
      %5332 = vmatprep.mubr.bf16.mxu0 0
      %5333 = vmatmul.mubr.bf16.gmra.mrb[0].mxu0 %v5249
      %v5334 = vpop.f32.mrb[0].mxu0
      %v5335 = vadd.f32 0.0, %v5334
      %v5336 = vpop.f32.mrb[0].mxu0
      %v5337 = vpop.f32.mrb[0].mxu0
      %v5338 = vadd.f32 0.0, %v5337
      %v5339 = vpop.f32.mrb[0].mxu0
      %5340 = vmatprep.mubr.bf16.mxu0 0
      %5341 = vmatmul.mubr.bf16.gmra.mrb[0].mxu0 %v5252
      %v5342 = vpop.f32.mrb[0].mxu0
      %v5343 = vadd.f32 0.0, %v5342
      %v5344 = vpop.f32.mrb[0].mxu0
      %v5345 = vpop.f32.mrb[0].mxu0
      %v5346 = vadd.f32 0.0, %v5345
      %v5347 = vpop.f32.mrb[0].mxu0
      %5348 = vmatprep.mubr.bf16.mxu0 0
      %5349 = vmatmul.mubr.bf16.gmra.mrb[0].mxu0 %v5255
      %v5350 = vpop.f32.mrb[0].mxu0
      %v5351 = vadd.f32 0.0, %v5350
      %v5352 = vpop.f32.mrb[0].mxu0
      %v5353 = vpop.f32.mrb[0].mxu0
      %v5354 = vadd.f32 0.0, %v5353
      %v5355 = vpop.f32.mrb[0].mxu0
      %5356 = vdwg.mxu0
      %v5358 = vsel %vm1465, %v5169, 0
      %v5361 = vsel %vm1465, %v5170, 0
      %v5364 = vsel %vm1465, %v5171, 0
      %v5367 = vsel %vm1465, %v5172, 0
      %v5370 = vsel %vm1465, %v5173, 0
      %v5373 = vsel %vm1465, %v5174, 0
      %v5376 = vsel %vm1465, %v5175, 0
      %v5379 = vsel %vm1465, %v5176, 0
      %v5382 = vsel %vm1490, %v5226, 0
      %5384 = vmatprep.subr.bf16.mxu0 0
      %5385 = vmatpush1.bf16.msra.mxu0 %v5382
      %5386 = vmatprep.subr.bf16.mxu0 0
      %5387 = vmatpush1.bf16.msra.mxu0 0
      %5388 = vmatprep.subr.bf16.mxu0 0
      %5389 = vmatpush1.bf16.msra.mxu0 0
      %5390 = vmatprep.subr.bf16.mxu0 0
      %5391 = vmatpush1.bf16.msra.mxu0 0
      %5392 = vmatprep.subr.bf16.mxu0 0
      %5393 = vmatpush1.bf16.msra.mxu0 0
      %5394 = vmatprep.subr.bf16.mxu0 0
      %5395 = vmatpush1.bf16.msra.mxu0 0
      %5396 = vmatprep.subr.bf16.mxu0 0
      %5397 = vmatpush1.bf16.msra.mxu0 0
      %5398 = vmatprep.subr.bf16.mxu0 0
      %5399 = vmatpush1.bf16.msra.mxu0 0
      %5400 = vmatprep.subr.bf16.mxu0 0
      %5401 = vmatpush1.bf16.msra.mxu0 0
      %5402 = vmatprep.subr.bf16.mxu0 0
      %5403 = vmatpush1.bf16.msra.mxu0 0
      %5404 = vmatprep.subr.bf16.mxu0 0
      %5405 = vmatpush1.bf16.msra.mxu0 0
      %5406 = vmatprep.subr.bf16.mxu0 0
      %5407 = vmatpush1.bf16.msra.mxu0 0
      %5408 = vmatprep.subr.bf16.mxu0 0
      %5409 = vmatpush1.bf16.msra.mxu0 0
      %5410 = vmatprep.subr.bf16.mxu0 0
      %5411 = vmatpush1.bf16.msra.mxu0 0
      %5412 = vmatprep.subr.bf16.mxu0 0
      %5413 = vmatpush1.bf16.msra.mxu0 0
      %5414 = vmatprep.subr.bf16.mxu0 0
      %5415 = vmatpush1.bf16.msra.mxu0 0
      %5416 = vmatprep.mubr.bf16.mxu0 0
      %5417 = vmatmul.mubr.bf16.gmra.mrb[0].mxu0 %v5358
      %v5418 = vpop.f32.mrb[0].mxu0
      %v5419 = vadd.f32 0.0, %v5418
      %v5420 = vpop.f32.mrb[0].mxu0
      %v5421 = vpop.f32.mrb[0].mxu0
      %v5422 = vadd.f32 0.0, %v5421
      %v5423 = vpop.f32.mrb[0].mxu0
      %5424 = vmatprep.mubr.bf16.mxu0 0
      %5425 = vmatmul.mubr.bf16.gmra.mrb[0].mxu0 %v5361
      %v5426 = vpop.f32.mrb[0].mxu0
      %v5427 = vadd.f32 0.0, %v5426
      %v5428 = vpop.f32.mrb[0].mxu0
      %v5429 = vpop.f32.mrb[0].mxu0
      %v5430 = vadd.f32 0.0, %v5429
      %v5431 = vpop.f32.mrb[0].mxu0
      %5432 = vmatprep.mubr.bf16.mxu0 0
      %5433 = vmatmul.mubr.bf16.gmra.mrb[0].mxu0 %v5364
      %v5434 = vpop.f32.mrb[0].mxu0
      %v5435 = vadd.f32 0.0, %v5434
      %v5436 = vpop.f32.mrb[0].mxu0
      %v5437 = vpop.f32.mrb[0].mxu0
      %v5438 = vadd.f32 0.0, %v5437
      %v5439 = vpop.f32.mrb[0].mxu0
      %5440 = vmatprep.mubr.bf16.mxu0 0
      %5441 = vmatmul.mubr.bf16.gmra.mrb[0].mxu0 %v5367
      %v5442 = vpop.f32.mrb[0].mxu0
      %v5443 = vadd.f32 0.0, %v5442
      %v5444 = vpop.f32.mrb[0].mxu0
      %v5445 = vpop.f32.mrb[0].mxu0
      %v5446 = vadd.f32 0.0, %v5445
      %v5447 = vpop.f32.mrb[0].mxu0
      %5448 = vmatprep.mubr.bf16.mxu0 0
      %5449 = vmatmul.mubr.bf16.gmra.mrb[0].mxu0 %v5370
      %v5450 = vpop.f32.mrb[0].mxu0
      %v5451 = vadd.f32 0.0, %v5450
      %v5452 = vpop.f32.mrb[0].mxu0
      %v5453 = vpop.f32.mrb[0].mxu0
      %v5454 = vadd.f32 0.0, %v5453
      %v5455 = vpop.f32.mrb[0].mxu0
      %5456 = vmatprep.mubr.bf16.mxu0 0
      %5457 = vmatmul.mubr.bf16.gmra.mrb[0].mxu0 %v5373
      %v5458 = vpop.f32.mrb[0].mxu0
      %v5459 = vadd.f32 0.0, %v5458
      %v5460 = vpop.f32.mrb[0].mxu0
      %v5461 = vpop.f32.mrb[0].mxu0
      %v5462 = vadd.f32 0.0, %v5461
      %v5463 = vpop.f32.mrb[0].mxu0
      %5464 = vmatprep.mubr.bf16.mxu0 0
      %5465 = vmatmul.mubr.bf16.gmra.mrb[0].mxu0 %v5376
      %v5466 = vpop.f32.mrb[0].mxu0
      %v5467 = vadd.f32 0.0, %v5466
      %v5468 = vpop.f32.mrb[0].mxu0
      %v5469 = vpop.f32.mrb[0].mxu0
      %v5470 = vadd.f32 0.0, %v5469
      %v5471 = vpop.f32.mrb[0].mxu0
      %5472 = vmatprep.mubr.bf16.mxu0 0
      %5473 = vmatmul.mubr.bf16.gmra.mrb[0].mxu0 %v5379
      %v5474 = vpop.f32.mrb[0].mxu0
      %v5475 = vadd.f32 0.0, %v5474
      %v5476 = vpop.f32.mrb[0].mxu0
      %v5477 = vpop.f32.mrb[0].mxu0
      %v5478 = vadd.f32 0.0, %v5477
      %v5479 = vpop.f32.mrb[0].mxu0
      %5480 = vdwg.mxu0
      %v5482 = vsel %vm1465, %v5177, 0
      %v5485 = vsel %vm1465, %v5178, 0
      %v5488 = vsel %vm1465, %v5179, 0
      %v5491 = vsel %vm1465, %v5180, 0
      %v5494 = vsel %vm1465, %v5181, 0
      %v5497 = vsel %vm1465, %v5182, 0
      %v5500 = vsel %vm1465, %v5183, 0
      %v5503 = vsel %vm1465, %v5184, 0
      %v5506 = vsel %vm1490, %v5227, 0
      %5508 = vmatprep.subr.bf16.mxu0 0
      %5509 = vmatpush1.bf16.msra.mxu0 %v5506
      %5510 = vmatprep.subr.bf16.mxu0 0
      %5511 = vmatpush1.bf16.msra.mxu0 0
      %5512 = vmatprep.subr.bf16.mxu0 0
      %5513 = vmatpush1.bf16.msra.mxu0 0
      %5514 = vmatprep.subr.bf16.mxu0 0
      %5515 = vmatpush1.bf16.msra.mxu0 0
      %5516 = vmatprep.subr.bf16.mxu0 0
      %5517 = vmatpush1.bf16.msra.mxu0 0
      %5518 = vmatprep.subr.bf16.mxu0 0
      %5519 = vmatpush1.bf16.msra.mxu0 0
      %5520 = vmatprep.subr.bf16.mxu0 0
      %5521 = vmatpush1.bf16.msra.mxu0 0
      %5522 = vmatprep.subr.bf16.mxu0 0
      %5523 = vmatpush1.bf16.msra.mxu0 0
      %5524 = vmatprep.subr.bf16.mxu0 0
      %5525 = vmatpush1.bf16.msra.mxu0 0
      %5526 = vmatprep.subr.bf16.mxu0 0
      %5527 = vmatpush1.bf16.msra.mxu0 0
      %5528 = vmatprep.subr.bf16.mxu0 0
      %5529 = vmatpush1.bf16.msra.mxu0 0
      %5530 = vmatprep.subr.bf16.mxu0 0
      %5531 = vmatpush1.bf16.msra.mxu0 0
      %5532 = vmatprep.subr.bf16.mxu0 0
      %5533 = vmatpush1.bf16.msra.mxu0 0
      %5534 = vmatprep.subr.bf16.mxu0 0
      %5535 = vmatpush1.bf16.msra.mxu0 0
      %5536 = vmatprep.subr.bf16.mxu0 0
      %5537 = vmatpush1.bf16.msra.mxu0 0
      %5538 = vmatprep.subr.bf16.mxu0 0
      %5539 = vmatpush1.bf16.msra.mxu0 0
      %5540 = vmatprep.mubr.bf16.mxu0 0
      %5541 = vmatmul.mubr.bf16.gmra.mrb[0].mxu0 %v5482
      %v5542 = vpop.f32.mrb[0].mxu0
      %v5543 = vadd.f32 0.0, %v5542
      %v5544 = vpop.f32.mrb[0].mxu0
      %v5545 = vpop.f32.mrb[0].mxu0
      %v5546 = vadd.f32 0.0, %v5545
      %v5547 = vpop.f32.mrb[0].mxu0
      %5548 = vmatprep.mubr.bf16.mxu0 0
      %5549 = vmatmul.mubr.bf16.gmra.mrb[0].mxu0 %v5485
      %v5550 = vpop.f32.mrb[0].mxu0
      %v5551 = vadd.f32 0.0, %v5550
      %v5552 = vpop.f32.mrb[0].mxu0
      %v5553 = vpop.f32.mrb[0].mxu0
      %v5554 = vadd.f32 0.0, %v5553
      %v5555 = vpop.f32.mrb[0].mxu0
      %5556 = vmatprep.mubr.bf16.mxu0 0
      %5557 = vmatmul.mubr.bf16.gmra.mrb[0].mxu0 %v5488
      %v5558 = vpop.f32.mrb[0].mxu0
      %v5559 = vadd.f32 0.0, %v5558
      %v5560 = vpop.f32.mrb[0].mxu0
      %v5561 = vpop.f32.mrb[0].mxu0
      %v5562 = vadd.f32 0.0, %v5561
      %v5563 = vpop.f32.mrb[0].mxu0
      %5564 = vmatprep.mubr.bf16.mxu0 0
      %5565 = vmatmul.mubr.bf16.gmra.mrb[0].mxu0 %v5491
      %v5566 = vpop.f32.mrb[0].mxu0
      %v5567 = vadd.f32 0.0, %v5566
      %v5568 = vpop.f32.mrb[0].mxu0
      %v5569 = vpop.f32.mrb[0].mxu0
      %v5570 = vadd.f32 0.0, %v5569
      %v5571 = vpop.f32.mrb[0].mxu0
      %5572 = vmatprep.mubr.bf16.mxu0 0
      %5573 = vmatmul.mubr.bf16.gmra.mrb[0].mxu0 %v5494
      %v5574 = vpop.f32.mrb[0].mxu0
      %v5575 = vadd.f32 0.0, %v5574
      %v5576 = vpop.f32.mrb[0].mxu0
      %v5577 = vpop.f32.mrb[0].mxu0
      %v5578 = vadd.f32 0.0, %v5577
      %v5579 = vpop.f32.mrb[0].mxu0
      %5580 = vmatprep.mubr.bf16.mxu0 0
      %5581 = vmatmul.mubr.bf16.gmra.mrb[0].mxu0 %v5497
      %v5582 = vpop.f32.mrb[0].mxu0
      %v5583 = vadd.f32 0.0, %v5582
      %v5584 = vpop.f32.mrb[0].mxu0
      %v5585 = vpop.f32.mrb[0].mxu0
      %v5586 = vadd.f32 0.0, %v5585
      %v5587 = vpop.f32.mrb[0].mxu0
      %5588 = vmatprep.mubr.bf16.mxu0 0
      %5589 = vmatmul.mubr.bf16.gmra.mrb[0].mxu0 %v5500
      %v5590 = vpop.f32.mrb[0].mxu0
      %v5591 = vadd.f32 0.0, %v5590
      %v5592 = vpop.f32.mrb[0].mxu0
      %v5593 = vpop.f32.mrb[0].mxu0
      %v5594 = vadd.f32 0.0, %v5593
      %v5595 = vpop.f32.mrb[0].mxu0
      %5596 = vmatprep.mubr.bf16.mxu0 0
      %5597 = vmatmul.mubr.bf16.gmra.mrb[0].mxu0 %v5503
      %v5598 = vpop.f32.mrb[0].mxu0
      %v5599 = vadd.f32 0.0, %v5598
      %v5600 = vpop.f32.mrb[0].mxu0
      %v5601 = vpop.f32.mrb[0].mxu0
      %v5602 = vadd.f32 0.0, %v5601
      %v5603 = vpop.f32.mrb[0].mxu0
      %5604 = vdwg.mxu0
      %v5606 = vsel %vm1465, %v5185, 0
      %v5609 = vsel %vm1465, %v5186, 0
      %v5612 = vsel %vm1465, %v5187, 0
      %v5615 = vsel %vm1465, %v5188, 0
      %v5618 = vsel %vm1465, %v5189, 0
      %v5621 = vsel %vm1465, %v5190, 0
      %v5624 = vsel %vm1465, %v5191, 0
      %v5627 = vsel %vm1465, %v5192, 0
      %v5630 = vsel %vm1490, %v5228, 0
      %5632 = vmatprep.subr.bf16.mxu0 0
      %5633 = vmatpush1.bf16.msra.mxu0 %v5630
      %5634 = vmatprep.subr.bf16.mxu0 0
      %5635 = vmatpush1.bf16.msra.mxu0 0
      %5636 = vmatprep.subr.bf16.mxu0 0
      %5637 = vmatpush1.bf16.msra.mxu0 0
      %5638 = vmatprep.subr.bf16.mxu0 0
      %5639 = vmatpush1.bf16.msra.mxu0 0
      %5640 = vmatprep.subr.bf16.mxu0 0
      %5641 = vmatpush1.bf16.msra.mxu0 0
      %5642 = vmatprep.subr.bf16.mxu0 0
      %5643 = vmatpush1.bf16.msra.mxu0 0
      %5644 = vmatprep.subr.bf16.mxu0 0
      %5645 = vmatpush1.bf16.msra.mxu0 0
      %5646 = vmatprep.subr.bf16.mxu0 0
      %5647 = vmatpush1.bf16.msra.mxu0 0
      %5648 = vmatprep.subr.bf16.mxu0 0
      %5649 = vmatpush1.bf16.msra.mxu0 0
      %5650 = vmatprep.subr.bf16.mxu0 0
      %5651 = vmatpush1.bf16.msra.mxu0 0
      %5652 = vmatprep.subr.bf16.mxu0 0
      %5653 = vmatpush1.bf16.msra.mxu0 0
      %5654 = vmatprep.subr.bf16.mxu0 0
      %5655 = vmatpush1.bf16.msra.mxu0 0
      %5656 = vmatprep.subr.bf16.mxu0 0
      %5657 = vmatpush1.bf16.msra.mxu0 0
      %5658 = vmatprep.subr.bf16.mxu0 0
      %5659 = vmatpush1.bf16.msra.mxu0 0
      %5660 = vmatprep.subr.bf16.mxu0 0
      %5661 = vmatpush1.bf16.msra.mxu0 0
      %5662 = vmatprep.subr.bf16.mxu0 0
      %5663 = vmatpush1.bf16.msra.mxu0 0
      %5664 = vmatprep.mubr.bf16.mxu0 0
      %5665 = vmatmul.mubr.bf16.gmra.mrb[0].mxu0 %v5606
      %v5666 = vpop.f32.mrb[0].mxu0
      %v5667 = vadd.f32 0.0, %v5666
      %v5668 = vpop.f32.mrb[0].mxu0
      %v5669 = vpop.f32.mrb[0].mxu0
      %v5670 = vadd.f32 0.0, %v5669
      %v5671 = vpop.f32.mrb[0].mxu0
      %5672 = vmatprep.mubr.bf16.mxu0 0
      %5673 = vmatmul.mubr.bf16.gmra.mrb[0].mxu0 %v5609
      %v5674 = vpop.f32.mrb[0].mxu0
      %v5675 = vadd.f32 0.0, %v5674
      %v5676 = vpop.f32.mrb[0].mxu0
      %v5677 = vpop.f32.mrb[0].mxu0
      %v5678 = vadd.f32 0.0, %v5677
      %v5679 = vpop.f32.mrb[0].mxu0
      %5680 = vmatprep.mubr.bf16.mxu0 0
      %5681 = vmatmul.mubr.bf16.gmra.mrb[0].mxu0 %v5612
      %v5682 = vpop.f32.mrb[0].mxu0
      %v5683 = vadd.f32 0.0, %v5682
      %v5684 = vpop.f32.mrb[0].mxu0
      %v5685 = vpop.f32.mrb[0].mxu0
      %v5686 = vadd.f32 0.0, %v5685
      %v5687 = vpop.f32.mrb[0].mxu0
      %5688 = vmatprep.mubr.bf16.mxu0 0
      %5689 = vmatmul.mubr.bf16.gmra.mrb[0].mxu0 %v5615
      %v5690 = vpop.f32.mrb[0].mxu0
      %v5691 = vadd.f32 0.0, %v5690
      %v5692 = vpop.f32.mrb[0].mxu0
      %v5693 = vpop.f32.mrb[0].mxu0
      %v5694 = vadd.f32 0.0, %v5693
      %v5695 = vpop.f32.mrb[0].mxu0
      %5696 = vmatprep.mubr.bf16.mxu0 0
      %5697 = vmatmul.mubr.bf16.gmra.mrb[0].mxu0 %v5618
      %v5698 = vpop.f32.mrb[0].mxu0
      %v5699 = vadd.f32 0.0, %v5698
      %v5700 = vpop.f32.mrb[0].mxu0
      %v5701 = vpop.f32.mrb[0].mxu0
      %v5702 = vadd.f32 0.0, %v5701
      %v5703 = vpop.f32.mrb[0].mxu0
      %5704 = vmatprep.mubr.bf16.mxu0 0
      %5705 = vmatmul.mubr.bf16.gmra.mrb[0].mxu0 %v5621
      %v5706 = vpop.f32.mrb[0].mxu0
      %v5707 = vadd.f32 0.0, %v5706
      %v5708 = vpop.f32.mrb[0].mxu0
      %v5709 = vpop.f32.mrb[0].mxu0
      %v5710 = vadd.f32 0.0, %v5709
      %v5711 = vpop.f32.mrb[0].mxu0
      %5712 = vmatprep.mubr.bf16.mxu0 0
      %5713 = vmatmul.mubr.bf16.gmra.mrb[0].mxu0 %v5624
      %v5714 = vpop.f32.mrb[0].mxu0
      %v5715 = vadd.f32 0.0, %v5714
      %v5716 = vpop.f32.mrb[0].mxu0
      %v5717 = vpop.f32.mrb[0].mxu0
      %v5718 = vadd.f32 0.0, %v5717
      %v5719 = vpop.f32.mrb[0].mxu0
      %5720 = vmatprep.mubr.bf16.mxu0 0
      %5721 = vmatmul.mubr.bf16.gmra.mrb[0].mxu0 %v5627
      %v5722 = vpop.f32.mrb[0].mxu0
      %v5723 = vadd.f32 0.0, %v5722
      %v5724 = vpop.f32.mrb[0].mxu0
      %v5725 = vpop.f32.mrb[0].mxu0
      %v5726 = vadd.f32 0.0, %v5725
      %v5727 = vpop.f32.mrb[0].mxu0
      %5728 = vdwg.mxu0
      %v5730 = vsel %vm1465, %v5193, 0
      %v5733 = vsel %vm1465, %v5194, 0
      %v5736 = vsel %vm1465, %v5195, 0
      %v5739 = vsel %vm1465, %v5196, 0
      %v5742 = vsel %vm1465, %v5197, 0
      %v5745 = vsel %vm1465, %v5198, 0
      %v5748 = vsel %vm1465, %v5199, 0
      %v5751 = vsel %vm1465, %v5200, 0
      %v5754 = vsel %vm1490, %v5229, 0
      %5756 = vmatprep.subr.bf16.mxu0 0
      %5757 = vmatpush1.bf16.msra.mxu0 %v5754
      %5758 = vmatprep.subr.bf16.mxu0 0
      %5759 = vmatpush1.bf16.msra.mxu0 0
      %5760 = vmatprep.subr.bf16.mxu0 0
      %5761 = vmatpush1.bf16.msra.mxu0 0
      %5762 = vmatprep.subr.bf16.mxu0 0
      %5763 = vmatpush1.bf16.msra.mxu0 0
      %5764 = vmatprep.subr.bf16.mxu0 0
      %5765 = vmatpush1.bf16.msra.mxu0 0
      %5766 = vmatprep.subr.bf16.mxu0 0
      %5767 = vmatpush1.bf16.msra.mxu0 0
      %5768 = vmatprep.subr.bf16.mxu0 0
      %5769 = vmatpush1.bf16.msra.mxu0 0
      %5770 = vmatprep.subr.bf16.mxu0 0
      %5771 = vmatpush1.bf16.msra.mxu0 0
      %5772 = vmatprep.subr.bf16.mxu0 0
      %5773 = vmatpush1.bf16.msra.mxu0 0
      %5774 = vmatprep.subr.bf16.mxu0 0
      %5775 = vmatpush1.bf16.msra.mxu0 0
      %5776 = vmatprep.subr.bf16.mxu0 0
      %5777 = vmatpush1.bf16.msra.mxu0 0
      %5778 = vmatprep.subr.bf16.mxu0 0
      %5779 = vmatpush1.bf16.msra.mxu0 0
      %5780 = vmatprep.subr.bf16.mxu0 0
      %5781 = vmatpush1.bf16.msra.mxu0 0
      %5782 = vmatprep.subr.bf16.mxu0 0
      %5783 = vmatpush1.bf16.msra.mxu0 0
      %5784 = vmatprep.subr.bf16.mxu0 0
      %5785 = vmatpush1.bf16.msra.mxu0 0
      %5786 = vmatprep.subr.bf16.mxu0 0
      %5787 = vmatpush1.bf16.msra.mxu0 0
      %5788 = vmatprep.mubr.bf16.mxu0 0
      %5789 = vmatmul.mubr.bf16.gmra.mrb[0].mxu0 %v5730
      %v5790 = vpop.f32.mrb[0].mxu0
      %v5791 = vadd.f32 0.0, %v5790
      %v5792 = vpop.f32.mrb[0].mxu0
      %v5793 = vpop.f32.mrb[0].mxu0
      %v5794 = vadd.f32 0.0, %v5793
      %v5795 = vpop.f32.mrb[0].mxu0
      %5796 = vmatprep.mubr.bf16.mxu0 0
      %5797 = vmatmul.mubr.bf16.gmra.mrb[0].mxu0 %v5733
      %v5798 = vpop.f32.mrb[0].mxu0
      %v5799 = vadd.f32 0.0, %v5798
      %v5800 = vpop.f32.mrb[0].mxu0
      %v5801 = vpop.f32.mrb[0].mxu0
      %v5802 = vadd.f32 0.0, %v5801
      %v5803 = vpop.f32.mrb[0].mxu0
      %5804 = vmatprep.mubr.bf16.mxu0 0
      %5805 = vmatmul.mubr.bf16.gmra.mrb[0].mxu0 %v5736
      %v5806 = vpop.f32.mrb[0].mxu0
      %v5807 = vadd.f32 0.0, %v5806
      %v5808 = vpop.f32.mrb[0].mxu0
      %v5809 = vpop.f32.mrb[0].mxu0
      %v5810 = vadd.f32 0.0, %v5809
      %v5811 = vpop.f32.mrb[0].mxu0
      %5812 = vmatprep.mubr.bf16.mxu0 0
      %5813 = vmatmul.mubr.bf16.gmra.mrb[0].mxu0 %v5739
      %v5814 = vpop.f32.mrb[0].mxu0
      %v5815 = vadd.f32 0.0, %v5814
      %v5816 = vpop.f32.mrb[0].mxu0
      %v5817 = vpop.f32.mrb[0].mxu0
      %v5818 = vadd.f32 0.0, %v5817
      %v5819 = vpop.f32.mrb[0].mxu0
      %5820 = vmatprep.mubr.bf16.mxu0 0
      %5821 = vmatmul.mubr.bf16.gmra.mrb[0].mxu0 %v5742
      %v5822 = vpop.f32.mrb[0].mxu0
      %v5823 = vadd.f32 0.0, %v5822
      %v5824 = vpop.f32.mrb[0].mxu0
      %v5825 = vpop.f32.mrb[0].mxu0
      %v5826 = vadd.f32 0.0, %v5825
      %v5827 = vpop.f32.mrb[0].mxu0
      %5828 = vmatprep.mubr.bf16.mxu0 0
      %5829 = vmatmul.mubr.bf16.gmra.mrb[0].mxu0 %v5745
      %v5830 = vpop.f32.mrb[0].mxu0
      %v5831 = vadd.f32 0.0, %v5830
      %v5832 = vpop.f32.mrb[0].mxu0
      %v5833 = vpop.f32.mrb[0].mxu0
      %v5834 = vadd.f32 0.0, %v5833
      %v5835 = vpop.f32.mrb[0].mxu0
      %5836 = vmatprep.mubr.bf16.mxu0 0
      %5837 = vmatmul.mubr.bf16.gmra.mrb[0].mxu0 %v5748
      %v5838 = vpop.f32.mrb[0].mxu0
      %v5839 = vadd.f32 0.0, %v5838
      %v5840 = vpop.f32.mrb[0].mxu0
      %v5841 = vpop.f32.mrb[0].mxu0
      %v5842 = vadd.f32 0.0, %v5841
      %v5843 = vpop.f32.mrb[0].mxu0
      %5844 = vmatprep.mubr.bf16.mxu0 0
      %5845 = vmatmul.mubr.bf16.gmra.mrb[0].mxu0 %v5751
      %v5846 = vpop.f32.mrb[0].mxu0
      %v5847 = vadd.f32 0.0, %v5846
      %v5848 = vpop.f32.mrb[0].mxu0
      %v5849 = vpop.f32.mrb[0].mxu0
      %v5850 = vadd.f32 0.0, %v5849
      %v5851 = vpop.f32.mrb[0].mxu0
      %5852 = vdwg.mxu0
      %v5854 = vsel %vm1465, %v5201, 0
      %v5857 = vsel %vm1465, %v5202, 0
      %v5860 = vsel %vm1465, %v5203, 0
      %v5863 = vsel %vm1465, %v5204, 0
      %v5866 = vsel %vm1465, %v5205, 0
      %v5869 = vsel %vm1465, %v5206, 0
      %v5872 = vsel %vm1465, %v5207, 0
      %v5875 = vsel %vm1465, %v5208, 0
      %v5878 = vsel %vm1490, %v5230, 0
      %5880 = vmatprep.subr.bf16.mxu0 0
      %5881 = vmatpush1.bf16.msra.mxu0 %v5878
      %5882 = vmatprep.subr.bf16.mxu0 0
      %5883 = vmatpush1.bf16.msra.mxu0 0
      %5884 = vmatprep.subr.bf16.mxu0 0
      %5885 = vmatpush1.bf16.msra.mxu0 0
      %5886 = vmatprep.subr.bf16.mxu0 0
      %5887 = vmatpush1.bf16.msra.mxu0 0
      %5888 = vmatprep.subr.bf16.mxu0 0
      %5889 = vmatpush1.bf16.msra.mxu0 0
      %5890 = vmatprep.subr.bf16.mxu0 0
      %5891 = vmatpush1.bf16.msra.mxu0 0
      %5892 = vmatprep.subr.bf16.mxu0 0
      %5893 = vmatpush1.bf16.msra.mxu0 0
      %5894 = vmatprep.subr.bf16.mxu0 0
      %5895 = vmatpush1.bf16.msra.mxu0 0
      %5896 = vmatprep.subr.bf16.mxu0 0
      %5897 = vmatpush1.bf16.msra.mxu0 0
      %5898 = vmatprep.subr.bf16.mxu0 0
      %5899 = vmatpush1.bf16.msra.mxu0 0
      %5900 = vmatprep.subr.bf16.mxu0 0
      %5901 = vmatpush1.bf16.msra.mxu0 0
      %5902 = vmatprep.subr.bf16.mxu0 0
      %5903 = vmatpush1.bf16.msra.mxu0 0
      %5904 = vmatprep.subr.bf16.mxu0 0
      %5905 = vmatpush1.bf16.msra.mxu0 0
      %5906 = vmatprep.subr.bf16.mxu0 0
      %5907 = vmatpush1.bf16.msra.mxu0 0
      %5908 = vmatprep.subr.bf16.mxu0 0
      %5909 = vmatpush1.bf16.msra.mxu0 0
      %5910 = vmatprep.subr.bf16.mxu0 0
      %5911 = vmatpush1.bf16.msra.mxu0 0
      %5912 = vmatprep.mubr.bf16.mxu0 0
      %5913 = vmatmul.mubr.bf16.gmra.mrb[0].mxu0 %v5854
      %v5914 = vpop.f32.mrb[0].mxu0
      %v5915 = vadd.f32 0.0, %v5914
      %v5916 = vpop.f32.mrb[0].mxu0
      %v5917 = vpop.f32.mrb[0].mxu0
      %v5918 = vadd.f32 0.0, %v5917
      %v5919 = vpop.f32.mrb[0].mxu0
      %5920 = vmatprep.mubr.bf16.mxu0 0
      %5921 = vmatmul.mubr.bf16.gmra.mrb[0].mxu0 %v5857
      %v5922 = vpop.f32.mrb[0].mxu0
      %v5923 = vadd.f32 0.0, %v5922
      %v5924 = vpop.f32.mrb[0].mxu0
      %v5925 = vpop.f32.mrb[0].mxu0
      %v5926 = vadd.f32 0.0, %v5925
      %v5927 = vpop.f32.mrb[0].mxu0
      %5928 = vmatprep.mubr.bf16.mxu0 0
      %5929 = vmatmul.mubr.bf16.gmra.mrb[0].mxu0 %v5860
      %v5930 = vpop.f32.mrb[0].mxu0
      %v5931 = vadd.f32 0.0, %v5930
      %v5932 = vpop.f32.mrb[0].mxu0
      %v5933 = vpop.f32.mrb[0].mxu0
      %v5934 = vadd.f32 0.0, %v5933
      %v5935 = vpop.f32.mrb[0].mxu0
      %5936 = vmatprep.mubr.bf16.mxu0 0
      %5937 = vmatmul.mubr.bf16.gmra.mrb[0].mxu0 %v5863
      %v5938 = vpop.f32.mrb[0].mxu0
      %v5939 = vadd.f32 0.0, %v5938
      %v5940 = vpop.f32.mrb[0].mxu0
      %v5941 = vpop.f32.mrb[0].mxu0
      %v5942 = vadd.f32 0.0, %v5941
      %v5943 = vpop.f32.mrb[0].mxu0
      %5944 = vmatprep.mubr.bf16.mxu0 0
      %5945 = vmatmul.mubr.bf16.gmra.mrb[0].mxu0 %v5866
      %v5946 = vpop.f32.mrb[0].mxu0
      %v5947 = vadd.f32 0.0, %v5946
      %v5948 = vpop.f32.mrb[0].mxu0
      %v5949 = vpop.f32.mrb[0].mxu0
      %v5950 = vadd.f32 0.0, %v5949
      %v5951 = vpop.f32.mrb[0].mxu0
      %5952 = vmatprep.mubr.bf16.mxu0 0
      %5953 = vmatmul.mubr.bf16.gmra.mrb[0].mxu0 %v5869
      %v5954 = vpop.f32.mrb[0].mxu0
      %v5955 = vadd.f32 0.0, %v5954
      %v5956 = vpop.f32.mrb[0].mxu0
      %v5957 = vpop.f32.mrb[0].mxu0
      %v5958 = vadd.f32 0.0, %v5957
      %v5959 = vpop.f32.mrb[0].mxu0
      %5960 = vmatprep.mubr.bf16.mxu0 0
      %5961 = vmatmul.mubr.bf16.gmra.mrb[0].mxu0 %v5872
      %v5962 = vpop.f32.mrb[0].mxu0
      %v5963 = vadd.f32 0.0, %v5962
      %v5964 = vpop.f32.mrb[0].mxu0
      %v5965 = vpop.f32.mrb[0].mxu0
      %v5966 = vadd.f32 0.0, %v5965
      %v5967 = vpop.f32.mrb[0].mxu0
      %5968 = vmatprep.mubr.bf16.mxu0 0
      %5969 = vmatmul.mubr.bf16.gmra.mrb[0].mxu0 %v5875
      %v5970 = vpop.f32.mrb[0].mxu0
      %v5971 = vadd.f32 0.0, %v5970
      %v5972 = vpop.f32.mrb[0].mxu0
      %v5973 = vpop.f32.mrb[0].mxu0
      %v5974 = vadd.f32 0.0, %v5973
      %v5975 = vpop.f32.mrb[0].mxu0
      %5976 = vdwg.mxu0
      %v5978 = vsel %vm1465, %v5209, 0
      %v5981 = vsel %vm1465, %v5210, 0
      %v5984 = vsel %vm1465, %v5211, 0
      %v5987 = vsel %vm1465, %v5212, 0
      %v5990 = vsel %vm1465, %v5213, 0
      %v5993 = vsel %vm1465, %v5214, 0
      %v5996 = vsel %vm1465, %v5215, 0
      %v5999 = vsel %vm1465, %v5216, 0
      %v6002 = vsel %vm1490, %v5231, 0
      %6004 = vmatprep.subr.bf16.mxu0 0
      %6005 = vmatpush1.bf16.msra.mxu0 %v6002
      %6006 = vmatprep.subr.bf16.mxu0 0
      %6007 = vmatpush1.bf16.msra.mxu0 0
      %6008 = vmatprep.subr.bf16.mxu0 0
      %6009 = vmatpush1.bf16.msra.mxu0 0
      %6010 = vmatprep.subr.bf16.mxu0 0
      %6011 = vmatpush1.bf16.msra.mxu0 0
      %6012 = vmatprep.subr.bf16.mxu0 0
      %6013 = vmatpush1.bf16.msra.mxu0 0
      %6014 = vmatprep.subr.bf16.mxu0 0
      %6015 = vmatpush1.bf16.msra.mxu0 0
      %6016 = vmatprep.subr.bf16.mxu0 0
      %6017 = vmatpush1.bf16.msra.mxu0 0
      %6018 = vmatprep.subr.bf16.mxu0 0
      %6019 = vmatpush1.bf16.msra.mxu0 0
      %6020 = vmatprep.subr.bf16.mxu0 0
      %6021 = vmatpush1.bf16.msra.mxu0 0
      %6022 = vmatprep.subr.bf16.mxu0 0
      %6023 = vmatpush1.bf16.msra.mxu0 0
      %6024 = vmatprep.subr.bf16.mxu0 0
      %6025 = vmatpush1.bf16.msra.mxu0 0
      %6026 = vmatprep.subr.bf16.mxu0 0
      %6027 = vmatpush1.bf16.msra.mxu0 0
      %6028 = vmatprep.subr.bf16.mxu0 0
      %6029 = vmatpush1.bf16.msra.mxu0 0
      %6030 = vmatprep.subr.bf16.mxu0 0
      %6031 = vmatpush1.bf16.msra.mxu0 0
      %6032 = vmatprep.subr.bf16.mxu0 0
      %6033 = vmatpush1.bf16.msra.mxu0 0
      %6034 = vmatprep.subr.bf16.mxu0 0
      %6035 = vmatpush1.bf16.msra.mxu0 0
      %6036 = vmatprep.mubr.bf16.mxu0 0
      %6037 = vmatmul.mubr.bf16.gmra.mrb[0].mxu0 %v5978
      %v6038 = vpop.f32.mrb[0].mxu0
      %v6039 = vadd.f32 0.0, %v6038
      %v6040 = vpop.f32.mrb[0].mxu0
      %v6041 = vpop.f32.mrb[0].mxu0
      %v6042 = vadd.f32 0.0, %v6041
      %v6043 = vpop.f32.mrb[0].mxu0
      %6044 = vmatprep.mubr.bf16.mxu0 0
      %6045 = vmatmul.mubr.bf16.gmra.mrb[0].mxu0 %v5981
      %v6046 = vpop.f32.mrb[0].mxu0
      %v6047 = vadd.f32 0.0, %v6046
      %v6048 = vpop.f32.mrb[0].mxu0
      %v6049 = vpop.f32.mrb[0].mxu0
      %v6050 = vadd.f32 0.0, %v6049
      %v6051 = vpop.f32.mrb[0].mxu0
      %6052 = vmatprep.mubr.bf16.mxu0 0
      %6053 = vmatmul.mubr.bf16.gmra.mrb[0].mxu0 %v5984
      %v6054 = vpop.f32.mrb[0].mxu0
      %v6055 = vadd.f32 0.0, %v6054
      %v6056 = vpop.f32.mrb[0].mxu0
      %v6057 = vpop.f32.mrb[0].mxu0
      %v6058 = vadd.f32 0.0, %v6057
      %v6059 = vpop.f32.mrb[0].mxu0
      %6060 = vmatprep.mubr.bf16.mxu0 0
      %6061 = vmatmul.mubr.bf16.gmra.mrb[0].mxu0 %v5987
      %v6062 = vpop.f32.mrb[0].mxu0
      %v6063 = vadd.f32 0.0, %v6062
      %v6064 = vpop.f32.mrb[0].mxu0
      %v6065 = vpop.f32.mrb[0].mxu0
      %v6066 = vadd.f32 0.0, %v6065
      %v6067 = vpop.f32.mrb[0].mxu0
      %6068 = vmatprep.mubr.bf16.mxu0 0
      %6069 = vmatmul.mubr.bf16.gmra.mrb[0].mxu0 %v5990
      %v6070 = vpop.f32.mrb[0].mxu0
      %v6071 = vadd.f32 0.0, %v6070
      %v6072 = vpop.f32.mrb[0].mxu0
      %v6073 = vpop.f32.mrb[0].mxu0
      %v6074 = vadd.f32 0.0, %v6073
      %v6075 = vpop.f32.mrb[0].mxu0
      %6076 = vmatprep.mubr.bf16.mxu0 0
      %6077 = vmatmul.mubr.bf16.gmra.mrb[0].mxu0 %v5993
      %v6078 = vpop.f32.mrb[0].mxu0
      %v6079 = vadd.f32 0.0, %v6078
      %v6080 = vpop.f32.mrb[0].mxu0
      %v6081 = vpop.f32.mrb[0].mxu0
      %v6082 = vadd.f32 0.0, %v6081
      %v6083 = vpop.f32.mrb[0].mxu0
      %6084 = vmatprep.mubr.bf16.mxu0 0
      %6085 = vmatmul.mubr.bf16.gmra.mrb[0].mxu0 %v5996
      %v6086 = vpop.f32.mrb[0].mxu0
      %v6087 = vadd.f32 0.0, %v6086
      %v6088 = vpop.f32.mrb[0].mxu0
      %v6089 = vpop.f32.mrb[0].mxu0
      %v6090 = vadd.f32 0.0, %v6089
      %v6091 = vpop.f32.mrb[0].mxu0
      %6092 = vmatprep.mubr.bf16.mxu0 0
      %6093 = vmatmul.mubr.bf16.gmra.mrb[0].mxu0 %v5999
      %v6094 = vpop.f32.mrb[0].mxu0
      %v6095 = vadd.f32 0.0, %v6094
      %v6096 = vpop.f32.mrb[0].mxu0
      %v6097 = vpop.f32.mrb[0].mxu0
      %v6098 = vadd.f32 0.0, %v6097
      %v6099 = vpop.f32.mrb[0].mxu0
      %6100 = vdwg.mxu0
      %v6102 = vsel %vm1465, %v5217, 0
      %v6105 = vsel %vm1465, %v5218, 0
      %v6108 = vsel %vm1465, %v5219, 0
      %v6111 = vsel %vm1465, %v5220, 0
      %v6114 = vsel %vm1465, %v5221, 0
      %v6117 = vsel %vm1465, %v5222, 0
      %v6120 = vsel %vm1465, %v5223, 0
      %v6123 = vsel %vm1465, %v5224, 0
      %v6126 = vsel %vm1490, %v5232, 0
      %6128 = vmatprep.subr.bf16.mxu0 0
      %6129 = vmatpush1.bf16.msra.mxu0 %v6126
      %6130 = vmatprep.subr.bf16.mxu0 0
      %6131 = vmatpush1.bf16.msra.mxu0 0
      %6132 = vmatprep.subr.bf16.mxu0 0
      %6133 = vmatpush1.bf16.msra.mxu0 0
      %6134 = vmatprep.subr.bf16.mxu0 0
      %6135 = vmatpush1.bf16.msra.mxu0 0
      %6136 = vmatprep.subr.bf16.mxu0 0
      %6137 = vmatpush1.bf16.msra.mxu0 0
      %6138 = vmatprep.subr.bf16.mxu0 0
      %6139 = vmatpush1.bf16.msra.mxu0 0
      %6140 = vmatprep.subr.bf16.mxu0 0
      %6141 = vmatpush1.bf16.msra.mxu0 0
      %6142 = vmatprep.subr.bf16.mxu0 0
      %6143 = vmatpush1.bf16.msra.mxu0 0
      %6144 = vmatprep.subr.bf16.mxu0 0
      %6145 = vmatpush1.bf16.msra.mxu0 0
      %6146 = vmatprep.subr.bf16.mxu0 0
      %6147 = vmatpush1.bf16.msra.mxu0 0
      %6148 = vmatprep.subr.bf16.mxu0 0
      %6149 = vmatpush1.bf16.msra.mxu0 0
      %6150 = vmatprep.subr.bf16.mxu0 0
      %6151 = vmatpush1.bf16.msra.mxu0 0
      %6152 = vmatprep.subr.bf16.mxu0 0
      %6153 = vmatpush1.bf16.msra.mxu0 0
      %6154 = vmatprep.subr.bf16.mxu0 0
      %6155 = vmatpush1.bf16.msra.mxu0 0
      %6156 = vmatprep.subr.bf16.mxu0 0
      %6157 = vmatpush1.bf16.msra.mxu0 0
      %6158 = vmatprep.subr.bf16.mxu0 0
      %6159 = vmatpush1.bf16.msra.mxu0 0
      %6160 = vmatprep.mubr.bf16.mxu0 0
      %6161 = vmatmul.mubr.bf16.gmra.mrb[0].mxu0 %v6102
      %v6162 = vpop.f32.mrb[0].mxu0
      %v6163 = vadd.f32 0.0, %v6162
      %v6164 = vpop.f32.mrb[0].mxu0
      %v6165 = vpop.f32.mrb[0].mxu0
      %v6166 = vadd.f32 0.0, %v6165
      %v6167 = vpop.f32.mrb[0].mxu0
      %6168 = vmatprep.mubr.bf16.mxu0 0
      %6169 = vmatmul.mubr.bf16.gmra.mrb[0].mxu0 %v6105
      %v6170 = vpop.f32.mrb[0].mxu0
      %v6171 = vadd.f32 0.0, %v6170
      %v6172 = vpop.f32.mrb[0].mxu0
      %v6173 = vpop.f32.mrb[0].mxu0
      %v6174 = vadd.f32 0.0, %v6173
      %v6175 = vpop.f32.mrb[0].mxu0
      %6176 = vmatprep.mubr.bf16.mxu0 0
      %6177 = vmatmul.mubr.bf16.gmra.mrb[0].mxu0 %v6108
      %v6178 = vpop.f32.mrb[0].mxu0
      %v6179 = vadd.f32 0.0, %v6178
      %v6180 = vpop.f32.mrb[0].mxu0
      %v6181 = vpop.f32.mrb[0].mxu0
      %v6182 = vadd.f32 0.0, %v6181
      %v6183 = vpop.f32.mrb[0].mxu0
      %6184 = vmatprep.mubr.bf16.mxu0 0
      %6185 = vmatmul.mubr.bf16.gmra.mrb[0].mxu0 %v6111
      %v6186 = vpop.f32.mrb[0].mxu0
      %v6187 = vadd.f32 0.0, %v6186
      %v6188 = vpop.f32.mrb[0].mxu0
      %v6189 = vpop.f32.mrb[0].mxu0
      %v6190 = vadd.f32 0.0, %v6189
      %v6191 = vpop.f32.mrb[0].mxu0
      %6192 = vmatprep.mubr.bf16.mxu0 0
      %6193 = vmatmul.mubr.bf16.gmra.mrb[0].mxu0 %v6114
      %v6194 = vpop.f32.mrb[0].mxu0
      %v6195 = vadd.f32 0.0, %v6194
      %v6196 = vpop.f32.mrb[0].mxu0
      %v6197 = vpop.f32.mrb[0].mxu0
      %v6198 = vadd.f32 0.0, %v6197
      %v6199 = vpop.f32.mrb[0].mxu0
      %6200 = vmatprep.mubr.bf16.mxu0 0
      %6201 = vmatmul.mubr.bf16.gmra.mrb[0].mxu0 %v6117
      %v6202 = vpop.f32.mrb[0].mxu0
      %v6203 = vadd.f32 0.0, %v6202
      %v6204 = vpop.f32.mrb[0].mxu0
      %v6205 = vpop.f32.mrb[0].mxu0
      %v6206 = vadd.f32 0.0, %v6205
      %v6207 = vpop.f32.mrb[0].mxu0
      %6208 = vmatprep.mubr.bf16.mxu0 0
      %6209 = vmatmul.mubr.bf16.gmra.mrb[0].mxu0 %v6120
      %v6210 = vpop.f32.mrb[0].mxu0
      %v6211 = vadd.f32 0.0, %v6210
      %v6212 = vpop.f32.mrb[0].mxu0
      %v6213 = vpop.f32.mrb[0].mxu0
      %v6214 = vadd.f32 0.0, %v6213
      %v6215 = vpop.f32.mrb[0].mxu0
      %6216 = vmatprep.mubr.bf16.mxu0 0
      %6217 = vmatmul.mubr.bf16.gmra.mrb[0].mxu0 %v6123
      %v6218 = vpop.f32.mrb[0].mxu0
      %v6219 = vadd.f32 0.0, %v6218
      %v6220 = vpop.f32.mrb[0].mxu0
      %v6221 = vpop.f32.mrb[0].mxu0
      %v6222 = vadd.f32 0.0, %v6221
      %v6223 = vpop.f32.mrb[0].mxu0
      %6224 = vdwg.mxu0
      %6225 = vmax.xlane.f32.xlu0 %v5295
      %v6226 = vpop.xlane.xlu0 %6225
      %6227 = vmax.xlane.f32.xlu0 %v5298
      %v6228 = vpop.xlane.xlu0 %6227
      %6229 = vmax.xlane.f32.xlu0 %v5303
      %v6230 = vpop.xlane.xlu0 %6229
      %6231 = vmax.xlane.f32.xlu0 %v5306
      %v6232 = vpop.xlane.xlu0 %6231
      %6233 = vmax.xlane.f32.xlu0 %v5311
      %v6234 = vpop.xlane.xlu0 %6233
      %6235 = vmax.xlane.f32.xlu0 %v5314
      %v6236 = vpop.xlane.xlu0 %6235
      %6237 = vmax.xlane.f32.xlu0 %v5319
      %v6238 = vpop.xlane.xlu0 %6237
      %6239 = vmax.xlane.f32.xlu0 %v5322
      %v6240 = vpop.xlane.xlu0 %6239
      %6241 = vmax.xlane.f32.xlu0 %v5327
      %v6242 = vpop.xlane.xlu0 %6241
      %6243 = vmax.xlane.f32.xlu0 %v5330
      %v6244 = vpop.xlane.xlu0 %6243
      %6245 = vmax.xlane.f32.xlu0 %v5335
      %v6246 = vpop.xlane.xlu0 %6245
      %6247 = vmax.xlane.f32.xlu0 %v5338
      %v6248 = vpop.xlane.xlu0 %6247
      %6249 = vmax.xlane.f32.xlu0 %v5343
      %v6250 = vpop.xlane.xlu0 %6249
      %6251 = vmax.xlane.f32.xlu0 %v5346
      %v6252 = vpop.xlane.xlu0 %6251
      %6253 = vmax.xlane.f32.xlu0 %v5351
      %v6254 = vpop.xlane.xlu0 %6253
      %6255 = vmax.xlane.f32.xlu0 %v5354
      %v6256 = vpop.xlane.xlu0 %6255
      %6257 = vmax.xlane.f32.xlu0 %v5419
      %v6258 = vpop.xlane.xlu0 %6257
      %6259 = vmax.xlane.f32.xlu0 %v5422
      %v6260 = vpop.xlane.xlu0 %6259
      %6261 = vmax.xlane.f32.xlu0 %v5427
      %v6262 = vpop.xlane.xlu0 %6261
      %6263 = vmax.xlane.f32.xlu0 %v5430
      %v6264 = vpop.xlane.xlu0 %6263
      %6265 = vmax.xlane.f32.xlu0 %v5435
      %v6266 = vpop.xlane.xlu0 %6265
      %6267 = vmax.xlane.f32.xlu0 %v5438
      %v6268 = vpop.xlane.xlu0 %6267
      %6269 = vmax.xlane.f32.xlu0 %v5443
      %v6270 = vpop.xlane.xlu0 %6269
      %6271 = vmax.xlane.f32.xlu0 %v5446
      %v6272 = vpop.xlane.xlu0 %6271
      %6273 = vmax.xlane.f32.xlu0 %v5451
      %v6274 = vpop.xlane.xlu0 %6273
      %6275 = vmax.xlane.f32.xlu0 %v5454
      %v6276 = vpop.xlane.xlu0 %6275
      %6277 = vmax.xlane.f32.xlu0 %v5459
      %v6278 = vpop.xlane.xlu0 %6277
      %6279 = vmax.xlane.f32.xlu0 %v5462
      %v6280 = vpop.xlane.xlu0 %6279
      %6281 = vmax.xlane.f32.xlu0 %v5467
      %v6282 = vpop.xlane.xlu0 %6281
      %6283 = vmax.xlane.f32.xlu0 %v5470
      %v6284 = vpop.xlane.xlu0 %6283
      %6285 = vmax.xlane.f32.xlu0 %v5475
      %v6286 = vpop.xlane.xlu0 %6285
      %6287 = vmax.xlane.f32.xlu0 %v5478
      %v6288 = vpop.xlane.xlu0 %6287
      %6289 = vmax.xlane.f32.xlu0 %v5543
      %v6290 = vpop.xlane.xlu0 %6289
      %6291 = vmax.xlane.f32.xlu0 %v5546
      %v6292 = vpop.xlane.xlu0 %6291
      %6293 = vmax.xlane.f32.xlu0 %v5551
      %v6294 = vpop.xlane.xlu0 %6293
      %6295 = vmax.xlane.f32.xlu0 %v5554
      %v6296 = vpop.xlane.xlu0 %6295
      %6297 = vmax.xlane.f32.xlu0 %v5559
      %v6298 = vpop.xlane.xlu0 %6297
      %6299 = vmax.xlane.f32.xlu0 %v5562
      %v6300 = vpop.xlane.xlu0 %6299
      %6301 = vmax.xlane.f32.xlu0 %v5567
      %v6302 = vpop.xlane.xlu0 %6301
      %6303 = vmax.xlane.f32.xlu0 %v5570
      %v6304 = vpop.xlane.xlu0 %6303
      %6305 = vmax.xlane.f32.xlu0 %v5575
      %v6306 = vpop.xlane.xlu0 %6305
      %6307 = vmax.xlane.f32.xlu0 %v5578
      %v6308 = vpop.xlane.xlu0 %6307
      %6309 = vmax.xlane.f32.xlu0 %v5583
      %v6310 = vpop.xlane.xlu0 %6309
      %6311 = vmax.xlane.f32.xlu0 %v5586
      %v6312 = vpop.xlane.xlu0 %6311
      %6313 = vmax.xlane.f32.xlu0 %v5591
      %v6314 = vpop.xlane.xlu0 %6313
      %6315 = vmax.xlane.f32.xlu0 %v5594
      %v6316 = vpop.xlane.xlu0 %6315
      %6317 = vmax.xlane.f32.xlu0 %v5599
      %v6318 = vpop.xlane.xlu0 %6317
      %6319 = vmax.xlane.f32.xlu0 %v5602
      %v6320 = vpop.xlane.xlu0 %6319
      %6321 = vmax.xlane.f32.xlu0 %v5667
      %v6322 = vpop.xlane.xlu0 %6321
      %6323 = vmax.xlane.f32.xlu0 %v5670
      %v6324 = vpop.xlane.xlu0 %6323
      %6325 = vmax.xlane.f32.xlu0 %v5675
      %v6326 = vpop.xlane.xlu0 %6325
      %6327 = vmax.xlane.f32.xlu0 %v5678
      %v6328 = vpop.xlane.xlu0 %6327
      %6329 = vmax.xlane.f32.xlu0 %v5683
      %v6330 = vpop.xlane.xlu0 %6329
      %6331 = vmax.xlane.f32.xlu0 %v5686
      %v6332 = vpop.xlane.xlu0 %6331
      %6333 = vmax.xlane.f32.xlu0 %v5691
      %v6334 = vpop.xlane.xlu0 %6333
      %6335 = vmax.xlane.f32.xlu0 %v5694
      %v6336 = vpop.xlane.xlu0 %6335
      %6337 = vmax.xlane.f32.xlu0 %v5699
      %v6338 = vpop.xlane.xlu0 %6337
      %6339 = vmax.xlane.f32.xlu0 %v5702
      %v6340 = vpop.xlane.xlu0 %6339
      %6341 = vmax.xlane.f32.xlu0 %v5707
      %v6342 = vpop.xlane.xlu0 %6341
      %6343 = vmax.xlane.f32.xlu0 %v5710
      %v6344 = vpop.xlane.xlu0 %6343
      %6345 = vmax.xlane.f32.xlu0 %v5715
      %v6346 = vpop.xlane.xlu0 %6345
      %6347 = vmax.xlane.f32.xlu0 %v5718
      %v6348 = vpop.xlane.xlu0 %6347
      %6349 = vmax.xlane.f32.xlu0 %v5723
      %v6350 = vpop.xlane.xlu0 %6349
      %6351 = vmax.xlane.f32.xlu0 %v5726
      %v6352 = vpop.xlane.xlu0 %6351
      %6353 = vmax.xlane.f32.xlu0 %v5791
      %v6354 = vpop.xlane.xlu0 %6353
      %6355 = vmax.xlane.f32.xlu0 %v5794
      %v6356 = vpop.xlane.xlu0 %6355
      %6357 = vmax.xlane.f32.xlu0 %v5799
      %v6358 = vpop.xlane.xlu0 %6357
      %6359 = vmax.xlane.f32.xlu0 %v5802
      %v6360 = vpop.xlane.xlu0 %6359
      %6361 = vmax.xlane.f32.xlu0 %v5807
      %v6362 = vpop.xlane.xlu0 %6361
      %6363 = vmax.xlane.f32.xlu0 %v5810
      %v6364 = vpop.xlane.xlu0 %6363
      %6365 = vmax.xlane.f32.xlu0 %v5815
      %v6366 = vpop.xlane.xlu0 %6365
      %6367 = vmax.xlane.f32.xlu0 %v5818
      %v6368 = vpop.xlane.xlu0 %6367
      %6369 = vmax.xlane.f32.xlu0 %v5823
      %v6370 = vpop.xlane.xlu0 %6369
      %6371 = vmax.xlane.f32.xlu0 %v5826
      %v6372 = vpop.xlane.xlu0 %6371
      %6373 = vmax.xlane.f32.xlu0 %v5831
      %v6374 = vpop.xlane.xlu0 %6373
      %6375 = vmax.xlane.f32.xlu0 %v5834
      %v6376 = vpop.xlane.xlu0 %6375
      %6377 = vmax.xlane.f32.xlu0 %v5839
      %v6378 = vpop.xlane.xlu0 %6377
      %6379 = vmax.xlane.f32.xlu0 %v5842
      %v6380 = vpop.xlane.xlu0 %6379
      %6381 = vmax.xlane.f32.xlu0 %v5847
      %v6382 = vpop.xlane.xlu0 %6381
      %6383 = vmax.xlane.f32.xlu0 %v5850
      %v6384 = vpop.xlane.xlu0 %6383
      %6385 = vmax.xlane.f32.xlu0 %v5915
      %v6386 = vpop.xlane.xlu0 %6385
      %6387 = vmax.xlane.f32.xlu0 %v5918
      %v6388 = vpop.xlane.xlu0 %6387
      %6389 = vmax.xlane.f32.xlu0 %v5923
      %v6390 = vpop.xlane.xlu0 %6389
      %6391 = vmax.xlane.f32.xlu0 %v5926
      %v6392 = vpop.xlane.xlu0 %6391
      %6393 = vmax.xlane.f32.xlu0 %v5931
      %v6394 = vpop.xlane.xlu0 %6393
      %6395 = vmax.xlane.f32.xlu0 %v5934
      %v6396 = vpop.xlane.xlu0 %6395
      %6397 = vmax.xlane.f32.xlu0 %v5939
      %v6398 = vpop.xlane.xlu0 %6397
      %6399 = vmax.xlane.f32.xlu0 %v5942
      %v6400 = vpop.xlane.xlu0 %6399
      %6401 = vmax.xlane.f32.xlu0 %v5947
      %v6402 = vpop.xlane.xlu0 %6401
      %6403 = vmax.xlane.f32.xlu0 %v5950
      %v6404 = vpop.xlane.xlu0 %6403
      %6405 = vmax.xlane.f32.xlu0 %v5955
      %v6406 = vpop.xlane.xlu0 %6405
      %6407 = vmax.xlane.f32.xlu0 %v5958
      %v6408 = vpop.xlane.xlu0 %6407
      %6409 = vmax.xlane.f32.xlu0 %v5963
      %v6410 = vpop.xlane.xlu0 %6409
      %6411 = vmax.xlane.f32.xlu0 %v5966
      %v6412 = vpop.xlane.xlu0 %6411
      %6413 = vmax.xlane.f32.xlu0 %v5971
      %v6414 = vpop.xlane.xlu0 %6413
      %6415 = vmax.xlane.f32.xlu0 %v5974
      %v6416 = vpop.xlane.xlu0 %6415
      %6417 = vmax.xlane.f32.xlu0 %v6039
      %v6418 = vpop.xlane.xlu0 %6417
      %6419 = vmax.xlane.f32.xlu0 %v6042
      %v6420 = vpop.xlane.xlu0 %6419
      %6421 = vmax.xlane.f32.xlu0 %v6047
      %v6422 = vpop.xlane.xlu0 %6421
      %6423 = vmax.xlane.f32.xlu0 %v6050
      %v6424 = vpop.xlane.xlu0 %6423
      %6425 = vmax.xlane.f32.xlu0 %v6055
      %v6426 = vpop.xlane.xlu0 %6425
      %6427 = vmax.xlane.f32.xlu0 %v6058
      %v6428 = vpop.xlane.xlu0 %6427
      %6429 = vmax.xlane.f32.xlu0 %v6063
      %v6430 = vpop.xlane.xlu0 %6429
      %6431 = vmax.xlane.f32.xlu0 %v6066
      %v6432 = vpop.xlane.xlu0 %6431
      %6433 = vmax.xlane.f32.xlu0 %v6071
      %v6434 = vpop.xlane.xlu0 %6433
      %6435 = vmax.xlane.f32.xlu0 %v6074
      %v6436 = vpop.xlane.xlu0 %6435
      %6437 = vmax.xlane.f32.xlu0 %v6079
      %v6438 = vpop.xlane.xlu0 %6437
      %6439 = vmax.xlane.f32.xlu0 %v6082
      %v6440 = vpop.xlane.xlu0 %6439
      %6441 = vmax.xlane.f32.xlu0 %v6087
      %v6442 = vpop.xlane.xlu0 %6441
      %6443 = vmax.xlane.f32.xlu0 %v6090
      %v6444 = vpop.xlane.xlu0 %6443
      %6445 = vmax.xlane.f32.xlu0 %v6095
      %v6446 = vpop.xlane.xlu0 %6445
      %6447 = vmax.xlane.f32.xlu0 %v6098
      %v6448 = vpop.xlane.xlu0 %6447
      %6449 = vmax.xlane.f32.xlu0 %v6163
      %v6450 = vpop.xlane.xlu0 %6449
      %6451 = vmax.xlane.f32.xlu0 %v6166
      %v6452 = vpop.xlane.xlu0 %6451
      %6453 = vmax.xlane.f32.xlu0 %v6171
      %v6454 = vpop.xlane.xlu0 %6453
      %6455 = vmax.xlane.f32.xlu0 %v6174
      %v6456 = vpop.xlane.xlu0 %6455
      %6457 = vmax.xlane.f32.xlu0 %v6179
      %v6458 = vpop.xlane.xlu0 %6457
      %6459 = vmax.xlane.f32.xlu0 %v6182
      %v6460 = vpop.xlane.xlu0 %6459
      %6461 = vmax.xlane.f32.xlu0 %v6187
      %v6462 = vpop.xlane.xlu0 %6461
      %6463 = vmax.xlane.f32.xlu0 %v6190
      %v6464 = vpop.xlane.xlu0 %6463
      %6465 = vmax.xlane.f32.xlu0 %v6195
      %v6466 = vpop.xlane.xlu0 %6465
      %6467 = vmax.xlane.f32.xlu0 %v6198
      %v6468 = vpop.xlane.xlu0 %6467
      %6469 = vmax.xlane.f32.xlu0 %v6203
      %v6470 = vpop.xlane.xlu0 %6469
      %6471 = vmax.xlane.f32.xlu0 %v6206
      %v6472 = vpop.xlane.xlu0 %6471
      %6473 = vmax.xlane.f32.xlu0 %v6211
      %v6474 = vpop.xlane.xlu0 %6473
      %6475 = vmax.xlane.f32.xlu0 %v6214
      %v6476 = vpop.xlane.xlu0 %6475
      %6477 = vmax.xlane.f32.xlu0 %v6219
      %v6478 = vpop.xlane.xlu0 %6477
      %6479 = vmax.xlane.f32.xlu0 %v6222
      %v6480 = vpop.xlane.xlu0 %6479
      %v6481 = vsub.f32 %v5295, %v6226
      %v6482 = vsub.f32 %v5298, %v6228
      %v6483 = vsub.f32 %v5303, %v6230
      %v6484 = vsub.f32 %v5306, %v6232
      %v6485 = vsub.f32 %v5311, %v6234
      %v6486 = vsub.f32 %v5314, %v6236
      %v6487 = vsub.f32 %v5319, %v6238
      %v6488 = vsub.f32 %v5322, %v6240
      %v6489 = vsub.f32 %v5327, %v6242
      %v6490 = vsub.f32 %v5330, %v6244
      %v6491 = vsub.f32 %v5335, %v6246
      %v6492 = vsub.f32 %v5338, %v6248
      %v6493 = vsub.f32 %v5343, %v6250
      %v6494 = vsub.f32 %v5346, %v6252
      %v6495 = vsub.f32 %v5351, %v6254
      %v6496 = vsub.f32 %v5354, %v6256
      %v6497 = vsub.f32 %v5419, %v6258
      %v6498 = vsub.f32 %v5422, %v6260
      %v6499 = vsub.f32 %v5427, %v6262
      %v6500 = vsub.f32 %v5430, %v6264
      %v6501 = vsub.f32 %v5435, %v6266
      %v6502 = vsub.f32 %v5438, %v6268
      %v6503 = vsub.f32 %v5443, %v6270
      %v6504 = vsub.f32 %v5446, %v6272
      %v6505 = vsub.f32 %v5451, %v6274
      %v6506 = vsub.f32 %v5454, %v6276
      %v6507 = vsub.f32 %v5459, %v6278
      %v6508 = vsub.f32 %v5462, %v6280
      %v6509 = vsub.f32 %v5467, %v6282
      %v6510 = vsub.f32 %v5470, %v6284
      %v6511 = vsub.f32 %v5475, %v6286
      %v6512 = vsub.f32 %v5478, %v6288
      %v6513 = vsub.f32 %v5543, %v6290
      %v6514 = vsub.f32 %v5546, %v6292
      %v6515 = vsub.f32 %v5551, %v6294
      %v6516 = vsub.f32 %v5554, %v6296
      %v6517 = vsub.f32 %v5559, %v6298
      %v6518 = vsub.f32 %v5562, %v6300
      %v6519 = vsub.f32 %v5567, %v6302
      %v6520 = vsub.f32 %v5570, %v6304
      %v6521 = vsub.f32 %v5575, %v6306
      %v6522 = vsub.f32 %v5578, %v6308
      %v6523 = vsub.f32 %v5583, %v6310
      %v6524 = vsub.f32 %v5586, %v6312
      %v6525 = vsub.f32 %v5591, %v6314
      %v6526 = vsub.f32 %v5594, %v6316
      %v6527 = vsub.f32 %v5599, %v6318
      %v6528 = vsub.f32 %v5602, %v6320
      %v6529 = vsub.f32 %v5667, %v6322
      %v6530 = vsub.f32 %v5670, %v6324
      %v6531 = vsub.f32 %v5675, %v6326
      %v6532 = vsub.f32 %v5678, %v6328
      %v6533 = vsub.f32 %v5683, %v6330
      %v6534 = vsub.f32 %v5686, %v6332
      %v6535 = vsub.f32 %v5691, %v6334
      %v6536 = vsub.f32 %v5694, %v6336
      %v6537 = vsub.f32 %v5699, %v6338
      %v6538 = vsub.f32 %v5702, %v6340
      %v6539 = vsub.f32 %v5707, %v6342
      %v6540 = vsub.f32 %v5710, %v6344
      %v6541 = vsub.f32 %v5715, %v6346
      %v6542 = vsub.f32 %v5718, %v6348
      %v6543 = vsub.f32 %v5723, %v6350
      %v6544 = vsub.f32 %v5726, %v6352
      %v6545 = vsub.f32 %v5791, %v6354
      %v6546 = vsub.f32 %v5794, %v6356
      %v6547 = vsub.f32 %v5799, %v6358
      %v6548 = vsub.f32 %v5802, %v6360
      %v6549 = vsub.f32 %v5807, %v6362
      %v6550 = vsub.f32 %v5810, %v6364
      %v6551 = vsub.f32 %v5815, %v6366
      %v6552 = vsub.f32 %v5818, %v6368
      %v6553 = vsub.f32 %v5823, %v6370
      %v6554 = vsub.f32 %v5826, %v6372
      %v6555 = vsub.f32 %v5831, %v6374
      %v6556 = vsub.f32 %v5834, %v6376
      %v6557 = vsub.f32 %v5839, %v6378
      %v6558 = vsub.f32 %v5842, %v6380
      %v6559 = vsub.f32 %v5847, %v6382
      %v6560 = vsub.f32 %v5850, %v6384
      %v6561 = vsub.f32 %v5915, %v6386
      %v6562 = vsub.f32 %v5918, %v6388
      %v6563 = vsub.f32 %v5923, %v6390
      %v6564 = vsub.f32 %v5926, %v6392
      %v6565 = vsub.f32 %v5931, %v6394
      %v6566 = vsub.f32 %v5934, %v6396
      %v6567 = vsub.f32 %v5939, %v6398
      %v6568 = vsub.f32 %v5942, %v6400
      %v6569 = vsub.f32 %v5947, %v6402
      %v6570 = vsub.f32 %v5950, %v6404
      %v6571 = vsub.f32 %v5955, %v6406
      %v6572 = vsub.f32 %v5958, %v6408
      %v6573 = vsub.f32 %v5963, %v6410
      %v6574 = vsub.f32 %v5966, %v6412
      %v6575 = vsub.f32 %v5971, %v6414
      %v6576 = vsub.f32 %v5974, %v6416
      %v6577 = vsub.f32 %v6039, %v6418
      %v6578 = vsub.f32 %v6042, %v6420
      %v6579 = vsub.f32 %v6047, %v6422
      %v6580 = vsub.f32 %v6050, %v6424
      %v6581 = vsub.f32 %v6055, %v6426
      %v6582 = vsub.f32 %v6058, %v6428
      %v6583 = vsub.f32 %v6063, %v6430
      %v6584 = vsub.f32 %v6066, %v6432
      %v6585 = vsub.f32 %v6071, %v6434
      %v6586 = vsub.f32 %v6074, %v6436
      %v6587 = vsub.f32 %v6079, %v6438
      %v6588 = vsub.f32 %v6082, %v6440
      %v6589 = vsub.f32 %v6087, %v6442
      %v6590 = vsub.f32 %v6090, %v6444
      %v6591 = vsub.f32 %v6095, %v6446
      %v6592 = vsub.f32 %v6098, %v6448
      %v6593 = vsub.f32 %v6163, %v6450
      %v6594 = vsub.f32 %v6166, %v6452
      %v6595 = vsub.f32 %v6171, %v6454
      %v6596 = vsub.f32 %v6174, %v6456
      %v6597 = vsub.f32 %v6179, %v6458
      %v6598 = vsub.f32 %v6182, %v6460
      %v6599 = vsub.f32 %v6187, %v6462
      %v6600 = vsub.f32 %v6190, %v6464
      %v6601 = vsub.f32 %v6195, %v6466
      %v6602 = vsub.f32 %v6198, %v6468
      %v6603 = vsub.f32 %v6203, %v6470
      %v6604 = vsub.f32 %v6206, %v6472
      %v6605 = vsub.f32 %v6211, %v6474
      %v6606 = vsub.f32 %v6214, %v6476
      %v6607 = vsub.f32 %v6219, %v6478
      %v6608 = vsub.f32 %v6222, %v6480
      %v6609 = vmul.f32 %v6481, 1.442695
      %v6610 = vpow.pop %v6609
      %v6611 = vmul.f32 %v6482, 1.442695
      %v6612 = vpow.pop %v6611
      %v6613 = vmul.f32 %v6483, 1.442695
      %v6614 = vpow.pop %v6613
      %v6615 = vmul.f32 %v6484, 1.442695
      %v6616 = vpow.pop %v6615
      %v6617 = vmul.f32 %v6485, 1.442695
      %v6618 = vpow.pop %v6617
      %v6619 = vmul.f32 %v6486, 1.442695
      %v6620 = vpow.pop %v6619
      %v6621 = vmul.f32 %v6487, 1.442695
      %v6622 = vpow.pop %v6621
      %v6623 = vmul.f32 %v6488, 1.442695
      %v6624 = vpow.pop %v6623
      %v6625 = vmul.f32 %v6489, 1.442695
      %v6626 = vpow.pop %v6625
      %v6627 = vmul.f32 %v6490, 1.442695
      %v6628 = vpow.pop %v6627
      %v6629 = vmul.f32 %v6491, 1.442695
      %v6630 = vpow.pop %v6629
      %v6631 = vmul.f32 %v6492, 1.442695
      %v6632 = vpow.pop %v6631
      %v6633 = vmul.f32 %v6493, 1.442695
      %v6634 = vpow.pop %v6633
      %v6635 = vmul.f32 %v6494, 1.442695
      %v6636 = vpow.pop %v6635
      %v6637 = vmul.f32 %v6495, 1.442695
      %v6638 = vpow.pop %v6637
      %v6639 = vmul.f32 %v6496, 1.442695
      %v6640 = vpow.pop %v6639
      %v6641 = vmul.f32 %v6497, 1.442695
      %v6642 = vpow.pop %v6641
      %v6643 = vmul.f32 %v6498, 1.442695
      %v6644 = vpow.pop %v6643
      %v6645 = vmul.f32 %v6499, 1.442695
      %v6646 = vpow.pop %v6645
      %v6647 = vmul.f32 %v6500, 1.442695
      %v6648 = vpow.pop %v6647
      %v6649 = vmul.f32 %v6501, 1.442695
      %v6650 = vpow.pop %v6649
      %v6651 = vmul.f32 %v6502, 1.442695
      %v6652 = vpow.pop %v6651
      %v6653 = vmul.f32 %v6503, 1.442695
      %v6654 = vpow.pop %v6653
      %v6655 = vmul.f32 %v6504, 1.442695
      %v6656 = vpow.pop %v6655
      %v6657 = vmul.f32 %v6505, 1.442695
      %v6658 = vpow.pop %v6657
      %v6659 = vmul.f32 %v6506, 1.442695
      %v6660 = vpow.pop %v6659
      %v6661 = vmul.f32 %v6507, 1.442695
      %v6662 = vpow.pop %v6661
      %v6663 = vmul.f32 %v6508, 1.442695
      %v6664 = vpow.pop %v6663
      %v6665 = vmul.f32 %v6509, 1.442695
      %v6666 = vpow.pop %v6665
      %v6667 = vmul.f32 %v6510, 1.442695
      %v6668 = vpow.pop %v6667
      %v6669 = vmul.f32 %v6511, 1.442695
      %v6670 = vpow.pop %v6669
      %v6671 = vmul.f32 %v6512, 1.442695
      %v6672 = vpow.pop %v6671
      %v6673 = vmul.f32 %v6513, 1.442695
      %v6674 = vpow.pop %v6673
      %v6675 = vmul.f32 %v6514, 1.442695
      %v6676 = vpow.pop %v6675
      %v6677 = vmul.f32 %v6515, 1.442695
      %v6678 = vpow.pop %v6677
      %v6679 = vmul.f32 %v6516, 1.442695
      %v6680 = vpow.pop %v6679
      %v6681 = vmul.f32 %v6517, 1.442695
      %v6682 = vpow.pop %v6681
      %v6683 = vmul.f32 %v6518, 1.442695
      %v6684 = vpow.pop %v6683
      %v6685 = vmul.f32 %v6519, 1.442695
      %v6686 = vpow.pop %v6685
      %v6687 = vmul.f32 %v6520, 1.442695
      %v6688 = vpow.pop %v6687
      %v6689 = vmul.f32 %v6521, 1.442695
      %v6690 = vpow.pop %v6689
      %v6691 = vmul.f32 %v6522, 1.442695
      %v6692 = vpow.pop %v6691
      %v6693 = vmul.f32 %v6523, 1.442695
      %v6694 = vpow.pop %v6693
      %v6695 = vmul.f32 %v6524, 1.442695
      %v6696 = vpow.pop %v6695
      %v6697 = vmul.f32 %v6525, 1.442695
      %v6698 = vpow.pop %v6697
      %v6699 = vmul.f32 %v6526, 1.442695
      %v6700 = vpow.pop %v6699
      %v6701 = vmul.f32 %v6527, 1.442695
      %v6702 = vpow.pop %v6701
      %v6703 = vmul.f32 %v6528, 1.442695
      %v6704 = vpow.pop %v6703
      %v6705 = vmul.f32 %v6529, 1.442695
      %v6706 = vpow.pop %v6705
      %v6707 = vmul.f32 %v6530, 1.442695
      %v6708 = vpow.pop %v6707
      %v6709 = vmul.f32 %v6531, 1.442695
      %v6710 = vpow.pop %v6709
      %v6711 = vmul.f32 %v6532, 1.442695
      %v6712 = vpow.pop %v6711
      %v6713 = vmul.f32 %v6533, 1.442695
      %v6714 = vpow.pop %v6713
      %v6715 = vmul.f32 %v6534, 1.442695
      %v6716 = vpow.pop %v6715
      %v6717 = vmul.f32 %v6535, 1.442695
      %v6718 = vpow.pop %v6717
      %v6719 = vmul.f32 %v6536, 1.442695
      %v6720 = vpow.pop %v6719
      %v6721 = vmul.f32 %v6537, 1.442695
      %v6722 = vpow.pop %v6721
      %v6723 = vmul.f32 %v6538, 1.442695
      %v6724 = vpow.pop %v6723
      %v6725 = vmul.f32 %v6539, 1.442695
      %v6726 = vpow.pop %v6725
      %v6727 = vmul.f32 %v6540, 1.442695
      %v6728 = vpow.pop %v6727
      %v6729 = vmul.f32 %v6541, 1.442695
      %v6730 = vpow.pop %v6729
      %v6731 = vmul.f32 %v6542, 1.442695
      %v6732 = vpow.pop %v6731
      %v6733 = vmul.f32 %v6543, 1.442695
      %v6734 = vpow.pop %v6733
      %v6735 = vmul.f32 %v6544, 1.442695
      %v6736 = vpow.pop %v6735
      %v6737 = vmul.f32 %v6545, 1.442695
      %v6738 = vpow.pop %v6737
      %v6739 = vmul.f32 %v6546, 1.442695
      %v6740 = vpow.pop %v6739
      %v6741 = vmul.f32 %v6547, 1.442695
      %v6742 = vpow.pop %v6741
      %v6743 = vmul.f32 %v6548, 1.442695
      %v6744 = vpow.pop %v6743
      %v6745 = vmul.f32 %v6549, 1.442695
      %v6746 = vpow.pop %v6745
      %v6747 = vmul.f32 %v6550, 1.442695
      %v6748 = vpow.pop %v6747
      %v6749 = vmul.f32 %v6551, 1.442695
      %v6750 = vpow.pop %v6749
      %v6751 = vmul.f32 %v6552, 1.442695
      %v6752 = vpow.pop %v6751
      %v6753 = vmul.f32 %v6553, 1.442695
      %v6754 = vpow.pop %v6753
      %v6755 = vmul.f32 %v6554, 1.442695
      %v6756 = vpow.pop %v6755
      %v6757 = vmul.f32 %v6555, 1.442695
      %v6758 = vpow.pop %v6757
      %v6759 = vmul.f32 %v6556, 1.442695
      %v6760 = vpow.pop %v6759
      %v6761 = vmul.f32 %v6557, 1.442695
      %v6762 = vpow.pop %v6761
      %v6763 = vmul.f32 %v6558, 1.442695
      %v6764 = vpow.pop %v6763
      %v6765 = vmul.f32 %v6559, 1.442695
      %v6766 = vpow.pop %v6765
      %v6767 = vmul.f32 %v6560, 1.442695
      %v6768 = vpow.pop %v6767
      %v6769 = vmul.f32 %v6561, 1.442695
      %v6770 = vpow.pop %v6769
      %v6771 = vmul.f32 %v6562, 1.442695
      %v6772 = vpow.pop %v6771
      %v6773 = vmul.f32 %v6563, 1.442695
      %v6774 = vpow.pop %v6773
      %v6775 = vmul.f32 %v6564, 1.442695
      %v6776 = vpow.pop %v6775
      %v6777 = vmul.f32 %v6565, 1.442695
      %v6778 = vpow.pop %v6777
      %v6779 = vmul.f32 %v6566, 1.442695
      %v6780 = vpow.pop %v6779
      %v6781 = vmul.f32 %v6567, 1.442695
      %v6782 = vpow.pop %v6781
      %v6783 = vmul.f32 %v6568, 1.442695
      %v6784 = vpow.pop %v6783
      %v6785 = vmul.f32 %v6569, 1.442695
      %v6786 = vpow.pop %v6785
      %v6787 = vmul.f32 %v6570, 1.442695
      %v6788 = vpow.pop %v6787
      %v6789 = vmul.f32 %v6571, 1.442695
      %v6790 = vpow.pop %v6789
      %v6791 = vmul.f32 %v6572, 1.442695
      %v6792 = vpow.pop %v6791
      %v6793 = vmul.f32 %v6573, 1.442695
      %v6794 = vpow.pop %v6793
      %v6795 = vmul.f32 %v6574, 1.442695
      %v6796 = vpow.pop %v6795
      %v6797 = vmul.f32 %v6575, 1.442695
      %v6798 = vpow.pop %v6797
      %v6799 = vmul.f32 %v6576, 1.442695
      %v6800 = vpow.pop %v6799
      %v6801 = vmul.f32 %v6577, 1.442695
      %v6802 = vpow.pop %v6801
      %v6803 = vmul.f32 %v6578, 1.442695
      %v6804 = vpow.pop %v6803
      %v6805 = vmul.f32 %v6579, 1.442695
      %v6806 = vpow.pop %v6805
      %v6807 = vmul.f32 %v6580, 1.442695
      %v6808 = vpow.pop %v6807
      %v6809 = vmul.f32 %v6581, 1.442695
      %v6810 = vpow.pop %v6809
      %v6811 = vmul.f32 %v6582, 1.442695
      %v6812 = vpow.pop %v6811
      %v6813 = vmul.f32 %v6583, 1.442695
      %v6814 = vpow.pop %v6813
      %v6815 = vmul.f32 %v6584, 1.442695
      %v6816 = vpow.pop %v6815
      %v6817 = vmul.f32 %v6585, 1.442695
      %v6818 = vpow.pop %v6817
      %v6819 = vmul.f32 %v6586, 1.442695
      %v6820 = vpow.pop %v6819
      %v6821 = vmul.f32 %v6587, 1.442695
      %v6822 = vpow.pop %v6821
      %v6823 = vmul.f32 %v6588, 1.442695
      %v6824 = vpow.pop %v6823
      %v6825 = vmul.f32 %v6589, 1.442695
      %v6826 = vpow.pop %v6825
      %v6827 = vmul.f32 %v6590, 1.442695
      %v6828 = vpow.pop %v6827
      %v6829 = vmul.f32 %v6591, 1.442695
      %v6830 = vpow.pop %v6829
      %v6831 = vmul.f32 %v6592, 1.442695
      %v6832 = vpow.pop %v6831
      %v6833 = vmul.f32 %v6593, 1.442695
      %v6834 = vpow.pop %v6833
      %v6835 = vmul.f32 %v6594, 1.442695
      %v6836 = vpow.pop %v6835
      %v6837 = vmul.f32 %v6595, 1.442695
      %v6838 = vpow.pop %v6837
      %v6839 = vmul.f32 %v6596, 1.442695
      %v6840 = vpow.pop %v6839
      %v6841 = vmul.f32 %v6597, 1.442695
      %v6842 = vpow.pop %v6841
      %v6843 = vmul.f32 %v6598, 1.442695
      %v6844 = vpow.pop %v6843
      %v6845 = vmul.f32 %v6599, 1.442695
      %v6846 = vpow.pop %v6845
      %v6847 = vmul.f32 %v6600, 1.442695
      %v6848 = vpow.pop %v6847
      %v6849 = vmul.f32 %v6601, 1.442695
      %v6850 = vpow.pop %v6849
      %v6851 = vmul.f32 %v6602, 1.442695
      %v6852 = vpow.pop %v6851
      %v6853 = vmul.f32 %v6603, 1.442695
      %v6854 = vpow.pop %v6853
      %v6855 = vmul.f32 %v6604, 1.442695
      %v6856 = vpow.pop %v6855
      %v6857 = vmul.f32 %v6605, 1.442695
      %v6858 = vpow.pop %v6857
      %v6859 = vmul.f32 %v6606, 1.442695
      %v6860 = vpow.pop %v6859
      %v6861 = vmul.f32 %v6607, 1.442695
      %v6862 = vpow.pop %v6861
      %v6863 = vmul.f32 %v6608, 1.442695
      %v6864 = vpow.pop %v6863
      %6865 = vadd.xlane.f32.xlu0 %v6610
      %v6866 = vpop.xlane.xlu0 %6865
      %6867 = vadd.xlane.f32.xlu0 %v6612
      %v6868 = vpop.xlane.xlu0 %6867
      %6869 = vadd.xlane.f32.xlu0 %v6614
      %v6870 = vpop.xlane.xlu0 %6869
      %6871 = vadd.xlane.f32.xlu0 %v6616
      %v6872 = vpop.xlane.xlu0 %6871
      %6873 = vadd.xlane.f32.xlu0 %v6618
      %v6874 = vpop.xlane.xlu0 %6873
      %6875 = vadd.xlane.f32.xlu0 %v6620
      %v6876 = vpop.xlane.xlu0 %6875
      %6877 = vadd.xlane.f32.xlu0 %v6622
      %v6878 = vpop.xlane.xlu0 %6877
      %6879 = vadd.xlane.f32.xlu0 %v6624
      %v6880 = vpop.xlane.xlu0 %6879
      %6881 = vadd.xlane.f32.xlu0 %v6626
      %v6882 = vpop.xlane.xlu0 %6881
      %6883 = vadd.xlane.f32.xlu0 %v6628
      %v6884 = vpop.xlane.xlu0 %6883
      %6885 = vadd.xlane.f32.xlu0 %v6630
      %v6886 = vpop.xlane.xlu0 %6885
      %6887 = vadd.xlane.f32.xlu0 %v6632
      %v6888 = vpop.xlane.xlu0 %6887
      %6889 = vadd.xlane.f32.xlu0 %v6634
      %v6890 = vpop.xlane.xlu0 %6889
      %6891 = vadd.xlane.f32.xlu0 %v6636
      %v6892 = vpop.xlane.xlu0 %6891
      %6893 = vadd.xlane.f32.xlu0 %v6638
      %v6894 = vpop.xlane.xlu0 %6893
      %6895 = vadd.xlane.f32.xlu0 %v6640
      %v6896 = vpop.xlane.xlu0 %6895
      %6897 = vadd.xlane.f32.xlu0 %v6642
      %v6898 = vpop.xlane.xlu0 %6897
      %6899 = vadd.xlane.f32.xlu0 %v6644
      %v6900 = vpop.xlane.xlu0 %6899
      %6901 = vadd.xlane.f32.xlu0 %v6646
      %v6902 = vpop.xlane.xlu0 %6901
      %6903 = vadd.xlane.f32.xlu0 %v6648
      %v6904 = vpop.xlane.xlu0 %6903
      %6905 = vadd.xlane.f32.xlu0 %v6650
      %v6906 = vpop.xlane.xlu0 %6905
      %6907 = vadd.xlane.f32.xlu0 %v6652
      %v6908 = vpop.xlane.xlu0 %6907
      %6909 = vadd.xlane.f32.xlu0 %v6654
      %v6910 = vpop.xlane.xlu0 %6909
      %6911 = vadd.xlane.f32.xlu0 %v6656
      %v6912 = vpop.xlane.xlu0 %6911
      %6913 = vadd.xlane.f32.xlu0 %v6658
      %v6914 = vpop.xlane.xlu0 %6913
      %6915 = vadd.xlane.f32.xlu0 %v6660
      %v6916 = vpop.xlane.xlu0 %6915
      %6917 = vadd.xlane.f32.xlu0 %v6662
      %v6918 = vpop.xlane.xlu0 %6917
      %6919 = vadd.xlane.f32.xlu0 %v6664
      %v6920 = vpop.xlane.xlu0 %6919
      %6921 = vadd.xlane.f32.xlu0 %v6666
      %v6922 = vpop.xlane.xlu0 %6921
      %6923 = vadd.xlane.f32.xlu0 %v6668
      %v6924 = vpop.xlane.xlu0 %6923
      %6925 = vadd.xlane.f32.xlu0 %v6670
      %v6926 = vpop.xlane.xlu0 %6925
      %6927 = vadd.xlane.f32.xlu0 %v6672
      %v6928 = vpop.xlane.xlu0 %6927
      %6929 = vadd.xlane.f32.xlu0 %v6674
      %v6930 = vpop.xlane.xlu0 %6929
      %6931 = vadd.xlane.f32.xlu0 %v6676
      %v6932 = vpop.xlane.xlu0 %6931
      %6933 = vadd.xlane.f32.xlu0 %v6678
      %v6934 = vpop.xlane.xlu0 %6933
      %6935 = vadd.xlane.f32.xlu0 %v6680
      %v6936 = vpop.xlane.xlu0 %6935
      %6937 = vadd.xlane.f32.xlu0 %v6682
      %v6938 = vpop.xlane.xlu0 %6937
      %6939 = vadd.xlane.f32.xlu0 %v6684
      %v6940 = vpop.xlane.xlu0 %6939
      %6941 = vadd.xlane.f32.xlu0 %v6686
      %v6942 = vpop.xlane.xlu0 %6941
      %6943 = vadd.xlane.f32.xlu0 %v6688
      %v6944 = vpop.xlane.xlu0 %6943
      %6945 = vadd.xlane.f32.xlu0 %v6690
      %v6946 = vpop.xlane.xlu0 %6945
      %6947 = vadd.xlane.f32.xlu0 %v6692
      %v6948 = vpop.xlane.xlu0 %6947
      %6949 = vadd.xlane.f32.xlu0 %v6694
      %v6950 = vpop.xlane.xlu0 %6949
      %6951 = vadd.xlane.f32.xlu0 %v6696
      %v6952 = vpop.xlane.xlu0 %6951
      %6953 = vadd.xlane.f32.xlu0 %v6698
      %v6954 = vpop.xlane.xlu0 %6953
      %6955 = vadd.xlane.f32.xlu0 %v6700
      %v6956 = vpop.xlane.xlu0 %6955
      %6957 = vadd.xlane.f32.xlu0 %v6702
      %v6958 = vpop.xlane.xlu0 %6957
      %6959 = vadd.xlane.f32.xlu0 %v6704
      %v6960 = vpop.xlane.xlu0 %6959
      %6961 = vadd.xlane.f32.xlu0 %v6706
      %v6962 = vpop.xlane.xlu0 %6961
      %6963 = vadd.xlane.f32.xlu0 %v6708
      %v6964 = vpop.xlane.xlu0 %6963
      %6965 = vadd.xlane.f32.xlu0 %v6710
      %v6966 = vpop.xlane.xlu0 %6965
      %6967 = vadd.xlane.f32.xlu0 %v6712
      %v6968 = vpop.xlane.xlu0 %6967
      %6969 = vadd.xlane.f32.xlu0 %v6714
      %v6970 = vpop.xlane.xlu0 %6969
      %6971 = vadd.xlane.f32.xlu0 %v6716
      %v6972 = vpop.xlane.xlu0 %6971
      %6973 = vadd.xlane.f32.xlu0 %v6718
      %v6974 = vpop.xlane.xlu0 %6973
      %6975 = vadd.xlane.f32.xlu0 %v6720
      %v6976 = vpop.xlane.xlu0 %6975
      %6977 = vadd.xlane.f32.xlu0 %v6722
      %v6978 = vpop.xlane.xlu0 %6977
      %6979 = vadd.xlane.f32.xlu0 %v6724
      %v6980 = vpop.xlane.xlu0 %6979
      %6981 = vadd.xlane.f32.xlu0 %v6726
      %v6982 = vpop.xlane.xlu0 %6981
      %6983 = vadd.xlane.f32.xlu0 %v6728
      %v6984 = vpop.xlane.xlu0 %6983
      %6985 = vadd.xlane.f32.xlu0 %v6730
      %v6986 = vpop.xlane.xlu0 %6985
      %6987 = vadd.xlane.f32.xlu0 %v6732
      %v6988 = vpop.xlane.xlu0 %6987
      %6989 = vadd.xlane.f32.xlu0 %v6734
      %v6990 = vpop.xlane.xlu0 %6989
      %6991 = vadd.xlane.f32.xlu0 %v6736
      %v6992 = vpop.xlane.xlu0 %6991
      %6993 = vadd.xlane.f32.xlu0 %v6738
      %v6994 = vpop.xlane.xlu0 %6993
      %6995 = vadd.xlane.f32.xlu0 %v6740
      %v6996 = vpop.xlane.xlu0 %6995
      %6997 = vadd.xlane.f32.xlu0 %v6742
      %v6998 = vpop.xlane.xlu0 %6997
      %6999 = vadd.xlane.f32.xlu0 %v6744
      %v7000 = vpop.xlane.xlu0 %6999
      %7001 = vadd.xlane.f32.xlu0 %v6746
      %v7002 = vpop.xlane.xlu0 %7001
      %7003 = vadd.xlane.f32.xlu0 %v6748
      %v7004 = vpop.xlane.xlu0 %7003
      %7005 = vadd.xlane.f32.xlu0 %v6750
      %v7006 = vpop.xlane.xlu0 %7005
      %7007 = vadd.xlane.f32.xlu0 %v6752
      %v7008 = vpop.xlane.xlu0 %7007
      %7009 = vadd.xlane.f32.xlu0 %v6754
      %v7010 = vpop.xlane.xlu0 %7009
      %7011 = vadd.xlane.f32.xlu0 %v6756
      %v7012 = vpop.xlane.xlu0 %7011
      %7013 = vadd.xlane.f32.xlu0 %v6758
      %v7014 = vpop.xlane.xlu0 %7013
      %7015 = vadd.xlane.f32.xlu0 %v6760
      %v7016 = vpop.xlane.xlu0 %7015
      %7017 = vadd.xlane.f32.xlu0 %v6762
      %v7018 = vpop.xlane.xlu0 %7017
      %7019 = vadd.xlane.f32.xlu0 %v6764
      %v7020 = vpop.xlane.xlu0 %7019
      %7021 = vadd.xlane.f32.xlu0 %v6766
      %v7022 = vpop.xlane.xlu0 %7021
      %7023 = vadd.xlane.f32.xlu0 %v6768
      %v7024 = vpop.xlane.xlu0 %7023
      %7025 = vadd.xlane.f32.xlu0 %v6770
      %v7026 = vpop.xlane.xlu0 %7025
      %7027 = vadd.xlane.f32.xlu0 %v6772
      %v7028 = vpop.xlane.xlu0 %7027
      %7029 = vadd.xlane.f32.xlu0 %v6774
      %v7030 = vpop.xlane.xlu0 %7029
      %7031 = vadd.xlane.f32.xlu0 %v6776
      %v7032 = vpop.xlane.xlu0 %7031
      %7033 = vadd.xlane.f32.xlu0 %v6778
      %v7034 = vpop.xlane.xlu0 %7033
      %7035 = vadd.xlane.f32.xlu0 %v6780
      %v7036 = vpop.xlane.xlu0 %7035
      %7037 = vadd.xlane.f32.xlu0 %v6782
      %v7038 = vpop.xlane.xlu0 %7037
      %7039 = vadd.xlane.f32.xlu0 %v6784
      %v7040 = vpop.xlane.xlu0 %7039
      %7041 = vadd.xlane.f32.xlu0 %v6786
      %v7042 = vpop.xlane.xlu0 %7041
      %7043 = vadd.xlane.f32.xlu0 %v6788
      %v7044 = vpop.xlane.xlu0 %7043
      %7045 = vadd.xlane.f32.xlu0 %v6790
      %v7046 = vpop.xlane.xlu0 %7045
      %7047 = vadd.xlane.f32.xlu0 %v6792
      %v7048 = vpop.xlane.xlu0 %7047
      %7049 = vadd.xlane.f32.xlu0 %v6794
      %v7050 = vpop.xlane.xlu0 %7049
      %7051 = vadd.xlane.f32.xlu0 %v6796
      %v7052 = vpop.xlane.xlu0 %7051
      %7053 = vadd.xlane.f32.xlu0 %v6798
      %v7054 = vpop.xlane.xlu0 %7053
      %7055 = vadd.xlane.f32.xlu0 %v6800
      %v7056 = vpop.xlane.xlu0 %7055
      %7057 = vadd.xlane.f32.xlu0 %v6802
      %v7058 = vpop.xlane.xlu0 %7057
      %7059 = vadd.xlane.f32.xlu0 %v6804
      %v7060 = vpop.xlane.xlu0 %7059
      %7061 = vadd.xlane.f32.xlu0 %v6806
      %v7062 = vpop.xlane.xlu0 %7061
      %7063 = vadd.xlane.f32.xlu0 %v6808
      %v7064 = vpop.xlane.xlu0 %7063
      %7065 = vadd.xlane.f32.xlu0 %v6810
      %v7066 = vpop.xlane.xlu0 %7065
      %7067 = vadd.xlane.f32.xlu0 %v6812
      %v7068 = vpop.xlane.xlu0 %7067
      %7069 = vadd.xlane.f32.xlu0 %v6814
      %v7070 = vpop.xlane.xlu0 %7069
      %7071 = vadd.xlane.f32.xlu0 %v6816
      %v7072 = vpop.xlane.xlu0 %7071
      %7073 = vadd.xlane.f32.xlu0 %v6818
      %v7074 = vpop.xlane.xlu0 %7073
      %7075 = vadd.xlane.f32.xlu0 %v6820
      %v7076 = vpop.xlane.xlu0 %7075
      %7077 = vadd.xlane.f32.xlu0 %v6822
      %v7078 = vpop.xlane.xlu0 %7077
      %7079 = vadd.xlane.f32.xlu0 %v6824
      %v7080 = vpop.xlane.xlu0 %7079
      %7081 = vadd.xlane.f32.xlu0 %v6826
      %v7082 = vpop.xlane.xlu0 %7081
      %7083 = vadd.xlane.f32.xlu0 %v6828
      %v7084 = vpop.xlane.xlu0 %7083
      %7085 = vadd.xlane.f32.xlu0 %v6830
      %v7086 = vpop.xlane.xlu0 %7085
      %7087 = vadd.xlane.f32.xlu0 %v6832
      %v7088 = vpop.xlane.xlu0 %7087
      %7089 = vadd.xlane.f32.xlu0 %v6834
      %v7090 = vpop.xlane.xlu0 %7089
      %7091 = vadd.xlane.f32.xlu0 %v6836
      %v7092 = vpop.xlane.xlu0 %7091
      %7093 = vadd.xlane.f32.xlu0 %v6838
      %v7094 = vpop.xlane.xlu0 %7093
      %7095 = vadd.xlane.f32.xlu0 %v6840
      %v7096 = vpop.xlane.xlu0 %7095
      %7097 = vadd.xlane.f32.xlu0 %v6842
      %v7098 = vpop.xlane.xlu0 %7097
      %7099 = vadd.xlane.f32.xlu0 %v6844
      %v7100 = vpop.xlane.xlu0 %7099
      %7101 = vadd.xlane.f32.xlu0 %v6846
      %v7102 = vpop.xlane.xlu0 %7101
      %7103 = vadd.xlane.f32.xlu0 %v6848
      %v7104 = vpop.xlane.xlu0 %7103
      %7105 = vadd.xlane.f32.xlu0 %v6850
      %v7106 = vpop.xlane.xlu0 %7105
      %7107 = vadd.xlane.f32.xlu0 %v6852
      %v7108 = vpop.xlane.xlu0 %7107
      %7109 = vadd.xlane.f32.xlu0 %v6854
      %v7110 = vpop.xlane.xlu0 %7109
      %7111 = vadd.xlane.f32.xlu0 %v6856
      %v7112 = vpop.xlane.xlu0 %7111
      %7113 = vadd.xlane.f32.xlu0 %v6858
      %v7114 = vpop.xlane.xlu0 %7113
      %7115 = vadd.xlane.f32.xlu0 %v6860
      %v7116 = vpop.xlane.xlu0 %7115
      %7117 = vadd.xlane.f32.xlu0 %v6862
      %v7118 = vpop.xlane.xlu0 %7117
      %7119 = vadd.xlane.f32.xlu0 %v6864
      %v7120 = vpop.xlane.xlu0 %7119
      %v7121 = vrcp.pop %v6866
      %v7122 = vrcp.pop %v6868
      %v7123 = vrcp.pop %v6870
      %v7124 = vrcp.pop %v6872
      %v7125 = vrcp.pop %v6874
      %v7126 = vrcp.pop %v6876
      %v7127 = vrcp.pop %v6878
      %v7128 = vrcp.pop %v6880
      %v7129 = vrcp.pop %v6882
      %v7130 = vrcp.pop %v6884
      %v7131 = vrcp.pop %v6886
      %v7132 = vrcp.pop %v6888
      %v7133 = vrcp.pop %v6890
      %v7134 = vrcp.pop %v6892
      %v7135 = vrcp.pop %v6894
      %v7136 = vrcp.pop %v6896
      %v7137 = vrcp.pop %v6898
      %v7138 = vrcp.pop %v6900
      %v7139 = vrcp.pop %v6902
      %v7140 = vrcp.pop %v6904
      %v7141 = vrcp.pop %v6906
      %v7142 = vrcp.pop %v6908
      %v7143 = vrcp.pop %v6910
      %v7144 = vrcp.pop %v6912
      %v7145 = vrcp.pop %v6914
      %v7146 = vrcp.pop %v6916
      %v7147 = vrcp.pop %v6918
      %v7148 = vrcp.pop %v6920
      %v7149 = vrcp.pop %v6922
      %v7150 = vrcp.pop %v6924
      %v7151 = vrcp.pop %v6926
      %v7152 = vrcp.pop %v6928
      %v7153 = vrcp.pop %v6930
      %v7154 = vrcp.pop %v6932
      %v7155 = vrcp.pop %v6934
      %v7156 = vrcp.pop %v6936
      %v7157 = vrcp.pop %v6938
      %v7158 = vrcp.pop %v6940
      %v7159 = vrcp.pop %v6942
      %v7160 = vrcp.pop %v6944
      %v7161 = vrcp.pop %v6946
      %v7162 = vrcp.pop %v6948
      %v7163 = vrcp.pop %v6950
      %v7164 = vrcp.pop %v6952
      %v7165 = vrcp.pop %v6954
      %v7166 = vrcp.pop %v6956
      %v7167 = vrcp.pop %v6958
      %v7168 = vrcp.pop %v6960
      %v7169 = vrcp.pop %v6962
      %v7170 = vrcp.pop %v6964
      %v7171 = vrcp.pop %v6966
      %v7172 = vrcp.pop %v6968
      %v7173 = vrcp.pop %v6970
      %v7174 = vrcp.pop %v6972
      %v7175 = vrcp.pop %v6974
      %v7176 = vrcp.pop %v6976
      %v7177 = vrcp.pop %v6978
      %v7178 = vrcp.pop %v6980
      %v7179 = vrcp.pop %v6982
      %v7180 = vrcp.pop %v6984
      %v7181 = vrcp.pop %v6986
      %v7182 = vrcp.pop %v6988
      %v7183 = vrcp.pop %v6990
      %v7184 = vrcp.pop %v6992
      %v7185 = vrcp.pop %v6994
      %v7186 = vrcp.pop %v6996
      %v7187 = vrcp.pop %v6998
      %v7188 = vrcp.pop %v7000
      %v7189 = vrcp.pop %v7002
      %v7190 = vrcp.pop %v7004
      %v7191 = vrcp.pop %v7006
      %v7192 = vrcp.pop %v7008
      %v7193 = vrcp.pop %v7010
      %v7194 = vrcp.pop %v7012
      %v7195 = vrcp.pop %v7014
      %v7196 = vrcp.pop %v7016
      %v7197 = vrcp.pop %v7018
      %v7198 = vrcp.pop %v7020
      %v7199 = vrcp.pop %v7022
      %v7200 = vrcp.pop %v7024
      %v7201 = vrcp.pop %v7026
      %v7202 = vrcp.pop %v7028
      %v7203 = vrcp.pop %v7030
      %v7204 = vrcp.pop %v7032
      %v7205 = vrcp.pop %v7034
      %v7206 = vrcp.pop %v7036
      %v7207 = vrcp.pop %v7038
      %v7208 = vrcp.pop %v7040
      %v7209 = vrcp.pop %v7042
      %v7210 = vrcp.pop %v7044
      %v7211 = vrcp.pop %v7046
      %v7212 = vrcp.pop %v7048
      %v7213 = vrcp.pop %v7050
      %v7214 = vrcp.pop %v7052
      %v7215 = vrcp.pop %v7054
      %v7216 = vrcp.pop %v7056
      %v7217 = vrcp.pop %v7058
      %v7218 = vrcp.pop %v7060
      %v7219 = vrcp.pop %v7062
      %v7220 = vrcp.pop %v7064
      %v7221 = vrcp.pop %v7066
      %v7222 = vrcp.pop %v7068
      %v7223 = vrcp.pop %v7070
      %v7224 = vrcp.pop %v7072
      %v7225 = vrcp.pop %v7074
      %v7226 = vrcp.pop %v7076
      %v7227 = vrcp.pop %v7078
      %v7228 = vrcp.pop %v7080
      %v7229 = vrcp.pop %v7082
      %v7230 = vrcp.pop %v7084
      %v7231 = vrcp.pop %v7086
      %v7232 = vrcp.pop %v7088
      %v7233 = vrcp.pop %v7090
      %v7234 = vrcp.pop %v7092
      %v7235 = vrcp.pop %v7094
      %v7236 = vrcp.pop %v7096
      %v7237 = vrcp.pop %v7098
      %v7238 = vrcp.pop %v7100
      %v7239 = vrcp.pop %v7102
      %v7240 = vrcp.pop %v7104
      %v7241 = vrcp.pop %v7106
      %v7242 = vrcp.pop %v7108
      %v7243 = vrcp.pop %v7110
      %v7244 = vrcp.pop %v7112
      %v7245 = vrcp.pop %v7114
      %v7246 = vrcp.pop %v7116
      %v7247 = vrcp.pop %v7118
      %v7248 = vrcp.pop %v7120
      %v7249 = vmul.f32 %v6610, %v7121
      %v7250 = vmul.f32 %v6612, %v7122
      %v7251 = vmul.f32 %v6614, %v7123
      %v7252 = vmul.f32 %v6616, %v7124
      %v7253 = vmul.f32 %v6618, %v7125
      %v7254 = vmul.f32 %v6620, %v7126
      %v7255 = vmul.f32 %v6622, %v7127
      %v7256 = vmul.f32 %v6624, %v7128
      %v7257 = vmul.f32 %v6626, %v7129
      %v7258 = vmul.f32 %v6628, %v7130
      %v7259 = vmul.f32 %v6630, %v7131
      %v7260 = vmul.f32 %v6632, %v7132
      %v7261 = vmul.f32 %v6634, %v7133
      %v7262 = vmul.f32 %v6636, %v7134
      %v7263 = vmul.f32 %v6638, %v7135
      %v7264 = vmul.f32 %v6640, %v7136
      %v7265 = vmul.f32 %v6642, %v7137
      %v7266 = vmul.f32 %v6644, %v7138
      %v7267 = vmul.f32 %v6646, %v7139
      %v7268 = vmul.f32 %v6648, %v7140
      %v7269 = vmul.f32 %v6650, %v7141
      %v7270 = vmul.f32 %v6652, %v7142
      %v7271 = vmul.f32 %v6654, %v7143
      %v7272 = vmul.f32 %v6656, %v7144
      %v7273 = vmul.f32 %v6658, %v7145
      %v7274 = vmul.f32 %v6660, %v7146
      %v7275 = vmul.f32 %v6662, %v7147
      %v7276 = vmul.f32 %v6664, %v7148
      %v7277 = vmul.f32 %v6666, %v7149
      %v7278 = vmul.f32 %v6668, %v7150
      %v7279 = vmul.f32 %v6670, %v7151
      %v7280 = vmul.f32 %v6672, %v7152
      %v7281 = vmul.f32 %v6674, %v7153
      %v7282 = vmul.f32 %v6676, %v7154
      %v7283 = vmul.f32 %v6678, %v7155
      %v7284 = vmul.f32 %v6680, %v7156
      %v7285 = vmul.f32 %v6682, %v7157
      %v7286 = vmul.f32 %v6684, %v7158
      %v7287 = vmul.f32 %v6686, %v7159
      %v7288 = vmul.f32 %v6688, %v7160
      %v7289 = vmul.f32 %v6690, %v7161
      %v7290 = vmul.f32 %v6692, %v7162
      %v7291 = vmul.f32 %v6694, %v7163
      %v7292 = vmul.f32 %v6696, %v7164
      %v7293 = vmul.f32 %v6698, %v7165
      %v7294 = vmul.f32 %v6700, %v7166
      %v7295 = vmul.f32 %v6702, %v7167
      %v7296 = vmul.f32 %v6704, %v7168
      %v7297 = vmul.f32 %v6706, %v7169
      %v7298 = vmul.f32 %v6708, %v7170
      %v7299 = vmul.f32 %v6710, %v7171
      %v7300 = vmul.f32 %v6712, %v7172
      %v7301 = vmul.f32 %v6714, %v7173
      %v7302 = vmul.f32 %v6716, %v7174
      %v7303 = vmul.f32 %v6718, %v7175
      %v7304 = vmul.f32 %v6720, %v7176
      %v7305 = vmul.f32 %v6722, %v7177
      %v7306 = vmul.f32 %v6724, %v7178
      %v7307 = vmul.f32 %v6726, %v7179
      %v7308 = vmul.f32 %v6728, %v7180
      %v7309 = vmul.f32 %v6730, %v7181
      %v7310 = vmul.f32 %v6732, %v7182
      %v7311 = vmul.f32 %v6734, %v7183
      %v7312 = vmul.f32 %v6736, %v7184
      %v7313 = vmul.f32 %v6738, %v7185
      %v7314 = vmul.f32 %v6740, %v7186
      %v7315 = vmul.f32 %v6742, %v7187
      %v7316 = vmul.f32 %v6744, %v7188
      %v7317 = vmul.f32 %v6746, %v7189
      %v7318 = vmul.f32 %v6748, %v7190
      %v7319 = vmul.f32 %v6750, %v7191
      %v7320 = vmul.f32 %v6752, %v7192
      %v7321 = vmul.f32 %v6754, %v7193
      %v7322 = vmul.f32 %v6756, %v7194
      %v7323 = vmul.f32 %v6758, %v7195
      %v7324 = vmul.f32 %v6760, %v7196
      %v7325 = vmul.f32 %v6762, %v7197
      %v7326 = vmul.f32 %v6764, %v7198
      %v7327 = vmul.f32 %v6766, %v7199
      %v7328 = vmul.f32 %v6768, %v7200
      %v7329 = vmul.f32 %v6770, %v7201
      %v7330 = vmul.f32 %v6772, %v7202
      %v7331 = vmul.f32 %v6774, %v7203
      %v7332 = vmul.f32 %v6776, %v7204
      %v7333 = vmul.f32 %v6778, %v7205
      %v7334 = vmul.f32 %v6780, %v7206
      %v7335 = vmul.f32 %v6782, %v7207
      %v7336 = vmul.f32 %v6784, %v7208
      %v7337 = vmul.f32 %v6786, %v7209
      %v7338 = vmul.f32 %v6788, %v7210
      %v7339 = vmul.f32 %v6790, %v7211
      %v7340 = vmul.f32 %v6792, %v7212
      %v7341 = vmul.f32 %v6794, %v7213
      %v7342 = vmul.f32 %v6796, %v7214
      %v7343 = vmul.f32 %v6798, %v7215
      %v7344 = vmul.f32 %v6800, %v7216
      %v7345 = vmul.f32 %v6802, %v7217
      %v7346 = vmul.f32 %v6804, %v7218
      %v7347 = vmul.f32 %v6806, %v7219
      %v7348 = vmul.f32 %v6808, %v7220
      %v7349 = vmul.f32 %v6810, %v7221
      %v7350 = vmul.f32 %v6812, %v7222
      %v7351 = vmul.f32 %v6814, %v7223
      %v7352 = vmul.f32 %v6816, %v7224
      %v7353 = vmul.f32 %v6818, %v7225
      %v7354 = vmul.f32 %v6820, %v7226
      %v7355 = vmul.f32 %v6822, %v7227
      %v7356 = vmul.f32 %v6824, %v7228
      %v7357 = vmul.f32 %v6826, %v7229
      %v7358 = vmul.f32 %v6828, %v7230
      %v7359 = vmul.f32 %v6830, %v7231
      %v7360 = vmul.f32 %v6832, %v7232
      %v7361 = vmul.f32 %v6834, %v7233
      %v7362 = vmul.f32 %v6836, %v7234
      %v7363 = vmul.f32 %v6838, %v7235
      %v7364 = vmul.f32 %v6840, %v7236
      %v7365 = vmul.f32 %v6842, %v7237
      %v7366 = vmul.f32 %v6844, %v7238
      %v7367 = vmul.f32 %v6846, %v7239
      %v7368 = vmul.f32 %v6848, %v7240
      %v7369 = vmul.f32 %v6850, %v7241
      %v7370 = vmul.f32 %v6852, %v7242
      %v7371 = vmul.f32 %v6854, %v7243
      %v7372 = vmul.f32 %v6856, %v7244
      %v7373 = vmul.f32 %v6858, %v7245
      %v7374 = vmul.f32 %v6860, %v7246
      %v7375 = vmul.f32 %v6862, %v7247
      %v7376 = vmul.f32 %v6864, %v7248
      %v7377 = vpack.c.bf16 %v4855, %v4855
      %v7378 = vpack.c.bf16 %v5150, %v5150
      %v7379 = vpack.c.bf16 %v4858, %v4858
      %v7380 = vpack.c.bf16 %v5153, %v5153
      %v7381 = vpack.c.bf16 %v4863, %v4863
      %v7382 = vpack.c.bf16 %v5156, %v5156
      %v7383 = vpack.c.bf16 %v4866, %v4866
      %v7384 = vpack.c.bf16 %v5159, %v5159
      %v7385 = vpack.c.bf16 %v7250, %v7249
      %v7386 = vpack.c.bf16 %v7252, %v7251
      %v7387 = vpack.c.bf16 %v7254, %v7253
      %v7388 = vpack.c.bf16 %v7256, %v7255
      %v7389 = vpack.c.bf16 %v7258, %v7257
      %v7390 = vpack.c.bf16 %v7260, %v7259
      %v7391 = vpack.c.bf16 %v7262, %v7261
      %v7392 = vpack.c.bf16 %v7264, %v7263
      %v7393 = vpack.c.bf16 %v7266, %v7265
      %v7394 = vpack.c.bf16 %v7268, %v7267
      %v7395 = vpack.c.bf16 %v7270, %v7269
      %v7396 = vpack.c.bf16 %v7272, %v7271
      %v7397 = vpack.c.bf16 %v7274, %v7273
      %v7398 = vpack.c.bf16 %v7276, %v7275
      %v7399 = vpack.c.bf16 %v7278, %v7277
      %v7400 = vpack.c.bf16 %v7280, %v7279
      %v7401 = vpack.c.bf16 %v7282, %v7281
      %v7402 = vpack.c.bf16 %v7284, %v7283
      %v7403 = vpack.c.bf16 %v7286, %v7285
      %v7404 = vpack.c.bf16 %v7288, %v7287
      %v7405 = vpack.c.bf16 %v7290, %v7289
      %v7406 = vpack.c.bf16 %v7292, %v7291
      %v7407 = vpack.c.bf16 %v7294, %v7293
      %v7408 = vpack.c.bf16 %v7296, %v7295
      %v7409 = vpack.c.bf16 %v7298, %v7297
      %v7410 = vpack.c.bf16 %v7300, %v7299
      %v7411 = vpack.c.bf16 %v7302, %v7301
      %v7412 = vpack.c.bf16 %v7304, %v7303
      %v7413 = vpack.c.bf16 %v7306, %v7305
      %v7414 = vpack.c.bf16 %v7308, %v7307
      %v7415 = vpack.c.bf16 %v7310, %v7309
      %v7416 = vpack.c.bf16 %v7312, %v7311
      %v7417 = vpack.c.bf16 %v7314, %v7313
      %v7418 = vpack.c.bf16 %v7316, %v7315
      %v7419 = vpack.c.bf16 %v7318, %v7317
      %v7420 = vpack.c.bf16 %v7320, %v7319
      %v7421 = vpack.c.bf16 %v7322, %v7321
      %v7422 = vpack.c.bf16 %v7324, %v7323
      %v7423 = vpack.c.bf16 %v7326, %v7325
      %v7424 = vpack.c.bf16 %v7328, %v7327
      %v7425 = vpack.c.bf16 %v7330, %v7329
      %v7426 = vpack.c.bf16 %v7332, %v7331
      %v7427 = vpack.c.bf16 %v7334, %v7333
      %v7428 = vpack.c.bf16 %v7336, %v7335
      %v7429 = vpack.c.bf16 %v7338, %v7337
      %v7430 = vpack.c.bf16 %v7340, %v7339
      %v7431 = vpack.c.bf16 %v7342, %v7341
      %v7432 = vpack.c.bf16 %v7344, %v7343
      %v7433 = vpack.c.bf16 %v7346, %v7345
      %v7434 = vpack.c.bf16 %v7348, %v7347
      %v7435 = vpack.c.bf16 %v7350, %v7349
      %v7436 = vpack.c.bf16 %v7352, %v7351
      %v7437 = vpack.c.bf16 %v7354, %v7353
      %v7438 = vpack.c.bf16 %v7356, %v7355
      %v7439 = vpack.c.bf16 %v7358, %v7357
      %v7440 = vpack.c.bf16 %v7360, %v7359
      %v7441 = vpack.c.bf16 %v7362, %v7361
      %v7442 = vpack.c.bf16 %v7364, %v7363
      %v7443 = vpack.c.bf16 %v7366, %v7365
      %v7444 = vpack.c.bf16 %v7368, %v7367
      %v7445 = vpack.c.bf16 %v7370, %v7369
      %v7446 = vpack.c.bf16 %v7372, %v7371
      %v7447 = vpack.c.bf16 %v7374, %v7373
      %v7448 = vpack.c.bf16 %v7376, %v7375
      %7449 = vmatprep.subr.bf16.mxu0 0
      %7450 = vmatpush1.bf16.xpose.msra.mxu0 %v7385
      %7451 = vmatprep.subr.bf16.mxu0 0
      %7452 = vmatpush1.bf16.xpose.msra.mxu0 %v7386
      %7453 = vmatprep.subr.bf16.mxu0 0
      %7454 = vmatpush1.bf16.xpose.msra.mxu0 %v7387
      %7455 = vmatprep.subr.bf16.mxu0 0
      %7456 = vmatpush1.bf16.xpose.msra.mxu0 %v7388
      %7457 = vmatprep.subr.bf16.mxu0 0
      %7458 = vmatpush1.bf16.xpose.msra.mxu0 %v7389
      %7459 = vmatprep.subr.bf16.mxu0 0
      %7460 = vmatpush1.bf16.xpose.msra.mxu0 %v7390
      %7461 = vmatprep.subr.bf16.mxu0 0
      %7462 = vmatpush1.bf16.xpose.msra.mxu0 %v7391
      %7463 = vmatprep.subr.bf16.mxu0 0
      %7464 = vmatpush1.bf16.xpose.msra.mxu0 %v7392
      %7465 = vmatprep.subr.bf16.mxu0 0
      %7466 = vmatpush1.bf16.xpose.msra.mxu0 0
      %7467 = vmatprep.subr.bf16.mxu0 0
      %7468 = vmatpush1.bf16.xpose.msra.mxu0 0
      %7469 = vmatprep.subr.bf16.mxu0 0
      %7470 = vmatpush1.bf16.xpose.msra.mxu0 0
      %7471 = vmatprep.subr.bf16.mxu0 0
      %7472 = vmatpush1.bf16.xpose.msra.mxu0 0
      %7473 = vmatprep.subr.bf16.mxu0 0
      %7474 = vmatpush1.bf16.xpose.msra.mxu0 0
      %7475 = vmatprep.subr.bf16.mxu0 0
      %7476 = vmatpush1.bf16.xpose.msra.mxu0 0
      %7477 = vmatprep.subr.bf16.mxu0 0
      %7478 = vmatpush1.bf16.xpose.msra.mxu0 0
      %7479 = vmatprep.subr.bf16.mxu0 0
      %7480 = vmatpush1.bf16.xpose.msra.mxu0 0
      %7481 = vmatprep.mubr.bf16.mxu0 0
      %7482 = vmatmul.mubr.bf16.gmra.mrb[0].mxu0 %v7377
      %v7483 = vpop.f32.mrb[0].mxu0
      %v7484 = vadd.f32 0.0, %v7483
      %v7485 = vpop.f32.mrb[0].mxu0
      %v7486 = vpop.f32.mrb[0].mxu0
      %v7487 = vpop.f32.mrb[0].mxu0
      %7488 = vdwg.mxu0
      %7489 = vmatprep.subr.bf16.mxu0 0
      %7490 = vmatpush1.bf16.xpose.msra.mxu0 %v7393
      %7491 = vmatprep.subr.bf16.mxu0 0
      %7492 = vmatpush1.bf16.xpose.msra.mxu0 %v7394
      %7493 = vmatprep.subr.bf16.mxu0 0
      %7494 = vmatpush1.bf16.xpose.msra.mxu0 %v7395
      %7495 = vmatprep.subr.bf16.mxu0 0
      %7496 = vmatpush1.bf16.xpose.msra.mxu0 %v7396
      %7497 = vmatprep.subr.bf16.mxu0 0
      %7498 = vmatpush1.bf16.xpose.msra.mxu0 %v7397
      %7499 = vmatprep.subr.bf16.mxu0 0
      %7500 = vmatpush1.bf16.xpose.msra.mxu0 %v7398
      %7501 = vmatprep.subr.bf16.mxu0 0
      %7502 = vmatpush1.bf16.xpose.msra.mxu0 %v7399
      %7503 = vmatprep.subr.bf16.mxu0 0
      %7504 = vmatpush1.bf16.xpose.msra.mxu0 %v7400
      %7505 = vmatprep.subr.bf16.mxu0 0
      %7506 = vmatpush1.bf16.xpose.msra.mxu0 0
      %7507 = vmatprep.subr.bf16.mxu0 0
      %7508 = vmatpush1.bf16.xpose.msra.mxu0 0
      %7509 = vmatprep.subr.bf16.mxu0 0
      %7510 = vmatpush1.bf16.xpose.msra.mxu0 0
      %7511 = vmatprep.subr.bf16.mxu0 0
      %7512 = vmatpush1.bf16.xpose.msra.mxu0 0
      %7513 = vmatprep.subr.bf16.mxu0 0
      %7514 = vmatpush1.bf16.xpose.msra.mxu0 0
      %7515 = vmatprep.subr.bf16.mxu0 0
      %7516 = vmatpush1.bf16.xpose.msra.mxu0 0
      %7517 = vmatprep.subr.bf16.mxu0 0
      %7518 = vmatpush1.bf16.xpose.msra.mxu0 0
      %7519 = vmatprep.subr.bf16.mxu0 0
      %7520 = vmatpush1.bf16.xpose.msra.mxu0 0
      %7521 = vmatprep.mubr.bf16.mxu0 0
      %7522 = vmatmul.mubr.bf16.gmra.mrb[0].mxu0 %v7378
      %v7523 = vpop.f32.mrb[0].mxu0
      %v7524 = vadd.f32 0.0, %v7523
      %v7525 = vpop.f32.mrb[0].mxu0
      %v7526 = vpop.f32.mrb[0].mxu0
      %v7527 = vpop.f32.mrb[0].mxu0
      %7528 = vdwg.mxu0
      %7529 = vmatprep.subr.bf16.mxu0 0
      %7530 = vmatpush1.bf16.xpose.msra.mxu0 %v7401
      %7531 = vmatprep.subr.bf16.mxu0 0
      %7532 = vmatpush1.bf16.xpose.msra.mxu0 %v7402
      %7533 = vmatprep.subr.bf16.mxu0 0
      %7534 = vmatpush1.bf16.xpose.msra.mxu0 %v7403
      %7535 = vmatprep.subr.bf16.mxu0 0
      %7536 = vmatpush1.bf16.xpose.msra.mxu0 %v7404
      %7537 = vmatprep.subr.bf16.mxu0 0
      %7538 = vmatpush1.bf16.xpose.msra.mxu0 %v7405
      %7539 = vmatprep.subr.bf16.mxu0 0
      %7540 = vmatpush1.bf16.xpose.msra.mxu0 %v7406
      %7541 = vmatprep.subr.bf16.mxu0 0
      %7542 = vmatpush1.bf16.xpose.msra.mxu0 %v7407
      %7543 = vmatprep.subr.bf16.mxu0 0
      %7544 = vmatpush1.bf16.xpose.msra.mxu0 %v7408
      %7545 = vmatprep.subr.bf16.mxu0 0
      %7546 = vmatpush1.bf16.xpose.msra.mxu0 0
      %7547 = vmatprep.subr.bf16.mxu0 0
      %7548 = vmatpush1.bf16.xpose.msra.mxu0 0
      %7549 = vmatprep.subr.bf16.mxu0 0
      %7550 = vmatpush1.bf16.xpose.msra.mxu0 0
      %7551 = vmatprep.subr.bf16.mxu0 0
      %7552 = vmatpush1.bf16.xpose.msra.mxu0 0
      %7553 = vmatprep.subr.bf16.mxu0 0
      %7554 = vmatpush1.bf16.xpose.msra.mxu0 0
      %7555 = vmatprep.subr.bf16.mxu0 0
      %7556 = vmatpush1.bf16.xpose.msra.mxu0 0
      %7557 = vmatprep.subr.bf16.mxu0 0
      %7558 = vmatpush1.bf16.xpose.msra.mxu0 0
      %7559 = vmatprep.subr.bf16.mxu0 0
      %7560 = vmatpush1.bf16.xpose.msra.mxu0 0
      %7561 = vmatprep.mubr.bf16.mxu0 0
      %7562 = vmatmul.mubr.bf16.gmra.mrb[0].mxu0 %v7379
      %v7563 = vpop.f32.mrb[0].mxu0
      %v7564 = vadd.f32 0.0, %v7563
      %v7565 = vpop.f32.mrb[0].mxu0
      %v7566 = vpop.f32.mrb[0].mxu0
      %v7567 = vpop.f32.mrb[0].mxu0
      %7568 = vdwg.mxu0
      %7569 = vmatprep.subr.bf16.mxu0 0
      %7570 = vmatpush1.bf16.xpose.msra.mxu0 %v7409
      %7571 = vmatprep.subr.bf16.mxu0 0
      %7572 = vmatpush1.bf16.xpose.msra.mxu0 %v7410
      %7573 = vmatprep.subr.bf16.mxu0 0
      %7574 = vmatpush1.bf16.xpose.msra.mxu0 %v7411
      %7575 = vmatprep.subr.bf16.mxu0 0
      %7576 = vmatpush1.bf16.xpose.msra.mxu0 %v7412
      %7577 = vmatprep.subr.bf16.mxu0 0
      %7578 = vmatpush1.bf16.xpose.msra.mxu0 %v7413
      %7579 = vmatprep.subr.bf16.mxu0 0
      %7580 = vmatpush1.bf16.xpose.msra.mxu0 %v7414
      %7581 = vmatprep.subr.bf16.mxu0 0
      %7582 = vmatpush1.bf16.xpose.msra.mxu0 %v7415
      %7583 = vmatprep.subr.bf16.mxu0 0
      %7584 = vmatpush1.bf16.xpose.msra.mxu0 %v7416
      %7585 = vmatprep.subr.bf16.mxu0 0
      %7586 = vmatpush1.bf16.xpose.msra.mxu0 0
      %7587 = vmatprep.subr.bf16.mxu0 0
      %7588 = vmatpush1.bf16.xpose.msra.mxu0 0
      %7589 = vmatprep.subr.bf16.mxu0 0
      %7590 = vmatpush1.bf16.xpose.msra.mxu0 0
      %7591 = vmatprep.subr.bf16.mxu0 0
      %7592 = vmatpush1.bf16.xpose.msra.mxu0 0
      %7593 = vmatprep.subr.bf16.mxu0 0
      %7594 = vmatpush1.bf16.xpose.msra.mxu0 0
      %7595 = vmatprep.subr.bf16.mxu0 0
      %7596 = vmatpush1.bf16.xpose.msra.mxu0 0
      %7597 = vmatprep.subr.bf16.mxu0 0
      %7598 = vmatpush1.bf16.xpose.msra.mxu0 0
      %7599 = vmatprep.subr.bf16.mxu0 0
      %7600 = vmatpush1.bf16.xpose.msra.mxu0 0
      %7601 = vmatprep.mubr.bf16.mxu0 0
      %7602 = vmatmul.mubr.bf16.gmra.mrb[0].mxu0 %v7380
      %v7603 = vpop.f32.mrb[0].mxu0
      %v7604 = vadd.f32 0.0, %v7603
      %v7605 = vpop.f32.mrb[0].mxu0
      %v7606 = vpop.f32.mrb[0].mxu0
      %v7607 = vpop.f32.mrb[0].mxu0
      %7608 = vdwg.mxu0
      %7609 = vmatprep.subr.bf16.mxu0 0
      %7610 = vmatpush1.bf16.xpose.msra.mxu0 %v7417
      %7611 = vmatprep.subr.bf16.mxu0 0
      %7612 = vmatpush1.bf16.xpose.msra.mxu0 %v7418
      %7613 = vmatprep.subr.bf16.mxu0 0
      %7614 = vmatpush1.bf16.xpose.msra.mxu0 %v7419
      %7615 = vmatprep.subr.bf16.mxu0 0
      %7616 = vmatpush1.bf16.xpose.msra.mxu0 %v7420
      %7617 = vmatprep.subr.bf16.mxu0 0
      %7618 = vmatpush1.bf16.xpose.msra.mxu0 %v7421
      %7619 = vmatprep.subr.bf16.mxu0 0
      %7620 = vmatpush1.bf16.xpose.msra.mxu0 %v7422
      %7621 = vmatprep.subr.bf16.mxu0 0
      %7622 = vmatpush1.bf16.xpose.msra.mxu0 %v7423
      %7623 = vmatprep.subr.bf16.mxu0 0
      %7624 = vmatpush1.bf16.xpose.msra.mxu0 %v7424
      %7625 = vmatprep.subr.bf16.mxu0 0
      %7626 = vmatpush1.bf16.xpose.msra.mxu0 0
      %7627 = vmatprep.subr.bf16.mxu0 0
      %7628 = vmatpush1.bf16.xpose.msra.mxu0 0
      %7629 = vmatprep.subr.bf16.mxu0 0
      %7630 = vmatpush1.bf16.xpose.msra.mxu0 0
      %7631 = vmatprep.subr.bf16.mxu0 0
      %7632 = vmatpush1.bf16.xpose.msra.mxu0 0
      %7633 = vmatprep.subr.bf16.mxu0 0
      %7634 = vmatpush1.bf16.xpose.msra.mxu0 0
      %7635 = vmatprep.subr.bf16.mxu0 0
      %7636 = vmatpush1.bf16.xpose.msra.mxu0 0
      %7637 = vmatprep.subr.bf16.mxu0 0
      %7638 = vmatpush1.bf16.xpose.msra.mxu0 0
      %7639 = vmatprep.subr.bf16.mxu0 0
      %7640 = vmatpush1.bf16.xpose.msra.mxu0 0
      %7641 = vmatprep.mubr.bf16.mxu0 0
      %7642 = vmatmul.mubr.bf16.gmra.mrb[0].mxu0 %v7381
      %v7643 = vpop.f32.mrb[0].mxu0
      %v7644 = vadd.f32 0.0, %v7643
      %v7645 = vpop.f32.mrb[0].mxu0
      %v7646 = vpop.f32.mrb[0].mxu0
      %v7647 = vpop.f32.mrb[0].mxu0
      %7648 = vdwg.mxu0
      %7649 = vmatprep.subr.bf16.mxu0 0
      %7650 = vmatpush1.bf16.xpose.msra.mxu0 %v7425
      %7651 = vmatprep.subr.bf16.mxu0 0
      %7652 = vmatpush1.bf16.xpose.msra.mxu0 %v7426
      %7653 = vmatprep.subr.bf16.mxu0 0
      %7654 = vmatpush1.bf16.xpose.msra.mxu0 %v7427
      %7655 = vmatprep.subr.bf16.mxu0 0
      %7656 = vmatpush1.bf16.xpose.msra.mxu0 %v7428
      %7657 = vmatprep.subr.bf16.mxu0 0
      %7658 = vmatpush1.bf16.xpose.msra.mxu0 %v7429
      %7659 = vmatprep.subr.bf16.mxu0 0
      %7660 = vmatpush1.bf16.xpose.msra.mxu0 %v7430
      %7661 = vmatprep.subr.bf16.mxu0 0
      %7662 = vmatpush1.bf16.xpose.msra.mxu0 %v7431
      %7663 = vmatprep.subr.bf16.mxu0 0
      %7664 = vmatpush1.bf16.xpose.msra.mxu0 %v7432
      %7665 = vmatprep.subr.bf16.mxu0 0
      %7666 = vmatpush1.bf16.xpose.msra.mxu0 0
      %7667 = vmatprep.subr.bf16.mxu0 0
      %7668 = vmatpush1.bf16.xpose.msra.mxu0 0
      %7669 = vmatprep.subr.bf16.mxu0 0
      %7670 = vmatpush1.bf16.xpose.msra.mxu0 0
      %7671 = vmatprep.subr.bf16.mxu0 0
      %7672 = vmatpush1.bf16.xpose.msra.mxu0 0
      %7673 = vmatprep.subr.bf16.mxu0 0
      %7674 = vmatpush1.bf16.xpose.msra.mxu0 0
      %7675 = vmatprep.subr.bf16.mxu0 0
      %7676 = vmatpush1.bf16.xpose.msra.mxu0 0
      %7677 = vmatprep.subr.bf16.mxu0 0
      %7678 = vmatpush1.bf16.xpose.msra.mxu0 0
      %7679 = vmatprep.subr.bf16.mxu0 0
      %7680 = vmatpush1.bf16.xpose.msra.mxu0 0
      %7681 = vmatprep.mubr.bf16.mxu0 0
      %7682 = vmatmul.mubr.bf16.gmra.mrb[0].mxu0 %v7382
      %v7683 = vpop.f32.mrb[0].mxu0
      %v7684 = vadd.f32 0.0, %v7683
      %v7685 = vpop.f32.mrb[0].mxu0
      %v7686 = vpop.f32.mrb[0].mxu0
      %v7687 = vpop.f32.mrb[0].mxu0
      %7688 = vdwg.mxu0
      %7689 = vmatprep.subr.bf16.mxu0 0
      %7690 = vmatpush1.bf16.xpose.msra.mxu0 %v7433
      %7691 = vmatprep.subr.bf16.mxu0 0
      %7692 = vmatpush1.bf16.xpose.msra.mxu0 %v7434
      %7693 = vmatprep.subr.bf16.mxu0 0
      %7694 = vmatpush1.bf16.xpose.msra.mxu0 %v7435
      %7695 = vmatprep.subr.bf16.mxu0 0
      %7696 = vmatpush1.bf16.xpose.msra.mxu0 %v7436
      %7697 = vmatprep.subr.bf16.mxu0 0
      %7698 = vmatpush1.bf16.xpose.msra.mxu0 %v7437
      %7699 = vmatprep.subr.bf16.mxu0 0
      %7700 = vmatpush1.bf16.xpose.msra.mxu0 %v7438
      %7701 = vmatprep.subr.bf16.mxu0 0
      %7702 = vmatpush1.bf16.xpose.msra.mxu0 %v7439
      %7703 = vmatprep.subr.bf16.mxu0 0
      %7704 = vmatpush1.bf16.xpose.msra.mxu0 %v7440
      %7705 = vmatprep.subr.bf16.mxu0 0
      %7706 = vmatpush1.bf16.xpose.msra.mxu0 0
      %7707 = vmatprep.subr.bf16.mxu0 0
      %7708 = vmatpush1.bf16.xpose.msra.mxu0 0
      %7709 = vmatprep.subr.bf16.mxu0 0
      %7710 = vmatpush1.bf16.xpose.msra.mxu0 0
      %7711 = vmatprep.subr.bf16.mxu0 0
      %7712 = vmatpush1.bf16.xpose.msra.mxu0 0
      %7713 = vmatprep.subr.bf16.mxu0 0
      %7714 = vmatpush1.bf16.xpose.msra.mxu0 0
      %7715 = vmatprep.subr.bf16.mxu0 0
      %7716 = vmatpush1.bf16.xpose.msra.mxu0 0
      %7717 = vmatprep.subr.bf16.mxu0 0
      %7718 = vmatpush1.bf16.xpose.msra.mxu0 0
      %7719 = vmatprep.subr.bf16.mxu0 0
      %7720 = vmatpush1.bf16.xpose.msra.mxu0 0
      %7721 = vmatprep.mubr.bf16.mxu0 0
      %7722 = vmatmul.mubr.bf16.gmra.mrb[0].mxu0 %v7383
      %v7723 = vpop.f32.mrb[0].mxu0
      %v7724 = vadd.f32 0.0, %v7723
      %v7725 = vpop.f32.mrb[0].mxu0
      %v7726 = vpop.f32.mrb[0].mxu0
      %v7727 = vpop.f32.mrb[0].mxu0
      %7728 = vdwg.mxu0
      %7729 = vmatprep.subr.bf16.mxu0 0
      %7730 = vmatpush1.bf16.xpose.msra.mxu0 %v7441
      %7731 = vmatprep.subr.bf16.mxu0 0
      %7732 = vmatpush1.bf16.xpose.msra.mxu0 %v7442
      %7733 = vmatprep.subr.bf16.mxu0 0
      %7734 = vmatpush1.bf16.xpose.msra.mxu0 %v7443
      %7735 = vmatprep.subr.bf16.mxu0 0
      %7736 = vmatpush1.bf16.xpose.msra.mxu0 %v7444
      %7737 = vmatprep.subr.bf16.mxu0 0
      %7738 = vmatpush1.bf16.xpose.msra.mxu0 %v7445
      %7739 = vmatprep.subr.bf16.mxu0 0
      %7740 = vmatpush1.bf16.xpose.msra.mxu0 %v7446
      %7741 = vmatprep.subr.bf16.mxu0 0
      %7742 = vmatpush1.bf16.xpose.msra.mxu0 %v7447
      %7743 = vmatprep.subr.bf16.mxu0 0
      %7744 = vmatpush1.bf16.xpose.msra.mxu0 %v7448
      %7745 = vmatprep.subr.bf16.mxu0 0
      %7746 = vmatpush1.bf16.xpose.msra.mxu0 0
      %7747 = vmatprep.subr.bf16.mxu0 0
      %7748 = vmatpush1.bf16.xpose.msra.mxu0 0
      %7749 = vmatprep.subr.bf16.mxu0 0
      %7750 = vmatpush1.bf16.xpose.msra.mxu0 0
      %7751 = vmatprep.subr.bf16.mxu0 0
      %7752 = vmatpush1.bf16.xpose.msra.mxu0 0
      %7753 = vmatprep.subr.bf16.mxu0 0
      %7754 = vmatpush1.bf16.xpose.msra.mxu0 0
      %7755 = vmatprep.subr.bf16.mxu0 0
      %7756 = vmatpush1.bf16.xpose.msra.mxu0 0
      %7757 = vmatprep.subr.bf16.mxu0 0
      %7758 = vmatpush1.bf16.xpose.msra.mxu0 0
      %7759 = vmatprep.subr.bf16.mxu0 0
      %7760 = vmatpush1.bf16.xpose.msra.mxu0 0
      %7761 = vmatprep.mubr.bf16.mxu0 0
      %7762 = vmatmul.mubr.bf16.gmra.mrb[0].mxu0 %v7384
      %v7763 = vpop.f32.mrb[0].mxu0
      %v7764 = vadd.f32 0.0, %v7763
      %v7765 = vpop.f32.mrb[0].mxu0
      %v7766 = vpop.f32.mrb[0].mxu0
      %v7767 = vpop.f32.mrb[0].mxu0
      %7768 = vdwg.mxu0
      %v7770 = vrot.slane %v7524, 4
      %v7773 = vrot.slane %v7604, 4
      %v7776 = vrot.slane %v7684, 4
      %v7779 = vrot.slane %v7764, 4
      %v7781 = vsel %vm615, %v7484, %v7770
      %v7782 = vsel %vm615, %v7564, %v7773
      %v7783 = vsel %vm615, %v7644, %v7776
      %v7784 = vsel %vm615, %v7724, %v7779
      %s7785 = scalar_lea.vmem %s7, 16
      %v7786 = vld [vmem:[%s7785] sm:$0xf]
      %v7787 = vld [vmem:[%s7785 + $0x4] sm:$0xf]
      %v7788 = vld [vmem:[%s7785 + $0x8] sm:$0xf]
      %v7789 = vld [vmem:[%s7785 + $0xc] sm:$0xf]
      %v7790 = vpack.c.bf16 %v7782, %v7781
      %v7791 = vpack.c.bf16 %v7784, %v7783
      %7793 = vset.pattern.permute.xlu0 0
      %7794 = vperm.xlu0 %7793, %v4648
      %v7795 = vpop.permute.xlu0 %7794
      %7798 = vset.pattern.permute.xlu0 0
      %7799 = vperm.xlu0 %7798, %v4649
      %v7800 = vpop.permute.xlu0 %7799
      %7803 = vset.pattern.permute.xlu0 0
      %7804 = vperm.xlu0 %7803, %v4650
      %v7805 = vpop.permute.xlu0 %7804
      %7808 = vset.pattern.permute.xlu0 0
      %7809 = vperm.xlu0 %7808, %v4651
      %v7810 = vpop.permute.xlu0 %7809
      %v7816 = vunpack.c.l.b16 %v7786
      %v7817 = vunpack.c.l.b16 %v7787
      %v7818 = vunpack.c.l.b16 %v7788
      %v7819 = vunpack.c.l.b16 %v7789
      %v7820 = vpack.c.b16 %v7817, %v7816
      %v7821 = vpack.c.b16 %v7819, %v7818
      %v7823 = vsel %vm1001, %v7820, 0
      %v7826 = vsel %vm1001, %v7821, 0
      %7828 = vmatprep.subr.bf16.mxu0 0
      %7829 = vmatpush1.bf16.msra.mxu0 %v7790
      %7830 = vmatprep.subr.bf16.mxu0 0
      %7831 = vmatpush1.bf16.msra.mxu0 %v7791
      %7832 = vmatprep.subr.bf16.mxu0 0
      %7833 = vmatpush1.bf16.msra.mxu0 0
      %7834 = vmatprep.subr.bf16.mxu0 0
      %7835 = vmatpush1.bf16.msra.mxu0 0
      %7836 = vmatprep.subr.bf16.mxu0 0
      %7837 = vmatpush1.bf16.msra.mxu0 0
      %7838 = vmatprep.subr.bf16.mxu0 0
      %7839 = vmatpush1.bf16.msra.mxu0 0
      %7840 = vmatprep.subr.bf16.mxu0 0
      %7841 = vmatpush1.bf16.msra.mxu0 0
      %7842 = vmatprep.subr.bf16.mxu0 0
      %7843 = vmatpush1.bf16.msra.mxu0 0
      %7844 = vmatprep.subr.bf16.mxu0 0
      %7845 = vmatpush1.bf16.msra.mxu0 0
      %7846 = vmatprep.subr.bf16.mxu0 0
      %7847 = vmatpush1.bf16.msra.mxu0 0
      %7848 = vmatprep.subr.bf16.mxu0 0
      %7849 = vmatpush1.bf16.msra.mxu0 0
      %7850 = vmatprep.subr.bf16.mxu0 0
      %7851 = vmatpush1.bf16.msra.mxu0 0
      %7852 = vmatprep.subr.bf16.mxu0 0
      %7853 = vmatpush1.bf16.msra.mxu0 0
      %7854 = vmatprep.subr.bf16.mxu0 0
      %7855 = vmatpush1.bf16.msra.mxu0 0
      %7856 = vmatprep.subr.bf16.mxu0 0
      %7857 = vmatpush1.bf16.msra.mxu0 0
      %7858 = vmatprep.subr.bf16.mxu0 0
      %7859 = vmatpush1.bf16.msra.mxu0 0
      %7860 = vmatprep.mubr.bf16.mxu0 0
      %7861 = vmatmul.mubr.bf16.gmra.mrb[0].mxu0 %v7823
      %v7862 = vpop.f32.mrb[0].mxu0
      %v7863 = vadd.f32 %v7795, %v7862
      %v7864 = vpop.f32.mrb[0].mxu0
      %v7865 = vpop.f32.mrb[0].mxu0
      %v7866 = vadd.f32 %v7800, %v7865
      %v7867 = vpop.f32.mrb[0].mxu0
      %7868 = vmatprep.mubr.bf16.mxu0 0
      %7869 = vmatmul.mubr.bf16.gmra.mrb[0].mxu0 %v7826
      %v7870 = vpop.f32.mrb[0].mxu0
      %v7871 = vadd.f32 %v7805, %v7870
      %v7872 = vpop.f32.mrb[0].mxu0
      %v7873 = vpop.f32.mrb[0].mxu0
      %v7874 = vadd.f32 %v7810, %v7873
      %v7875 = vpop.f32.mrb[0].mxu0
      %7876 = vdwg.mxu0
      %v7877 = vadd.f32 %v4643, %v7863
      %v7878 = vadd.f32 %v4644, %v7866
      %v7879 = vadd.f32 %v4645, %v7871
      %v7880 = vadd.f32 %v4646, %v7874
      %v7881 = vadd.f32 %v7877, %v7878
      %v7882 = vadd.f32 %v7881, %v7879
      %v7883 = vadd.f32 %v7882, %v7880
      %v7884 = vrot.slane %v7883, 4
      %v7885 = vadd.f32 %v7883, %v7884
      %v7886 = vrot.slane %v7885, 2
      %v7887 = vadd.f32 %v7885, %v7886
      %v7888 = vrot.slane %v7887, 1
      %v7889 = vadd.f32 %v7887, %v7888
      %v7890 = vmul.f32 %v7889, %v4123
      %v7891 = vsub.f32 %v7877, %v7890
      %v7892 = vsub.f32 %v7878, %v7890
      %v7893 = vsub.f32 %v7879, %v7890
      %v7894 = vsub.f32 %v7880, %v7890
      %v7895 = vmul.f32 %v7891, %v7891
      %v7896 = vmul.f32 %v7892, %v7892
      %v7897 = vmul.f32 %v7893, %v7893
      %v7898 = vmul.f32 %v7894, %v7894
      %v7899 = vadd.f32 %v7895, %v7896
      %v7900 = vadd.f32 %v7899, %v7897
      %v7901 = vadd.f32 %v7900, %v7898
      %v7902 = vrot.slane %v7901, 4
      %v7903 = vadd.f32 %v7901, %v7902
      %v7904 = vrot.slane %v7903, 2
      %v7905 = vadd.f32 %v7903, %v7904
      %v7906 = vrot.slane %v7905, 1
      %v7907 = vadd.f32 %v7905, %v7906
      %v7908 = vmul.f32 %v7907, %v4123
      %v7909 = vadd.f32 %v7908, 1e-05
      %v7910 = vrsqrt.pop %v7909
      %v7911 = vmul.f32 %v7891, %v7910
      %v7912 = vmul.f32 %v7892, %v7910
      %v7913 = vmul.f32 %v7893, %v7910
      %v7914 = vmul.f32 %v7894, %v7910
      %7915 = vset.pattern.permute.xlu0 1
      %7916 = vperm.xlu0 %7915, %v4648
      %v7917 = vpop.permute.xlu0 %7916
      %7919 = vset.pattern.permute.xlu0 1
      %7920 = vperm.xlu0 %7919, %v4649
      %v7921 = vpop.permute.xlu0 %7920
      %7923 = vset.pattern.permute.xlu0 1
      %7924 = vperm.xlu0 %7923, %v4650
      %v7925 = vpop.permute.xlu0 %7924
      %7927 = vset.pattern.permute.xlu0 1
      %7928 = vperm.xlu0 %7927, %v4651
      %v7929 = vpop.permute.xlu0 %7928
      %v7931 = vmul.f32 %v7911, %v7917
      %v7932 = vmul.f32 %v7912, %v7921
      %v7933 = vmul.f32 %v7913, %v7925
      %v7934 = vmul.f32 %v7914, %v7929
      %7935 = vset.pattern.permute.xlu0 2
      %7936 = vperm.xlu0 %7935, %v4648
      %v7937 = vpop.permute.xlu0 %7936
      %7939 = vset.pattern.permute.xlu0 2
      %7940 = vperm.xlu0 %7939, %v4649
      %v7941 = vpop.permute.xlu0 %7940
      %7943 = vset.pattern.permute.xlu0 2
      %7944 = vperm.xlu0 %7943, %v4650
      %v7945 = vpop.permute.xlu0 %7944
      %7947 = vset.pattern.permute.xlu0 2
      %7948 = vperm.xlu0 %7947, %v4651
      %v7949 = vpop.permute.xlu0 %7948
      %v7951 = vadd.f32 %v7931, %v7937
      %v7952 = vadd.f32 %v7932, %v7941
      %v7953 = vadd.f32 %v7933, %v7945
      %v7954 = vadd.f32 %v7934, %v7949
      %s7955 = scalar_lea.vmem %s8, 64
      %v7956 = vld [vmem:[%s7955] sm:$0xf]
      %v7957 = vld [vmem:[%s7955 + $0x4] sm:$0xf]
      %v7958 = vld [vmem:[%s7955 + $0x8] sm:$0xf]
      %v7959 = vld [vmem:[%s7955 + $0xc] sm:$0xf]
      %v7960 = vld [vmem:[%s7955 + $0x10] sm:$0xf]
      %v7961 = vld [vmem:[%s7955 + $0x14] sm:$0xf]
      %v7962 = vld [vmem:[%s7955 + $0x18] sm:$0xf]
      %v7963 = vld [vmem:[%s7955 + $0x1c] sm:$0xf]
      %v7964 = vld [vmem:[%s7955 + $0x20] sm:$0xf]
      %v7965 = vld [vmem:[%s7955 + $0x24] sm:$0xf]
      %v7966 = vld [vmem:[%s7955 + $0x28] sm:$0xf]
      %v7967 = vld [vmem:[%s7955 + $0x2c] sm:$0xf]
      %v7968 = vld [vmem:[%s7955 + $0x30] sm:$0xf]
      %v7969 = vld [vmem:[%s7955 + $0x34] sm:$0xf]
      %v7970 = vld [vmem:[%s7955 + $0x38] sm:$0xf]
      %v7971 = vld [vmem:[%s7955 + $0x3c] sm:$0xf]
      %v7972 = vpack.c.bf16 %v7952, %v7951
      %v7973 = vpack.c.bf16 %v7954, %v7953
      %s7974 = scalar_lea.vmem %s9, 128
      %v7975 = vld [vmem:[%s7974] sm:$0xff]
      %v7976 = vld [vmem:[%s7974 + $0x8] sm:$0xff]
      %v7977 = vld [vmem:[%s7974 + $0x10] sm:$0xff]
      %v7978 = vld [vmem:[%s7974 + $0x18] sm:$0xff]
      %v7979 = vld [vmem:[%s7974 + $0x20] sm:$0xff]
      %v7980 = vld [vmem:[%s7974 + $0x28] sm:$0xff]
      %v7981 = vld [vmem:[%s7974 + $0x30] sm:$0xff]
      %v7982 = vld [vmem:[%s7974 + $0x38] sm:$0xff]
      %v7983 = vld [vmem:[%s7974 + $0x40] sm:$0xff]
      %v7984 = vld [vmem:[%s7974 + $0x48] sm:$0xff]
      %v7985 = vld [vmem:[%s7974 + $0x50] sm:$0xff]
      %v7986 = vld [vmem:[%s7974 + $0x58] sm:$0xff]
      %v7987 = vld [vmem:[%s7974 + $0x60] sm:$0xff]
      %v7988 = vld [vmem:[%s7974 + $0x68] sm:$0xff]
      %v7989 = vld [vmem:[%s7974 + $0x70] sm:$0xff]
      %v7990 = vld [vmem:[%s7974 + $0x78] sm:$0xff]
      %7992 = vset.pattern.permute.xlu0 0
      %7993 = vperm.xlu0 %7992, %v7975
      %v7994 = vpop.permute.xlu0 %7993
      %7997 = vset.pattern.permute.xlu0 0
      %7998 = vperm.xlu0 %7997, %v7976
      %v7999 = vpop.permute.xlu0 %7998
      %8002 = vset.pattern.permute.xlu0 0
      %8003 = vperm.xlu0 %8002, %v7977
      %v8004 = vpop.permute.xlu0 %8003
      %8007 = vset.pattern.permute.xlu0 0
      %8008 = vperm.xlu0 %8007, %v7978
      %v8009 = vpop.permute.xlu0 %8008
      %8012 = vset.pattern.permute.xlu0 0
      %8013 = vperm.xlu0 %8012, %v7979
      %v8014 = vpop.permute.xlu0 %8013
      %8017 = vset.pattern.permute.xlu0 0
      %8018 = vperm.xlu0 %8017, %v7980
      %v8019 = vpop.permute.xlu0 %8018
      %8022 = vset.pattern.permute.xlu0 0
      %8023 = vperm.xlu0 %8022, %v7981
      %v8024 = vpop.permute.xlu0 %8023
      %8027 = vset.pattern.permute.xlu0 0
      %8028 = vperm.xlu0 %8027, %v7982
      %v8029 = vpop.permute.xlu0 %8028
      %8032 = vset.pattern.permute.xlu0 0
      %8033 = vperm.xlu0 %8032, %v7983
      %v8034 = vpop.permute.xlu0 %8033
      %8037 = vset.pattern.permute.xlu0 0
      %8038 = vperm.xlu0 %8037, %v7984
      %v8039 = vpop.permute.xlu0 %8038
      %8042 = vset.pattern.permute.xlu0 0
      %8043 = vperm.xlu0 %8042, %v7985
      %v8044 = vpop.permute.xlu0 %8043
      %8047 = vset.pattern.permute.xlu0 0
      %8048 = vperm.xlu0 %8047, %v7986
      %v8049 = vpop.permute.xlu0 %8048
      %8052 = vset.pattern.permute.xlu0 0
      %8053 = vperm.xlu0 %8052, %v7987
      %v8054 = vpop.permute.xlu0 %8053
      %8057 = vset.pattern.permute.xlu0 0
      %8058 = vperm.xlu0 %8057, %v7988
      %v8059 = vpop.permute.xlu0 %8058
      %8062 = vset.pattern.permute.xlu0 0
      %8063 = vperm.xlu0 %8062, %v7989
      %v8064 = vpop.permute.xlu0 %8063
      %8067 = vset.pattern.permute.xlu0 0
      %8068 = vperm.xlu0 %8067, %v7990
      %v8069 = vpop.permute.xlu0 %8068
      %v8087 = vunpack.c.l.b16 %v7956
      %v8088 = vunpack.c.l.b16 %v7957
      %v8089 = vunpack.c.l.b16 %v7958
      %v8090 = vunpack.c.l.b16 %v7959
      %v8091 = vunpack.c.l.b16 %v7960
      %v8092 = vunpack.c.l.b16 %v7961
      %v8093 = vunpack.c.l.b16 %v7962
      %v8094 = vunpack.c.l.b16 %v7963
      %v8095 = vunpack.c.l.b16 %v7964
      %v8096 = vunpack.c.l.b16 %v7965
      %v8097 = vunpack.c.l.b16 %v7966
      %v8098 = vunpack.c.l.b16 %v7967
      %v8099 = vunpack.c.l.b16 %v7968
      %v8100 = vunpack.c.l.b16 %v7969
      %v8101 = vunpack.c.l.b16 %v7970
      %v8102 = vunpack.c.l.b16 %v7971
      %v8103 = vpack.c.b16 %v8088, %v8087
      %v8104 = vpack.c.b16 %v8090, %v8089
      %v8105 = vpack.c.b16 %v8092, %v8091
      %v8106 = vpack.c.b16 %v8094, %v8093
      %v8107 = vpack.c.b16 %v8096, %v8095
      %v8108 = vpack.c.b16 %v8098, %v8097
      %v8109 = vpack.c.b16 %v8100, %v8099
      %v8110 = vpack.c.b16 %v8102, %v8101
      %v8112 = vsel %vm1001, %v8103, 0
      %v8115 = vsel %vm1001, %v8104, 0
      %v8118 = vsel %vm1001, %v8105, 0
      %v8121 = vsel %vm1001, %v8106, 0
      %v8124 = vsel %vm1001, %v8107, 0
      %v8127 = vsel %vm1001, %v8108, 0
      %v8130 = vsel %vm1001, %v8109, 0
      %v8133 = vsel %vm1001, %v8110, 0
      %8135 = vmatprep.subr.bf16.mxu0 0
      %8136 = vmatpush1.bf16.msra.mxu0 %v7972
      %8137 = vmatprep.subr.bf16.mxu0 0
      %8138 = vmatpush1.bf16.msra.mxu0 %v7973
      %8139 = vmatprep.subr.bf16.mxu0 0
      %8140 = vmatpush1.bf16.msra.mxu0 0
      %8141 = vmatprep.subr.bf16.mxu0 0
      %8142 = vmatpush1.bf16.msra.mxu0 0
      %8143 = vmatprep.subr.bf16.mxu0 0
      %8144 = vmatpush1.bf16.msra.mxu0 0
      %8145 = vmatprep.subr.bf16.mxu0 0
      %8146 = vmatpush1.bf16.msra.mxu0 0
      %8147 = vmatprep.subr.bf16.mxu0 0
      %8148 = vmatpush1.bf16.msra.mxu0 0
      %8149 = vmatprep.subr.bf16.mxu0 0
      %8150 = vmatpush1.bf16.msra.mxu0 0
      %8151 = vmatprep.subr.bf16.mxu0 0
      %8152 = vmatpush1.bf16.msra.mxu0 0
      %8153 = vmatprep.subr.bf16.mxu0 0
      %8154 = vmatpush1.bf16.msra.mxu0 0
      %8155 = vmatprep.subr.bf16.mxu0 0
      %8156 = vmatpush1.bf16.msra.mxu0 0
      %8157 = vmatprep.subr.bf16.mxu0 0
      %8158 = vmatpush1.bf16.msra.mxu0 0
      %8159 = vmatprep.subr.bf16.mxu0 0
      %8160 = vmatpush1.bf16.msra.mxu0 0
      %8161 = vmatprep.subr.bf16.mxu0 0
      %8162 = vmatpush1.bf16.msra.mxu0 0
      %8163 = vmatprep.subr.bf16.mxu0 0
      %8164 = vmatpush1.bf16.msra.mxu0 0
      %8165 = vmatprep.subr.bf16.mxu0 0
      %8166 = vmatpush1.bf16.msra.mxu0 0
      %8167 = vmatprep.mubr.bf16.mxu0 0
      %8168 = vmatmul.mubr.bf16.gmra.mrb[0].mxu0 %v8112
      %v8169 = vpop.f32.mrb[0].mxu0
      %v8170 = vadd.f32 %v7994, %v8169
      %v8171 = vpop.f32.mrb[0].mxu0
      %v8172 = vpop.f32.mrb[0].mxu0
      %v8173 = vadd.f32 %v7999, %v8172
      %v8174 = vpop.f32.mrb[0].mxu0
      %8175 = vmatprep.mubr.bf16.mxu0 0
      %8176 = vmatmul.mubr.bf16.gmra.mrb[0].mxu0 %v8115
      %v8177 = vpop.f32.mrb[0].mxu0
      %v8178 = vadd.f32 %v8004, %v8177
      %v8179 = vpop.f32.mrb[0].mxu0
      %v8180 = vpop.f32.mrb[0].mxu0
      %v8181 = vadd.f32 %v8009, %v8180
      %v8182 = vpop.f32.mrb[0].mxu0
      %8183 = vmatprep.mubr.bf16.mxu0 0
      %8184 = vmatmul.mubr.bf16.gmra.mrb[0].mxu0 %v8118
      %v8185 = vpop.f32.mrb[0].mxu0
      %v8186 = vadd.f32 %v8014, %v8185
      %v8187 = vpop.f32.mrb[0].mxu0
      %v8188 = vpop.f32.mrb[0].mxu0
      %v8189 = vadd.f32 %v8019, %v8188
      %v8190 = vpop.f32.mrb[0].mxu0
      %8191 = vmatprep.mubr.bf16.mxu0 0
      %8192 = vmatmul.mubr.bf16.gmra.mrb[0].mxu0 %v8121
      %v8193 = vpop.f32.mrb[0].mxu0
      %v8194 = vadd.f32 %v8024, %v8193
      %v8195 = vpop.f32.mrb[0].mxu0
      %v8196 = vpop.f32.mrb[0].mxu0
      %v8197 = vadd.f32 %v8029, %v8196
      %v8198 = vpop.f32.mrb[0].mxu0
      %8199 = vmatprep.mubr.bf16.mxu0 0
      %8200 = vmatmul.mubr.bf16.gmra.mrb[0].mxu0 %v8124
      %v8201 = vpop.f32.mrb[0].mxu0
      %v8202 = vadd.f32 %v8034, %v8201
      %v8203 = vpop.f32.mrb[0].mxu0
      %v8204 = vpop.f32.mrb[0].mxu0
      %v8205 = vadd.f32 %v8039, %v8204
      %v8206 = vpop.f32.mrb[0].mxu0
      %8207 = vmatprep.mubr.bf16.mxu0 0
      %8208 = vmatmul.mubr.bf16.gmra.mrb[0].mxu0 %v8127
      %v8209 = vpop.f32.mrb[0].mxu0
      %v8210 = vadd.f32 %v8044, %v8209
      %v8211 = vpop.f32.mrb[0].mxu0
      %v8212 = vpop.f32.mrb[0].mxu0
      %v8213 = vadd.f32 %v8049, %v8212
      %v8214 = vpop.f32.mrb[0].mxu0
      %8215 = vmatprep.mubr.bf16.mxu0 0
      %8216 = vmatmul.mubr.bf16.gmra.mrb[0].mxu0 %v8130
      %v8217 = vpop.f32.mrb[0].mxu0
      %v8218 = vadd.f32 %v8054, %v8217
      %v8219 = vpop.f32.mrb[0].mxu0
      %v8220 = vpop.f32.mrb[0].mxu0
      %v8221 = vadd.f32 %v8059, %v8220
      %v8222 = vpop.f32.mrb[0].mxu0
      %8223 = vmatprep.mubr.bf16.mxu0 0
      %8224 = vmatmul.mubr.bf16.gmra.mrb[0].mxu0 %v8133
      %v8225 = vpop.f32.mrb[0].mxu0
      %v8226 = vadd.f32 %v8064, %v8225
      %v8227 = vpop.f32.mrb[0].mxu0
      %v8228 = vpop.f32.mrb[0].mxu0
      %v8229 = vadd.f32 %v8069, %v8228
      %v8230 = vpop.f32.mrb[0].mxu0
      %8231 = vdwg.mxu0
      %v8232 = vmax.f32 %v8170, 0.0
      %v8233 = vmax.f32 %v8173, 0.0
      %v8234 = vmax.f32 %v8178, 0.0
      %v8235 = vmax.f32 %v8181, 0.0
      %v8236 = vmax.f32 %v8186, 0.0
      %v8237 = vmax.f32 %v8189, 0.0
      %v8238 = vmax.f32 %v8194, 0.0
      %v8239 = vmax.f32 %v8197, 0.0
      %v8240 = vmax.f32 %v8202, 0.0
      %v8241 = vmax.f32 %v8205, 0.0
      %v8242 = vmax.f32 %v8210, 0.0
      %v8243 = vmax.f32 %v8213, 0.0
      %v8244 = vmax.f32 %v8218, 0.0
      %v8245 = vmax.f32 %v8221, 0.0
      %v8246 = vmax.f32 %v8226, 0.0
      %v8247 = vmax.f32 %v8229, 0.0
      %s8248 = scalar_lea.vmem %s10, 16
      %v8249 = vld [vmem:[%s8248] sm:$0xf]
      %v8250 = vld [vmem:[%s8248 + $0x4] sm:$0xf]
      %v8251 = vld [vmem:[%s8248 + $0x8] sm:$0xf]
      %v8252 = vld [vmem:[%s8248 + $0xc] sm:$0xf]
      %v8253 = vpack.c.bf16 %v8233, %v8232
      %v8254 = vpack.c.bf16 %v8235, %v8234
      %v8255 = vpack.c.bf16 %v8237, %v8236
      %v8256 = vpack.c.bf16 %v8239, %v8238
      %v8257 = vpack.c.bf16 %v8241, %v8240
      %v8258 = vpack.c.bf16 %v8243, %v8242
      %v8259 = vpack.c.bf16 %v8245, %v8244
      %v8260 = vpack.c.bf16 %v8247, %v8246
      %8261 = vset.pattern.permute.xlu0 3
      %8262 = vperm.xlu0 %8261, %v4648
      %v8263 = vpop.permute.xlu0 %8262
      %8265 = vset.pattern.permute.xlu0 3
      %8266 = vperm.xlu0 %8265, %v4649
      %v8267 = vpop.permute.xlu0 %8266
      %8269 = vset.pattern.permute.xlu0 3
      %8270 = vperm.xlu0 %8269, %v4650
      %v8271 = vpop.permute.xlu0 %8270
      %8273 = vset.pattern.permute.xlu0 3
      %8274 = vperm.xlu0 %8273, %v4651
      %v8275 = vpop.permute.xlu0 %8274
      %v8281 = vunpack.c.l.b16 %v8249
      %v8282 = vunpack.c.l.b16 %v8250
      %v8283 = vunpack.c.l.b16 %v8251
      %v8284 = vunpack.c.l.b16 %v8252
      %v8285 = vpack.c.b16 %v8282, %v8281
      %v8286 = vpack.c.b16 %v8284, %v8283
      %8289 = vmatprep.subr.bf16.mxu0 0
      %8290 = vmatpush1.bf16.msra.mxu0 %v8253
      %8291 = vmatprep.subr.bf16.mxu0 0
      %8292 = vmatpush1.bf16.msra.mxu0 %v8254
      %8293 = vmatprep.subr.bf16.mxu0 0
      %8294 = vmatpush1.bf16.msra.mxu0 %v8255
      %8295 = vmatprep.subr.bf16.mxu0 0
      %8296 = vmatpush1.bf16.msra.mxu0 %v8256
      %8297 = vmatprep.subr.bf16.mxu0 0
      %8298 = vmatpush1.bf16.msra.mxu0 %v8257
      %8299 = vmatprep.subr.bf16.mxu0 0
      %8300 = vmatpush1.bf16.msra.mxu0 %v8258
      %8301 = vmatprep.subr.bf16.mxu0 0
      %8302 = vmatpush1.bf16.msra.mxu0 %v8259
      %8303 = vmatprep.subr.bf16.mxu0 0
      %8304 = vmatpush1.bf16.msra.mxu0 %v8260
      %8305 = vmatprep.subr.bf16.mxu0 0
      %8306 = vmatpush1.bf16.msra.mxu0 0
      %8307 = vmatprep.subr.bf16.mxu0 0
      %8308 = vmatpush1.bf16.msra.mxu0 0
      %8309 = vmatprep.subr.bf16.mxu0 0
      %8310 = vmatpush1.bf16.msra.mxu0 0
      %8311 = vmatprep.subr.bf16.mxu0 0
      %8312 = vmatpush1.bf16.msra.mxu0 0
      %8313 = vmatprep.subr.bf16.mxu0 0
      %8314 = vmatpush1.bf16.msra.mxu0 0
      %8315 = vmatprep.subr.bf16.mxu0 0
      %8316 = vmatpush1.bf16.msra.mxu0 0
      %8317 = vmatprep.subr.bf16.mxu0 0
      %8318 = vmatpush1.bf16.msra.mxu0 0
      %8319 = vmatprep.subr.bf16.mxu0 0
      %8320 = vmatpush1.bf16.msra.mxu0 0
      %8321 = vmatprep.mubr.bf16.mxu0 0
      %8322 = vmatmul.mubr.bf16.gmra.mrb[0].mxu0 %v8285
      %v8323 = vpop.f32.mrb[0].mxu0
      %v8324 = vadd.f32 %v8263, %v8323
      %v8325 = vpop.f32.mrb[0].mxu0
      %v8326 = vpop.f32.mrb[0].mxu0
      %v8327 = vadd.f32 %v8267, %v8326
      %v8328 = vpop.f32.mrb[0].mxu0
      %8329 = vmatprep.mubr.bf16.mxu0 0
      %8330 = vmatmul.mubr.bf16.gmra.mrb[0].mxu0 %v8286
      %v8331 = vpop.f32.mrb[0].mxu0
      %v8332 = vadd.f32 %v8271, %v8331
      %v8333 = vpop.f32.mrb[0].mxu0
      %v8334 = vpop.f32.mrb[0].mxu0
      %v8335 = vadd.f32 %v8275, %v8334
      %v8336 = vpop.f32.mrb[0].mxu0
      %8337 = vdwg.mxu0
      %v8338 = vadd.f32 %v7951, %v8324
      %v8339 = vadd.f32 %v7952, %v8327
      %v8340 = vadd.f32 %v7953, %v8332
      %v8341 = vadd.f32 %v7954, %v8335
      %v8342 = vadd.f32 %v8338, %v8339
      %v8343 = vadd.f32 %v8342, %v8340
      %v8344 = vadd.f32 %v8343, %v8341
      %v8345 = vrot.slane %v8344, 4
      %v8346 = vadd.f32 %v8344, %v8345
      %v8347 = vrot.slane %v8346, 2
      %v8348 = vadd.f32 %v8346, %v8347
      %v8349 = vrot.slane %v8348, 1
      %v8350 = vadd.f32 %v8348, %v8349
      %v8351 = vmul.f32 %v8350, %v4123
      %v8352 = vsub.f32 %v8338, %v8351
      %v8353 = vsub.f32 %v8339, %v8351
      %v8354 = vsub.f32 %v8340, %v8351
      %v8355 = vsub.f32 %v8341, %v8351
      %v8356 = vmul.f32 %v8352, %v8352
      %v8357 = vmul.f32 %v8353, %v8353
      %v8358 = vmul.f32 %v8354, %v8354
      %v8359 = vmul.f32 %v8355, %v8355
      %v8360 = vadd.f32 %v8356, %v8357
      %v8361 = vadd.f32 %v8360, %v8358
      %v8362 = vadd.f32 %v8361, %v8359
      %v8363 = vrot.slane %v8362, 4
      %v8364 = vadd.f32 %v8362, %v8363
      %v8365 = vrot.slane %v8364, 2
      %v8366 = vadd.f32 %v8364, %v8365
      %v8367 = vrot.slane %v8366, 1
      %v8368 = vadd.f32 %v8366, %v8367
      %v8369 = vmul.f32 %v8368, %v4123
      %v8370 = vadd.f32 %v8369, 1e-05
      %v8371 = vrsqrt.pop %v8370
      %v8372 = vmul.f32 %v8352, %v8371
      %v8373 = vmul.f32 %v8353, %v8371
      %v8374 = vmul.f32 %v8354, %v8371
      %v8375 = vmul.f32 %v8355, %v8371
      %8376 = vset.pattern.permute.xlu0 4
      %8377 = vperm.xlu0 %8376, %v4648
      %v8378 = vpop.permute.xlu0 %8377
      %8380 = vset.pattern.permute.xlu0 4
      %8381 = vperm.xlu0 %8380, %v4649
      %v8382 = vpop.permute.xlu0 %8381
      %8384 = vset.pattern.permute.xlu0 4
      %8385 = vperm.xlu0 %8384, %v4650
      %v8386 = vpop.permute.xlu0 %8385
      %8388 = vset.pattern.permute.xlu0 4
      %8389 = vperm.xlu0 %8388, %v4651
      %v8390 = vpop.permute.xlu0 %8389
      %v8392 = vmul.f32 %v8372, %v8378
      %v8393 = vmul.f32 %v8373, %v8382
      %v8394 = vmul.f32 %v8374, %v8386
      %v8395 = vmul.f32 %v8375, %v8390
      %8396 = vset.pattern.permute.xlu0 5
      %8397 = vperm.xlu0 %8396, %v4648
      %v8398 = vpop.permute.xlu0 %8397
      %8400 = vset.pattern.permute.xlu0 5
      %8401 = vperm.xlu0 %8400, %v4649
      %v8402 = vpop.permute.xlu0 %8401
      %8404 = vset.pattern.permute.xlu0 5
      %8405 = vperm.xlu0 %8404, %v4650
      %v8406 = vpop.permute.xlu0 %8405
      %8408 = vset.pattern.permute.xlu0 5
      %8409 = vperm.xlu0 %8408, %v4651
      %v8410 = vpop.permute.xlu0 %8409
      %v8412 = vadd.f32 %v8392, %v8398
      %v8413 = vadd.f32 %v8393, %v8402
      %v8414 = vadd.f32 %v8394, %v8406
      %v8415 = vadd.f32 %v8395, %v8410
      %v8416 = vld [vmem:[%s14] sm:$0xff]
      %v8417 = vld [vmem:[%s14 + $0x8] sm:$0xff]
      %8418 = vrot.lane.b32.xlu0 %v8412, 127
      %v8419 = vpop.permute.xlu0 %8418
      %8420 = vrot.lane.b32.xlu0 %v8413, 127
      %v8421 = vpop.permute.xlu0 %8420
      %8422 = vrot.lane.b32.xlu0 %v8414, 127
      %v8423 = vpop.permute.xlu0 %8422
      %8424 = vrot.lane.b32.xlu0 %v8415, 127
      %v8425 = vpop.permute.xlu0 %8424
      %vm8426 = vcmp.eq.s32.totalorder %v587, 127
      %v8427 = vsel %vm8426, 0.0, %v8419
      %v8428 = vsel %vm8426, 0.0, %v8421
      %v8429 = vsel %vm8426, 0.0, %v8423
      %v8430 = vsel %vm8426, 0.0, %v8425
      %v8431 = vld [vmem:[%s12] sm:$0xf]
      %v8432 = vld [vmem:[%s12 + $0x4] sm:$0xf]
      %v8433 = vpack.c.bf16 %v8413, %v8412
      %v8434 = vpack.c.bf16 %v8415, %v8414
      %8436 = vset.pattern.permute.xlu0 0
      %8437 = vperm.xlu0 %8436, %v8416
      %v8438 = vpop.permute.xlu0 %8437
      %8441 = vset.pattern.permute.xlu0 0
      %8442 = vperm.xlu0 %8441, %v8417
      %v8443 = vpop.permute.xlu0 %8442
      %v8447 = vunpack.c.l.b16 %v8431
      %v8448 = vunpack.c.l.b16 %v8432
      %v8449 = vpack.c.b16 %v8448, %v8447
      %v8451 = vsel %vm1001, %v8449, 0
      %8453 = vmatprep.subr.bf16.mxu0 0
      %8454 = vmatpush1.bf16.msra.mxu0 %v8433
      %8455 = vmatprep.subr.bf16.mxu0 0
      %8456 = vmatpush1.bf16.msra.mxu0 %v8434
      %8457 = vmatprep.subr.bf16.mxu0 0
      %8458 = vmatpush1.bf16.msra.mxu0 0
      %8459 = vmatprep.subr.bf16.mxu0 0
      %8460 = vmatpush1.bf16.msra.mxu0 0
      %8461 = vmatprep.subr.bf16.mxu0 0
      %8462 = vmatpush1.bf16.msra.mxu0 0
      %8463 = vmatprep.subr.bf16.mxu0 0
      %8464 = vmatpush1.bf16.msra.mxu0 0
      %8465 = vmatprep.subr.bf16.mxu0 0
      %8466 = vmatpush1.bf16.msra.mxu0 0
      %8467 = vmatprep.subr.bf16.mxu0 0
      %8468 = vmatpush1.bf16.msra.mxu0 0
      %8469 = vmatprep.subr.bf16.mxu0 0
      %8470 = vmatpush1.bf16.msra.mxu0 0
      %8471 = vmatprep.subr.bf16.mxu0 0
      %8472 = vmatpush1.bf16.msra.mxu0 0
      %8473 = vmatprep.subr.bf16.mxu0 0
      %8474 = vmatpush1.bf16.msra.mxu0 0
      %8475 = vmatprep.subr.bf16.mxu0 0
      %8476 = vmatpush1.bf16.msra.mxu0 0
      %8477 = vmatprep.subr.bf16.mxu0 0
      %8478 = vmatpush1.bf16.msra.mxu0 0
      %8479 = vmatprep.subr.bf16.mxu0 0
      %8480 = vmatpush1.bf16.msra.mxu0 0
      %8481 = vmatprep.subr.bf16.mxu0 0
      %8482 = vmatpush1.bf16.msra.mxu0 0
      %8483 = vmatprep.subr.bf16.mxu0 0
      %8484 = vmatpush1.bf16.msra.mxu0 0
      %8485 = vmatprep.mubr.bf16.mxu0 0
      %8486 = vmatmul.mubr.bf16.gmra.mrb[0].mxu0 %v8451
      %v8487 = vpop.f32.mrb[0].mxu0
      %v8488 = vadd.f32 %v8438, %v8487
      %v8489 = vpop.f32.mrb[0].mxu0
      %v8490 = vpop.f32.mrb[0].mxu0
      %v8491 = vadd.f32 %v8443, %v8490
      %v8492 = vpop.f32.mrb[0].mxu0
      %8493 = vdwg.mxu0
      %v8494 = vld [vmem:[%s13] sm:$0xf]
      %v8495 = vld [vmem:[%s13 + $0x4] sm:$0xf]
      %v8496 = vpack.c.bf16 %v8428, %v8427
      %v8497 = vpack.c.bf16 %v8430, %v8429
      %v8500 = vunpack.c.l.b16 %v8494
      %v8501 = vunpack.c.l.b16 %v8495
      %v8502 = vpack.c.b16 %v8501, %v8500
      %vm8503 = vcmask 523264
      %v8505 = vsel %vm8503, %v8502, 0
      %8507 = vmatprep.subr.bf16.mxu0 0
      %8508 = vmatpush1.bf16.msra.mxu0 %v8433
      %8509 = vmatprep.subr.bf16.mxu0 0
      %8510 = vmatpush1.bf16.msra.mxu0 %v8434
      %8511 = vmatprep.subr.bf16.mxu0 0
      %8512 = vmatpush1.bf16.msra.mxu0 %v8496
      %8513 = vmatprep.subr.bf16.mxu0 0
      %8514 = vmatpush1.bf16.msra.mxu0 %v8497
      %8515 = vmatprep.subr.bf16.mxu0 0
      %8516 = vmatpush1.bf16.msra.mxu0 0
      %8517 = vmatprep.subr.bf16.mxu0 0
      %8518 = vmatpush1.bf16.msra.mxu0 0
      %8519 = vmatprep.subr.bf16.mxu0 0
      %8520 = vmatpush1.bf16.msra.mxu0 0
      %8521 = vmatprep.subr.bf16.mxu0 0
      %8522 = vmatpush1.bf16.msra.mxu0 0
      %8523 = vmatprep.subr.bf16.mxu0 0
      %8524 = vmatpush1.bf16.msra.mxu0 0
      %8525 = vmatprep.subr.bf16.mxu0 0
      %8526 = vmatpush1.bf16.msra.mxu0 0
      %8527 = vmatprep.subr.bf16.mxu0 0
      %8528 = vmatpush1.bf16.msra.mxu0 0
      %8529 = vmatprep.subr.bf16.mxu0 0
      %8530 = vmatpush1.bf16.msra.mxu0 0
      %8531 = vmatprep.subr.bf16.mxu0 0
      %8532 = vmatpush1.bf16.msra.mxu0 0
      %8533 = vmatprep.subr.bf16.mxu0 0
      %8534 = vmatpush1.bf16.msra.mxu0 0
      %8535 = vmatprep.subr.bf16.mxu0 0
      %8536 = vmatpush1.bf16.msra.mxu0 0
      %8537 = vmatprep.subr.bf16.mxu0 0
      %8538 = vmatpush1.bf16.msra.mxu0 0
      %8539 = vmatprep.mubr.bf16.mxu0 0
      %8540 = vmatmul.mubr.bf16.gmra.mrb[0].mxu0 %v8505
      %v8541 = vpop.f32.mrb[0].mxu0
      %v8542 = vadd.f32 %v8438, %v8541
      %v8543 = vpop.f32.mrb[0].mxu0
      %v8544 = vpop.f32.mrb[0].mxu0
      %v8545 = vadd.f32 %v8443, %v8544
      %v8546 = vpop.f32.mrb[0].mxu0
      %8547 = vdwg.mxu0
      %v8548 = vmax.f32 %v8488, 0.0
      %v8549 = vmax.f32 %v8491, 0.0
      %8550 = vset.pattern.permute.xlu0 1
      %8551 = vperm.xlu0 %8550, %v8416
      %v8552 = vpop.permute.xlu0 %8551
      %8554 = vset.pattern.permute.xlu0 1
      %8555 = vperm.xlu0 %8554, %v8417
      %v8556 = vpop.permute.xlu0 %8555
      %v8558 = vmul.f32 %v8548, %v8552
      %v8559 = vmul.f32 %v8549, %v8556
      %8560 = vset.pattern.permute.xlu0 2
      %8561 = vperm.xlu0 %8560, %v8416
      %v8562 = vpop.permute.xlu0 %8561
      %8564 = vset.pattern.permute.xlu0 2
      %8565 = vperm.xlu0 %8564, %v8417
      %v8566 = vpop.permute.xlu0 %8565
      %v8568 = vadd.f32 %v8558, %v8562
      %v8569 = vadd.f32 %v8559, %v8566
      %v8570 = vmax.f32 %v8542, 0.0
      %v8571 = vmax.f32 %v8545, 0.0
      %v8572 = vmul.f32 %v8570, %v8552
      %v8573 = vmul.f32 %v8571, %v8556
      %v8574 = vadd.f32 %v8572, %v8562
      %v8575 = vadd.f32 %v8573, %v8566
      %v8576 = vld [vmem:[%s17] sm:$0xff]
      %8577 = vrot.lane.b32.xlu0 %v8568, 127
      %v8578 = vpop.permute.xlu0 %8577
      %8579 = vrot.lane.b32.xlu0 %v8569, 127
      %v8580 = vpop.permute.xlu0 %8579
      %v8581 = vsel %vm8426, 0.0, %v8578
      %v8582 = vsel %vm8426, 0.0, %v8580
      %v8583 = vld [vmem:[%s15] sm:$0xf]
      %v8584 = vpack.c.bf16 %v8569, %v8568
      %8586 = vset.pattern.permute.xlu0 0
      %8587 = vperm.xlu0 %8586, %v8576
      %v8588 = vpop.permute.xlu0 %8587
      %vm8590 = vcmask 130048
      %v8592 = vsel %vm8590, %v8583, 0
      %8594 = vmatprep.subr.bf16.mxu0 0
      %8595 = vmatpush1.bf16.msra.mxu0 %v8584
      %8596 = vmatprep.subr.bf16.mxu0 0
      %8597 = vmatpush1.bf16.msra.mxu0 0
      %8598 = vmatprep.subr.bf16.mxu0 0
      %8599 = vmatpush1.bf16.msra.mxu0 0
      %8600 = vmatprep.subr.bf16.mxu0 0
      %8601 = vmatpush1.bf16.msra.mxu0 0
      %8602 = vmatprep.subr.bf16.mxu0 0
      %8603 = vmatpush1.bf16.msra.mxu0 0
      %8604 = vmatprep.subr.bf16.mxu0 0
      %8605 = vmatpush1.bf16.msra.mxu0 0
      %8606 = vmatprep.subr.bf16.mxu0 0
      %8607 = vmatpush1.bf16.msra.mxu0 0
      %8608 = vmatprep.subr.bf16.mxu0 0
      %8609 = vmatpush1.bf16.msra.mxu0 0
      %8610 = vmatprep.subr.bf16.mxu0 0
      %8611 = vmatpush1.bf16.msra.mxu0 0
      %8612 = vmatprep.subr.bf16.mxu0 0
      %8613 = vmatpush1.bf16.msra.mxu0 0
      %8614 = vmatprep.subr.bf16.mxu0 0
      %8615 = vmatpush1.bf16.msra.mxu0 0
      %8616 = vmatprep.subr.bf16.mxu0 0
      %8617 = vmatpush1.bf16.msra.mxu0 0
      %8618 = vmatprep.subr.bf16.mxu0 0
      %8619 = vmatpush1.bf16.msra.mxu0 0
      %8620 = vmatprep.subr.bf16.mxu0 0
      %8621 = vmatpush1.bf16.msra.mxu0 0
      %8622 = vmatprep.subr.bf16.mxu0 0
      %8623 = vmatpush1.bf16.msra.mxu0 0
      %8624 = vmatprep.subr.bf16.mxu0 0
      %8625 = vmatpush1.bf16.msra.mxu0 0
      %8626 = vmatprep.mubr.bf16.mxu0 0
      %8627 = vmatmul.mubr.bf16.gmra.mrb[0].mxu0 %v8592
      %v8628 = vpop.f32.mrb[0].mxu0
      %v8629 = vadd.f32 %v8588, %v8628
      %v8630 = vpop.f32.mrb[0].mxu0
      %v8631 = vpop.f32.mrb[0].mxu0
      %v8632 = vpop.f32.mrb[0].mxu0
      %8633 = vdwg.mxu0
      %8634 = vst [vmem:[%s575] sm:$0xff] %v8629
      %v8635 = vld [vmem:[%s16] sm:$0xf]
      %v8636 = vpack.c.bf16 %v8575, %v8574
      %v8638 = vsel %vm1001, %v8635, 0
      %8640 = vmatprep.subr.bf16.mxu0 0
      %8641 = vmatpush1.bf16.msra.mxu0 %v8584
      %8642 = vmatprep.subr.bf16.mxu0 0
      %8643 = vmatpush1.bf16.msra.mxu0 %v8636
      %8644 = vmatprep.subr.bf16.mxu0 0
      %8645 = vmatpush1.bf16.msra.mxu0 0
      %8646 = vmatprep.subr.bf16.mxu0 0
      %8647 = vmatpush1.bf16.msra.mxu0 0
      %8648 = vmatprep.subr.bf16.mxu0 0
      %8649 = vmatpush1.bf16.msra.mxu0 0
      %8650 = vmatprep.subr.bf16.mxu0 0
      %8651 = vmatpush1.bf16.msra.mxu0 0
      %8652 = vmatprep.subr.bf16.mxu0 0
      %8653 = vmatpush1.bf16.msra.mxu0 0
      %8654 = vmatprep.subr.bf16.mxu0 0
      %8655 = vmatpush1.bf16.msra.mxu0 0
      %8656 = vmatprep.subr.bf16.mxu0 0
      %8657 = vmatpush1.bf16.msra.mxu0 0
      %8658 = vmatprep.subr.bf16.mxu0 0
      %8659 = vmatpush1.bf16.msra.mxu0 0
      %8660 = vmatprep.subr.bf16.mxu0 0
      %8661 = vmatpush1.bf16.msra.mxu0 0
      %8662 = vmatprep.subr.bf16.mxu0 0
      %8663 = vmatpush1.bf16.msra.mxu0 0
      %8664 = vmatprep.subr.bf16.mxu0 0
      %8665 = vmatpush1.bf16.msra.mxu0 0
      %8666 = vmatprep.subr.bf16.mxu0 0
      %8667 = vmatpush1.bf16.msra.mxu0 0
      %8668 = vmatprep.subr.bf16.mxu0 0
      %8669 = vmatpush1.bf16.msra.mxu0 0
      %8670 = vmatprep.subr.bf16.mxu0 0
      %8671 = vmatpush1.bf16.msra.mxu0 0
      %8672 = vmatprep.mubr.bf16.mxu0 0
      %8673 = vmatmul.mubr.bf16.gmra.mrb[0].mxu0 %v8638
      %v8674 = vpop.f32.mrb[0].mxu0
      %v8675 = vadd.f32 %v8588, %v8674
      %v8676 = vpop.f32.mrb[0].mxu0
      %v8677 = vpop.f32.mrb[0].mxu0
      %v8678 = vpop.f32.mrb[0].mxu0
      %8679 = vdwg.mxu0
      %s8680 = scalar_lea.vmem %s575, 8
      %8681 = vst [vmem:[%s8680] sm:$0xff] %v8675
      %v8682 = vld [vmem:[%s15] sm:$0xf]
      %v8684 = vsel %vm8590, %v8682, 0
      %8686 = vmatprep.subr.bf16.mxu0 0
      %8687 = vmatpush1.bf16.msra.mxu0 %v8636
      %8688 = vmatprep.subr.bf16.mxu0 0
      %8689 = vmatpush1.bf16.msra.mxu0 0
      %8690 = vmatprep.subr.bf16.mxu0 0
      %8691 = vmatpush1.bf16.msra.mxu0 0
      %8692 = vmatprep.subr.bf16.mxu0 0
      %8693 = vmatpush1.bf16.msra.mxu0 0
      %8694 = vmatprep.subr.bf16.mxu0 0
      %8695 = vmatpush1.bf16.msra.mxu0 0
      %8696 = vmatprep.subr.bf16.mxu0 0
      %8697 = vmatpush1.bf16.msra.mxu0 0
      %8698 = vmatprep.subr.bf16.mxu0 0
      %8699 = vmatpush1.bf16.msra.mxu0 0
      %8700 = vmatprep.subr.bf16.mxu0 0
      %8701 = vmatpush1.bf16.msra.mxu0 0
      %8702 = vmatprep.subr.bf16.mxu0 0
      %8703 = vmatpush1.bf16.msra.mxu0 0
      %8704 = vmatprep.subr.bf16.mxu0 0
      %8705 = vmatpush1.bf16.msra.mxu0 0
      %8706 = vmatprep.subr.bf16.mxu0 0
      %8707 = vmatpush1.bf16.msra.mxu0 0
      %8708 = vmatprep.subr.bf16.mxu0 0
      %8709 = vmatpush1.bf16.msra.mxu0 0
      %8710 = vmatprep.subr.bf16.mxu0 0
      %8711 = vmatpush1.bf16.msra.mxu0 0
      %8712 = vmatprep.subr.bf16.mxu0 0
      %8713 = vmatpush1.bf16.msra.mxu0 0
      %8714 = vmatprep.subr.bf16.mxu0 0
      %8715 = vmatpush1.bf16.msra.mxu0 0
      %8716 = vmatprep.subr.bf16.mxu0 0
      %8717 = vmatpush1.bf16.msra.mxu0 0
      %8718 = vmatprep.mubr.bf16.mxu0 0
      %8719 = vmatmul.mubr.bf16.gmra.mrb[0].mxu0 %v8684
      %v8720 = vpop.f32.mrb[0].mxu0
      %v8721 = vadd.f32 %v8588, %v8720
      %v8722 = vpop.f32.mrb[0].mxu0
      %v8723 = vpop.f32.mrb[0].mxu0
      %v8724 = vpop.f32.mrb[0].mxu0
      %8725 = vdwg.mxu0
      %s8726 = scalar_lea.vmem %s575, 16
      %8727 = vst [vmem:[%s8726] sm:$0xff] %v8721
      %v8728 = vld [vmem:[%s16] sm:$0xf]
      %v8729 = vpack.c.bf16 %v8582, %v8581
      %v8731 = vsel %vm1001, %v8728, 0
      %8733 = vmatprep.subr.bf16.mxu0 0
      %8734 = vmatpush1.bf16.msra.mxu0 %v8636
      %8735 = vmatprep.subr.bf16.mxu0 0
      %8736 = vmatpush1.bf16.msra.mxu0 %v8729
      %8737 = vmatprep.subr.bf16.mxu0 0
      %8738 = vmatpush1.bf16.msra.mxu0 0
      %8739 = vmatprep.subr.bf16.mxu0 0
      %8740 = vmatpush1.bf16.msra.mxu0 0
      %8741 = vmatprep.subr.bf16.mxu0 0
      %8742 = vmatpush1.bf16.msra.mxu0 0
      %8743 = vmatprep.subr.bf16.mxu0 0
      %8744 = vmatpush1.bf16.msra.mxu0 0
      %8745 = vmatprep.subr.bf16.mxu0 0
      %8746 = vmatpush1.bf16.msra.mxu0 0
      %8747 = vmatprep.subr.bf16.mxu0 0
      %8748 = vmatpush1.bf16.msra.mxu0 0
      %8749 = vmatprep.subr.bf16.mxu0 0
      %8750 = vmatpush1.bf16.msra.mxu0 0
      %8751 = vmatprep.subr.bf16.mxu0 0
      %8752 = vmatpush1.bf16.msra.mxu0 0
      %8753 = vmatprep.subr.bf16.mxu0 0
      %8754 = vmatpush1.bf16.msra.mxu0 0
      %8755 = vmatprep.subr.bf16.mxu0 0
      %8756 = vmatpush1.bf16.msra.mxu0 0
      %8757 = vmatprep.subr.bf16.mxu0 0
      %8758 = vmatpush1.bf16.msra.mxu0 0
      %8759 = vmatprep.subr.bf16.mxu0 0
      %8760 = vmatpush1.bf16.msra.mxu0 0
      %8761 = vmatprep.subr.bf16.mxu0 0
      %8762 = vmatpush1.bf16.msra.mxu0 0
      %8763 = vmatprep.subr.bf16.mxu0 0
      %8764 = vmatpush1.bf16.msra.mxu0 0
      %8765 = vmatprep.mubr.bf16.mxu0 0
      %8766 = vmatmul.mubr.bf16.gmra.mrb[0].mxu0 %v8731
      %v8767 = vpop.f32.mrb[0].mxu0
      %v8768 = vadd.f32 %v8588, %v8767
      %v8769 = vpop.f32.mrb[0].mxu0
      %v8770 = vpop.f32.mrb[0].mxu0
      %v8771 = vpop.f32.mrb[0].mxu0
      %8772 = vdwg.mxu0
      %s8773 = scalar_lea.vmem %s575, 24
      %8774 = vst [vmem:[%s8773] sm:$0xff] %v8768
      %p8775 = scmp.lt.s32.totalorder %s29, 3
      %s8776 = scalar_select %p8775, %s29, 3
      %s8777 = smul.addr %s8776, 4
      %s8778 = smul.addr %s8777, 8
      %s8779 = scalar_lea.vmem %s18, %s8778
      // Predicated region
      $region93: #{transformer_ae_forward.1} parent=91 // pred_check
        %p8780 = pneg %p430
      $region94: #{transformer_ae_forward.1} parent=91 // pred_check_branch
        %8782 = sbr.rel (%p8780) target = $region96
      $region95: #{transformer_ae_forward.1} parent=91 // pred_region
        _
      $region96: #{transformer_ae_forward.1} parent=91 // pred_fallthru
        _
    $region92: #{transformer_ae_forward.1} parent=5 // pred_fallthru
      _
    %p8783 = scmp.le.s32.totalorder 2, %s24
    // Predicated region
    $region97: #{transformer_ae_forward.1} parent=5 // pred_check
      %p8784 = pneg %p8783
    $region98: #{transformer_ae_forward.1} parent=5 // pred_check_branch
      %8786 = sbr.rel (%p8784) target = $region100
    $region99: #{transformer_ae_forward.1} parent=5 // pred_region
      %s8787 = ssub.s32 %s24, 2
      // Predicated region
      $region101: #{transformer_ae_forward.1} parent=99 // pred_check
        %p8788 = pneg %p436
      $region102: #{transformer_ae_forward.1} parent=99 // pred_check_branch
        %8790 = sbr.rel (%p8788) target = $region104
      $region103: #{transformer_ae_forward.1} parent=99 // pred_region
        %p8791 = scmp.lt.s32.totalorder %s30, 3
        %s8792 = scalar_select %p8791, %s30, 3
        %s8793 = smul.addr %s8792, 4
        %s8794 = smul.addr %s8793, 8
        %s8795 = scalar_lea.vmem %s18, %s8794
      $region104: #{transformer_ae_forward.1} parent=99 // pred_fallthru
        _
    $region100: #{transformer_ae_forward.1} parent=5 // pred_fallthru
      _
  $region6: #{transformer_ae_forward.1} parent=0 // loop_footer
    %s28 = sadd.s32 1, %s24
  $region7: #{transformer_ae_forward.1} parent=0 // loop_footer_branch
    %23 = sbr.rel target = $region3
  $region8: #{transformer_ae_forward.1} parent=0 // loop_exit
    _

</llo_original>
